<compile_context>
chip_gen: v5e
topology: v5e:2x2
jax: 0.10.0
libtpu: 0.0.40
codegen_flags: <defaults>
</compile_context>

<pallas_src>
import functools
import math

import jax
import jax.numpy as jnp
from jax import lax
from jax.experimental import pallas as pl
from jax.experimental.pallas import tpu as pltpu

_DOT_DTYPE = jnp.bfloat16      # MXU operand dtype (accumulation stays f32)
_ROW_TILE = 512                # row tile for the 1x1 projection matmul


def _round_up(x, m):
    return ((x + m - 1) // m) * m


# --------------------------------------------------------------------------- #
# Pallas kernels
# --------------------------------------------------------------------------- #
def _conv_same_kernel(*refs, k, W, D, relu, has_res):
    """One output H-plane of a kxkxk 'same' conv, BN folded, fused epilogue.

    refs = (x_h+0, ..., x_h+k-1, w, b, [res], out)
      x_h+d : (Wp, Dp, Cin)  padded input slab at padded-H row h+d
      w     : (k, k, k, Cin, Cout)
      b     : (1, Cout)                 (BN-folded bias)
      res   : (W, D, Cout)              (optional residual, added pre-ReLU)
      out   : (W, D, Cout)
    """
    x_refs = refs[:k]
    w_ref = refs[k]
    b_ref = refs[k + 1]
    if has_res:
        res_ref = refs[k + 2]
        o_ref = refs[k + 3]
    else:
        o_ref = refs[k + 2]

    Cin = x_refs[0].shape[-1]
    Cout = w_ref.shape[-1]

    w = w_ref[...]                                   # (k,k,k,Cin,Cout) f32
    acc = jnp.zeros((W * D, Cout), jnp.float32)
    for dh in range(k):
        xh = x_refs[dh][...]                         # (Wp, Dp, Cin) f32
        for dw in range(k):
            for dd in range(k):
                patch = xh[dw:dw + W, dd:dd + D, :].reshape(W * D, Cin)
                acc = acc + jnp.dot(patch.astype(_DOT_DTYPE),
                                    w[dh, dw, dd].astype(_DOT_DTYPE),
                                    preferred_element_type=jnp.float32)

    y = acc + b_ref[...]                             # BN-folded bias
    if has_res:
        y = y + res_ref[...].reshape(W * D, Cout)    # fused residual add
    if relu:
        y = jnp.maximum(y, 0.0)
    o_ref[...] = y.reshape(W, D, Cout).astype(o_ref.dtype)


def _pointwise_kernel(x_ref, w_ref, b_ref, o_ref, *, relu):
    """y = [relu](x @ w + b) — 1x1x1 conv (+ folded BN) as a row-tiled matmul."""
    y = jnp.dot(x_ref[...].astype(_DOT_DTYPE), w_ref[...].astype(_DOT_DTYPE),
                preferred_element_type=jnp.float32)
    y = y + b_ref[...]
    if relu:
        y = jnp.maximum(y, 0.0)
    o_ref[...] = y.astype(o_ref.dtype)


# --------------------------------------------------------------------------- #
# Wrappers
# --------------------------------------------------------------------------- #
def _shift_map(n, h, *, dh):
    # element index along padded H (block size 1 -> block idx == element idx)
    return (n, h + dh, 0, 0, 0)


def pallas_conv_same(x, w, b, *, relu, residual=None):
    """kxkxk 'same' 3-D conv, channel-last, BN folded into (w, b).

    x        : (N, H, W, D, Cin)
    w        : (k, k, k, Cin, Cout)   taps over (H, W, D)
    b        : (Cout,)
    residual : optional (N, H, W, D, Cout) added before the final ReLU
    """
    N, H, W, D, Cin = x.shape
    k = w.shape[0]
    assert w.shape[:3] == (k, k, k) and k % 2 == 1, "odd kernel_size only"
    Cout = w.shape[-1]
    p = k // 2

    xp = jnp.pad(x, ((0, 0), (p, p), (p, p), (p, p), (0, 0)))
    Wp, Dp = W + 2 * p, D + 2 * p

    in_specs = [pl.BlockSpec((None, None, Wp, Dp, Cin),
                             functools.partial(_shift_map, dh=dh))
                for dh in range(k)]
    in_specs += [pl.BlockSpec((k, k, k, Cin, Cout), lambda n, h: (0, 0, 0, 0, 0)),
                 pl.BlockSpec((1, Cout), lambda n, h: (0, 0))]
    inputs = [xp] * k + [w, b.reshape(1, Cout)]

    has_res = residual is not None
    if has_res:
        in_specs.append(pl.BlockSpec((None, None, W, D, Cout),
                                     lambda n, h: (n, h, 0, 0, 0)))
        inputs.append(residual)

    kernel = functools.partial(_conv_same_kernel, k=k, W=W, D=D,
                               relu=relu, has_res=has_res)
    return pl.pallas_call(
        kernel,
        out_shape=jax.ShapeDtypeStruct((N, H, W, D, Cout), jnp.float32),
        grid=(N, H),
        in_specs=in_specs,
        out_specs=pl.BlockSpec((None, None, W, D, Cout),
                               lambda n, h: (n, h, 0, 0, 0)),
        compiler_params=pltpu.CompilerParams(
            dimension_semantics=("parallel", "parallel")),
    )(*inputs)


def pallas_pointwise(x, w, b, *, relu, row_tile=_ROW_TILE):
    """y = [relu](x @ w + b); x: (M, Cin), w: (Cin, Cout)."""
    M, K = x.shape
    Nout = w.shape[-1]
    tm = min(row_tile, _round_up(M, 8))
    Mp = _round_up(M, tm)
    xp = x if Mp == M else jnp.pad(x, ((0, Mp - M), (0, 0)))  # skip pad when divisible
    out = pl.pallas_call(
        functools.partial(_pointwise_kernel, relu=relu),
        out_shape=jax.ShapeDtypeStruct((Mp, Nout), jnp.float32),
        grid=(Mp // tm,),
        in_specs=[pl.BlockSpec((tm, K), lambda i: (i, 0)),
                  pl.BlockSpec((K, Nout), lambda i: (0, 0)),
                  pl.BlockSpec((1, Nout), lambda i: (0, 0))],
        out_specs=pl.BlockSpec((tm, Nout), lambda i: (i, 0)),
        compiler_params=pltpu.CompilerParams(dimension_semantics=("parallel",)),
    )(xp, w, b.reshape(1, Nout))
    return out if Mp == M else out[:M]


# --------------------------------------------------------------------------- #
# ResConvBlock forward
# --------------------------------------------------------------------------- #
def _fold_bn(w, b, bn, eps):
    """Fold eval-mode BatchNorm (gamma, beta, running mean/var) into conv (w, b)."""
    s = bn["gamma"] / jnp.sqrt(bn["var"] + eps)
    return w * s, (b - bn["mean"]) * s + bn["beta"]


def resconv_block_forward(x_in, params, eps=1e-5):
    """ResConvBlock.forward — x_in is channel-first (N, Cin, H, W, D)."""
    x = jnp.transpose(x_in, (0, 2, 3, 4, 1)).astype(jnp.float32)   # channel-last
    N, H, W, D, Cin = x.shape

    w1, b1 = _fold_bn(params["conv1"]["w"], params["conv1"]["b"], params["bn1"], eps)
    w2, b2 = _fold_bn(params["conv2"]["w"], params["conv2"]["b"], params["bn2"], eps)
    Cout = w1.shape[-1]

    # Residual branch: identity, or 1x1x1 conv + BN (folded) when Cin != Cout.
    if "conv3" in params:
        w3, b3 = _fold_bn(params["conv3"]["w"], params["conv3"]["b"], params["bn3"], eps)
        x_res = pallas_pointwise(x.reshape(-1, Cin), w3.reshape(Cin, Cout), b3,
                                 relu=False).reshape(N, H, W, D, Cout)
    else:
        x_res = x

    # conv1 + BN1 + ReLU   (single fused kernel)
    h = pallas_conv_same(x, w1, b1, relu=True)
    # conv2 + BN2 + residual add + final ReLU   (single fused kernel)
    y = pallas_conv_same(h, w2, b2, relu=True, residual=x_res)

    return jnp.transpose(y, (0, 4, 1, 2, 3))                       # channel-first


# --------------------------------------------------------------------------- #
# Pure-JAX reference (for correctness check)
# --------------------------------------------------------------------------- #
def reference_forward(x_in, params, eps=1e-5):
    x = jnp.transpose(x_in, (0, 2, 3, 4, 1)).astype(jnp.float32)

    def conv(z, w, b):
        y = lax.conv_general_dilated(z, w, (1, 1, 1), "SAME",
                                     dimension_numbers=("NHWDC", "HWDIO", "NHWDC"))
        return y + b

    def bn(y, p):
        s = p["gamma"] / jnp.sqrt(p["var"] + eps)
        return (y - p["mean"]) * s + p["beta"]

    h = jnp.maximum(bn(conv(x, params["conv1"]["w"], params["conv1"]["b"]), params["bn1"]), 0.0)
    x_conv = bn(conv(h, params["conv2"]["w"], params["conv2"]["b"]), params["bn2"])
    if "conv3" in params:
        x_res = bn(conv(x, params["conv3"]["w"], params["conv3"]["b"]), params["bn3"])
    else:
        x_res = x
    y = jnp.maximum(x_conv + x_res, 0.0)
    return jnp.transpose(y, (0, 4, 1, 2, 3))


# --------------------------------------------------------------------------- #
# Deterministic synthetic parameters (shapes follow the module __init__)
# --------------------------------------------------------------------------- #
def init_params(key, in_channels, out_channels, kernel_size):
    ks = iter(jax.random.split(key, 32))

    def conv_p(cin, cout, k):
        fan_in = cin * k ** 3
        w = jax.random.normal(next(ks), (k, k, k, cin, cout), jnp.float32) / math.sqrt(fan_in)
        b = 0.05 * jax.random.normal(next(ks), (cout,), jnp.float32)
        return {"w": w, "b": b}

    def bn_p(c):
        return {
            "gamma": 1.0 + 0.1 * jax.random.normal(next(ks), (c,), jnp.float32),
            "beta": 0.1 * jax.random.normal(next(ks), (c,), jnp.float32),
            "mean": 0.1 * jax.random.normal(next(ks), (c,), jnp.float32),
            "var": 1.0 + 0.1 * jax.random.uniform(next(ks), (c,), jnp.float32),
        }

    p = {"conv1": conv_p(in_channels, out_channels, kernel_size),
         "bn1": bn_p(out_channels),
         "conv2": conv_p(out_channels, out_channels, kernel_size),
         "bn2": bn_p(out_channels)}
    if in_channels != out_channels:
        p["conv3"] = conv_p(in_channels, out_channels, 1)
        p["bn3"] = bn_p(out_channels)
    return p


# --------------------------------------------------------------------------- #
if __name__ == "__main__":
    key = jax.random.PRNGKey(0)
    k_p1, k_x1, k_p2, k_x2 = jax.random.split(key, 4)

    fwd = jax.jit(resconv_block_forward)
    ref = jax.jit(reference_forward)

    # --- Config 1: in_channels != out_channels (exercises the conv3 projection) ---
    N, Cin, Cout, H, W, D, K = 2, 8, 16, 16, 16, 16, 3
    params1 = init_params(k_p1, Cin, Cout, K)
    x1 = jax.random.normal(k_x1, (N, Cin, H, W, D), jnp.float32)

    out1 = jax.block_until_ready(fwd(x1, params1))
    ref1 = jax.block_until_ready(ref(x1, params1))
    assert out1.shape == (N, Cout, H, W, D) and out1.dtype == jnp.float32
    assert bool(jnp.all(jnp.isfinite(out1)))
    err1 = float(jnp.max(jnp.abs(out1 - ref1)))
    assert err1 < 1e-1, f"config1 max abs err {err1}"

    # --- Config 2: in_channels == out_channels (identity residual) ---
    params2 = init_params(k_p2, 8, 8, K)
    x2 = jax.random.normal(k_x2, (2, 8, 8, 8, 8), jnp.float32)
    out2 = jax.block_until_ready(fwd(x2, params2))
    ref2 = jax.block_until_ready(ref(x2, params2))
    assert out2.shape == x2.shape
    assert bool(jnp.all(jnp.isfinite(out2)))
    err2 = float(jnp.max(jnp.abs(out2 - ref2)))
    assert err2 < 1e-1, f"config2 max abs err {err2}"

    print("KERNEL_OK")
</pallas_src>

<mosaic_0001>
module attributes {stable_mosaic.version = 11 : i64} {
  func.func @_conv_same_kernel(%arg0: i32, %arg1: i32, %arg2: memref<1x1x18x18x8xf32, #tpu.memory_space<vmem>>, %arg3: memref<1x1x18x18x8xf32, #tpu.memory_space<vmem>>, %arg4: memref<1x1x18x18x8xf32, #tpu.memory_space<vmem>>, %arg5: memref<3x3x3x8x16xf32, #tpu.memory_space<vmem>>, %arg6: memref<1x16xf32, #tpu.memory_space<vmem>>, %arg7: memref<1x1x16x16x16xf32, #tpu.memory_space<vmem>>) attributes {dimension_semantics = [#tpu.dimension_semantics<parallel>, #tpu.dimension_semantics<parallel>], iteration_bounds = array<i64: 2, 16>, scalar_prefetch = 0 : i64, scratch_operands = 0 : i64, tpu.core_type = #tpu.core_type<tc>, window_params = [{transform_indices = @transform_0, window_bounds = array<i64: 1, 1, 18, 18, 8>}, {transform_indices = @transform_1, window_bounds = array<i64: 1, 1, 18, 18, 8>}, {transform_indices = @transform_2, window_bounds = array<i64: 1, 1, 18, 18, 8>}, {pipeline_mode = #tpu.pipeline_mode<synchronous>, transform_indices = @transform_3, window_bounds = array<i64: 3, 3, 3, 8, 16>}, {pipeline_mode = #tpu.pipeline_mode<synchronous>, transform_indices = @transform_4, window_bounds = array<i64: 1, 16>}, {transform_indices = @transform_5, window_bounds = array<i64: 1, 1, 16, 16, 16>}]} {
    %c0 = arith.constant 0 : index
    %c0_0 = arith.constant 0 : index
    %c0_1 = arith.constant 0 : index
    %c0_2 = arith.constant 0 : index
    %c0_3 = arith.constant 0 : index
    %0 = vector.load %arg5[%c0, %c0_0, %c0_1, %c0_2, %c0_3] : memref<3x3x3x8x16xf32, #tpu.memory_space<vmem>>, vector<3x3x3x8x16xf32>
    %cst = arith.constant 0.000000e+00 : f32
    %1 = vector.broadcast %cst : f32 to vector<256x16xf32>
    %c0_4 = arith.constant 0 : index
    %c0_5 = arith.constant 0 : index
    %c0_6 = arith.constant 0 : index
    %c0_7 = arith.constant 0 : index
    %c0_8 = arith.constant 0 : index
    %2 = vector.load %arg2[%c0_4, %c0_5, %c0_6, %c0_7, %c0_8] : memref<1x1x18x18x8xf32, #tpu.memory_space<vmem>>, vector<1x1x18x18x8xf32>
    %3 = vector.shape_cast %2 : vector<1x1x18x18x8xf32> to vector<18x18x8xf32>
    %4 = vector.extract_strided_slice %3 {offsets = [0, 0, 0], sizes = [16, 16, 8], strides = [1, 1, 1]} : vector<18x18x8xf32> to vector<16x16x8xf32>
    %5 = vector.shape_cast %4 : vector<16x16x8xf32> to vector<256x8xf32>
    %6 = arith.truncf %5 : vector<256x8xf32> to vector<256x8xbf16>
    %7 = vector.extract_strided_slice %0 {offsets = [0, 0, 0, 0, 0], sizes = [1, 1, 1, 8, 16], strides = [1, 1, 1, 1, 1]} : vector<3x3x3x8x16xf32> to vector<1x1x1x8x16xf32>
    %8 = vector.shape_cast %7 : vector<1x1x1x8x16xf32> to vector<8x16xf32>
    %9 = arith.truncf %8 : vector<8x16xf32> to vector<8x16xbf16>
    %cst_9 = arith.constant dense<0.000000e+00> : vector<256x16xf32>
    %10 = tpu.matmul %6, %9, %cst_9 {dimension_numbers = #tpu.dot_dimension_numbers<[1], [0], [0], [1], [0, 0, 1, 1], [], []>} : vector<256x8xbf16>, vector<8x16xbf16>, vector<256x16xf32> -> vector<256x16xf32>
    %11 = arith.addf %1, %10 : vector<256x16xf32>
    %12 = vector.extract_strided_slice %3 {offsets = [0, 1, 0], sizes = [16, 16, 8], strides = [1, 1, 1]} : vector<18x18x8xf32> to vector<16x16x8xf32>
    %13 = vector.shape_cast %12 : vector<16x16x8xf32> to vector<256x8xf32>
    %14 = arith.truncf %13 : vector<256x8xf32> to vector<256x8xbf16>
    %15 = vector.extract_strided_slice %0 {offsets = [0, 0, 1, 0, 0], sizes = [1, 1, 1, 8, 16], strides = [1, 1, 1, 1, 1]} : vector<3x3x3x8x16xf32> to vector<1x1x1x8x16xf32>
    %16 = vector.shape_cast %15 : vector<1x1x1x8x16xf32> to vector<8x16xf32>
    %17 = arith.truncf %16 : vector<8x16xf32> to vector<8x16xbf16>
    %cst_10 = arith.constant dense<0.000000e+00> : vector<256x16xf32>
    %18 = tpu.matmul %14, %17, %cst_10 {dimension_numbers = #tpu.dot_dimension_numbers<[1], [0], [0], [1], [0, 0, 1, 1], [], []>} : vector<256x8xbf16>, vector<8x16xbf16>, vector<256x16xf32> -> vector<256x16xf32>
    %19 = arith.addf %11, %18 : vector<256x16xf32>
    %20 = vector.extract_strided_slice %3 {offsets = [0, 2, 0], sizes = [16, 16, 8], strides = [1, 1, 1]} : vector<18x18x8xf32> to vector<16x16x8xf32>
    %21 = vector.shape_cast %20 : vector<16x16x8xf32> to vector<256x8xf32>
    %22 = arith.truncf %21 : vector<256x8xf32> to vector<256x8xbf16>
    %23 = vector.extract_strided_slice %0 {offsets = [0, 0, 2, 0, 0], sizes = [1, 1, 1, 8, 16], strides = [1, 1, 1, 1, 1]} : vector<3x3x3x8x16xf32> to vector<1x1x1x8x16xf32>
    %24 = vector.shape_cast %23 : vector<1x1x1x8x16xf32> to vector<8x16xf32>
    %25 = arith.truncf %24 : vector<8x16xf32> to vector<8x16xbf16>
    %cst_11 = arith.constant dense<0.000000e+00> : vector<256x16xf32>
    %26 = tpu.matmul %22, %25, %cst_11 {dimension_numbers = #tpu.dot_dimension_numbers<[1], [0], [0], [1], [0, 0, 1, 1], [], []>} : vector<256x8xbf16>, vector<8x16xbf16>, vector<256x16xf32> -> vector<256x16xf32>
    %27 = arith.addf %19, %26 : vector<256x16xf32>
    %28 = vector.extract_strided_slice %3 {offsets = [1, 0, 0], sizes = [16, 16, 8], strides = [1, 1, 1]} : vector<18x18x8xf32> to vector<16x16x8xf32>
    %29 = vector.shape_cast %28 : vector<16x16x8xf32> to vector<256x8xf32>
    %30 = arith.truncf %29 : vector<256x8xf32> to vector<256x8xbf16>
    %31 = vector.extract_strided_slice %0 {offsets = [0, 1, 0, 0, 0], sizes = [1, 1, 1, 8, 16], strides = [1, 1, 1, 1, 1]} : vector<3x3x3x8x16xf32> to vector<1x1x1x8x16xf32>
    %32 = vector.shape_cast %31 : vector<1x1x1x8x16xf32> to vector<8x16xf32>
    %33 = arith.truncf %32 : vector<8x16xf32> to vector<8x16xbf16>
    %cst_12 = arith.constant dense<0.000000e+00> : vector<256x16xf32>
    %34 = tpu.matmul %30, %33, %cst_12 {dimension_numbers = #tpu.dot_dimension_numbers<[1], [0], [0], [1], [0, 0, 1, 1], [], []>} : vector<256x8xbf16>, vector<8x16xbf16>, vector<256x16xf32> -> vector<256x16xf32>
    %35 = arith.addf %27, %34 : vector<256x16xf32>
    %36 = vector.extract_strided_slice %3 {offsets = [1, 1, 0], sizes = [16, 16, 8], strides = [1, 1, 1]} : vector<18x18x8xf32> to vector<16x16x8xf32>
    %37 = vector.shape_cast %36 : vector<16x16x8xf32> to vector<256x8xf32>
    %38 = arith.truncf %37 : vector<256x8xf32> to vector<256x8xbf16>
    %39 = vector.extract_strided_slice %0 {offsets = [0, 1, 1, 0, 0], sizes = [1, 1, 1, 8, 16], strides = [1, 1, 1, 1, 1]} : vector<3x3x3x8x16xf32> to vector<1x1x1x8x16xf32>
    %40 = vector.shape_cast %39 : vector<1x1x1x8x16xf32> to vector<8x16xf32>
    %41 = arith.truncf %40 : vector<8x16xf32> to vector<8x16xbf16>
    %cst_13 = arith.constant dense<0.000000e+00> : vector<256x16xf32>
    %42 = tpu.matmul %38, %41, %cst_13 {dimension_numbers = #tpu.dot_dimension_numbers<[1], [0], [0], [1], [0, 0, 1, 1], [], []>} : vector<256x8xbf16>, vector<8x16xbf16>, vector<256x16xf32> -> vector<256x16xf32>
    %43 = arith.addf %35, %42 : vector<256x16xf32>
    %44 = vector.extract_strided_slice %3 {offsets = [1, 2, 0], sizes = [16, 16, 8], strides = [1, 1, 1]} : vector<18x18x8xf32> to vector<16x16x8xf32>
    %45 = vector.shape_cast %44 : vector<16x16x8xf32> to vector<256x8xf32>
    %46 = arith.truncf %45 : vector<256x8xf32> to vector<256x8xbf16>
    %47 = vector.extract_strided_slice %0 {offsets = [0, 1, 2, 0, 0], sizes = [1, 1, 1, 8, 16], strides = [1, 1, 1, 1, 1]} : vector<3x3x3x8x16xf32> to vector<1x1x1x8x16xf32>
    %48 = vector.shape_cast %47 : vector<1x1x1x8x16xf32> to vector<8x16xf32>
    %49 = arith.truncf %48 : vector<8x16xf32> to vector<8x16xbf16>
    %cst_14 = arith.constant dense<0.000000e+00> : vector<256x16xf32>
    %50 = tpu.matmul %46, %49, %cst_14 {dimension_numbers = #tpu.dot_dimension_numbers<[1], [0], [0], [1], [0, 0, 1, 1], [], []>} : vector<256x8xbf16>, vector<8x16xbf16>, vector<256x16xf32> -> vector<256x16xf32>
    %51 = arith.addf %43, %50 : vector<256x16xf32>
    %52 = vector.extract_strided_slice %3 {offsets = [2, 0, 0], sizes = [16, 16, 8], strides = [1, 1, 1]} : vector<18x18x8xf32> to vector<16x16x8xf32>
    %53 = vector.shape_cast %52 : vector<16x16x8xf32> to vector<256x8xf32>
    %54 = arith.truncf %53 : vector<256x8xf32> to vector<256x8xbf16>
    %55 = vector.extract_strided_slice %0 {offsets = [0, 2, 0, 0, 0], sizes = [1, 1, 1, 8, 16], strides = [1, 1, 1, 1, 1]} : vector<3x3x3x8x16xf32> to vector<1x1x1x8x16xf32>
    %56 = vector.shape_cast %55 : vector<1x1x1x8x16xf32> to vector<8x16xf32>
    %57 = arith.truncf %56 : vector<8x16xf32> to vector<8x16xbf16>
    %cst_15 = arith.constant dense<0.000000e+00> : vector<256x16xf32>
    %58 = tpu.matmul %54, %57, %cst_15 {dimension_numbers = #tpu.dot_dimension_numbers<[1], [0], [0], [1], [0, 0, 1, 1], [], []>} : vector<256x8xbf16>, vector<8x16xbf16>, vector<256x16xf32> -> vector<256x16xf32>
    %59 = arith.addf %51, %58 : vector<256x16xf32>
    %60 = vector.extract_strided_slice %3 {offsets = [2, 1, 0], sizes = [16, 16, 8], strides = [1, 1, 1]} : vector<18x18x8xf32> to vector<16x16x8xf32>
    %61 = vector.shape_cast %60 : vector<16x16x8xf32> to vector<256x8xf32>
    %62 = arith.truncf %61 : vector<256x8xf32> to vector<256x8xbf16>
    %63 = vector.extract_strided_slice %0 {offsets = [0, 2, 1, 0, 0], sizes = [1, 1, 1, 8, 16], strides = [1, 1, 1, 1, 1]} : vector<3x3x3x8x16xf32> to vector<1x1x1x8x16xf32>
    %64 = vector.shape_cast %63 : vector<1x1x1x8x16xf32> to vector<8x16xf32>
    %65 = arith.truncf %64 : vector<8x16xf32> to vector<8x16xbf16>
    %cst_16 = arith.constant dense<0.000000e+00> : vector<256x16xf32>
    %66 = tpu.matmul %62, %65, %cst_16 {dimension_numbers = #tpu.dot_dimension_numbers<[1], [0], [0], [1], [0, 0, 1, 1], [], []>} : vector<256x8xbf16>, vector<8x16xbf16>, vector<256x16xf32> -> vector<256x16xf32>
    %67 = arith.addf %59, %66 : vector<256x16xf32>
    %68 = vector.extract_strided_slice %3 {offsets = [2, 2, 0], sizes = [16, 16, 8], strides = [1, 1, 1]} : vector<18x18x8xf32> to vector<16x16x8xf32>
    %69 = vector.shape_cast %68 : vector<16x16x8xf32> to vector<256x8xf32>
    %70 = arith.truncf %69 : vector<256x8xf32> to vector<256x8xbf16>
    %71 = vector.extract_strided_slice %0 {offsets = [0, 2, 2, 0, 0], sizes = [1, 1, 1, 8, 16], strides = [1, 1, 1, 1, 1]} : vector<3x3x3x8x16xf32> to vector<1x1x1x8x16xf32>
    %72 = vector.shape_cast %71 : vector<1x1x1x8x16xf32> to vector<8x16xf32>
    %73 = arith.truncf %72 : vector<8x16xf32> to vector<8x16xbf16>
    %cst_17 = arith.constant dense<0.000000e+00> : vector<256x16xf32>
    %74 = tpu.matmul %70, %73, %cst_17 {dimension_numbers = #tpu.dot_dimension_numbers<[1], [0], [0], [1], [0, 0, 1, 1], [], []>} : vector<256x8xbf16>, vector<8x16xbf16>, vector<256x16xf32> -> vector<256x16xf32>
    %75 = arith.addf %67, %74 : vector<256x16xf32>
    %c0_18 = arith.constant 0 : index
    %c0_19 = arith.constant 0 : index
    %c0_20 = arith.constant 0 : index
    %c0_21 = arith.constant 0 : index
    %c0_22 = arith.constant 0 : index
    %76 = vector.load %arg3[%c0_18, %c0_19, %c0_20, %c0_21, %c0_22] : memref<1x1x18x18x8xf32, #tpu.memory_space<vmem>>, vector<1x1x18x18x8xf32>
    %77 = vector.shape_cast %76 : vector<1x1x18x18x8xf32> to vector<18x18x8xf32>
    %78 = vector.extract_strided_slice %77 {offsets = [0, 0, 0], sizes = [16, 16, 8], strides = [1, 1, 1]} : vector<18x18x8xf32> to vector<16x16x8xf32>
    %79 = vector.shape_cast %78 : vector<16x16x8xf32> to vector<256x8xf32>
    %80 = arith.truncf %79 : vector<256x8xf32> to vector<256x8xbf16>
    %81 = vector.extract_strided_slice %0 {offsets = [1, 0, 0, 0, 0], sizes = [1, 1, 1, 8, 16], strides = [1, 1, 1, 1, 1]} : vector<3x3x3x8x16xf32> to vector<1x1x1x8x16xf32>
    %82 = vector.shape_cast %81 : vector<1x1x1x8x16xf32> to vector<8x16xf32>
    %83 = arith.truncf %82 : vector<8x16xf32> to vector<8x16xbf16>
    %cst_23 = arith.constant dense<0.000000e+00> : vector<256x16xf32>
    %84 = tpu.matmul %80, %83, %cst_23 {dimension_numbers = #tpu.dot_dimension_numbers<[1], [0], [0], [1], [0, 0, 1, 1], [], []>} : vector<256x8xbf16>, vector<8x16xbf16>, vector<256x16xf32> -> vector<256x16xf32>
    %85 = arith.addf %75, %84 : vector<256x16xf32>
    %86 = vector.extract_strided_slice %77 {offsets = [0, 1, 0], sizes = [16, 16, 8], strides = [1, 1, 1]} : vector<18x18x8xf32> to vector<16x16x8xf32>
    %87 = vector.shape_cast %86 : vector<16x16x8xf32> to vector<256x8xf32>
    %88 = arith.truncf %87 : vector<256x8xf32> to vector<256x8xbf16>
    %89 = vector.extract_strided_slice %0 {offsets = [1, 0, 1, 0, 0], sizes = [1, 1, 1, 8, 16], strides = [1, 1, 1, 1, 1]} : vector<3x3x3x8x16xf32> to vector<1x1x1x8x16xf32>
    %90 = vector.shape_cast %89 : vector<1x1x1x8x16xf32> to vector<8x16xf32>
    %91 = arith.truncf %90 : vector<8x16xf32> to vector<8x16xbf16>
    %cst_24 = arith.constant dense<0.000000e+00> : vector<256x16xf32>
    %92 = tpu.matmul %88, %91, %cst_24 {dimension_numbers = #tpu.dot_dimension_numbers<[1], [0], [0], [1], [0, 0, 1, 1], [], []>} : vector<256x8xbf16>, vector<8x16xbf16>, vector<256x16xf32> -> vector<256x16xf32>
    %93 = arith.addf %85, %92 : vector<256x16xf32>
    %94 = vector.extract_strided_slice %77 {offsets = [0, 2, 0], sizes = [16, 16, 8], strides = [1, 1, 1]} : vector<18x18x8xf32> to vector<16x16x8xf32>
    %95 = vector.shape_cast %94 : vector<16x16x8xf32> to vector<256x8xf32>
    %96 = arith.truncf %95 : vector<256x8xf32> to vector<256x8xbf16>
    %97 = vector.extract_strided_slice %0 {offsets = [1, 0, 2, 0, 0], sizes = [1, 1, 1, 8, 16], strides = [1, 1, 1, 1, 1]} : vector<3x3x3x8x16xf32> to vector<1x1x1x8x16xf32>
    %98 = vector.shape_cast %97 : vector<1x1x1x8x16xf32> to vector<8x16xf32>
    %99 = arith.truncf %98 : vector<8x16xf32> to vector<8x16xbf16>
    %cst_25 = arith.constant dense<0.000000e+00> : vector<256x16xf32>
    %100 = tpu.matmul %96, %99, %cst_25 {dimension_numbers = #tpu.dot_dimension_numbers<[1], [0], [0], [1], [0, 0, 1, 1], [], []>} : vector<256x8xbf16>, vector<8x16xbf16>, vector<256x16xf32> -> vector<256x16xf32>
    %101 = arith.addf %93, %100 : vector<256x16xf32>
    %102 = vector.extract_strided_slice %77 {offsets = [1, 0, 0], sizes = [16, 16, 8], strides = [1, 1, 1]} : vector<18x18x8xf32> to vector<16x16x8xf32>
    %103 = vector.shape_cast %102 : vector<16x16x8xf32> to vector<256x8xf32>
    %104 = arith.truncf %103 : vector<256x8xf32> to vector<256x8xbf16>
    %105 = vector.extract_strided_slice %0 {offsets = [1, 1, 0, 0, 0], sizes = [1, 1, 1, 8, 16], strides = [1, 1, 1, 1, 1]} : vector<3x3x3x8x16xf32> to vector<1x1x1x8x16xf32>
    %106 = vector.shape_cast %105 : vector<1x1x1x8x16xf32> to vector<8x16xf32>
    %107 = arith.truncf %106 : vector<8x16xf32> to vector<8x16xbf16>
    %cst_26 = arith.constant dense<0.000000e+00> : vector<256x16xf32>
    %108 = tpu.matmul %104, %107, %cst_26 {dimension_numbers = #tpu.dot_dimension_numbers<[1], [0], [0], [1], [0, 0, 1, 1], [], []>} : vector<256x8xbf16>, vector<8x16xbf16>, vector<256x16xf32> -> vector<256x16xf32>
    %109 = arith.addf %101, %108 : vector<256x16xf32>
    %110 = vector.extract_strided_slice %77 {offsets = [1, 1, 0], sizes = [16, 16, 8], strides = [1, 1, 1]} : vector<18x18x8xf32> to vector<16x16x8xf32>
    %111 = vector.shape_cast %110 : vector<16x16x8xf32> to vector<256x8xf32>
    %112 = arith.truncf %111 : vector<256x8xf32> to vector<256x8xbf16>
    %113 = vector.extract_strided_slice %0 {offsets = [1, 1, 1, 0, 0], sizes = [1, 1, 1, 8, 16], strides = [1, 1, 1, 1, 1]} : vector<3x3x3x8x16xf32> to vector<1x1x1x8x16xf32>
    %114 = vector.shape_cast %113 : vector<1x1x1x8x16xf32> to vector<8x16xf32>
    %115 = arith.truncf %114 : vector<8x16xf32> to vector<8x16xbf16>
    %cst_27 = arith.constant dense<0.000000e+00> : vector<256x16xf32>
    %116 = tpu.matmul %112, %115, %cst_27 {dimension_numbers = #tpu.dot_dimension_numbers<[1], [0], [0], [1], [0, 0, 1, 1], [], []>} : vector<256x8xbf16>, vector<8x16xbf16>, vector<256x16xf32> -> vector<256x16xf32>
    %117 = arith.addf %109, %116 : vector<256x16xf32>
    %118 = vector.extract_strided_slice %77 {offsets = [1, 2, 0], sizes = [16, 16, 8], strides = [1, 1, 1]} : vector<18x18x8xf32> to vector<16x16x8xf32>
    %119 = vector.shape_cast %118 : vector<16x16x8xf32> to vector<256x8xf32>
    %120 = arith.truncf %119 : vector<256x8xf32> to vector<256x8xbf16>
    %121 = vector.extract_strided_slice %0 {offsets = [1, 1, 2, 0, 0], sizes = [1, 1, 1, 8, 16], strides = [1, 1, 1, 1, 1]} : vector<3x3x3x8x16xf32> to vector<1x1x1x8x16xf32>
    %122 = vector.shape_cast %121 : vector<1x1x1x8x16xf32> to vector<8x16xf32>
    %123 = arith.truncf %122 : vector<8x16xf32> to vector<8x16xbf16>
    %cst_28 = arith.constant dense<0.000000e+00> : vector<256x16xf32>
    %124 = tpu.matmul %120, %123, %cst_28 {dimension_numbers = #tpu.dot_dimension_numbers<[1], [0], [0], [1], [0, 0, 1, 1], [], []>} : vector<256x8xbf16>, vector<8x16xbf16>, vector<256x16xf32> -> vector<256x16xf32>
    %125 = arith.addf %117, %124 : vector<256x16xf32>
    %126 = vector.extract_strided_slice %77 {offsets = [2, 0, 0], sizes = [16, 16, 8], strides = [1, 1, 1]} : vector<18x18x8xf32> to vector<16x16x8xf32>
    %127 = vector.shape_cast %126 : vector<16x16x8xf32> to vector<256x8xf32>
    %128 = arith.truncf %127 : vector<256x8xf32> to vector<256x8xbf16>
    %129 = vector.extract_strided_slice %0 {offsets = [1, 2, 0, 0, 0], sizes = [1, 1, 1, 8, 16], strides = [1, 1, 1, 1, 1]} : vector<3x3x3x8x16xf32> to vector<1x1x1x8x16xf32>
    %130 = vector.shape_cast %129 : vector<1x1x1x8x16xf32> to vector<8x16xf32>
    %131 = arith.truncf %130 : vector<8x16xf32> to vector<8x16xbf16>
    %cst_29 = arith.constant dense<0.000000e+00> : vector<256x16xf32>
    %132 = tpu.matmul %128, %131, %cst_29 {dimension_numbers = #tpu.dot_dimension_numbers<[1], [0], [0], [1], [0, 0, 1, 1], [], []>} : vector<256x8xbf16>, vector<8x16xbf16>, vector<256x16xf32> -> vector<256x16xf32>
    %133 = arith.addf %125, %132 : vector<256x16xf32>
    %134 = vector.extract_strided_slice %77 {offsets = [2, 1, 0], sizes = [16, 16, 8], strides = [1, 1, 1]} : vector<18x18x8xf32> to vector<16x16x8xf32>
    %135 = vector.shape_cast %134 : vector<16x16x8xf32> to vector<256x8xf32>
    %136 = arith.truncf %135 : vector<256x8xf32> to vector<256x8xbf16>
    %137 = vector.extract_strided_slice %0 {offsets = [1, 2, 1, 0, 0], sizes = [1, 1, 1, 8, 16], strides = [1, 1, 1, 1, 1]} : vector<3x3x3x8x16xf32> to vector<1x1x1x8x16xf32>
    %138 = vector.shape_cast %137 : vector<1x1x1x8x16xf32> to vector<8x16xf32>
    %139 = arith.truncf %138 : vector<8x16xf32> to vector<8x16xbf16>
    %cst_30 = arith.constant dense<0.000000e+00> : vector<256x16xf32>
    %140 = tpu.matmul %136, %139, %cst_30 {dimension_numbers = #tpu.dot_dimension_numbers<[1], [0], [0], [1], [0, 0, 1, 1], [], []>} : vector<256x8xbf16>, vector<8x16xbf16>, vector<256x16xf32> -> vector<256x16xf32>
    %141 = arith.addf %133, %140 : vector<256x16xf32>
    %142 = vector.extract_strided_slice %77 {offsets = [2, 2, 0], sizes = [16, 16, 8], strides = [1, 1, 1]} : vector<18x18x8xf32> to vector<16x16x8xf32>
    %143 = vector.shape_cast %142 : vector<16x16x8xf32> to vector<256x8xf32>
    %144 = arith.truncf %143 : vector<256x8xf32> to vector<256x8xbf16>
    %145 = vector.extract_strided_slice %0 {offsets = [1, 2, 2, 0, 0], sizes = [1, 1, 1, 8, 16], strides = [1, 1, 1, 1, 1]} : vector<3x3x3x8x16xf32> to vector<1x1x1x8x16xf32>
    %146 = vector.shape_cast %145 : vector<1x1x1x8x16xf32> to vector<8x16xf32>
    %147 = arith.truncf %146 : vector<8x16xf32> to vector<8x16xbf16>
    %cst_31 = arith.constant dense<0.000000e+00> : vector<256x16xf32>
    %148 = tpu.matmul %144, %147, %cst_31 {dimension_numbers = #tpu.dot_dimension_numbers<[1], [0], [0], [1], [0, 0, 1, 1], [], []>} : vector<256x8xbf16>, vector<8x16xbf16>, vector<256x16xf32> -> vector<256x16xf32>
    %149 = arith.addf %141, %148 : vector<256x16xf32>
    %c0_32 = arith.constant 0 : index
    %c0_33 = arith.constant 0 : index
    %c0_34 = arith.constant 0 : index
    %c0_35 = arith.constant 0 : index
    %c0_36 = arith.constant 0 : index
    %150 = vector.load %arg4[%c0_32, %c0_33, %c0_34, %c0_35, %c0_36] : memref<1x1x18x18x8xf32, #tpu.memory_space<vmem>>, vector<1x1x18x18x8xf32>
    %151 = vector.shape_cast %150 : vector<1x1x18x18x8xf32> to vector<18x18x8xf32>
    %152 = vector.extract_strided_slice %151 {offsets = [0, 0, 0], sizes = [16, 16, 8], strides = [1, 1, 1]} : vector<18x18x8xf32> to vector<16x16x8xf32>
    %153 = vector.shape_cast %152 : vector<16x16x8xf32> to vector<256x8xf32>
    %154 = arith.truncf %153 : vector<256x8xf32> to vector<256x8xbf16>
    %155 = vector.extract_strided_slice %0 {offsets = [2, 0, 0, 0, 0], sizes = [1, 1, 1, 8, 16], strides = [1, 1, 1, 1, 1]} : vector<3x3x3x8x16xf32> to vector<1x1x1x8x16xf32>
    %156 = vector.shape_cast %155 : vector<1x1x1x8x16xf32> to vector<8x16xf32>
    %157 = arith.truncf %156 : vector<8x16xf32> to vector<8x16xbf16>
    %cst_37 = arith.constant dense<0.000000e+00> : vector<256x16xf32>
    %158 = tpu.matmul %154, %157, %cst_37 {dimension_numbers = #tpu.dot_dimension_numbers<[1], [0], [0], [1], [0, 0, 1, 1], [], []>} : vector<256x8xbf16>, vector<8x16xbf16>, vector<256x16xf32> -> vector<256x16xf32>
    %159 = arith.addf %149, %158 : vector<256x16xf32>
    %160 = vector.extract_strided_slice %151 {offsets = [0, 1, 0], sizes = [16, 16, 8], strides = [1, 1, 1]} : vector<18x18x8xf32> to vector<16x16x8xf32>
    %161 = vector.shape_cast %160 : vector<16x16x8xf32> to vector<256x8xf32>
    %162 = arith.truncf %161 : vector<256x8xf32> to vector<256x8xbf16>
    %163 = vector.extract_strided_slice %0 {offsets = [2, 0, 1, 0, 0], sizes = [1, 1, 1, 8, 16], strides = [1, 1, 1, 1, 1]} : vector<3x3x3x8x16xf32> to vector<1x1x1x8x16xf32>
    %164 = vector.shape_cast %163 : vector<1x1x1x8x16xf32> to vector<8x16xf32>
    %165 = arith.truncf %164 : vector<8x16xf32> to vector<8x16xbf16>
    %cst_38 = arith.constant dense<0.000000e+00> : vector<256x16xf32>
    %166 = tpu.matmul %162, %165, %cst_38 {dimension_numbers = #tpu.dot_dimension_numbers<[1], [0], [0], [1], [0, 0, 1, 1], [], []>} : vector<256x8xbf16>, vector<8x16xbf16>, vector<256x16xf32> -> vector<256x16xf32>
    %167 = arith.addf %159, %166 : vector<256x16xf32>
    %168 = vector.extract_strided_slice %151 {offsets = [0, 2, 0], sizes = [16, 16, 8], strides = [1, 1, 1]} : vector<18x18x8xf32> to vector<16x16x8xf32>
    %169 = vector.shape_cast %168 : vector<16x16x8xf32> to vector<256x8xf32>
    %170 = arith.truncf %169 : vector<256x8xf32> to vector<256x8xbf16>
    %171 = vector.extract_strided_slice %0 {offsets = [2, 0, 2, 0, 0], sizes = [1, 1, 1, 8, 16], strides = [1, 1, 1, 1, 1]} : vector<3x3x3x8x16xf32> to vector<1x1x1x8x16xf32>
    %172 = vector.shape_cast %171 : vector<1x1x1x8x16xf32> to vector<8x16xf32>
    %173 = arith.truncf %172 : vector<8x16xf32> to vector<8x16xbf16>
    %cst_39 = arith.constant dense<0.000000e+00> : vector<256x16xf32>
    %174 = tpu.matmul %170, %173, %cst_39 {dimension_numbers = #tpu.dot_dimension_numbers<[1], [0], [0], [1], [0, 0, 1, 1], [], []>} : vector<256x8xbf16>, vector<8x16xbf16>, vector<256x16xf32> -> vector<256x16xf32>
    %175 = arith.addf %167, %174 : vector<256x16xf32>
    %176 = vector.extract_strided_slice %151 {offsets = [1, 0, 0], sizes = [16, 16, 8], strides = [1, 1, 1]} : vector<18x18x8xf32> to vector<16x16x8xf32>
    %177 = vector.shape_cast %176 : vector<16x16x8xf32> to vector<256x8xf32>
    %178 = arith.truncf %177 : vector<256x8xf32> to vector<256x8xbf16>
    %179 = vector.extract_strided_slice %0 {offsets = [2, 1, 0, 0, 0], sizes = [1, 1, 1, 8, 16], strides = [1, 1, 1, 1, 1]} : vector<3x3x3x8x16xf32> to vector<1x1x1x8x16xf32>
    %180 = vector.shape_cast %179 : vector<1x1x1x8x16xf32> to vector<8x16xf32>
    %181 = arith.truncf %180 : vector<8x16xf32> to vector<8x16xbf16>
    %cst_40 = arith.constant dense<0.000000e+00> : vector<256x16xf32>
    %182 = tpu.matmul %178, %181, %cst_40 {dimension_numbers = #tpu.dot_dimension_numbers<[1], [0], [0], [1], [0, 0, 1, 1], [], []>} : vector<256x8xbf16>, vector<8x16xbf16>, vector<256x16xf32> -> vector<256x16xf32>
    %183 = arith.addf %175, %182 : vector<256x16xf32>
    %184 = vector.extract_strided_slice %151 {offsets = [1, 1, 0], sizes = [16, 16, 8], strides = [1, 1, 1]} : vector<18x18x8xf32> to vector<16x16x8xf32>
    %185 = vector.shape_cast %184 : vector<16x16x8xf32> to vector<256x8xf32>
    %186 = arith.truncf %185 : vector<256x8xf32> to vector<256x8xbf16>
    %187 = vector.extract_strided_slice %0 {offsets = [2, 1, 1, 0, 0], sizes = [1, 1, 1, 8, 16], strides = [1, 1, 1, 1, 1]} : vector<3x3x3x8x16xf32> to vector<1x1x1x8x16xf32>
    %188 = vector.shape_cast %187 : vector<1x1x1x8x16xf32> to vector<8x16xf32>
    %189 = arith.truncf %188 : vector<8x16xf32> to vector<8x16xbf16>
    %cst_41 = arith.constant dense<0.000000e+00> : vector<256x16xf32>
    %190 = tpu.matmul %186, %189, %cst_41 {dimension_numbers = #tpu.dot_dimension_numbers<[1], [0], [0], [1], [0, 0, 1, 1], [], []>} : vector<256x8xbf16>, vector<8x16xbf16>, vector<256x16xf32> -> vector<256x16xf32>
    %191 = arith.addf %183, %190 : vector<256x16xf32>
    %192 = vector.extract_strided_slice %151 {offsets = [1, 2, 0], sizes = [16, 16, 8], strides = [1, 1, 1]} : vector<18x18x8xf32> to vector<16x16x8xf32>
    %193 = vector.shape_cast %192 : vector<16x16x8xf32> to vector<256x8xf32>
    %194 = arith.truncf %193 : vector<256x8xf32> to vector<256x8xbf16>
    %195 = vector.extract_strided_slice %0 {offsets = [2, 1, 2, 0, 0], sizes = [1, 1, 1, 8, 16], strides = [1, 1, 1, 1, 1]} : vector<3x3x3x8x16xf32> to vector<1x1x1x8x16xf32>
    %196 = vector.shape_cast %195 : vector<1x1x1x8x16xf32> to vector<8x16xf32>
    %197 = arith.truncf %196 : vector<8x16xf32> to vector<8x16xbf16>
    %cst_42 = arith.constant dense<0.000000e+00> : vector<256x16xf32>
    %198 = tpu.matmul %194, %197, %cst_42 {dimension_numbers = #tpu.dot_dimension_numbers<[1], [0], [0], [1], [0, 0, 1, 1], [], []>} : vector<256x8xbf16>, vector<8x16xbf16>, vector<256x16xf32> -> vector<256x16xf32>
    %199 = arith.addf %191, %198 : vector<256x16xf32>
    %200 = vector.extract_strided_slice %151 {offsets = [2, 0, 0], sizes = [16, 16, 8], strides = [1, 1, 1]} : vector<18x18x8xf32> to vector<16x16x8xf32>
    %201 = vector.shape_cast %200 : vector<16x16x8xf32> to vector<256x8xf32>
    %202 = arith.truncf %201 : vector<256x8xf32> to vector<256x8xbf16>
    %203 = vector.extract_strided_slice %0 {offsets = [2, 2, 0, 0, 0], sizes = [1, 1, 1, 8, 16], strides = [1, 1, 1, 1, 1]} : vector<3x3x3x8x16xf32> to vector<1x1x1x8x16xf32>
    %204 = vector.shape_cast %203 : vector<1x1x1x8x16xf32> to vector<8x16xf32>
    %205 = arith.truncf %204 : vector<8x16xf32> to vector<8x16xbf16>
    %cst_43 = arith.constant dense<0.000000e+00> : vector<256x16xf32>
    %206 = tpu.matmul %202, %205, %cst_43 {dimension_numbers = #tpu.dot_dimension_numbers<[1], [0], [0], [1], [0, 0, 1, 1], [], []>} : vector<256x8xbf16>, vector<8x16xbf16>, vector<256x16xf32> -> vector<256x16xf32>
    %207 = arith.addf %199, %206 : vector<256x16xf32>
    %208 = vector.extract_strided_slice %151 {offsets = [2, 1, 0], sizes = [16, 16, 8], strides = [1, 1, 1]} : vector<18x18x8xf32> to vector<16x16x8xf32>
    %209 = vector.shape_cast %208 : vector<16x16x8xf32> to vector<256x8xf32>
    %210 = arith.truncf %209 : vector<256x8xf32> to vector<256x8xbf16>
    %211 = vector.extract_strided_slice %0 {offsets = [2, 2, 1, 0, 0], sizes = [1, 1, 1, 8, 16], strides = [1, 1, 1, 1, 1]} : vector<3x3x3x8x16xf32> to vector<1x1x1x8x16xf32>
    %212 = vector.shape_cast %211 : vector<1x1x1x8x16xf32> to vector<8x16xf32>
    %213 = arith.truncf %212 : vector<8x16xf32> to vector<8x16xbf16>
    %cst_44 = arith.constant dense<0.000000e+00> : vector<256x16xf32>
    %214 = tpu.matmul %210, %213, %cst_44 {dimension_numbers = #tpu.dot_dimension_numbers<[1], [0], [0], [1], [0, 0, 1, 1], [], []>} : vector<256x8xbf16>, vector<8x16xbf16>, vector<256x16xf32> -> vector<256x16xf32>
    %215 = arith.addf %207, %214 : vector<256x16xf32>
    %216 = vector.extract_strided_slice %151 {offsets = [2, 2, 0], sizes = [16, 16, 8], strides = [1, 1, 1]} : vector<18x18x8xf32> to vector<16x16x8xf32>
    %217 = vector.shape_cast %216 : vector<16x16x8xf32> to vector<256x8xf32>
    %218 = arith.truncf %217 : vector<256x8xf32> to vector<256x8xbf16>
    %219 = vector.extract_strided_slice %0 {offsets = [2, 2, 2, 0, 0], sizes = [1, 1, 1, 8, 16], strides = [1, 1, 1, 1, 1]} : vector<3x3x3x8x16xf32> to vector<1x1x1x8x16xf32>
    %220 = vector.shape_cast %219 : vector<1x1x1x8x16xf32> to vector<8x16xf32>
    %221 = arith.truncf %220 : vector<8x16xf32> to vector<8x16xbf16>
    %cst_45 = arith.constant dense<0.000000e+00> : vector<256x16xf32>
    %222 = tpu.matmul %218, %221, %cst_45 {dimension_numbers = #tpu.dot_dimension_numbers<[1], [0], [0], [1], [0, 0, 1, 1], [], []>} : vector<256x8xbf16>, vector<8x16xbf16>, vector<256x16xf32> -> vector<256x16xf32>
    %223 = arith.addf %215, %222 : vector<256x16xf32>
    %c0_46 = arith.constant 0 : index
    %c0_47 = arith.constant 0 : index
    %224 = vector.load %arg6[%c0_46, %c0_47] : memref<1x16xf32, #tpu.memory_space<vmem>>, vector<1x16xf32>
    %225 = vector.broadcast %224 : vector<1x16xf32> to vector<256x16xf32>
    %226 = arith.addf %223, %225 : vector<256x16xf32>
    %cst_48 = arith.constant 0.000000e+00 : f32
    %227 = vector.broadcast %cst_48 : f32 to vector<256x16xf32>
    %228 = arith.maximumf %226, %227 : vector<256x16xf32>
    %229 = vector.shape_cast %228 : vector<256x16xf32> to vector<16x16x16xf32>
    %c0_49 = arith.constant 0 : index
    %c0_50 = arith.constant 0 : index
    %c0_51 = arith.constant 0 : index
    %c0_52 = arith.constant 0 : index
    %c0_53 = arith.constant 0 : index
    %230 = vector.load %arg7[%c0_49, %c0_50, %c0_51, %c0_52, %c0_53] : memref<1x1x16x16x16xf32, #tpu.memory_space<vmem>>, vector<1x1x16x16x16xf32>
    %231 = vector.shape_cast %230 : vector<1x1x16x16x16xf32> to vector<16x16x16xf32>
    %232 = vector.shape_cast %229 : vector<16x16x16xf32> to vector<1x1x16x16x16xf32>
    tpu.vector_store %arg7[%c0_49, %c0_50, %c0_51, %c0_52, %c0_53], %232 {strides = array<i32>} : memref<1x1x16x16x16xf32, #tpu.memory_space<vmem>>, vector<1x1x16x16x16xf32>,
    return
  }
  func.func @transform_0(%arg0: i32, %arg1: i32) -> (i32, i32, i32, i32, i32) {
    %c0_i32 = arith.constant 0 : i32
    %0 = arith.addi %arg1, %c0_i32 : i32
    %c0_i32_0 = arith.constant 0 : i32
    %c0_i32_1 = arith.constant 0 : i32
    %c0_i32_2 = arith.constant 0 : i32
    %c0_i32_3 = arith.constant 0 : i32
    return %arg0, %0, %c0_i32_0, %c0_i32_1, %c0_i32_2 : i32, i32, i32, i32, i32
  }
  func.func @transform_1(%arg0: i32, %arg1: i32) -> (i32, i32, i32, i32, i32) {
    %c1_i32 = arith.constant 1 : i32
    %0 = arith.addi %arg1, %c1_i32 : i32
    %c0_i32 = arith.constant 0 : i32
    %c0_i32_0 = arith.constant 0 : i32
    %c0_i32_1 = arith.constant 0 : i32
    %c0_i32_2 = arith.constant 0 : i32
    return %arg0, %0, %c0_i32, %c0_i32_0, %c0_i32_1 : i32, i32, i32, i32, i32
  }
  func.func @transform_2(%arg0: i32, %arg1: i32) -> (i32, i32, i32, i32, i32) {
    %c2_i32 = arith.constant 2 : i32
    %0 = arith.addi %arg1, %c2_i32 : i32
    %c0_i32 = arith.constant 0 : i32
    %c0_i32_0 = arith.constant 0 : i32
    %c0_i32_1 = arith.constant 0 : i32
    %c0_i32_2 = arith.constant 0 : i32
    return %arg0, %0, %c0_i32, %c0_i32_0, %c0_i32_1 : i32, i32, i32, i32, i32
  }
  func.func @transform_3(%arg0: i32, %arg1: i32) -> (i32, i32, i32, i32, i32) {
    %c0_i32 = arith.constant 0 : i32
    %c0_i32_0 = arith.constant 0 : i32
    %c0_i32_1 = arith.constant 0 : i32
    %c0_i32_2 = arith.constant 0 : i32
    %c0_i32_3 = arith.constant 0 : i32
    %c0_i32_4 = arith.constant 0 : i32
    return %c0_i32, %c0_i32_0, %c0_i32_1, %c0_i32_2, %c0_i32_3 : i32, i32, i32, i32, i32
  }
  func.func @transform_4(%arg0: i32, %arg1: i32) -> (i32, i32) {
    %c0_i32 = arith.constant 0 : i32
    %c0_i32_0 = arith.constant 0 : i32
    %c0_i32_1 = arith.constant 0 : i32
    return %c0_i32, %c0_i32_0 : i32, i32
  }
  func.func @transform_5(%arg0: i32, %arg1: i32) -> (i32, i32, i32, i32, i32) {
    %c0_i32 = arith.constant 0 : i32
    %c0_i32_0 = arith.constant 0 : i32
    %c0_i32_1 = arith.constant 0 : i32
    %c0_i32_2 = arith.constant 0 : i32
    return %arg0, %arg1, %c0_i32, %c0_i32_0, %c0_i32_1 : i32, i32, i32, i32, i32
  }
}

module attributes {stable_mosaic.version = 11 : i64} {
  func.func @_pointwise_kernel(%arg0: i32, %arg1: memref<512x8xf32, #tpu.memory_space<vmem>>, %arg2: memref<8x16xf32, #tpu.memory_space<vmem>>, %arg3: memref<1x16xf32, #tpu.memory_space<vmem>>, %arg4: memref<512x16xf32, #tpu.memory_space<vmem>>) attributes {dimension_semantics = [#tpu.dimension_semantics<parallel>], iteration_bounds = array<i64: 16>, scalar_prefetch = 0 : i64, scratch_operands = 0 : i64, tpu.core_type = #tpu.core_type<tc>, window_params = [{transform_indices = @transform_0, window_bounds = array<i64: 512, 8>}, {pipeline_mode = #tpu.pipeline_mode<synchronous>, transform_indices = @transform_1, window_bounds = array<i64: 8, 16>}, {pipeline_mode = #tpu.pipeline_mode<synchronous>, transform_indices = @transform_2, window_bounds = array<i64: 1, 16>}, {transform_indices = @transform_3, window_bounds = array<i64: 512, 16>}]} {
    %c0 = arith.constant 0 : index
    %c0_0 = arith.constant 0 : index
    %0 = vector.load %arg1[%c0, %c0_0] : memref<512x8xf32, #tpu.memory_space<vmem>>, vector<512x8xf32>
    %1 = arith.truncf %0 : vector<512x8xf32> to vector<512x8xbf16>
    %c0_1 = arith.constant 0 : index
    %c0_2 = arith.constant 0 : index
    %2 = vector.load %arg2[%c0_1, %c0_2] : memref<8x16xf32, #tpu.memory_space<vmem>>, vector<8x16xf32>
    %3 = arith.truncf %2 : vector<8x16xf32> to vector<8x16xbf16>
    %cst = arith.constant dense<0.000000e+00> : vector<512x16xf32>
    %4 = tpu.matmul %1, %3, %cst {dimension_numbers = #tpu.dot_dimension_numbers<[1], [0], [0], [1], [0, 0, 1, 1], [], []>} : vector<512x8xbf16>, vector<8x16xbf16>, vector<512x16xf32> -> vector<512x16xf32>
    %c0_3 = arith.constant 0 : index
    %c0_4 = arith.constant 0 : index
    %5 = vector.load %arg3[%c0_3, %c0_4] : memref<1x16xf32, #tpu.memory_space<vmem>>, vector<1x16xf32>
    %6 = vector.broadcast %5 : vector<1x16xf32> to vector<512x16xf32>
    %7 = arith.addf %4, %6 : vector<512x16xf32>
    %c0_5 = arith.constant 0 : index
    %c0_6 = arith.constant 0 : index
    %8 = vector.load %arg4[%c0_5, %c0_6] : memref<512x16xf32, #tpu.memory_space<vmem>>, vector<512x16xf32>
    tpu.vector_store %arg4[%c0_5, %c0_6], %7 {strides = array<i32>} : memref<512x16xf32, #tpu.memory_space<vmem>>, vector<512x16xf32>,
    return
  }
  func.func @transform_0(%arg0: i32) -> (i32, i32) {
    %c0_i32 = arith.constant 0 : i32
    %c0_i32_0 = arith.constant 0 : i32
    return %arg0, %c0_i32 : i32, i32
  }
  func.func @transform_1(%arg0: i32) -> (i32, i32) {
    %c0_i32 = arith.constant 0 : i32
    %c0_i32_0 = arith.constant 0 : i32
    %c0_i32_1 = arith.constant 0 : i32
    return %c0_i32, %c0_i32_0 : i32, i32
  }
  func.func @transform_2(%arg0: i32) -> (i32, i32) {
    %c0_i32 = arith.constant 0 : i32
    %c0_i32_0 = arith.constant 0 : i32
    %c0_i32_1 = arith.constant 0 : i32
    return %c0_i32, %c0_i32_0 : i32, i32
  }
  func.func @transform_3(%arg0: i32) -> (i32, i32) {
    %c0_i32 = arith.constant 0 : i32
    %c0_i32_0 = arith.constant 0 : i32
    return %arg0, %c0_i32 : i32, i32
  }
}

module attributes {stable_mosaic.version = 11 : i64} {
  func.func @_conv_same_kernel(%arg0: i32, %arg1: i32, %arg2: memref<1x1x18x18x16xf32, #tpu.memory_space<vmem>>, %arg3: memref<1x1x18x18x16xf32, #tpu.memory_space<vmem>>, %arg4: memref<1x1x18x18x16xf32, #tpu.memory_space<vmem>>, %arg5: memref<3x3x3x16x16xf32, #tpu.memory_space<vmem>>, %arg6: memref<1x16xf32, #tpu.memory_space<vmem>>, %arg7: memref<1x1x16x16x16xf32, #tpu.memory_space<vmem>>, %arg8: memref<1x1x16x16x16xf32, #tpu.memory_space<vmem>>) attributes {dimension_semantics = [#tpu.dimension_semantics<parallel>, #tpu.dimension_semantics<parallel>], iteration_bounds = array<i64: 2, 16>, scalar_prefetch = 0 : i64, scratch_operands = 0 : i64, tpu.core_type = #tpu.core_type<tc>, window_params = [{transform_indices = @transform_0, window_bounds = array<i64: 1, 1, 18, 18, 16>}, {transform_indices = @transform_1, window_bounds = array<i64: 1, 1, 18, 18, 16>}, {transform_indices = @transform_2, window_bounds = array<i64: 1, 1, 18, 18, 16>}, {pipeline_mode = #tpu.pipeline_mode<synchronous>, transform_indices = @transform_3, window_bounds = array<i64: 3, 3, 3, 16, 16>}, {pipeline_mode = #tpu.pipeline_mode<synchronous>, transform_indices = @transform_4, window_bounds = array<i64: 1, 16>}, {transform_indices = @transform_5, window_bounds = array<i64: 1, 1, 16, 16, 16>}, {transform_indices = @transform_6, window_bounds = array<i64: 1, 1, 16, 16, 16>}]} {
    %c0 = arith.constant 0 : index
    %c0_0 = arith.constant 0 : index
    %c0_1 = arith.constant 0 : index
    %c0_2 = arith.constant 0 : index
    %c0_3 = arith.constant 0 : index
    %0 = vector.load %arg5[%c0, %c0_0, %c0_1, %c0_2, %c0_3] : memref<3x3x3x16x16xf32, #tpu.memory_space<vmem>>, vector<3x3x3x16x16xf32>
    %cst = arith.constant 0.000000e+00 : f32
    %1 = vector.broadcast %cst : f32 to vector<256x16xf32>
    %c0_4 = arith.constant 0 : index
    %c0_5 = arith.constant 0 : index
    %c0_6 = arith.constant 0 : index
    %c0_7 = arith.constant 0 : index
    %c0_8 = arith.constant 0 : index
    %2 = vector.load %arg2[%c0_4, %c0_5, %c0_6, %c0_7, %c0_8] : memref<1x1x18x18x16xf32, #tpu.memory_space<vmem>>, vector<1x1x18x18x16xf32>
    %3 = vector.shape_cast %2 : vector<1x1x18x18x16xf32> to vector<18x18x16xf32>
    %4 = vector.extract_strided_slice %3 {offsets = [0, 0, 0], sizes = [16, 16, 16], strides = [1, 1, 1]} : vector<18x18x16xf32> to vector<16x16x16xf32>
    %5 = vector.shape_cast %4 : vector<16x16x16xf32> to vector<256x16xf32>
    %6 = arith.truncf %5 : vector<256x16xf32> to vector<256x16xbf16>
    %7 = vector.extract_strided_slice %0 {offsets = [0, 0, 0, 0, 0], sizes = [1, 1, 1, 16, 16], strides = [1, 1, 1, 1, 1]} : vector<3x3x3x16x16xf32> to vector<1x1x1x16x16xf32>
    %8 = vector.shape_cast %7 : vector<1x1x1x16x16xf32> to vector<16x16xf32>
    %9 = arith.truncf %8 : vector<16x16xf32> to vector<16x16xbf16>
    %cst_9 = arith.constant dense<0.000000e+00> : vector<256x16xf32>
    %10 = tpu.matmul %6, %9, %cst_9 {dimension_numbers = #tpu.dot_dimension_numbers<[1], [0], [0], [1], [0, 0, 1, 1], [], []>} : vector<256x16xbf16>, vector<16x16xbf16>, vector<256x16xf32> -> vector<256x16xf32>
    %11 = arith.addf %1, %10 : vector<256x16xf32>
    %12 = vector.extract_strided_slice %3 {offsets = [0, 1, 0], sizes = [16, 16, 16], strides = [1, 1, 1]} : vector<18x18x16xf32> to vector<16x16x16xf32>
    %13 = vector.shape_cast %12 : vector<16x16x16xf32> to vector<256x16xf32>
    %14 = arith.truncf %13 : vector<256x16xf32> to vector<256x16xbf16>
    %15 = vector.extract_strided_slice %0 {offsets = [0, 0, 1, 0, 0], sizes = [1, 1, 1, 16, 16], strides = [1, 1, 1, 1, 1]} : vector<3x3x3x16x16xf32> to vector<1x1x1x16x16xf32>
    %16 = vector.shape_cast %15 : vector<1x1x1x16x16xf32> to vector<16x16xf32>
    %17 = arith.truncf %16 : vector<16x16xf32> to vector<16x16xbf16>
    %cst_10 = arith.constant dense<0.000000e+00> : vector<256x16xf32>
    %18 = tpu.matmul %14, %17, %cst_10 {dimension_numbers = #tpu.dot_dimension_numbers<[1], [0], [0], [1], [0, 0, 1, 1], [], []>} : vector<256x16xbf16>, vector<16x16xbf16>, vector<256x16xf32> -> vector<256x16xf32>
    %19 = arith.addf %11, %18 : vector<256x16xf32>
    %20 = vector.extract_strided_slice %3 {offsets = [0, 2, 0], sizes = [16, 16, 16], strides = [1, 1, 1]} : vector<18x18x16xf32> to vector<16x16x16xf32>
    %21 = vector.shape_cast %20 : vector<16x16x16xf32> to vector<256x16xf32>
    %22 = arith.truncf %21 : vector<256x16xf32> to vector<256x16xbf16>
    %23 = vector.extract_strided_slice %0 {offsets = [0, 0, 2, 0, 0], sizes = [1, 1, 1, 16, 16], strides = [1, 1, 1, 1, 1]} : vector<3x3x3x16x16xf32> to vector<1x1x1x16x16xf32>
    %24 = vector.shape_cast %23 : vector<1x1x1x16x16xf32> to vector<16x16xf32>
    %25 = arith.truncf %24 : vector<16x16xf32> to vector<16x16xbf16>
    %cst_11 = arith.constant dense<0.000000e+00> : vector<256x16xf32>
    %26 = tpu.matmul %22, %25, %cst_11 {dimension_numbers = #tpu.dot_dimension_numbers<[1], [0], [0], [1], [0, 0, 1, 1], [], []>} : vector<256x16xbf16>, vector<16x16xbf16>, vector<256x16xf32> -> vector<256x16xf32>
    %27 = arith.addf %19, %26 : vector<256x16xf32>
    %28 = vector.extract_strided_slice %3 {offsets = [1, 0, 0], sizes = [16, 16, 16], strides = [1, 1, 1]} : vector<18x18x16xf32> to vector<16x16x16xf32>
    %29 = vector.shape_cast %28 : vector<16x16x16xf32> to vector<256x16xf32>
    %30 = arith.truncf %29 : vector<256x16xf32> to vector<256x16xbf16>
    %31 = vector.extract_strided_slice %0 {offsets = [0, 1, 0, 0, 0], sizes = [1, 1, 1, 16, 16], strides = [1, 1, 1, 1, 1]} : vector<3x3x3x16x16xf32> to vector<1x1x1x16x16xf32>
    %32 = vector.shape_cast %31 : vector<1x1x1x16x16xf32> to vector<16x16xf32>
    %33 = arith.truncf %32 : vector<16x16xf32> to vector<16x16xbf16>
    %cst_12 = arith.constant dense<0.000000e+00> : vector<256x16xf32>
    %34 = tpu.matmul %30, %33, %cst_12 {dimension_numbers = #tpu.dot_dimension_numbers<[1], [0], [0], [1], [0, 0, 1, 1], [], []>} : vector<256x16xbf16>, vector<16x16xbf16>, vector<256x16xf32> -> vector<256x16xf32>
    %35 = arith.addf %27, %34 : vector<256x16xf32>
    %36 = vector.extract_strided_slice %3 {offsets = [1, 1, 0], sizes = [16, 16, 16], strides = [1, 1, 1]} : vector<18x18x16xf32> to vector<16x16x16xf32>
    %37 = vector.shape_cast %36 : vector<16x16x16xf32> to vector<256x16xf32>
    %38 = arith.truncf %37 : vector<256x16xf32> to vector<256x16xbf16>
    %39 = vector.extract_strided_slice %0 {offsets = [0, 1, 1, 0, 0], sizes = [1, 1, 1, 16, 16], strides = [1, 1, 1, 1, 1]} : vector<3x3x3x16x16xf32> to vector<1x1x1x16x16xf32>
    %40 = vector.shape_cast %39 : vector<1x1x1x16x16xf32> to vector<16x16xf32>
    %41 = arith.truncf %40 : vector<16x16xf32> to vector<16x16xbf16>
    %cst_13 = arith.constant dense<0.000000e+00> : vector<256x16xf32>
    %42 = tpu.matmul %38, %41, %cst_13 {dimension_numbers = #tpu.dot_dimension_numbers<[1], [0], [0], [1], [0, 0, 1, 1], [], []>} : vector<256x16xbf16>, vector<16x16xbf16>, vector<256x16xf32> -> vector<256x16xf32>
    %43 = arith.addf %35, %42 : vector<256x16xf32>
    %44 = vector.extract_strided_slice %3 {offsets = [1, 2, 0], sizes = [16, 16, 16], strides = [1, 1, 1]} : vector<18x18x16xf32> to vector<16x16x16xf32>
    %45 = vector.shape_cast %44 : vector<16x16x16xf32> to vector<256x16xf32>
    %46 = arith.truncf %45 : vector<256x16xf32> to vector<256x16xbf16>
    %47 = vector.extract_strided_slice %0 {offsets = [0, 1, 2, 0, 0], sizes = [1, 1, 1, 16, 16], strides = [1, 1, 1, 1, 1]} : vector<3x3x3x16x16xf32> to vector<1x1x1x16x16xf32>
    %48 = vector.shape_cast %47 : vector<1x1x1x16x16xf32> to vector<16x16xf32>
    %49 = arith.truncf %48 : vector<16x16xf32> to vector<16x16xbf16>
    %cst_14 = arith.constant dense<0.000000e+00> : vector<256x16xf32>
    %50 = tpu.matmul %46, %49, %cst_14 {dimension_numbers = #tpu.dot_dimension_numbers<[1], [0], [0], [1], [0, 0, 1, 1], [], []>} : vector<256x16xbf16>, vector<16x16xbf16>, vector<256x16xf32> -> vector<256x16xf32>
    %51 = arith.addf %43, %50 : vector<256x16xf32>
    %52 = vector.extract_strided_slice %3 {offsets = [2, 0, 0], sizes = [16, 16, 16], strides = [1, 1, 1]} : vector<18x18x16xf32> to vector<16x16x16xf32>
    %53 = vector.shape_cast %52 : vector<16x16x16xf32> to vector<256x16xf32>
    %54 = arith.truncf %53 : vector<256x16xf32> to vector<256x16xbf16>
    %55 = vector.extract_strided_slice %0 {offsets = [0, 2, 0, 0, 0], sizes = [1, 1, 1, 16, 16], strides = [1, 1, 1, 1, 1]} : vector<3x3x3x16x16xf32> to vector<1x1x1x16x16xf32>
    %56 = vector.shape_cast %55 : vector<1x1x1x16x16xf32> to vector<16x16xf32>
    %57 = arith.truncf %56 : vector<16x16xf32> to vector<16x16xbf16>
    %cst_15 = arith.constant dense<0.000000e+00> : vector<256x16xf32>
    %58 = tpu.matmul %54, %57, %cst_15 {dimension_numbers = #tpu.dot_dimension_numbers<[1], [0], [0], [1], [0, 0, 1, 1], [], []>} : vector<256x16xbf16>, vector<16x16xbf16>, vector<256x16xf32> -> vector<256x16xf32>
    %59 = arith.addf %51, %58 : vector<256x16xf32>
    %60 = vector.extract_strided_slice %3 {offsets = [2, 1, 0], sizes = [16, 16, 16], strides = [1, 1, 1]} : vector<18x18x16xf32> to vector<16x16x16xf32>
    %61 = vector.shape_cast %60 : vector<16x16x16xf32> to vector<256x16xf32>
    %62 = arith.truncf %61 : vector<256x16xf32> to vector<256x16xbf16>
    %63 = vector.extract_strided_slice %0 {offsets = [0, 2, 1, 0, 0], sizes = [1, 1, 1, 16, 16], strides = [1, 1, 1, 1, 1]} : vector<3x3x3x16x16xf32> to vector<1x1x1x16x16xf32>
    %64 = vector.shape_cast %63 : vector<1x1x1x16x16xf32> to vector<16x16xf32>
    %65 = arith.truncf %64 : vector<16x16xf32> to vector<16x16xbf16>
    %cst_16 = arith.constant dense<0.000000e+00> : vector<256x16xf32>
    %66 = tpu.matmul %62, %65, %cst_16 {dimension_numbers = #tpu.dot_dimension_numbers<[1], [0], [0], [1], [0, 0, 1, 1], [], []>} : vector<256x16xbf16>, vector<16x16xbf16>, vector<256x16xf32> -> vector<256x16xf32>
    %67 = arith.addf %59, %66 : vector<256x16xf32>
    %68 = vector.extract_strided_slice %3 {offsets = [2, 2, 0], sizes = [16, 16, 16], strides = [1, 1, 1]} : vector<18x18x16xf32> to vector<16x16x16xf32>
    %69 = vector.shape_cast %68 : vector<16x16x16xf32> to vector<256x16xf32>
    %70 = arith.truncf %69 : vector<256x16xf32> to vector<256x16xbf16>
    %71 = vector.extract_strided_slice %0 {offsets = [0, 2, 2, 0, 0], sizes = [1, 1, 1, 16, 16], strides = [1, 1, 1, 1, 1]} : vector<3x3x3x16x16xf32> to vector<1x1x1x16x16xf32>
    %72 = vector.shape_cast %71 : vector<1x1x1x16x16xf32> to vector<16x16xf32>
    %73 = arith.truncf %72 : vector<16x16xf32> to vector<16x16xbf16>
    %cst_17 = arith.constant dense<0.000000e+00> : vector<256x16xf32>
    %74 = tpu.matmul %70, %73, %cst_17 {dimension_numbers = #tpu.dot_dimension_numbers<[1], [0], [0], [1], [0, 0, 1, 1], [], []>} : vector<256x16xbf16>, vector<16x16xbf16>, vector<256x16xf32> -> vector<256x16xf32>
    %75 = arith.addf %67, %74 : vector<256x16xf32>
    %c0_18 = arith.constant 0 : index
    %c0_19 = arith.constant 0 : index
    %c0_20 = arith.constant 0 : index
    %c0_21 = arith.constant 0 : index
    %c0_22 = arith.constant 0 : index
    %76 = vector.load %arg3[%c0_18, %c0_19, %c0_20, %c0_21, %c0_22] : memref<1x1x18x18x16xf32, #tpu.memory_space<vmem>>, vector<1x1x18x18x16xf32>
    %77 = vector.shape_cast %76 : vector<1x1x18x18x16xf32> to vector<18x18x16xf32>
    %78 = vector.extract_strided_slice %77 {offsets = [0, 0, 0], sizes = [16, 16, 16], strides = [1, 1, 1]} : vector<18x18x16xf32> to vector<16x16x16xf32>
    %79 = vector.shape_cast %78 : vector<16x16x16xf32> to vector<256x16xf32>
    %80 = arith.truncf %79 : vector<256x16xf32> to vector<256x16xbf16>
    %81 = vector.extract_strided_slice %0 {offsets = [1, 0, 0, 0, 0], sizes = [1, 1, 1, 16, 16], strides = [1, 1, 1, 1, 1]} : vector<3x3x3x16x16xf32> to vector<1x1x1x16x16xf32>
    %82 = vector.shape_cast %81 : vector<1x1x1x16x16xf32> to vector<16x16xf32>
    %83 = arith.truncf %82 : vector<16x16xf32> to vector<16x16xbf16>
    %cst_23 = arith.constant dense<0.000000e+00> : vector<256x16xf32>
    %84 = tpu.matmul %80, %83, %cst_23 {dimension_numbers = #tpu.dot_dimension_numbers<[1], [0], [0], [1], [0, 0, 1, 1], [], []>} : vector<256x16xbf16>, vector<16x16xbf16>, vector<256x16xf32> -> vector<256x16xf32>
    %85 = arith.addf %75, %84 : vector<256x16xf32>
    %86 = vector.extract_strided_slice %77 {offsets = [0, 1, 0], sizes = [16, 16, 16], strides = [1, 1, 1]} : vector<18x18x16xf32> to vector<16x16x16xf32>
    %87 = vector.shape_cast %86 : vector<16x16x16xf32> to vector<256x16xf32>
    %88 = arith.truncf %87 : vector<256x16xf32> to vector<256x16xbf16>
    %89 = vector.extract_strided_slice %0 {offsets = [1, 0, 1, 0, 0], sizes = [1, 1, 1, 16, 16], strides = [1, 1, 1, 1, 1]} : vector<3x3x3x16x16xf32> to vector<1x1x1x16x16xf32>
    %90 = vector.shape_cast %89 : vector<1x1x1x16x16xf32> to vector<16x16xf32>
    %91 = arith.truncf %90 : vector<16x16xf32> to vector<16x16xbf16>
    %cst_24 = arith.constant dense<0.000000e+00> : vector<256x16xf32>
    %92 = tpu.matmul %88, %91, %cst_24 {dimension_numbers = #tpu.dot_dimension_numbers<[1], [0], [0], [1], [0, 0, 1, 1], [], []>} : vector<256x16xbf16>, vector<16x16xbf16>, vector<256x16xf32> -> vector<256x16xf32>
    %93 = arith.addf %85, %92 : vector<256x16xf32>
    %94 = vector.extract_strided_slice %77 {offsets = [0, 2, 0], sizes = [16, 16, 16], strides = [1, 1, 1]} : vector<18x18x16xf32> to vector<16x16x16xf32>
    %95 = vector.shape_cast %94 : vector<16x16x16xf32> to vector<256x16xf32>
    %96 = arith.truncf %95 : vector<256x16xf32> to vector<256x16xbf16>
    %97 = vector.extract_strided_slice %0 {offsets = [1, 0, 2, 0, 0], sizes = [1, 1, 1, 16, 16], strides = [1, 1, 1, 1, 1]} : vector<3x3x3x16x16xf32> to vector<1x1x1x16x16xf32>
    %98 = vector.shape_cast %97 : vector<1x1x1x16x16xf32> to vector<16x16xf32>
    %99 = arith.truncf %98 : vector<16x16xf32> to vector<16x16xbf16>
    %cst_25 = arith.constant dense<0.000000e+00> : vector<256x16xf32>
    %100 = tpu.matmul %96, %99, %cst_25 {dimension_numbers = #tpu.dot_dimension_numbers<[1], [0], [0], [1], [0, 0, 1, 1], [], []>} : vector<256x16xbf16>, vector<16x16xbf16>, vector<256x16xf32> -> vector<256x16xf32>
    %101 = arith.addf %93, %100 : vector<256x16xf32>
    %102 = vector.extract_strided_slice %77 {offsets = [1, 0, 0], sizes = [16, 16, 16], strides = [1, 1, 1]} : vector<18x18x16xf32> to vector<16x16x16xf32>
    %103 = vector.shape_cast %102 : vector<16x16x16xf32> to vector<256x16xf32>
    %104 = arith.truncf %103 : vector<256x16xf32> to vector<256x16xbf16>
    %105 = vector.extract_strided_slice %0 {offsets = [1, 1, 0, 0, 0], sizes = [1, 1, 1, 16, 16], strides = [1, 1, 1, 1, 1]} : vector<3x3x3x16x16xf32> to vector<1x1x1x16x16xf32>
    %106 = vector.shape_cast %105 : vector<1x1x1x16x16xf32> to vector<16x16xf32>
    %107 = arith.truncf %106 : vector<16x16xf32> to vector<16x16xbf16>
    %cst_26 = arith.constant dense<0.000000e+00> : vector<256x16xf32>
    %108 = tpu.matmul %104, %107, %cst_26 {dimension_numbers = #tpu.dot_dimension_numbers<[1], [0], [0], [1], [0, 0, 1, 1], [], []>} : vector<256x16xbf16>, vector<16x16xbf16>, vector<256x16xf32> -> vector<256x16xf32>
    %109 = arith.addf %101, %108 : vector<256x16xf32>
    %110 = vector.extract_strided_slice %77 {offsets = [1, 1, 0], sizes = [16, 16, 16], strides = [1, 1, 1]} : vector<18x18x16xf32> to vector<16x16x16xf32>
    %111 = vector.shape_cast %110 : vector<16x16x16xf32> to vector<256x16xf32>
    %112 = arith.truncf %111 : vector<256x16xf32> to vector<256x16xbf16>
    %113 = vector.extract_strided_slice %0 {offsets = [1, 1, 1, 0, 0], sizes = [1, 1, 1, 16, 16], strides = [1, 1, 1, 1, 1]} : vector<3x3x3x16x16xf32> to vector<1x1x1x16x16xf32>
    %114 = vector.shape_cast %113 : vector<1x1x1x16x16xf32> to vector<16x16xf32>
    %115 = arith.truncf %114 : vector<16x16xf32> to vector<16x16xbf16>
    %cst_27 = arith.constant dense<0.000000e+00> : vector<256x16xf32>
    %116 = tpu.matmul %112, %115, %cst_27 {dimension_numbers = #tpu.dot_dimension_numbers<[1], [0], [0], [1], [0, 0, 1, 1], [], []>} : vector<256x16xbf16>, vector<16x16xbf16>, vector<256x16xf32> -> vector<256x16xf32>
    %117 = arith.addf %109, %116 : vector<256x16xf32>
    %118 = vector.extract_strided_slice %77 {offsets = [1, 2, 0], sizes = [16, 16, 16], strides = [1, 1, 1]} : vector<18x18x16xf32> to vector<16x16x16xf32>
    %119 = vector.shape_cast %118 : vector<16x16x16xf32> to vector<256x16xf32>
    %120 = arith.truncf %119 : vector<256x16xf32> to vector<256x16xbf16>
    %121 = vector.extract_strided_slice %0 {offsets = [1, 1, 2, 0, 0], sizes = [1, 1, 1, 16, 16], strides = [1, 1, 1, 1, 1]} : vector<3x3x3x16x16xf32> to vector<1x1x1x16x16xf32>
    %122 = vector.shape_cast %121 : vector<1x1x1x16x16xf32> to vector<16x16xf32>
    %123 = arith.truncf %122 : vector<16x16xf32> to vector<16x16xbf16>
    %cst_28 = arith.constant dense<0.000000e+00> : vector<256x16xf32>
    %124 = tpu.matmul %120, %123, %cst_28 {dimension_numbers = #tpu.dot_dimension_numbers<[1], [0], [0], [1], [0, 0, 1, 1], [], []>} : vector<256x16xbf16>, vector<16x16xbf16>, vector<256x16xf32> -> vector<256x16xf32>
    %125 = arith.addf %117, %124 : vector<256x16xf32>
    %126 = vector.extract_strided_slice %77 {offsets = [2, 0, 0], sizes = [16, 16, 16], strides = [1, 1, 1]} : vector<18x18x16xf32> to vector<16x16x16xf32>
    %127 = vector.shape_cast %126 : vector<16x16x16xf32> to vector<256x16xf32>
    %128 = arith.truncf %127 : vector<256x16xf32> to vector<256x16xbf16>
    %129 = vector.extract_strided_slice %0 {offsets = [1, 2, 0, 0, 0], sizes = [1, 1, 1, 16, 16], strides = [1, 1, 1, 1, 1]} : vector<3x3x3x16x16xf32> to vector<1x1x1x16x16xf32>
    %130 = vector.shape_cast %129 : vector<1x1x1x16x16xf32> to vector<16x16xf32>
    %131 = arith.truncf %130 : vector<16x16xf32> to vector<16x16xbf16>
    %cst_29 = arith.constant dense<0.000000e+00> : vector<256x16xf32>
    %132 = tpu.matmul %128, %131, %cst_29 {dimension_numbers = #tpu.dot_dimension_numbers<[1], [0], [0], [1], [0, 0, 1, 1], [], []>} : vector<256x16xbf16>, vector<16x16xbf16>, vector<256x16xf32> -> vector<256x16xf32>
    %133 = arith.addf %125, %132 : vector<256x16xf32>
    %134 = vector.extract_strided_slice %77 {offsets = [2, 1, 0], sizes = [16, 16, 16], strides = [1, 1, 1]} : vector<18x18x16xf32> to vector<16x16x16xf32>
    %135 = vector.shape_cast %134 : vector<16x16x16xf32> to vector<256x16xf32>
    %136 = arith.truncf %135 : vector<256x16xf32> to vector<256x16xbf16>
    %137 = vector.extract_strided_slice %0 {offsets = [1, 2, 1, 0, 0], sizes = [1, 1, 1, 16, 16], strides = [1, 1, 1, 1, 1]} : vector<3x3x3x16x16xf32> to vector<1x1x1x16x16xf32>
    %138 = vector.shape_cast %137 : vector<1x1x1x16x16xf32> to vector<16x16xf32>
    %139 = arith.truncf %138 : vector<16x16xf32> to vector<16x16xbf16>
    %cst_30 = arith.constant dense<0.000000e+00> : vector<256x16xf32>
    %140 = tpu.matmul %136, %139, %cst_30 {dimension_numbers = #tpu.dot_dimension_numbers<[1], [0], [0], [1], [0, 0, 1, 1], [], []>} : vector<256x16xbf16>, vector<16x16xbf16>, vector<256x16xf32> -> vector<256x16xf32>
    %141 = arith.addf %133, %140 : vector<256x16xf32>
    %142 = vector.extract_strided_slice %77 {offsets = [2, 2, 0], sizes = [16, 16, 16], strides = [1, 1, 1]} : vector<18x18x16xf32> to vector<16x16x16xf32>
    %143 = vector.shape_cast %142 : vector<16x16x16xf32> to vector<256x16xf32>
    %144 = arith.truncf %143 : vector<256x16xf32> to vector<256x16xbf16>
    %145 = vector.extract_strided_slice %0 {offsets = [1, 2, 2, 0, 0], sizes = [1, 1, 1, 16, 16], strides = [1, 1, 1, 1, 1]} : vector<3x3x3x16x16xf32> to vector<1x1x1x16x16xf32>
    %146 = vector.shape_cast %145 : vector<1x1x1x16x16xf32> to vector<16x16xf32>
    %147 = arith.truncf %146 : vector<16x16xf32> to vector<16x16xbf16>
    %cst_31 = arith.constant dense<0.000000e+00> : vector<256x16xf32>
    %148 = tpu.matmul %144, %147, %cst_31 {dimension_numbers = #tpu.dot_dimension_numbers<[1], [0], [0], [1], [0, 0, 1, 1], [], []>} : vector<256x16xbf16>, vector<16x16xbf16>, vector<256x16xf32> -> vector<256x16xf32>
    %149 = arith.addf %141, %148 : vector<256x16xf32>
    %c0_32 = arith.constant 0 : index
    %c0_33 = arith.constant 0 : index
    %c0_34 = arith.constant 0 : index
    %c0_35 = arith.constant 0 : index
    %c0_36 = arith.constant 0 : index
    %150 = vector.load %arg4[%c0_32, %c0_33, %c0_34, %c0_35, %c0_36] : memref<1x1x18x18x16xf32, #tpu.memory_space<vmem>>, vector<1x1x18x18x16xf32>
    %151 = vector.shape_cast %150 : vector<1x1x18x18x16xf32> to vector<18x18x16xf32>
    %152 = vector.extract_strided_slice %151 {offsets = [0, 0, 0], sizes = [16, 16, 16], strides = [1, 1, 1]} : vector<18x18x16xf32> to vector<16x16x16xf32>
    %153 = vector.shape_cast %152 : vector<16x16x16xf32> to vector<256x16xf32>
    %154 = arith.truncf %153 : vector<256x16xf32> to vector<256x16xbf16>
    %155 = vector.extract_strided_slice %0 {offsets = [2, 0, 0, 0, 0], sizes = [1, 1, 1, 16, 16], strides = [1, 1, 1, 1, 1]} : vector<3x3x3x16x16xf32> to vector<1x1x1x16x16xf32>
    %156 = vector.shape_cast %155 : vector<1x1x1x16x16xf32> to vector<16x16xf32>
    %157 = arith.truncf %156 : vector<16x16xf32> to vector<16x16xbf16>
    %cst_37 = arith.constant dense<0.000000e+00> : vector<256x16xf32>
    %158 = tpu.matmul %154, %157, %cst_37 {dimension_numbers = #tpu.dot_dimension_numbers<[1], [0], [0], [1], [0, 0, 1, 1], [], []>} : vector<256x16xbf16>, vector<16x16xbf16>, vector<256x16xf32> -> vector<256x16xf32>
    %159 = arith.addf %149, %158 : vector<256x16xf32>
    %160 = vector.extract_strided_slice %151 {offsets = [0, 1, 0], sizes = [16, 16, 16], strides = [1, 1, 1]} : vector<18x18x16xf32> to vector<16x16x16xf32>
    %161 = vector.shape_cast %160 : vector<16x16x16xf32> to vector<256x16xf32>
    %162 = arith.truncf %161 : vector<256x16xf32> to vector<256x16xbf16>
    %163 = vector.extract_strided_slice %0 {offsets = [2, 0, 1, 0, 0], sizes = [1, 1, 1, 16, 16], strides = [1, 1, 1, 1, 1]} : vector<3x3x3x16x16xf32> to vector<1x1x1x16x16xf32>
    %164 = vector.shape_cast %163 : vector<1x1x1x16x16xf32> to vector<16x16xf32>
    %165 = arith.truncf %164 : vector<16x16xf32> to vector<16x16xbf16>
    %cst_38 = arith.constant dense<0.000000e+00> : vector<256x16xf32>
    %166 = tpu.matmul %162, %165, %cst_38 {dimension_numbers = #tpu.dot_dimension_numbers<[1], [0], [0], [1], [0, 0, 1, 1], [], []>} : vector<256x16xbf16>, vector<16x16xbf16>, vector<256x16xf32> -> vector<256x16xf32>
    %167 = arith.addf %159, %166 : vector<256x16xf32>
    %168 = vector.extract_strided_slice %151 {offsets = [0, 2, 0], sizes = [16, 16, 16], strides = [1, 1, 1]} : vector<18x18x16xf32> to vector<16x16x16xf32>
    %169 = vector.shape_cast %168 : vector<16x16x16xf32> to vector<256x16xf32>
    %170 = arith.truncf %169 : vector<256x16xf32> to vector<256x16xbf16>
    %171 = vector.extract_strided_slice %0 {offsets = [2, 0, 2, 0, 0], sizes = [1, 1, 1, 16, 16], strides = [1, 1, 1, 1, 1]} : vector<3x3x3x16x16xf32> to vector<1x1x1x16x16xf32>
    %172 = vector.shape_cast %171 : vector<1x1x1x16x16xf32> to vector<16x16xf32>
    %173 = arith.truncf %172 : vector<16x16xf32> to vector<16x16xbf16>
    %cst_39 = arith.constant dense<0.000000e+00> : vector<256x16xf32>
    %174 = tpu.matmul %170, %173, %cst_39 {dimension_numbers = #tpu.dot_dimension_numbers<[1], [0], [0], [1], [0, 0, 1, 1], [], []>} : vector<256x16xbf16>, vector<16x16xbf16>, vector<256x16xf32> -> vector<256x16xf32>
    %175 = arith.addf %167, %174 : vector<256x16xf32>
    %176 = vector.extract_strided_slice %151 {offsets = [1, 0, 0], sizes = [16, 16, 16], strides = [1, 1, 1]} : vector<18x18x16xf32> to vector<16x16x16xf32>
    %177 = vector.shape_cast %176 : vector<16x16x16xf32> to vector<256x16xf32>
    %178 = arith.truncf %177 : vector<256x16xf32> to vector<256x16xbf16>
    %179 = vector.extract_strided_slice %0 {offsets = [2, 1, 0, 0, 0], sizes = [1, 1, 1, 16, 16], strides = [1, 1, 1, 1, 1]} : vector<3x3x3x16x16xf32> to vector<1x1x1x16x16xf32>
    %180 = vector.shape_cast %179 : vector<1x1x1x16x16xf32> to vector<16x16xf32>
    %181 = arith.truncf %180 : vector<16x16xf32> to vector<16x16xbf16>
    %cst_40 = arith.constant dense<0.000000e+00> : vector<256x16xf32>
    %182 = tpu.matmul %178, %181, %cst_40 {dimension_numbers = #tpu.dot_dimension_numbers<[1], [0], [0], [1], [0, 0, 1, 1], [], []>} : vector<256x16xbf16>, vector<16x16xbf16>, vector<256x16xf32> -> vector<256x16xf32>
    %183 = arith.addf %175, %182 : vector<256x16xf32>
    %184 = vector.extract_strided_slice %151 {offsets = [1, 1, 0], sizes = [16, 16, 16], strides = [1, 1, 1]} : vector<18x18x16xf32> to vector<16x16x16xf32>
    %185 = vector.shape_cast %184 : vector<16x16x16xf32> to vector<256x16xf32>
    %186 = arith.truncf %185 : vector<256x16xf32> to vector<256x16xbf16>
    %187 = vector.extract_strided_slice %0 {offsets = [2, 1, 1, 0, 0], sizes = [1, 1, 1, 16, 16], strides = [1, 1, 1, 1, 1]} : vector<3x3x3x16x16xf32> to vector<1x1x1x16x16xf32>
    %188 = vector.shape_cast %187 : vector<1x1x1x16x16xf32> to vector<16x16xf32>
    %189 = arith.truncf %188 : vector<16x16xf32> to vector<16x16xbf16>
    %cst_41 = arith.constant dense<0.000000e+00> : vector<256x16xf32>
    %190 = tpu.matmul %186, %189, %cst_41 {dimension_numbers = #tpu.dot_dimension_numbers<[1], [0], [0], [1], [0, 0, 1, 1], [], []>} : vector<256x16xbf16>, vector<16x16xbf16>, vector<256x16xf32> -> vector<256x16xf32>
    %191 = arith.addf %183, %190 : vector<256x16xf32>
    %192 = vector.extract_strided_slice %151 {offsets = [1, 2, 0], sizes = [16, 16, 16], strides = [1, 1, 1]} : vector<18x18x16xf32> to vector<16x16x16xf32>
    %193 = vector.shape_cast %192 : vector<16x16x16xf32> to vector<256x16xf32>
    %194 = arith.truncf %193 : vector<256x16xf32> to vector<256x16xbf16>
    %195 = vector.extract_strided_slice %0 {offsets = [2, 1, 2, 0, 0], sizes = [1, 1, 1, 16, 16], strides = [1, 1, 1, 1, 1]} : vector<3x3x3x16x16xf32> to vector<1x1x1x16x16xf32>
    %196 = vector.shape_cast %195 : vector<1x1x1x16x16xf32> to vector<16x16xf32>
    %197 = arith.truncf %196 : vector<16x16xf32> to vector<16x16xbf16>
    %cst_42 = arith.constant dense<0.000000e+00> : vector<256x16xf32>
    %198 = tpu.matmul %194, %197, %cst_42 {dimension_numbers = #tpu.dot_dimension_numbers<[1], [0], [0], [1], [0, 0, 1, 1], [], []>} : vector<256x16xbf16>, vector<16x16xbf16>, vector<256x16xf32> -> vector<256x16xf32>
    %199 = arith.addf %191, %198 : vector<256x16xf32>
    %200 = vector.extract_strided_slice %151 {offsets = [2, 0, 0], sizes = [16, 16, 16], strides = [1, 1, 1]} : vector<18x18x16xf32> to vector<16x16x16xf32>
    %201 = vector.shape_cast %200 : vector<16x16x16xf32> to vector<256x16xf32>
    %202 = arith.truncf %201 : vector<256x16xf32> to vector<256x16xbf16>
    %203 = vector.extract_strided_slice %0 {offsets = [2, 2, 0, 0, 0], sizes = [1, 1, 1, 16, 16], strides = [1, 1, 1, 1, 1]} : vector<3x3x3x16x16xf32> to vector<1x1x1x16x16xf32>
    %204 = vector.shape_cast %203 : vector<1x1x1x16x16xf32> to vector<16x16xf32>
    %205 = arith.truncf %204 : vector<16x16xf32> to vector<16x16xbf16>
    %cst_43 = arith.constant dense<0.000000e+00> : vector<256x16xf32>
    %206 = tpu.matmul %202, %205, %cst_43 {dimension_numbers = #tpu.dot_dimension_numbers<[1], [0], [0], [1], [0, 0, 1, 1], [], []>} : vector<256x16xbf16>, vector<16x16xbf16>, vector<256x16xf32> -> vector<256x16xf32>
    %207 = arith.addf %199, %206 : vector<256x16xf32>
    %208 = vector.extract_strided_slice %151 {offsets = [2, 1, 0], sizes = [16, 16, 16], strides = [1, 1, 1]} : vector<18x18x16xf32> to vector<16x16x16xf32>
    %209 = vector.shape_cast %208 : vector<16x16x16xf32> to vector<256x16xf32>
    %210 = arith.truncf %209 : vector<256x16xf32> to vector<256x16xbf16>
    %211 = vector.extract_strided_slice %0 {offsets = [2, 2, 1, 0, 0], sizes = [1, 1, 1, 16, 16], strides = [1, 1, 1, 1, 1]} : vector<3x3x3x16x16xf32> to vector<1x1x1x16x16xf32>
    %212 = vector.shape_cast %211 : vector<1x1x1x16x16xf32> to vector<16x16xf32>
    %213 = arith.truncf %212 : vector<16x16xf32> to vector<16x16xbf16>
    %cst_44 = arith.constant dense<0.000000e+00> : vector<256x16xf32>
    %214 = tpu.matmul %210, %213, %cst_44 {dimension_numbers = #tpu.dot_dimension_numbers<[1], [0], [0], [1], [0, 0, 1, 1], [], []>} : vector<256x16xbf16>, vector<16x16xbf16>, vector<256x16xf32> -> vector<256x16xf32>
    %215 = arith.addf %207, %214 : vector<256x16xf32>
    %216 = vector.extract_strided_slice %151 {offsets = [2, 2, 0], sizes = [16, 16, 16], strides = [1, 1, 1]} : vector<18x18x16xf32> to vector<16x16x16xf32>
    %217 = vector.shape_cast %216 : vector<16x16x16xf32> to vector<256x16xf32>
    %218 = arith.truncf %217 : vector<256x16xf32> to vector<256x16xbf16>
    %219 = vector.extract_strided_slice %0 {offsets = [2, 2, 2, 0, 0], sizes = [1, 1, 1, 16, 16], strides = [1, 1, 1, 1, 1]} : vector<3x3x3x16x16xf32> to vector<1x1x1x16x16xf32>
    %220 = vector.shape_cast %219 : vector<1x1x1x16x16xf32> to vector<16x16xf32>
    %221 = arith.truncf %220 : vector<16x16xf32> to vector<16x16xbf16>
    %cst_45 = arith.constant dense<0.000000e+00> : vector<256x16xf32>
    %222 = tpu.matmul %218, %221, %cst_45 {dimension_numbers = #tpu.dot_dimension_numbers<[1], [0], [0], [1], [0, 0, 1, 1], [], []>} : vector<256x16xbf16>, vector<16x16xbf16>, vector<256x16xf32> -> vector<256x16xf32>
    %223 = arith.addf %215, %222 : vector<256x16xf32>
    %c0_46 = arith.constant 0 : index
    %c0_47 = arith.constant 0 : index
    %224 = vector.load %arg6[%c0_46, %c0_47] : memref<1x16xf32, #tpu.memory_space<vmem>>, vector<1x16xf32>
    %225 = vector.broadcast %224 : vector<1x16xf32> to vector<256x16xf32>
    %226 = arith.addf %223, %225 : vector<256x16xf32>
    %c0_48 = arith.constant 0 : index
    %c0_49 = arith.constant 0 : index
    %c0_50 = arith.constant 0 : index
    %c0_51 = arith.constant 0 : index
    %c0_52 = arith.constant 0 : index
    %227 = vector.load %arg7[%c0_48, %c0_49, %c0_50, %c0_51, %c0_52] : memref<1x1x16x16x16xf32, #tpu.memory_space<vmem>>, vector<1x1x16x16x16xf32>
    %228 = vector.shape_cast %227 : vector<1x1x16x16x16xf32> to vector<16x16x16xf32>
    %229 = vector.shape_cast %228 : vector<16x16x16xf32> to vector<256x16xf32>
    %230 = arith.addf %226, %229 : vector<256x16xf32>
    %cst_53 = arith.constant 0.000000e+00 : f32
    %231 = vector.broadcast %cst_53 : f32 to vector<256x16xf32>
    %232 = arith.maximumf %230, %231 : vector<256x16xf32>
    %233 = vector.shape_cast %232 : vector<256x16xf32> to vector<16x16x16xf32>
    %c0_54 = arith.constant 0 : index
    %c0_55 = arith.constant 0 : index
    %c0_56 = arith.constant 0 : index
    %c0_57 = arith.constant 0 : index
    %c0_58 = arith.constant 0 : index
    %234 = vector.load %arg8[%c0_54, %c0_55, %c0_56, %c0_57, %c0_58] : memref<1x1x16x16x16xf32, #tpu.memory_space<vmem>>, vector<1x1x16x16x16xf32>
    %235 = vector.shape_cast %234 : vector<1x1x16x16x16xf32> to vector<16x16x16xf32>
    %236 = vector.shape_cast %233 : vector<16x16x16xf32> to vector<1x1x16x16x16xf32>
    tpu.vector_store %arg8[%c0_54, %c0_55, %c0_56, %c0_57, %c0_58], %236 {strides = array<i32>} : memref<1x1x16x16x16xf32, #tpu.memory_space<vmem>>, vector<1x1x16x16x16xf32>,
    return
  }
  func.func @transform_0(%arg0: i32, %arg1: i32) -> (i32, i32, i32, i32, i32) {
    %c0_i32 = arith.constant 0 : i32
    %0 = arith.addi %arg1, %c0_i32 : i32
    %c0_i32_0 = arith.constant 0 : i32
    %c0_i32_1 = arith.constant 0 : i32
    %c0_i32_2 = arith.constant 0 : i32
    %c0_i32_3 = arith.constant 0 : i32
    return %arg0, %0, %c0_i32_0, %c0_i32_1, %c0_i32_2 : i32, i32, i32, i32, i32
  }
  func.func @transform_1(%arg0: i32, %arg1: i32) -> (i32, i32, i32, i32, i32) {
    %c1_i32 = arith.constant 1 : i32
    %0 = arith.addi %arg1, %c1_i32 : i32
    %c0_i32 = arith.constant 0 : i32
    %c0_i32_0 = arith.constant 0 : i32
    %c0_i32_1 = arith.constant 0 : i32
    %c0_i32_2 = arith.constant 0 : i32
    return %arg0, %0, %c0_i32, %c0_i32_0, %c0_i32_1 : i32, i32, i32, i32, i32
  }
  func.func @transform_2(%arg0: i32, %arg1: i32) -> (i32, i32, i32, i32, i32) {
    %c2_i32 = arith.constant 2 : i32
    %0 = arith.addi %arg1, %c2_i32 : i32
    %c0_i32 = arith.constant 0 : i32
    %c0_i32_0 = arith.constant 0 : i32
    %c0_i32_1 = arith.constant 0 : i32
    %c0_i32_2 = arith.constant 0 : i32
    return %arg0, %0, %c0_i32, %c0_i32_0, %c0_i32_1 : i32, i32, i32, i32, i32
  }
  func.func @transform_3(%arg0: i32, %arg1: i32) -> (i32, i32, i32, i32, i32) {
    %c0_i32 = arith.constant 0 : i32
    %c0_i32_0 = arith.constant 0 : i32
    %c0_i32_1 = arith.constant 0 : i32
    %c0_i32_2 = arith.constant 0 : i32
    %c0_i32_3 = arith.constant 0 : i32
    %c0_i32_4 = arith.constant 0 : i32
    return %c0_i32, %c0_i32_0, %c0_i32_1, %c0_i32_2, %c0_i32_3 : i32, i32, i32, i32, i32
  }
  func.func @transform_4(%arg0: i32, %arg1: i32) -> (i32, i32) {
    %c0_i32 = arith.constant 0 : i32
    %c0_i32_0 = arith.constant 0 : i32
    %c0_i32_1 = arith.constant 0 : i32
    return %c0_i32, %c0_i32_0 : i32, i32
  }
  func.func @transform_5(%arg0: i32, %arg1: i32) -> (i32, i32, i32, i32, i32) {
    %c0_i32 = arith.constant 0 : i32
    %c0_i32_0 = arith.constant 0 : i32
    %c0_i32_1 = arith.constant 0 : i32
    %c0_i32_2 = arith.constant 0 : i32
    return %arg0, %arg1, %c0_i32, %c0_i32_0, %c0_i32_1 : i32, i32, i32, i32, i32
  }
  func.func @transform_6(%arg0: i32, %arg1: i32) -> (i32, i32, i32, i32, i32) {
    %c0_i32 = arith.constant 0 : i32
    %c0_i32_0 = arith.constant 0 : i32
    %c0_i32_1 = arith.constant 0 : i32
    %c0_i32_2 = arith.constant 0 : i32
    return %arg0, %arg1, %c0_i32, %c0_i32_0, %c0_i32_1 : i32, i32, i32, i32, i32
  }
}

</mosaic_0001>

<llo_original>
// kernel: resconv_block_forward.3
$region0: #{resconv_block_forward.3}
  #allocation0 [shape = 'u32[]', space=smem, size = 0x4, offset = 0x4, fixed_abs, tag = 'smem constant byte address 0x4 - core index']
  #allocation1 [shape = 'u32[72,128]{1,0:T(1,128)}', space=vmem, size = 0x9000, scoped, tag = 'internal scratch']
  %s0 = inlined_call_operand.vmem [shape: f32[8192,8], index: 0, kind: input, shape index: {}]
  %s1 = inlined_call_operand.vmem [shape: f32[8,16], index: 1, kind: input, shape index: {}]
  %s2 = inlined_call_operand.vmem [shape: f32[1,16], index: 2, kind: input, shape index: {}]
  %s3 = inlined_call_operand.vmem [shape: f32[8192,16], index: 3, kind: output, shape index: {}]
  %s4 = sld [smem:[#allocation0]]
  $region45: #{resconv_block_forward.3} parent=0
    _
  %s6 = ssub.s32 1, %s4
  %s7 = scalar_select 0, %s6, %s4
  loop: start=0, step=1, limit=18
  $region2: #{resconv_block_forward.3} parent=0 // loop_pre_header
    _
  $region3: #{resconv_block_forward.3} parent=0 // loop_header
    %s9 = sphi 0, %s13
    %p10 = scmp.ge.s32.totalorder %s9, 18
    %s19 = sphi 0, %s21
    %s22 = sphi 0, %s19
    %s23 = sphi 0, %s22
    %s39 = sphi 0, %s23
    %s43 = sphi 0, %s43
    %s45 = sphi 0, %s43
    %s46 = sphi 0, %s45
    %s60 = sphi 0, %s46
    %s64 = sphi 0, %s64
    %s66 = sphi 0, %s64
    %s67 = sphi 0, %s66
    %s81 = sphi 0, %s67
    %s87 = sphi 0, %s89
    %s90 = sphi 0, %s87
    %s91 = sphi 0, %s90
    %s107 = sphi 0, %s91
  $region4: #{resconv_block_forward.3} parent=0 // loop_header_branch
    %12 = sbr.rel (%p10) target = $region8
  $region5: #{resconv_block_forward.3} parent=0 // loop_body
    %s14 = ssub.s32 %s9, 1
    %s15 = ssub.s32 %s9, 2
    %s16 = sadd.s32 %s9, 1
    %s17 = ssub.s32 %s9, %s16
    %p18 = scmp.eq.s32.totalorder %s17, 0
    %s20 = sadd.s32 %s19, 1
    %s21 = scalar_select %p18, %s19, %s20
    %p24 = pneg %p18
    %p25 = scmp.eq.s32.totalorder %s9, 15
    %p26 = por %p24, %p25
    %p27 = scmp.ne.s32.totalorder %s19, %s22
    %p28 = scmp.eq.s32.totalorder %s9, 0
    %p29 = por %p27, %p28
    %p30 = scmp.ne.s32.totalorder %s19, %s22
    %p31 = scmp.eq.s32.totalorder %s14, 15
    %p32 = por %p30, %p31
    %p33 = scmp.ne.s32.totalorder %s22, %s23
    %p34 = scmp.eq.s32.totalorder %s14, 0
    %p35 = por %p33, %p34
    %p36 = scmp.ne.s32.totalorder %s22, %s23
    %p37 = scmp.eq.s32.totalorder %s15, 15
    %p38 = por %p36, %p37
    %p40 = scmp.ne.s32.totalorder %s23, %s39
    %p41 = scmp.eq.s32.totalorder %s15, 0
    %p42 = por %p40, %p41
    %s44 = sadd.s32 %s43, 1
    %p47 = scmp.eq.s32.totalorder %s9, 15
    %p48 = scmp.ne.s32.totalorder %s43, %s45
    %p49 = scmp.eq.s32.totalorder %s9, 0
    %p50 = por %p48, %p49
    %p51 = scmp.ne.s32.totalorder %s43, %s45
    %p52 = scmp.eq.s32.totalorder %s14, 15
    %p53 = por %p51, %p52
    %p54 = scmp.ne.s32.totalorder %s45, %s46
    %p55 = scmp.eq.s32.totalorder %s14, 0
    %p56 = por %p54, %p55
    %p57 = scmp.ne.s32.totalorder %s45, %s46
    %p58 = scmp.eq.s32.totalorder %s15, 15
    %p59 = por %p57, %p58
    %p61 = scmp.ne.s32.totalorder %s46, %s60
    %p62 = scmp.eq.s32.totalorder %s15, 0
    %p63 = por %p61, %p62
    %s65 = sadd.s32 %s64, 1
    %p68 = scmp.eq.s32.totalorder %s9, 15
    %p69 = scmp.ne.s32.totalorder %s64, %s66
    %p70 = scmp.eq.s32.totalorder %s9, 0
    %p71 = por %p69, %p70
    %p72 = scmp.ne.s32.totalorder %s64, %s66
    %p73 = scmp.eq.s32.totalorder %s14, 15
    %p74 = por %p72, %p73
    %p75 = scmp.ne.s32.totalorder %s66, %s67
    %p76 = scmp.eq.s32.totalorder %s14, 0
    %p77 = por %p75, %p76
    %p78 = scmp.ne.s32.totalorder %s66, %s67
    %p79 = scmp.eq.s32.totalorder %s15, 15
    %p80 = por %p78, %p79
    %p82 = scmp.ne.s32.totalorder %s67, %s81
    %p83 = scmp.eq.s32.totalorder %s15, 0
    %p84 = por %p82, %p83
    %s85 = ssub.s32 %s9, %s16
    %p86 = scmp.eq.s32.totalorder %s85, 0
    %s88 = sadd.s32 %s87, 1
    %s89 = scalar_select %p86, %s87, %s88
    %p92 = pneg %p86
    %p93 = scmp.eq.s32.totalorder %s9, 15
    %p94 = por %p92, %p93
    %p95 = scmp.ne.s32.totalorder %s87, %s90
    %p96 = scmp.eq.s32.totalorder %s9, 0
    %p97 = por %p95, %p96
    %p98 = scmp.ne.s32.totalorder %s87, %s90
    %p99 = scmp.eq.s32.totalorder %s14, 15
    %p100 = por %p98, %p99
    %p101 = scmp.ne.s32.totalorder %s90, %s91
    %p102 = scmp.eq.s32.totalorder %s14, 0
    %p103 = por %p101, %p102
    %p104 = scmp.ne.s32.totalorder %s90, %s91
    %p105 = scmp.eq.s32.totalorder %s15, 15
    %p106 = por %p104, %p105
    %p108 = scmp.ne.s32.totalorder %s91, %s107
    %p109 = scmp.eq.s32.totalorder %s15, 0
    %p110 = por %p108, %p109
    %p111 = scmp.le.s32.totalorder 1, %s9
    %p112 = scmp.lt.s32.totalorder %s9, 17
    %p113 = pnand %p111, %p112
    %p114 = pneg %p113
    // Predicated region
    $region9: #{resconv_block_forward.3} parent=5 // pred_check
      _
    $region10: #{resconv_block_forward.3} parent=5 // pred_check_branch
      %116 = sbr.rel (%p113) target = $region12
    $region11: #{resconv_block_forward.3} parent=5 // pred_region
      %s117 = ssub.s32 %s9, 1
      // Predicated region
      $region13: #{resconv_block_forward.3} parent=11 // pred_check
        %p118 = pneg %p56
      $region14: #{resconv_block_forward.3} parent=11 // pred_check_branch
        %120 = sbr.rel (%p118) target = $region16
      $region15: #{resconv_block_forward.3} parent=11 // pred_region
        _
      $region16: #{resconv_block_forward.3} parent=11 // pred_fallthru
        _
      // Predicated region
      $region17: #{resconv_block_forward.3} parent=11 // pred_check
        %p121 = pneg %p77
      $region18: #{resconv_block_forward.3} parent=11 // pred_check_branch
        %123 = sbr.rel (%p121) target = $region20
      $region19: #{resconv_block_forward.3} parent=11 // pred_region
        _
      $region20: #{resconv_block_forward.3} parent=11 // pred_fallthru
        _
    $region12: #{resconv_block_forward.3} parent=5 // pred_fallthru
      _
    %p124 = scmp.lt.s32.totalorder %s9, 16
    // Predicated region
    $region21: #{resconv_block_forward.3} parent=5 // pred_check
      %p125 = pneg %p124
    $region22: #{resconv_block_forward.3} parent=5 // pred_check_branch
      %127 = sbr.rel (%p125) target = $region24
    $region23: #{resconv_block_forward.3} parent=5 // pred_region
      // Predicated region
      $region25: #{resconv_block_forward.3} parent=23 // pred_check
        %p128 = pneg %p29
      $region26: #{resconv_block_forward.3} parent=23 // pred_check_branch
        %130 = sbr.rel (%p128) target = $region28
      $region27: #{resconv_block_forward.3} parent=23 // pred_region
        %s131 = smul.u32 64, %s9
        %p132 = scmp.lt.s32.totalorder %s131, 1023
        %s133 = scalar_select %p132, %s131, 1023
        %s134 = smul.addr %s133, 8
        %s135 = scalar_lea.vmem %s0, %s134
        %s136 = smul.u32 64, %s9
      $region28: #{resconv_block_forward.3} parent=23 // pred_fallthru
        _
    $region24: #{resconv_block_forward.3} parent=5 // pred_fallthru
      _
    %p137 = scmp.le.s32.totalorder 1, %s9
    %p138 = scmp.lt.s32.totalorder %s9, 17
    %p139 = pnand %p137, %p138
    %p140 = pneg %p139
    // Predicated region
    $region29: #{resconv_block_forward.3} parent=5 // pred_check
      _
    $region30: #{resconv_block_forward.3} parent=5 // pred_check_branch
      %142 = sbr.rel (%p139) target = $region32
    $region31: #{resconv_block_forward.3} parent=5 // pred_region
      %s143 = ssub.s32 %s9, 1
      %s144 = smul.u32 64, %s14
      %p145 = scmp.lt.s32.totalorder %s144, 1023
      %s146 = scalar_select %p145, %s144, 1023
      %s147 = smul.addr %s146, 8
      %s148 = scalar_lea.vmem %s0, %s147
      %p149 = pneg %p35
      %p150 = pneg %p32
      %p151 = pneg %p56
      %p152 = pneg %p53
      %p153 = pneg %p77
      %p154 = pneg %p74
      %p155 = pneg %p103
      %p156 = pneg %p100
      %s157 = smul.u32 64, %s14
      %p158 = scmp.lt.s32.totalorder %s157, 1023
      %s159 = scalar_select %p158, %s157, 1023
      %s160 = smul.addr %s159, 8
      %s161 = scalar_lea.vmem %s3, %s160
      %s162 = smul.u32 64, %s14
      %p163 = scmp.lt.s32.totalorder %s162, 1023
      %s164 = scalar_select %p163, %s162, 1023
      %s165 = smul.addr %s164, 8
      %s166 = scalar_lea.vmem %s0, %s165
      %s167 = smul.u32 64, %s14
      %s168 = smul.u32 64, %s14
      %p169 = scmp.lt.s32.totalorder %s168, 1023
      %s170 = scalar_select %p169, %s168, 1023
      %s171 = smul.addr %s170, 8
      %s172 = scalar_lea.vmem %s3, %s171
      %s173 = smul.u32 64, %s14
      %v175 = vld [vmem:[%s166] sm:$0xff]
      %v176 = vld [vmem:[%s166 + $0x8] sm:$0xff]
      %v177 = vld [vmem:[%s166 + $0x10] sm:$0xff]
      %v178 = vld [vmem:[%s166 + $0x18] sm:$0xff]
      %v179 = vld [vmem:[%s166 + $0x20] sm:$0xff]
      %v180 = vld [vmem:[%s166 + $0x28] sm:$0xff]
      %v181 = vld [vmem:[%s166 + $0x30] sm:$0xff]
      %v182 = vld [vmem:[%s166 + $0x38] sm:$0xff]
      %v183 = vld [vmem:[%s166 + $0x40] sm:$0xff]
      %v184 = vld [vmem:[%s166 + $0x48] sm:$0xff]
      %v185 = vld [vmem:[%s166 + $0x50] sm:$0xff]
      %v186 = vld [vmem:[%s166 + $0x58] sm:$0xff]
      %v187 = vld [vmem:[%s166 + $0x60] sm:$0xff]
      %v188 = vld [vmem:[%s166 + $0x68] sm:$0xff]
      %v189 = vld [vmem:[%s166 + $0x70] sm:$0xff]
      %v190 = vld [vmem:[%s166 + $0x78] sm:$0xff]
      %v191 = vld [vmem:[%s166 + $0x80] sm:$0xff]
      %v192 = vld [vmem:[%s166 + $0x88] sm:$0xff]
      %v193 = vld [vmem:[%s166 + $0x90] sm:$0xff]
      %v194 = vld [vmem:[%s166 + $0x98] sm:$0xff]
      %v195 = vld [vmem:[%s166 + $0xa0] sm:$0xff]
      %v196 = vld [vmem:[%s166 + $0xa8] sm:$0xff]
      %v197 = vld [vmem:[%s166 + $0xb0] sm:$0xff]
      %v198 = vld [vmem:[%s166 + $0xb8] sm:$0xff]
      %v199 = vld [vmem:[%s166 + $0xc0] sm:$0xff]
      %v200 = vld [vmem:[%s166 + $0xc8] sm:$0xff]
      %v201 = vld [vmem:[%s166 + $0xd0] sm:$0xff]
      %v202 = vld [vmem:[%s166 + $0xd8] sm:$0xff]
      %v203 = vld [vmem:[%s166 + $0xe0] sm:$0xff]
      %v204 = vld [vmem:[%s166 + $0xe8] sm:$0xff]
      %v205 = vld [vmem:[%s166 + $0xf0] sm:$0xff]
      %v206 = vld [vmem:[%s166 + $0xf8] sm:$0xff]
      %v207 = vld [vmem:[%s166 + $0x100] sm:$0xff]
      %v208 = vld [vmem:[%s166 + $0x108] sm:$0xff]
      %v209 = vld [vmem:[%s166 + $0x110] sm:$0xff]
      %v210 = vld [vmem:[%s166 + $0x118] sm:$0xff]
      %v211 = vld [vmem:[%s166 + $0x120] sm:$0xff]
      %v212 = vld [vmem:[%s166 + $0x128] sm:$0xff]
      %v213 = vld [vmem:[%s166 + $0x130] sm:$0xff]
      %v214 = vld [vmem:[%s166 + $0x138] sm:$0xff]
      %v215 = vld [vmem:[%s166 + $0x140] sm:$0xff]
      %v216 = vld [vmem:[%s166 + $0x148] sm:$0xff]
      %v217 = vld [vmem:[%s166 + $0x150] sm:$0xff]
      %v218 = vld [vmem:[%s166 + $0x158] sm:$0xff]
      %v219 = vld [vmem:[%s166 + $0x160] sm:$0xff]
      %v220 = vld [vmem:[%s166 + $0x168] sm:$0xff]
      %v221 = vld [vmem:[%s166 + $0x170] sm:$0xff]
      %v222 = vld [vmem:[%s166 + $0x178] sm:$0xff]
      %v223 = vld [vmem:[%s166 + $0x180] sm:$0xff]
      %v224 = vld [vmem:[%s166 + $0x188] sm:$0xff]
      %v225 = vld [vmem:[%s166 + $0x190] sm:$0xff]
      %v226 = vld [vmem:[%s166 + $0x198] sm:$0xff]
      %v227 = vld [vmem:[%s166 + $0x1a0] sm:$0xff]
      %v228 = vld [vmem:[%s166 + $0x1a8] sm:$0xff]
      %v229 = vld [vmem:[%s166 + $0x1b0] sm:$0xff]
      %v230 = vld [vmem:[%s166 + $0x1b8] sm:$0xff]
      %v231 = vld [vmem:[%s166 + $0x1c0] sm:$0xff]
      %v232 = vld [vmem:[%s166 + $0x1c8] sm:$0xff]
      %v233 = vld [vmem:[%s166 + $0x1d0] sm:$0xff]
      %v234 = vld [vmem:[%s166 + $0x1d8] sm:$0xff]
      %v235 = vld [vmem:[%s166 + $0x1e0] sm:$0xff]
      %v236 = vld [vmem:[%s166 + $0x1e8] sm:$0xff]
      %v237 = vld [vmem:[%s166 + $0x1f0] sm:$0xff]
      %v238 = vld [vmem:[%s166 + $0x1f8] sm:$0xff]
      %v239 = vpack.c.bf16 %v176, %v175
      %v240 = vpack.c.bf16 %v178, %v177
      %v241 = vpack.c.bf16 %v180, %v179
      %v242 = vpack.c.bf16 %v182, %v181
      %v243 = vpack.c.bf16 %v184, %v183
      %v244 = vpack.c.bf16 %v186, %v185
      %v245 = vpack.c.bf16 %v188, %v187
      %v246 = vpack.c.bf16 %v190, %v189
      %v247 = vpack.c.bf16 %v192, %v191
      %v248 = vpack.c.bf16 %v194, %v193
      %v249 = vpack.c.bf16 %v196, %v195
      %v250 = vpack.c.bf16 %v198, %v197
      %v251 = vpack.c.bf16 %v200, %v199
      %v252 = vpack.c.bf16 %v202, %v201
      %v253 = vpack.c.bf16 %v204, %v203
      %v254 = vpack.c.bf16 %v206, %v205
      %v255 = vpack.c.bf16 %v208, %v207
      %v256 = vpack.c.bf16 %v210, %v209
      %v257 = vpack.c.bf16 %v212, %v211
      %v258 = vpack.c.bf16 %v214, %v213
      %v259 = vpack.c.bf16 %v216, %v215
      %v260 = vpack.c.bf16 %v218, %v217
      %v261 = vpack.c.bf16 %v220, %v219
      %v262 = vpack.c.bf16 %v222, %v221
      %v263 = vpack.c.bf16 %v224, %v223
      %v264 = vpack.c.bf16 %v226, %v225
      %v265 = vpack.c.bf16 %v228, %v227
      %v266 = vpack.c.bf16 %v230, %v229
      %v267 = vpack.c.bf16 %v232, %v231
      %v268 = vpack.c.bf16 %v234, %v233
      %v269 = vpack.c.bf16 %v236, %v235
      %v270 = vpack.c.bf16 %v238, %v237
      %v271 = vld [vmem:[%s1] sm:$0xff]
      %v272 = vpack.c.bf16 %v271, %v271
      %v273 = vld [vmem:[%s2] sm:$0x1]
      %v275 = vperm.slane %v273, 0
      %vm277 = vcmask 64512
      %v279 = vsel %vm277, %v239, 0
      %v282 = vsel %vm277, %v240, 0
      %v285 = vsel %vm277, %v241, 0
      %v288 = vsel %vm277, %v242, 0
      %v291 = vsel %vm277, %v243, 0
      %v294 = vsel %vm277, %v244, 0
      %v297 = vsel %vm277, %v245, 0
      %v300 = vsel %vm277, %v246, 0
      %v303 = vsel %vm277, %v247, 0
      %v306 = vsel %vm277, %v248, 0
      %v309 = vsel %vm277, %v249, 0
      %v312 = vsel %vm277, %v250, 0
      %v315 = vsel %vm277, %v251, 0
      %v318 = vsel %vm277, %v252, 0
      %v321 = vsel %vm277, %v253, 0
      %v324 = vsel %vm277, %v254, 0
      %v327 = vsel %vm277, %v255, 0
      %v330 = vsel %vm277, %v256, 0
      %v333 = vsel %vm277, %v257, 0
      %v336 = vsel %vm277, %v258, 0
      %v339 = vsel %vm277, %v259, 0
      %v342 = vsel %vm277, %v260, 0
      %v345 = vsel %vm277, %v261, 0
      %v348 = vsel %vm277, %v262, 0
      %v351 = vsel %vm277, %v263, 0
      %v354 = vsel %vm277, %v264, 0
      %v357 = vsel %vm277, %v265, 0
      %v360 = vsel %vm277, %v266, 0
      %v363 = vsel %vm277, %v267, 0
      %v366 = vsel %vm277, %v268, 0
      %v369 = vsel %vm277, %v269, 0
      %v372 = vsel %vm277, %v270, 0
      %vm374 = vcmask 1043456
      %v376 = vsel %vm374, %v272, 0
      %378 = vmatpush.bf16.msra.mxu0 0
      %379 = vmatpush.bf16.msra.mxu0 0
      %380 = vmatpush.bf16.msra.mxu0 0
      %381 = vmatpush.bf16.msra.mxu0 0
      %382 = vmatpush.bf16.msra.mxu0 0
      %383 = vmatpush.bf16.msra.mxu0 0
      %384 = vmatpush.bf16.msra.mxu0 0
      %385 = vmatpush.bf16.msra.mxu0 %v376
      %386 = vmatmul.bf16.gmra.mxu0 %v279
      %v387 = vpop.f32.mrf.mxu0
      %v388 = vadd.f32 %v275, %v387
      %v389 = vpop.f32.mrf.mxu0
      %v390 = vadd.f32 %v275, %v389
      %391 = vmatmul.bf16.gmra.mxu0 %v282
      %v392 = vpop.f32.mrf.mxu0
      %v393 = vadd.f32 %v275, %v392
      %v394 = vpop.f32.mrf.mxu0
      %v395 = vadd.f32 %v275, %v394
      %396 = vmatmul.bf16.gmra.mxu0 %v285
      %v397 = vpop.f32.mrf.mxu0
      %v398 = vadd.f32 %v275, %v397
      %v399 = vpop.f32.mrf.mxu0
      %v400 = vadd.f32 %v275, %v399
      %401 = vmatmul.bf16.gmra.mxu0 %v288
      %v402 = vpop.f32.mrf.mxu0
      %v403 = vadd.f32 %v275, %v402
      %v404 = vpop.f32.mrf.mxu0
      %v405 = vadd.f32 %v275, %v404
      %406 = vmatmul.bf16.gmra.mxu0 %v291
      %v407 = vpop.f32.mrf.mxu0
      %v408 = vadd.f32 %v275, %v407
      %v409 = vpop.f32.mrf.mxu0
      %v410 = vadd.f32 %v275, %v409
      %411 = vmatmul.bf16.gmra.mxu0 %v294
      %v412 = vpop.f32.mrf.mxu0
      %v413 = vadd.f32 %v275, %v412
      %v414 = vpop.f32.mrf.mxu0
      %v415 = vadd.f32 %v275, %v414
      %416 = vmatmul.bf16.gmra.mxu0 %v297
      %v417 = vpop.f32.mrf.mxu0
      %v418 = vadd.f32 %v275, %v417
      %v419 = vpop.f32.mrf.mxu0
      %v420 = vadd.f32 %v275, %v419
      %421 = vmatmul.bf16.gmra.mxu0 %v300
      %v422 = vpop.f32.mrf.mxu0
      %v423 = vadd.f32 %v275, %v422
      %v424 = vpop.f32.mrf.mxu0
      %v425 = vadd.f32 %v275, %v424
      %426 = vmatmul.bf16.gmra.mxu0 %v303
      %v427 = vpop.f32.mrf.mxu0
      %v428 = vadd.f32 %v275, %v427
      %v429 = vpop.f32.mrf.mxu0
      %v430 = vadd.f32 %v275, %v429
      %431 = vmatmul.bf16.gmra.mxu0 %v306
      %v432 = vpop.f32.mrf.mxu0
      %v433 = vadd.f32 %v275, %v432
      %v434 = vpop.f32.mrf.mxu0
      %v435 = vadd.f32 %v275, %v434
      %436 = vmatmul.bf16.gmra.mxu0 %v309
      %v437 = vpop.f32.mrf.mxu0
      %v438 = vadd.f32 %v275, %v437
      %v439 = vpop.f32.mrf.mxu0
      %v440 = vadd.f32 %v275, %v439
      %441 = vmatmul.bf16.gmra.mxu0 %v312
      %v442 = vpop.f32.mrf.mxu0
      %v443 = vadd.f32 %v275, %v442
      %v444 = vpop.f32.mrf.mxu0
      %v445 = vadd.f32 %v275, %v444
      %446 = vmatmul.bf16.gmra.mxu0 %v315
      %v447 = vpop.f32.mrf.mxu0
      %v448 = vadd.f32 %v275, %v447
      %v449 = vpop.f32.mrf.mxu0
      %v450 = vadd.f32 %v275, %v449
      %451 = vmatmul.bf16.gmra.mxu0 %v318
      %v452 = vpop.f32.mrf.mxu0
      %v453 = vadd.f32 %v275, %v452
      %v454 = vpop.f32.mrf.mxu0
      %v455 = vadd.f32 %v275, %v454
      %456 = vmatmul.bf16.gmra.mxu0 %v321
      %v457 = vpop.f32.mrf.mxu0
      %v458 = vadd.f32 %v275, %v457
      %v459 = vpop.f32.mrf.mxu0
      %v460 = vadd.f32 %v275, %v459
      %461 = vmatmul.bf16.gmra.mxu0 %v324
      %v462 = vpop.f32.mrf.mxu0
      %v463 = vadd.f32 %v275, %v462
      %v464 = vpop.f32.mrf.mxu0
      %v465 = vadd.f32 %v275, %v464
      %466 = vmatmul.bf16.gmra.mxu0 %v327
      %v467 = vpop.f32.mrf.mxu0
      %v468 = vadd.f32 %v275, %v467
      %v469 = vpop.f32.mrf.mxu0
      %v470 = vadd.f32 %v275, %v469
      %471 = vmatmul.bf16.gmra.mxu0 %v330
      %v472 = vpop.f32.mrf.mxu0
      %v473 = vadd.f32 %v275, %v472
      %v474 = vpop.f32.mrf.mxu0
      %v475 = vadd.f32 %v275, %v474
      %476 = vmatmul.bf16.gmra.mxu0 %v333
      %v477 = vpop.f32.mrf.mxu0
      %v478 = vadd.f32 %v275, %v477
      %v479 = vpop.f32.mrf.mxu0
      %v480 = vadd.f32 %v275, %v479
      %481 = vmatmul.bf16.gmra.mxu0 %v336
      %v482 = vpop.f32.mrf.mxu0
      %v483 = vadd.f32 %v275, %v482
      %v484 = vpop.f32.mrf.mxu0
      %v485 = vadd.f32 %v275, %v484
      %486 = vmatmul.bf16.gmra.mxu0 %v339
      %v487 = vpop.f32.mrf.mxu0
      %v488 = vadd.f32 %v275, %v487
      %v489 = vpop.f32.mrf.mxu0
      %v490 = vadd.f32 %v275, %v489
      %491 = vmatmul.bf16.gmra.mxu0 %v342
      %v492 = vpop.f32.mrf.mxu0
      %v493 = vadd.f32 %v275, %v492
      %v494 = vpop.f32.mrf.mxu0
      %v495 = vadd.f32 %v275, %v494
      %496 = vmatmul.bf16.gmra.mxu0 %v345
      %v497 = vpop.f32.mrf.mxu0
      %v498 = vadd.f32 %v275, %v497
      %v499 = vpop.f32.mrf.mxu0
      %v500 = vadd.f32 %v275, %v499
      %501 = vmatmul.bf16.gmra.mxu0 %v348
      %v502 = vpop.f32.mrf.mxu0
      %v503 = vadd.f32 %v275, %v502
      %v504 = vpop.f32.mrf.mxu0
      %v505 = vadd.f32 %v275, %v504
      %506 = vmatmul.bf16.gmra.mxu0 %v351
      %v507 = vpop.f32.mrf.mxu0
      %v508 = vadd.f32 %v275, %v507
      %v509 = vpop.f32.mrf.mxu0
      %v510 = vadd.f32 %v275, %v509
      %511 = vmatmul.bf16.gmra.mxu0 %v354
      %v512 = vpop.f32.mrf.mxu0
      %v513 = vadd.f32 %v275, %v512
      %v514 = vpop.f32.mrf.mxu0
      %v515 = vadd.f32 %v275, %v514
      %516 = vmatmul.bf16.gmra.mxu0 %v357
      %v517 = vpop.f32.mrf.mxu0
      %v518 = vadd.f32 %v275, %v517
      %v519 = vpop.f32.mrf.mxu0
      %v520 = vadd.f32 %v275, %v519
      %521 = vmatmul.bf16.gmra.mxu0 %v360
      %v522 = vpop.f32.mrf.mxu0
      %v523 = vadd.f32 %v275, %v522
      %v524 = vpop.f32.mrf.mxu0
      %v525 = vadd.f32 %v275, %v524
      %526 = vmatmul.bf16.gmra.mxu0 %v363
      %v527 = vpop.f32.mrf.mxu0
      %v528 = vadd.f32 %v275, %v527
      %v529 = vpop.f32.mrf.mxu0
      %v530 = vadd.f32 %v275, %v529
      %531 = vmatmul.bf16.gmra.mxu0 %v366
      %v532 = vpop.f32.mrf.mxu0
      %v533 = vadd.f32 %v275, %v532
      %v534 = vpop.f32.mrf.mxu0
      %v535 = vadd.f32 %v275, %v534
      %536 = vmatmul.bf16.gmra.mxu0 %v369
      %v537 = vpop.f32.mrf.mxu0
      %v538 = vadd.f32 %v275, %v537
      %v539 = vpop.f32.mrf.mxu0
      %v540 = vadd.f32 %v275, %v539
      %541 = vmatmul.bf16.gmra.mxu0 %v372
      %v542 = vpop.f32.mrf.mxu0
      %v543 = vadd.f32 %v275, %v542
      %v544 = vpop.f32.mrf.mxu0
      %v545 = vadd.f32 %v275, %v544
      %546 = vdwg.mxu0
      %vm547 = vcmask 130048
      %548 = vst.msk [vmem:[%s172] sm:$0xff] %vm547, %v388
      %549 = vst.msk [vmem:[%s172 + $0x8] sm:$0xff] %vm547, %v390
      %550 = vst.msk [vmem:[%s172 + $0x10] sm:$0xff] %vm547, %v393
      %551 = vst.msk [vmem:[%s172 + $0x18] sm:$0xff] %vm547, %v395
      %552 = vst.msk [vmem:[%s172 + $0x20] sm:$0xff] %vm547, %v398
      %553 = vst.msk [vmem:[%s172 + $0x28] sm:$0xff] %vm547, %v400
      %554 = vst.msk [vmem:[%s172 + $0x30] sm:$0xff] %vm547, %v403
      %555 = vst.msk [vmem:[%s172 + $0x38] sm:$0xff] %vm547, %v405
      %556 = vst.msk [vmem:[%s172 + $0x40] sm:$0xff] %vm547, %v408
      %557 = vst.msk [vmem:[%s172 + $0x48] sm:$0xff] %vm547, %v410
      %558 = vst.msk [vmem:[%s172 + $0x50] sm:$0xff] %vm547, %v413
      %559 = vst.msk [vmem:[%s172 + $0x58] sm:$0xff] %vm547, %v415
      %560 = vst.msk [vmem:[%s172 + $0x60] sm:$0xff] %vm547, %v418
      %561 = vst.msk [vmem:[%s172 + $0x68] sm:$0xff] %vm547, %v420
      %562 = vst.msk [vmem:[%s172 + $0x70] sm:$0xff] %vm547, %v423
      %563 = vst.msk [vmem:[%s172 + $0x78] sm:$0xff] %vm547, %v425
      %564 = vst.msk [vmem:[%s172 + $0x80] sm:$0xff] %vm547, %v428
      %565 = vst.msk [vmem:[%s172 + $0x88] sm:$0xff] %vm547, %v430
      %566 = vst.msk [vmem:[%s172 + $0x90] sm:$0xff] %vm547, %v433
      %567 = vst.msk [vmem:[%s172 + $0x98] sm:$0xff] %vm547, %v435
      %568 = vst.msk [vmem:[%s172 + $0xa0] sm:$0xff] %vm547, %v438
      %569 = vst.msk [vmem:[%s172 + $0xa8] sm:$0xff] %vm547, %v440
      %570 = vst.msk [vmem:[%s172 + $0xb0] sm:$0xff] %vm547, %v443
      %571 = vst.msk [vmem:[%s172 + $0xb8] sm:$0xff] %vm547, %v445
      %572 = vst.msk [vmem:[%s172 + $0xc0] sm:$0xff] %vm547, %v448
      %573 = vst.msk [vmem:[%s172 + $0xc8] sm:$0xff] %vm547, %v450
      %574 = vst.msk [vmem:[%s172 + $0xd0] sm:$0xff] %vm547, %v453
      %575 = vst.msk [vmem:[%s172 + $0xd8] sm:$0xff] %vm547, %v455
      %576 = vst.msk [vmem:[%s172 + $0xe0] sm:$0xff] %vm547, %v458
      %577 = vst.msk [vmem:[%s172 + $0xe8] sm:$0xff] %vm547, %v460
      %578 = vst.msk [vmem:[%s172 + $0xf0] sm:$0xff] %vm547, %v463
      %579 = vst.msk [vmem:[%s172 + $0xf8] sm:$0xff] %vm547, %v465
      %580 = vst.msk [vmem:[%s172 + $0x100] sm:$0xff] %vm547, %v468
      %581 = vst.msk [vmem:[%s172 + $0x108] sm:$0xff] %vm547, %v470
      %582 = vst.msk [vmem:[%s172 + $0x110] sm:$0xff] %vm547, %v473
      %583 = vst.msk [vmem:[%s172 + $0x118] sm:$0xff] %vm547, %v475
      %584 = vst.msk [vmem:[%s172 + $0x120] sm:$0xff] %vm547, %v478
      %585 = vst.msk [vmem:[%s172 + $0x128] sm:$0xff] %vm547, %v480
      %586 = vst.msk [vmem:[%s172 + $0x130] sm:$0xff] %vm547, %v483
      %587 = vst.msk [vmem:[%s172 + $0x138] sm:$0xff] %vm547, %v485
      %588 = vst.msk [vmem:[%s172 + $0x140] sm:$0xff] %vm547, %v488
      %589 = vst.msk [vmem:[%s172 + $0x148] sm:$0xff] %vm547, %v490
      %590 = vst.msk [vmem:[%s172 + $0x150] sm:$0xff] %vm547, %v493
      %591 = vst.msk [vmem:[%s172 + $0x158] sm:$0xff] %vm547, %v495
      %592 = vst.msk [vmem:[%s172 + $0x160] sm:$0xff] %vm547, %v498
      %593 = vst.msk [vmem:[%s172 + $0x168] sm:$0xff] %vm547, %v500
      %594 = vst.msk [vmem:[%s172 + $0x170] sm:$0xff] %vm547, %v503
      %595 = vst.msk [vmem:[%s172 + $0x178] sm:$0xff] %vm547, %v505
      %596 = vst.msk [vmem:[%s172 + $0x180] sm:$0xff] %vm547, %v508
      %597 = vst.msk [vmem:[%s172 + $0x188] sm:$0xff] %vm547, %v510
      %598 = vst.msk [vmem:[%s172 + $0x190] sm:$0xff] %vm547, %v513
      %599 = vst.msk [vmem:[%s172 + $0x198] sm:$0xff] %vm547, %v515
      %600 = vst.msk [vmem:[%s172 + $0x1a0] sm:$0xff] %vm547, %v518
      %601 = vst.msk [vmem:[%s172 + $0x1a8] sm:$0xff] %vm547, %v520
      %602 = vst.msk [vmem:[%s172 + $0x1b0] sm:$0xff] %vm547, %v523
      %603 = vst.msk [vmem:[%s172 + $0x1b8] sm:$0xff] %vm547, %v525
      %604 = vst.msk [vmem:[%s172 + $0x1c0] sm:$0xff] %vm547, %v528
      %605 = vst.msk [vmem:[%s172 + $0x1c8] sm:$0xff] %vm547, %v530
      %606 = vst.msk [vmem:[%s172 + $0x1d0] sm:$0xff] %vm547, %v533
      %607 = vst.msk [vmem:[%s172 + $0x1d8] sm:$0xff] %vm547, %v535
      %608 = vst.msk [vmem:[%s172 + $0x1e0] sm:$0xff] %vm547, %v538
      %609 = vst.msk [vmem:[%s172 + $0x1e8] sm:$0xff] %vm547, %v540
      %610 = vst.msk [vmem:[%s172 + $0x1f0] sm:$0xff] %vm547, %v543
      %611 = vst.msk [vmem:[%s172 + $0x1f8] sm:$0xff] %vm547, %v545
      %s612 = smul.u32 64, %s14
      %p613 = scmp.lt.s32.totalorder %s612, 1023
      %s614 = scalar_select %p613, %s612, 1023
      %s615 = smul.addr %s614, 8
      %s616 = scalar_lea.vmem %s3, %s615
      // Predicated region
      $region33: #{resconv_block_forward.3} parent=31 // pred_check
        %p617 = pneg %p100
      $region34: #{resconv_block_forward.3} parent=31 // pred_check_branch
        %619 = sbr.rel (%p617) target = $region36
      $region35: #{resconv_block_forward.3} parent=31 // pred_region
        %s620 = smul.u32 64, %s14
      $region36: #{resconv_block_forward.3} parent=31 // pred_fallthru
        _
    $region32: #{resconv_block_forward.3} parent=5 // pred_fallthru
      _
    %p621 = scmp.le.s32.totalorder 2, %s9
    // Predicated region
    $region37: #{resconv_block_forward.3} parent=5 // pred_check
      %p622 = pneg %p621
    $region38: #{resconv_block_forward.3} parent=5 // pred_check_branch
      %624 = sbr.rel (%p622) target = $region40
    $region39: #{resconv_block_forward.3} parent=5 // pred_region
      %s625 = ssub.s32 %s9, 2
      // Predicated region
      $region41: #{resconv_block_forward.3} parent=39 // pred_check
        %p626 = pneg %p106
      $region42: #{resconv_block_forward.3} parent=39 // pred_check_branch
        %628 = sbr.rel (%p626) target = $region44
      $region43: #{resconv_block_forward.3} parent=39 // pred_region
        %s629 = smul.u32 64, %s15
        %p630 = scmp.lt.s32.totalorder %s629, 1023
        %s631 = scalar_select %p630, %s629, 1023
        %s632 = smul.addr %s631, 8
        %s633 = scalar_lea.vmem %s3, %s632
      $region44: #{resconv_block_forward.3} parent=39 // pred_fallthru
        _
    $region40: #{resconv_block_forward.3} parent=5 // pred_fallthru
      _
  $region6: #{resconv_block_forward.3} parent=0 // loop_footer
    %s13 = sadd.s32 1, %s9
  $region7: #{resconv_block_forward.3} parent=0 // loop_footer_branch
    %8 = sbr.rel target = $region3
  $region8: #{resconv_block_forward.3} parent=0 // loop_exit
    _

// kernel: resconv_block_forward.4
$region0: #{resconv_block_forward.4}
  #allocation0 [shape = 'u32[]', space=smem, size = 0x4, offset = 0x4, fixed_abs, tag = 'smem constant byte address 0x4 - core index']
  #allocation1 [shape = 'u32[72,128]{1,0:T(1,128)}', space=vmem, size = 0x9000, scoped, tag = 'internal scratch']
  %s0 = inlined_call_operand.vmem [shape: f32[2,18,18,18,8], index: 0, kind: input, shape index: {}, may-alias: {0,1,2}]
  %s1 = inlined_call_operand.vmem [shape: f32[2,18,18,18,8], index: 1, kind: input, shape index: {}, may-alias: {0,1,2}]
  %s2 = inlined_call_operand.vmem [shape: f32[2,18,18,18,8], index: 2, kind: input, shape index: {}, may-alias: {0,1,2}]
  %s3 = inlined_call_operand.vmem [shape: f32[3,3,3,8,16], index: 3, kind: input, shape index: {}]
  %s4 = inlined_call_operand.vmem [shape: f32[1,16], index: 4, kind: input, shape index: {}]
  %s5 = inlined_call_operand.vmem [shape: f32[2,16,16,16,16], index: 5, kind: output, shape index: {}]
  %s6 = sld [smem:[#allocation0]]
  $region53: #{resconv_block_forward.4} parent=0
    _
  %s8 = ssub.s32 1, %s6
  %s9 = scalar_select 0, %s8, %s6
  loop: start=0, step=1, limit=34
  $region2: #{resconv_block_forward.4} parent=0 // loop_pre_header
    _
  $region3: #{resconv_block_forward.4} parent=0 // loop_header
    %s11 = sphi 0, %s15
    %p12 = scmp.ge.s32.totalorder %s11, 34
    %s18 = sphi 0, %s30
    %s19 = sphi 0, %s26
    %s20 = sphi 0, %s18
    %s21 = sphi 0, %s19
    %s22 = sphi 0, %s20
    %s23 = sphi 0, %s21
    %s35 = sphi 0, %s37
    %s38 = sphi 0, %s35
    %s39 = sphi 0, %s38
    %s55 = sphi 0, %s39
    %s65 = sphi 0, %s67
    %s68 = sphi 0, %s65
    %s69 = sphi 0, %s68
    %s85 = sphi 0, %s69
    %s95 = sphi 0, %s97
    %s98 = sphi 0, %s95
    %s99 = sphi 0, %s98
    %s115 = sphi 0, %s99
    %s119 = sphi 0, %s119
    %s121 = sphi 0, %s119
    %s122 = sphi 0, %s121
    %s136 = sphi 0, %s122
    %s140 = sphi 0, %s140
    %s142 = sphi 0, %s140
    %s143 = sphi 0, %s142
    %s157 = sphi 0, %s143
    %s165 = sphi 0, %s167
    %s168 = sphi 0, %s165
    %s169 = sphi 0, %s168
    %s185 = sphi 0, %s169
  $region4: #{resconv_block_forward.4} parent=0 // loop_header_branch
    %14 = sbr.rel (%p12) target = $region8
  $region5: #{resconv_block_forward.4} parent=0 // loop_body
    %s16 = ssub.s32 %s11, 1
    %s17 = ssub.s32 %s11, 2
    %s24 = sadd.s32 1, %s19
    %p25 = scmp.ge.s32.totalorder %s24, 16
    %s26 = scalar_select %p25, 0, %s24
    %s27 = sadd.s32 1, %s18
    %s28 = scalar_select %p25, %s27, %s18
    %p29 = scmp.ge.s32.totalorder %s28, 2
    %s30 = scalar_select %p29, 0, %s28
    %s31 = ssub.s32 %s18, %s30
    %s32 = ssub.s32 %s19, %s26
    %s33 = sor.u32 %s31, %s32
    %p34 = scmp.eq.s32.totalorder %s33, 0
    %s36 = sadd.s32 %s35, 1
    %s37 = scalar_select %p34, %s35, %s36
    %p40 = pneg %p34
    %p41 = scmp.eq.s32.totalorder %s11, 31
    %p42 = por %p40, %p41
    %p43 = scmp.ne.s32.totalorder %s35, %s38
    %p44 = scmp.eq.s32.totalorder %s11, 0
    %p45 = por %p43, %p44
    %p46 = scmp.ne.s32.totalorder %s35, %s38
    %p47 = scmp.eq.s32.totalorder %s16, 31
    %p48 = por %p46, %p47
    %p49 = scmp.ne.s32.totalorder %s38, %s39
    %p50 = scmp.eq.s32.totalorder %s16, 0
    %p51 = por %p49, %p50
    %p52 = scmp.ne.s32.totalorder %s38, %s39
    %p53 = scmp.eq.s32.totalorder %s17, 31
    %p54 = por %p52, %p53
    %p56 = scmp.ne.s32.totalorder %s39, %s55
    %p57 = scmp.eq.s32.totalorder %s17, 0
    %p58 = por %p56, %p57
    %s59 = sadd.s32 %s19, 1
    %s60 = sadd.s32 %s26, 1
    %s61 = ssub.s32 %s18, %s30
    %s62 = ssub.s32 %s59, %s60
    %s63 = sor.u32 %s61, %s62
    %p64 = scmp.eq.s32.totalorder %s63, 0
    %s66 = sadd.s32 %s65, 1
    %s67 = scalar_select %p64, %s65, %s66
    %p70 = pneg %p64
    %p71 = scmp.eq.s32.totalorder %s11, 31
    %p72 = por %p70, %p71
    %p73 = scmp.ne.s32.totalorder %s65, %s68
    %p74 = scmp.eq.s32.totalorder %s11, 0
    %p75 = por %p73, %p74
    %p76 = scmp.ne.s32.totalorder %s65, %s68
    %p77 = scmp.eq.s32.totalorder %s16, 31
    %p78 = por %p76, %p77
    %p79 = scmp.ne.s32.totalorder %s68, %s69
    %p80 = scmp.eq.s32.totalorder %s16, 0
    %p81 = por %p79, %p80
    %p82 = scmp.ne.s32.totalorder %s68, %s69
    %p83 = scmp.eq.s32.totalorder %s17, 31
    %p84 = por %p82, %p83
    %p86 = scmp.ne.s32.totalorder %s69, %s85
    %p87 = scmp.eq.s32.totalorder %s17, 0
    %p88 = por %p86, %p87
    %s89 = sadd.s32 %s19, 2
    %s90 = sadd.s32 %s26, 2
    %s91 = ssub.s32 %s18, %s30
    %s92 = ssub.s32 %s89, %s90
    %s93 = sor.u32 %s91, %s92
    %p94 = scmp.eq.s32.totalorder %s93, 0
    %s96 = sadd.s32 %s95, 1
    %s97 = scalar_select %p94, %s95, %s96
    %p100 = pneg %p94
    %p101 = scmp.eq.s32.totalorder %s11, 31
    %p102 = por %p100, %p101
    %p103 = scmp.ne.s32.totalorder %s95, %s98
    %p104 = scmp.eq.s32.totalorder %s11, 0
    %p105 = por %p103, %p104
    %p106 = scmp.ne.s32.totalorder %s95, %s98
    %p107 = scmp.eq.s32.totalorder %s16, 31
    %p108 = por %p106, %p107
    %p109 = scmp.ne.s32.totalorder %s98, %s99
    %p110 = scmp.eq.s32.totalorder %s16, 0
    %p111 = por %p109, %p110
    %p112 = scmp.ne.s32.totalorder %s98, %s99
    %p113 = scmp.eq.s32.totalorder %s17, 31
    %p114 = por %p112, %p113
    %p116 = scmp.ne.s32.totalorder %s99, %s115
    %p117 = scmp.eq.s32.totalorder %s17, 0
    %p118 = por %p116, %p117
    %s120 = sadd.s32 %s119, 1
    %p123 = scmp.eq.s32.totalorder %s11, 31
    %p124 = scmp.ne.s32.totalorder %s119, %s121
    %p125 = scmp.eq.s32.totalorder %s11, 0
    %p126 = por %p124, %p125
    %p127 = scmp.ne.s32.totalorder %s119, %s121
    %p128 = scmp.eq.s32.totalorder %s16, 31
    %p129 = por %p127, %p128
    %p130 = scmp.ne.s32.totalorder %s121, %s122
    %p131 = scmp.eq.s32.totalorder %s16, 0
    %p132 = por %p130, %p131
    %p133 = scmp.ne.s32.totalorder %s121, %s122
    %p134 = scmp.eq.s32.totalorder %s17, 31
    %p135 = por %p133, %p134
    %p137 = scmp.ne.s32.totalorder %s122, %s136
    %p138 = scmp.eq.s32.totalorder %s17, 0
    %p139 = por %p137, %p138
    %s141 = sadd.s32 %s140, 1
    %p144 = scmp.eq.s32.totalorder %s11, 31
    %p145 = scmp.ne.s32.totalorder %s140, %s142
    %p146 = scmp.eq.s32.totalorder %s11, 0
    %p147 = por %p145, %p146
    %p148 = scmp.ne.s32.totalorder %s140, %s142
    %p149 = scmp.eq.s32.totalorder %s16, 31
    %p150 = por %p148, %p149
    %p151 = scmp.ne.s32.totalorder %s142, %s143
    %p152 = scmp.eq.s32.totalorder %s16, 0
    %p153 = por %p151, %p152
    %p154 = scmp.ne.s32.totalorder %s142, %s143
    %p155 = scmp.eq.s32.totalorder %s17, 31
    %p156 = por %p154, %p155
    %p158 = scmp.ne.s32.totalorder %s143, %s157
    %p159 = scmp.eq.s32.totalorder %s17, 0
    %p160 = por %p158, %p159
    %s161 = ssub.s32 %s18, %s30
    %s162 = ssub.s32 %s19, %s26
    %s163 = sor.u32 %s161, %s162
    %p164 = scmp.eq.s32.totalorder %s163, 0
    %s166 = sadd.s32 %s165, 1
    %s167 = scalar_select %p164, %s165, %s166
    %p170 = pneg %p164
    %p171 = scmp.eq.s32.totalorder %s11, 31
    %p172 = por %p170, %p171
    %p173 = scmp.ne.s32.totalorder %s165, %s168
    %p174 = scmp.eq.s32.totalorder %s11, 0
    %p175 = por %p173, %p174
    %p176 = scmp.ne.s32.totalorder %s165, %s168
    %p177 = scmp.eq.s32.totalorder %s16, 31
    %p178 = por %p176, %p177
    %p179 = scmp.ne.s32.totalorder %s168, %s169
    %p180 = scmp.eq.s32.totalorder %s16, 0
    %p181 = por %p179, %p180
    %p182 = scmp.ne.s32.totalorder %s168, %s169
    %p183 = scmp.eq.s32.totalorder %s17, 31
    %p184 = por %p182, %p183
    %p186 = scmp.ne.s32.totalorder %s169, %s185
    %p187 = scmp.eq.s32.totalorder %s17, 0
    %p188 = por %p186, %p187
    %p189 = scmp.le.s32.totalorder 1, %s11
    %p190 = scmp.lt.s32.totalorder %s11, 33
    %p191 = pnand %p189, %p190
    %p192 = pneg %p191
    // Predicated region
    $region9: #{resconv_block_forward.4} parent=5 // pred_check
      _
    $region10: #{resconv_block_forward.4} parent=5 // pred_check_branch
      %194 = sbr.rel (%p191) target = $region12
    $region11: #{resconv_block_forward.4} parent=5 // pred_region
      %s195 = ssub.s32 %s11, 1
      // Predicated region
      $region13: #{resconv_block_forward.4} parent=11 // pred_check
        %p196 = pneg %p132
      $region14: #{resconv_block_forward.4} parent=11 // pred_check_branch
        %198 = sbr.rel (%p196) target = $region16
      $region15: #{resconv_block_forward.4} parent=11 // pred_region
        _
      $region16: #{resconv_block_forward.4} parent=11 // pred_fallthru
        _
      // Predicated region
      $region17: #{resconv_block_forward.4} parent=11 // pred_check
        %p199 = pneg %p153
      $region18: #{resconv_block_forward.4} parent=11 // pred_check_branch
        %201 = sbr.rel (%p199) target = $region20
      $region19: #{resconv_block_forward.4} parent=11 // pred_region
        _
      $region20: #{resconv_block_forward.4} parent=11 // pred_fallthru
        _
    $region12: #{resconv_block_forward.4} parent=5 // pred_fallthru
      _
    %p202 = scmp.lt.s32.totalorder %s11, 32
    // Predicated region
    $region21: #{resconv_block_forward.4} parent=5 // pred_check
      %p203 = pneg %p202
    $region22: #{resconv_block_forward.4} parent=5 // pred_check_branch
      %205 = sbr.rel (%p203) target = $region24
    $region23: #{resconv_block_forward.4} parent=5 // pred_region
      // Predicated region
      $region25: #{resconv_block_forward.4} parent=23 // pred_check
        %p206 = pneg %p45
      $region26: #{resconv_block_forward.4} parent=23 // pred_check_branch
        %208 = sbr.rel (%p206) target = $region28
      $region27: #{resconv_block_forward.4} parent=23 // pred_region
        %p209 = scmp.lt.s32.totalorder %s18, 1
        %s210 = scalar_select %p209, %s18, 1
        %p211 = scmp.lt.s32.totalorder %s19, 17
        %s212 = scalar_select %p211, %s19, 17
        %s213 = smul.addr %s212, 54
        %s214 = smul.addr %s210, 972
        %s215 = sadd.s32 %s213, %s214
        %s216 = smul.addr %s215, 8
        %s217 = scalar_lea.vmem %s0, %s216
      $region28: #{resconv_block_forward.4} parent=23 // pred_fallthru
        _
      // Predicated region
      $region29: #{resconv_block_forward.4} parent=23 // pred_check
        %p218 = pneg %p75
      $region30: #{resconv_block_forward.4} parent=23 // pred_check_branch
        %220 = sbr.rel (%p218) target = $region32
      $region31: #{resconv_block_forward.4} parent=23 // pred_region
        %s221 = sadd.s32 %s19, 1
        %p222 = scmp.lt.s32.totalorder %s18, 1
        %s223 = scalar_select %p222, %s18, 1
        %p224 = scmp.lt.s32.totalorder %s221, 17
        %s225 = scalar_select %p224, %s221, 17
        %s226 = smul.addr %s225, 54
        %s227 = smul.addr %s223, 972
        %s228 = sadd.s32 %s226, %s227
        %s229 = smul.addr %s228, 8
        %s230 = scalar_lea.vmem %s1, %s229
        %s231 = sadd.s32 %s19, 1
      $region32: #{resconv_block_forward.4} parent=23 // pred_fallthru
        _
      // Predicated region
      $region33: #{resconv_block_forward.4} parent=23 // pred_check
        %p232 = pneg %p105
      $region34: #{resconv_block_forward.4} parent=23 // pred_check_branch
        %234 = sbr.rel (%p232) target = $region36
      $region35: #{resconv_block_forward.4} parent=23 // pred_region
        %s235 = sadd.s32 %s19, 2
        %p236 = scmp.lt.s32.totalorder %s18, 1
        %s237 = scalar_select %p236, %s18, 1
        %p238 = scmp.lt.s32.totalorder %s235, 17
        %s239 = scalar_select %p238, %s235, 17
        %s240 = smul.addr %s239, 54
        %s241 = smul.addr %s237, 972
        %s242 = sadd.s32 %s240, %s241
        %s243 = smul.addr %s242, 8
        %s244 = scalar_lea.vmem %s2, %s243
        %s245 = sadd.s32 %s19, 2
      $region36: #{resconv_block_forward.4} parent=23 // pred_fallthru
        _
    $region24: #{resconv_block_forward.4} parent=5 // pred_fallthru
      _
    %p246 = scmp.le.s32.totalorder 1, %s11
    %p247 = scmp.lt.s32.totalorder %s11, 33
    %p248 = pnand %p246, %p247
    %p249 = pneg %p248
    // Predicated region
    $region37: #{resconv_block_forward.4} parent=5 // pred_check
      _
    $region38: #{resconv_block_forward.4} parent=5 // pred_check_branch
      %251 = sbr.rel (%p248) target = $region40
    $region39: #{resconv_block_forward.4} parent=5 // pred_region
      %s252 = ssub.s32 %s11, 1
      %p253 = scmp.lt.s32.totalorder %s20, 1
      %s254 = scalar_select %p253, %s20, 1
      %p255 = scmp.lt.s32.totalorder %s21, 17
      %s256 = scalar_select %p255, %s21, 17
      %s257 = smul.addr %s256, 54
      %s258 = smul.addr %s254, 972
      %s259 = sadd.s32 %s257, %s258
      %s260 = smul.addr %s259, 8
      %s261 = scalar_lea.vmem %s0, %s260
      %p262 = pneg %p51
      %p263 = pneg %p48
      %s264 = sadd.s32 %s21, 1
      %p265 = scmp.lt.s32.totalorder %s20, 1
      %s266 = scalar_select %p265, %s20, 1
      %p267 = scmp.lt.s32.totalorder %s264, 17
      %s268 = scalar_select %p267, %s264, 17
      %s269 = smul.addr %s268, 54
      %s270 = smul.addr %s266, 972
      %s271 = sadd.s32 %s269, %s270
      %s272 = smul.addr %s271, 8
      %s273 = scalar_lea.vmem %s1, %s272
      %p274 = pneg %p81
      %p275 = pneg %p78
      %s276 = sadd.s32 %s21, 2
      %p277 = scmp.lt.s32.totalorder %s20, 1
      %s278 = scalar_select %p277, %s20, 1
      %p279 = scmp.lt.s32.totalorder %s276, 17
      %s280 = scalar_select %p279, %s276, 17
      %s281 = smul.addr %s280, 54
      %s282 = smul.addr %s278, 972
      %s283 = sadd.s32 %s281, %s282
      %s284 = smul.addr %s283, 8
      %s285 = scalar_lea.vmem %s2, %s284
      %p286 = pneg %p111
      %p287 = pneg %p108
      %p288 = pneg %p132
      %p289 = pneg %p129
      %p290 = pneg %p153
      %p291 = pneg %p150
      %p292 = pneg %p181
      %p293 = pneg %p178
      %p294 = scmp.lt.s32.totalorder %s20, 1
      %s295 = scalar_select %p294, %s20, 1
      %p296 = scmp.lt.s32.totalorder %s21, 15
      %s297 = scalar_select %p296, %s21, 15
      %s298 = smul.addr %s297, 32
      %s299 = smul.addr %s295, 512
      %s300 = sadd.s32 %s298, %s299
      %s301 = smul.addr %s300, 8
      %s302 = scalar_lea.vmem %s5, %s301
      %p303 = scmp.lt.s32.totalorder %s20, 1
      %s304 = scalar_select %p303, %s20, 1
      %p305 = scmp.lt.s32.totalorder %s21, 17
      %s306 = scalar_select %p305, %s21, 17
      %s307 = smul.addr %s306, 54
      %s308 = smul.addr %s304, 972
      %s309 = sadd.s32 %s307, %s308
      %s310 = smul.addr %s309, 8
      %s311 = scalar_lea.vmem %s0, %s310
      %s312 = sadd.s32 %s21, 1
      %p313 = scmp.lt.s32.totalorder %s20, 1
      %s314 = scalar_select %p313, %s20, 1
      %p315 = scmp.lt.s32.totalorder %s312, 17
      %s316 = scalar_select %p315, %s312, 17
      %s317 = smul.addr %s316, 54
      %s318 = smul.addr %s314, 972
      %s319 = sadd.s32 %s317, %s318
      %s320 = smul.addr %s319, 8
      %s321 = scalar_lea.vmem %s1, %s320
      %s322 = sadd.s32 %s21, 1
      %s323 = sadd.s32 %s21, 2
      %p324 = scmp.lt.s32.totalorder %s20, 1
      %s325 = scalar_select %p324, %s20, 1
      %p326 = scmp.lt.s32.totalorder %s323, 17
      %s327 = scalar_select %p326, %s323, 17
      %s328 = smul.addr %s327, 54
      %s329 = smul.addr %s325, 972
      %s330 = sadd.s32 %s328, %s329
      %s331 = smul.addr %s330, 8
      %s332 = scalar_lea.vmem %s2, %s331
      %s333 = sadd.s32 %s21, 2
      %p334 = scmp.lt.s32.totalorder %s20, 1
      %s335 = scalar_select %p334, %s20, 1
      %p336 = scmp.lt.s32.totalorder %s21, 15
      %s337 = scalar_select %p336, %s21, 15
      %s338 = smul.addr %s337, 32
      %s339 = smul.addr %s335, 512
      %s340 = sadd.s32 %s338, %s339
      %s341 = smul.addr %s340, 8
      %s342 = scalar_lea.vmem %s5, %s341
      %v344 = vld [vmem:[%s3] sm:$0xff]
      %v345 = vld [vmem:[%s3 + $0x8] sm:$0xff]
      %v346 = vld [vmem:[%s3 + $0x10] sm:$0xff]
      %v347 = vld [vmem:[%s3 + $0x18] sm:$0xff]
      %v348 = vld [vmem:[%s3 + $0x20] sm:$0xff]
      %v349 = vld [vmem:[%s3 + $0x28] sm:$0xff]
      %v350 = vld [vmem:[%s3 + $0x30] sm:$0xff]
      %v351 = vld [vmem:[%s3 + $0x38] sm:$0xff]
      %v352 = vld [vmem:[%s3 + $0x40] sm:$0xff]
      %v353 = vld [vmem:[%s3 + $0x48] sm:$0xff]
      %v354 = vld [vmem:[%s3 + $0x50] sm:$0xff]
      %v355 = vld [vmem:[%s3 + $0x58] sm:$0xff]
      %v356 = vld [vmem:[%s3 + $0x60] sm:$0xff]
      %v357 = vld [vmem:[%s3 + $0x68] sm:$0xff]
      %v358 = vld [vmem:[%s3 + $0x70] sm:$0xff]
      %v359 = vld [vmem:[%s3 + $0x78] sm:$0xff]
      %v360 = vld [vmem:[%s3 + $0x80] sm:$0xff]
      %v361 = vld [vmem:[%s3 + $0x88] sm:$0xff]
      %v362 = vld [vmem:[%s3 + $0x90] sm:$0xff]
      %v363 = vld [vmem:[%s3 + $0x98] sm:$0xff]
      %v364 = vld [vmem:[%s3 + $0xa0] sm:$0xff]
      %v365 = vld [vmem:[%s3 + $0xa8] sm:$0xff]
      %v366 = vld [vmem:[%s3 + $0xb0] sm:$0xff]
      %v367 = vld [vmem:[%s3 + $0xb8] sm:$0xff]
      %v368 = vld [vmem:[%s3 + $0xc0] sm:$0xff]
      %v369 = vld [vmem:[%s3 + $0xc8] sm:$0xff]
      %v370 = vld [vmem:[%s3 + $0xd0] sm:$0xff]
      %v371 = vld [vmem:[%s311] sm:$0xff]
      %v372 = vld [vmem:[%s311 + $0x8] sm:$0xff]
      %v373 = vld [vmem:[%s311 + $0x10] sm:$0x3]
      %v374 = vld [vmem:[%s311 + $0x18] sm:$0xff]
      %v375 = vld [vmem:[%s311 + $0x20] sm:$0xff]
      %v376 = vld [vmem:[%s311 + $0x28] sm:$0x3]
      %v377 = vld [vmem:[%s311 + $0x30] sm:$0xff]
      %v378 = vld [vmem:[%s311 + $0x38] sm:$0xff]
      %v379 = vld [vmem:[%s311 + $0x40] sm:$0x3]
      %v380 = vld [vmem:[%s311 + $0x48] sm:$0xff]
      %v381 = vld [vmem:[%s311 + $0x50] sm:$0xff]
      %v382 = vld [vmem:[%s311 + $0x58] sm:$0x3]
      %v383 = vld [vmem:[%s311 + $0x60] sm:$0xff]
      %v384 = vld [vmem:[%s311 + $0x68] sm:$0xff]
      %v385 = vld [vmem:[%s311 + $0x70] sm:$0x3]
      %v386 = vld [vmem:[%s311 + $0x78] sm:$0xff]
      %v387 = vld [vmem:[%s311 + $0x80] sm:$0xff]
      %v388 = vld [vmem:[%s311 + $0x88] sm:$0x3]
      %v389 = vld [vmem:[%s311 + $0x90] sm:$0xff]
      %v390 = vld [vmem:[%s311 + $0x98] sm:$0xff]
      %v391 = vld [vmem:[%s311 + $0xa0] sm:$0x3]
      %v392 = vld [vmem:[%s311 + $0xa8] sm:$0xff]
      %v393 = vld [vmem:[%s311 + $0xb0] sm:$0xff]
      %v394 = vld [vmem:[%s311 + $0xb8] sm:$0x3]
      %v395 = vld [vmem:[%s311 + $0xc0] sm:$0xff]
      %v396 = vld [vmem:[%s311 + $0xc8] sm:$0xff]
      %v397 = vld [vmem:[%s311 + $0xd0] sm:$0x3]
      %v398 = vld [vmem:[%s311 + $0xd8] sm:$0xff]
      %v399 = vld [vmem:[%s311 + $0xe0] sm:$0xff]
      %v400 = vld [vmem:[%s311 + $0xe8] sm:$0x3]
      %v401 = vld [vmem:[%s311 + $0xf0] sm:$0xff]
      %v402 = vld [vmem:[%s311 + $0xf8] sm:$0xff]
      %v403 = vld [vmem:[%s311 + $0x100] sm:$0x3]
      %v404 = vld [vmem:[%s311 + $0x108] sm:$0xff]
      %v405 = vld [vmem:[%s311 + $0x110] sm:$0xff]
      %v406 = vld [vmem:[%s311 + $0x118] sm:$0x3]
      %v407 = vld [vmem:[%s311 + $0x120] sm:$0xff]
      %v408 = vld [vmem:[%s311 + $0x128] sm:$0xff]
      %v409 = vld [vmem:[%s311 + $0x130] sm:$0x3]
      %v410 = vld [vmem:[%s311 + $0x138] sm:$0xff]
      %v411 = vld [vmem:[%s311 + $0x140] sm:$0xff]
      %v412 = vld [vmem:[%s311 + $0x148] sm:$0x3]
      %v413 = vld [vmem:[%s311 + $0x150] sm:$0xff]
      %v414 = vld [vmem:[%s311 + $0x158] sm:$0xff]
      %v415 = vld [vmem:[%s311 + $0x160] sm:$0x3]
      %v416 = vld [vmem:[%s311 + $0x168] sm:$0xff]
      %v417 = vld [vmem:[%s311 + $0x170] sm:$0xff]
      %v418 = vld [vmem:[%s311 + $0x178] sm:$0x3]
      %v419 = vld [vmem:[%s311 + $0x180] sm:$0xff]
      %v420 = vld [vmem:[%s311 + $0x188] sm:$0xff]
      %v421 = vld [vmem:[%s311 + $0x190] sm:$0x3]
      %v422 = vld [vmem:[%s311 + $0x198] sm:$0xff]
      %v423 = vld [vmem:[%s311 + $0x1a0] sm:$0xff]
      %v424 = vld [vmem:[%s311 + $0x1a8] sm:$0x3]
      %v425 = vpack.c.bf16 %v372, %v371
      %v426 = vpack.c.bf16 %v375, %v374
      %v427 = vpack.c.bf16 %v378, %v377
      %v428 = vpack.c.bf16 %v381, %v380
      %v429 = vpack.c.bf16 %v384, %v383
      %v430 = vpack.c.bf16 %v387, %v386
      %v431 = vpack.c.bf16 %v390, %v389
      %v432 = vpack.c.bf16 %v393, %v392
      %v433 = vpack.c.bf16 %v396, %v395
      %v434 = vpack.c.bf16 %v399, %v398
      %v435 = vpack.c.bf16 %v402, %v401
      %v436 = vpack.c.bf16 %v405, %v404
      %v437 = vpack.c.bf16 %v408, %v407
      %v438 = vpack.c.bf16 %v411, %v410
      %v439 = vpack.c.bf16 %v414, %v413
      %v440 = vpack.c.bf16 %v417, %v416
      %v441 = vpack.c.bf16 %v344, %v344
      %vm490 = vcmask 1046528
      %v491 = vrot.slane %v371, 1
      %v492 = vrot.slane %v372, 1
      %v493 = vsel %vm490, %v491, %v492
      %v494 = vrot.slane %v373, 1
      %v495 = vsel %vm490, %v492, %v494
      %v496 = vrot.slane %v374, 1
      %v497 = vrot.slane %v375, 1
      %v498 = vsel %vm490, %v496, %v497
      %v499 = vrot.slane %v376, 1
      %v500 = vsel %vm490, %v497, %v499
      %v501 = vrot.slane %v377, 1
      %v502 = vrot.slane %v378, 1
      %v503 = vsel %vm490, %v501, %v502
      %v504 = vrot.slane %v379, 1
      %v505 = vsel %vm490, %v502, %v504
      %v506 = vrot.slane %v380, 1
      %v507 = vrot.slane %v381, 1
      %v508 = vsel %vm490, %v506, %v507
      %v509 = vrot.slane %v382, 1
      %v510 = vsel %vm490, %v507, %v509
      %v511 = vrot.slane %v383, 1
      %v512 = vrot.slane %v384, 1
      %v513 = vsel %vm490, %v511, %v512
      %v514 = vrot.slane %v385, 1
      %v515 = vsel %vm490, %v512, %v514
      %v516 = vrot.slane %v386, 1
      %v517 = vrot.slane %v387, 1
      %v518 = vsel %vm490, %v516, %v517
      %v519 = vrot.slane %v388, 1
      %v520 = vsel %vm490, %v517, %v519
      %v521 = vrot.slane %v389, 1
      %v522 = vrot.slane %v390, 1
      %v523 = vsel %vm490, %v521, %v522
      %v524 = vrot.slane %v391, 1
      %v525 = vsel %vm490, %v522, %v524
      %v526 = vrot.slane %v392, 1
      %v527 = vrot.slane %v393, 1
      %v528 = vsel %vm490, %v526, %v527
      %v529 = vrot.slane %v394, 1
      %v530 = vsel %vm490, %v527, %v529
      %v531 = vrot.slane %v395, 1
      %v532 = vrot.slane %v396, 1
      %v533 = vsel %vm490, %v531, %v532
      %v534 = vrot.slane %v397, 1
      %v535 = vsel %vm490, %v532, %v534
      %v536 = vrot.slane %v398, 1
      %v537 = vrot.slane %v399, 1
      %v538 = vsel %vm490, %v536, %v537
      %v539 = vrot.slane %v400, 1
      %v540 = vsel %vm490, %v537, %v539
      %v541 = vrot.slane %v401, 1
      %v542 = vrot.slane %v402, 1
      %v543 = vsel %vm490, %v541, %v542
      %v544 = vrot.slane %v403, 1
      %v545 = vsel %vm490, %v542, %v544
      %v546 = vrot.slane %v404, 1
      %v547 = vrot.slane %v405, 1
      %v548 = vsel %vm490, %v546, %v547
      %v549 = vrot.slane %v406, 1
      %v550 = vsel %vm490, %v547, %v549
      %v551 = vrot.slane %v407, 1
      %v552 = vrot.slane %v408, 1
      %v553 = vsel %vm490, %v551, %v552
      %v554 = vrot.slane %v409, 1
      %v555 = vsel %vm490, %v552, %v554
      %v556 = vrot.slane %v410, 1
      %v557 = vrot.slane %v411, 1
      %v558 = vsel %vm490, %v556, %v557
      %v559 = vrot.slane %v412, 1
      %v560 = vsel %vm490, %v557, %v559
      %v561 = vrot.slane %v413, 1
      %v562 = vrot.slane %v414, 1
      %v563 = vsel %vm490, %v561, %v562
      %v564 = vrot.slane %v415, 1
      %v565 = vsel %vm490, %v562, %v564
      %v566 = vrot.slane %v416, 1
      %v567 = vrot.slane %v417, 1
      %v568 = vsel %vm490, %v566, %v567
      %v569 = vrot.slane %v418, 1
      %v570 = vsel %vm490, %v567, %v569
      %v603 = vpack.c.bf16 %v495, %v493
      %v604 = vpack.c.bf16 %v500, %v498
      %v605 = vpack.c.bf16 %v505, %v503
      %v606 = vpack.c.bf16 %v510, %v508
      %v607 = vpack.c.bf16 %v515, %v513
      %v608 = vpack.c.bf16 %v520, %v518
      %v609 = vpack.c.bf16 %v525, %v523
      %v610 = vpack.c.bf16 %v530, %v528
      %v611 = vpack.c.bf16 %v535, %v533
      %v612 = vpack.c.bf16 %v540, %v538
      %v613 = vpack.c.bf16 %v545, %v543
      %v614 = vpack.c.bf16 %v550, %v548
      %v615 = vpack.c.bf16 %v555, %v553
      %v616 = vpack.c.bf16 %v560, %v558
      %v617 = vpack.c.bf16 %v565, %v563
      %v618 = vpack.c.bf16 %v570, %v568
      %v619 = vpack.c.bf16 %v345, %v345
      %vm620 = vcmask 64512
      %v622 = vsel %vm620, %v603, 0
      %v625 = vsel %vm620, %v604, 0
      %v628 = vsel %vm620, %v605, 0
      %v631 = vsel %vm620, %v606, 0
      %v634 = vsel %vm620, %v607, 0
      %v637 = vsel %vm620, %v608, 0
      %v640 = vsel %vm620, %v609, 0
      %v643 = vsel %vm620, %v610, 0
      %v646 = vsel %vm620, %v611, 0
      %v649 = vsel %vm620, %v612, 0
      %v652 = vsel %vm620, %v613, 0
      %v655 = vsel %vm620, %v614, 0
      %v658 = vsel %vm620, %v615, 0
      %v661 = vsel %vm620, %v616, 0
      %v664 = vsel %vm620, %v617, 0
      %v667 = vsel %vm620, %v618, 0
      %vm669 = vcmask 1043456
      %v671 = vsel %vm669, %v619, 0
      %673 = vmatpush.bf16.msra.mxu0 0
      %674 = vmatpush.bf16.msra.mxu0 0
      %675 = vmatpush.bf16.msra.mxu0 0
      %676 = vmatpush.bf16.msra.mxu0 0
      %677 = vmatpush.bf16.msra.mxu0 0
      %678 = vmatpush.bf16.msra.mxu0 0
      %679 = vmatpush.bf16.msra.mxu0 0
      %680 = vmatpush.bf16.msra.mxu0 %v671
      %681 = vmatmul.bf16.gmra.mxu0 %v622
      %v682 = vpop.f32.mrf.mxu0
      %v683 = vadd.f32 0.0, %v682
      %v684 = vpop.f32.mrf.mxu0
      %v685 = vadd.f32 0.0, %v684
      %686 = vmatmul.bf16.gmra.mxu0 %v625
      %v687 = vpop.f32.mrf.mxu0
      %v688 = vadd.f32 0.0, %v687
      %v689 = vpop.f32.mrf.mxu0
      %v690 = vadd.f32 0.0, %v689
      %691 = vmatmul.bf16.gmra.mxu0 %v628
      %v692 = vpop.f32.mrf.mxu0
      %v693 = vadd.f32 0.0, %v692
      %v694 = vpop.f32.mrf.mxu0
      %v695 = vadd.f32 0.0, %v694
      %696 = vmatmul.bf16.gmra.mxu0 %v631
      %v697 = vpop.f32.mrf.mxu0
      %v698 = vadd.f32 0.0, %v697
      %v699 = vpop.f32.mrf.mxu0
      %v700 = vadd.f32 0.0, %v699
      %701 = vmatmul.bf16.gmra.mxu0 %v634
      %v702 = vpop.f32.mrf.mxu0
      %v703 = vadd.f32 0.0, %v702
      %v704 = vpop.f32.mrf.mxu0
      %v705 = vadd.f32 0.0, %v704
      %706 = vmatmul.bf16.gmra.mxu0 %v637
      %v707 = vpop.f32.mrf.mxu0
      %v708 = vadd.f32 0.0, %v707
      %v709 = vpop.f32.mrf.mxu0
      %v710 = vadd.f32 0.0, %v709
      %711 = vmatmul.bf16.gmra.mxu0 %v640
      %v712 = vpop.f32.mrf.mxu0
      %v713 = vadd.f32 0.0, %v712
      %v714 = vpop.f32.mrf.mxu0
      %v715 = vadd.f32 0.0, %v714
      %716 = vmatmul.bf16.gmra.mxu0 %v643
      %v717 = vpop.f32.mrf.mxu0
      %v718 = vadd.f32 0.0, %v717
      %v719 = vpop.f32.mrf.mxu0
      %v720 = vadd.f32 0.0, %v719
      %721 = vmatmul.bf16.gmra.mxu0 %v646
      %v722 = vpop.f32.mrf.mxu0
      %v723 = vadd.f32 0.0, %v722
      %v724 = vpop.f32.mrf.mxu0
      %v725 = vadd.f32 0.0, %v724
      %726 = vmatmul.bf16.gmra.mxu0 %v649
      %v727 = vpop.f32.mrf.mxu0
      %v728 = vadd.f32 0.0, %v727
      %v729 = vpop.f32.mrf.mxu0
      %v730 = vadd.f32 0.0, %v729
      %731 = vmatmul.bf16.gmra.mxu0 %v652
      %v732 = vpop.f32.mrf.mxu0
      %v733 = vadd.f32 0.0, %v732
      %v734 = vpop.f32.mrf.mxu0
      %v735 = vadd.f32 0.0, %v734
      %736 = vmatmul.bf16.gmra.mxu0 %v655
      %v737 = vpop.f32.mrf.mxu0
      %v738 = vadd.f32 0.0, %v737
      %v739 = vpop.f32.mrf.mxu0
      %v740 = vadd.f32 0.0, %v739
      %741 = vmatmul.bf16.gmra.mxu0 %v658
      %v742 = vpop.f32.mrf.mxu0
      %v743 = vadd.f32 0.0, %v742
      %v744 = vpop.f32.mrf.mxu0
      %v745 = vadd.f32 0.0, %v744
      %746 = vmatmul.bf16.gmra.mxu0 %v661
      %v747 = vpop.f32.mrf.mxu0
      %v748 = vadd.f32 0.0, %v747
      %v749 = vpop.f32.mrf.mxu0
      %v750 = vadd.f32 0.0, %v749
      %751 = vmatmul.bf16.gmra.mxu0 %v664
      %v752 = vpop.f32.mrf.mxu0
      %v753 = vadd.f32 0.0, %v752
      %v754 = vpop.f32.mrf.mxu0
      %v755 = vadd.f32 0.0, %v754
      %756 = vmatmul.bf16.gmra.mxu0 %v667
      %v757 = vpop.f32.mrf.mxu0
      %v758 = vadd.f32 0.0, %v757
      %v759 = vpop.f32.mrf.mxu0
      %v760 = vadd.f32 0.0, %v759
      %761 = vdwg.mxu0
      %v763 = vsel %vm620, %v425, 0
      %v766 = vsel %vm620, %v426, 0
      %v769 = vsel %vm620, %v427, 0
      %v772 = vsel %vm620, %v428, 0
      %v775 = vsel %vm620, %v429, 0
      %v778 = vsel %vm620, %v430, 0
      %v781 = vsel %vm620, %v431, 0
      %v784 = vsel %vm620, %v432, 0
      %v787 = vsel %vm620, %v433, 0
      %v790 = vsel %vm620, %v434, 0
      %v793 = vsel %vm620, %v435, 0
      %v796 = vsel %vm620, %v436, 0
      %v799 = vsel %vm620, %v437, 0
      %v802 = vsel %vm620, %v438, 0
      %v805 = vsel %vm620, %v439, 0
      %v808 = vsel %vm620, %v440, 0
      %v811 = vsel %vm669, %v441, 0
      %813 = vmatpush.bf16.msra.mxu0 0
      %814 = vmatpush.bf16.msra.mxu0 0
      %815 = vmatpush.bf16.msra.mxu0 0
      %816 = vmatpush.bf16.msra.mxu0 0
      %817 = vmatpush.bf16.msra.mxu0 0
      %818 = vmatpush.bf16.msra.mxu0 0
      %819 = vmatpush.bf16.msra.mxu0 0
      %820 = vmatpush.bf16.msra.mxu0 %v811
      %821 = vmatmul.bf16.gmra.mxu0 %v763
      %v822 = vpop.f32.mrf.mxu0
      %v823 = vadd.f32 %v683, %v822
      %v824 = vpop.f32.mrf.mxu0
      %v825 = vadd.f32 %v685, %v824
      %826 = vmatmul.bf16.gmra.mxu0 %v766
      %v827 = vpop.f32.mrf.mxu0
      %v828 = vadd.f32 %v688, %v827
      %v829 = vpop.f32.mrf.mxu0
      %v830 = vadd.f32 %v690, %v829
      %831 = vmatmul.bf16.gmra.mxu0 %v769
      %v832 = vpop.f32.mrf.mxu0
      %v833 = vadd.f32 %v693, %v832
      %v834 = vpop.f32.mrf.mxu0
      %v835 = vadd.f32 %v695, %v834
      %836 = vmatmul.bf16.gmra.mxu0 %v772
      %v837 = vpop.f32.mrf.mxu0
      %v838 = vadd.f32 %v698, %v837
      %v839 = vpop.f32.mrf.mxu0
      %v840 = vadd.f32 %v700, %v839
      %841 = vmatmul.bf16.gmra.mxu0 %v775
      %v842 = vpop.f32.mrf.mxu0
      %v843 = vadd.f32 %v703, %v842
      %v844 = vpop.f32.mrf.mxu0
      %v845 = vadd.f32 %v705, %v844
      %846 = vmatmul.bf16.gmra.mxu0 %v778
      %v847 = vpop.f32.mrf.mxu0
      %v848 = vadd.f32 %v708, %v847
      %v849 = vpop.f32.mrf.mxu0
      %v850 = vadd.f32 %v710, %v849
      %851 = vmatmul.bf16.gmra.mxu0 %v781
      %v852 = vpop.f32.mrf.mxu0
      %v853 = vadd.f32 %v713, %v852
      %v854 = vpop.f32.mrf.mxu0
      %v855 = vadd.f32 %v715, %v854
      %856 = vmatmul.bf16.gmra.mxu0 %v784
      %v857 = vpop.f32.mrf.mxu0
      %v858 = vadd.f32 %v718, %v857
      %v859 = vpop.f32.mrf.mxu0
      %v860 = vadd.f32 %v720, %v859
      %861 = vmatmul.bf16.gmra.mxu0 %v787
      %v862 = vpop.f32.mrf.mxu0
      %v863 = vadd.f32 %v723, %v862
      %v864 = vpop.f32.mrf.mxu0
      %v865 = vadd.f32 %v725, %v864
      %866 = vmatmul.bf16.gmra.mxu0 %v790
      %v867 = vpop.f32.mrf.mxu0
      %v868 = vadd.f32 %v728, %v867
      %v869 = vpop.f32.mrf.mxu0
      %v870 = vadd.f32 %v730, %v869
      %871 = vmatmul.bf16.gmra.mxu0 %v793
      %v872 = vpop.f32.mrf.mxu0
      %v873 = vadd.f32 %v733, %v872
      %v874 = vpop.f32.mrf.mxu0
      %v875 = vadd.f32 %v735, %v874
      %876 = vmatmul.bf16.gmra.mxu0 %v796
      %v877 = vpop.f32.mrf.mxu0
      %v878 = vadd.f32 %v738, %v877
      %v879 = vpop.f32.mrf.mxu0
      %v880 = vadd.f32 %v740, %v879
      %881 = vmatmul.bf16.gmra.mxu0 %v799
      %v882 = vpop.f32.mrf.mxu0
      %v883 = vadd.f32 %v743, %v882
      %v884 = vpop.f32.mrf.mxu0
      %v885 = vadd.f32 %v745, %v884
      %886 = vmatmul.bf16.gmra.mxu0 %v802
      %v887 = vpop.f32.mrf.mxu0
      %v888 = vadd.f32 %v748, %v887
      %v889 = vpop.f32.mrf.mxu0
      %v890 = vadd.f32 %v750, %v889
      %891 = vmatmul.bf16.gmra.mxu0 %v805
      %v892 = vpop.f32.mrf.mxu0
      %v893 = vadd.f32 %v753, %v892
      %v894 = vpop.f32.mrf.mxu0
      %v895 = vadd.f32 %v755, %v894
      %896 = vmatmul.bf16.gmra.mxu0 %v808
      %v897 = vpop.f32.mrf.mxu0
      %v898 = vadd.f32 %v758, %v897
      %v899 = vpop.f32.mrf.mxu0
      %v900 = vadd.f32 %v760, %v899
      %901 = vdwg.mxu0
      %vm902 = vcmask 1045504
      %v903 = vrot.slane %v371, 2
      %v904 = vrot.slane %v372, 2
      %v905 = vsel %vm902, %v903, %v904
      %v906 = vrot.slane %v373, 2
      %v907 = vsel %vm902, %v904, %v906
      %v908 = vrot.slane %v374, 2
      %v909 = vrot.slane %v375, 2
      %v910 = vsel %vm902, %v908, %v909
      %v911 = vrot.slane %v376, 2
      %v912 = vsel %vm902, %v909, %v911
      %v913 = vrot.slane %v377, 2
      %v914 = vrot.slane %v378, 2
      %v915 = vsel %vm902, %v913, %v914
      %v916 = vrot.slane %v379, 2
      %v917 = vsel %vm902, %v914, %v916
      %v918 = vrot.slane %v380, 2
      %v919 = vrot.slane %v381, 2
      %v920 = vsel %vm902, %v918, %v919
      %v921 = vrot.slane %v382, 2
      %v922 = vsel %vm902, %v919, %v921
      %v923 = vrot.slane %v383, 2
      %v924 = vrot.slane %v384, 2
      %v925 = vsel %vm902, %v923, %v924
      %v926 = vrot.slane %v385, 2
      %v927 = vsel %vm902, %v924, %v926
      %v928 = vrot.slane %v386, 2
      %v929 = vrot.slane %v387, 2
      %v930 = vsel %vm902, %v928, %v929
      %v931 = vrot.slane %v388, 2
      %v932 = vsel %vm902, %v929, %v931
      %v933 = vrot.slane %v389, 2
      %v934 = vrot.slane %v390, 2
      %v935 = vsel %vm902, %v933, %v934
      %v936 = vrot.slane %v391, 2
      %v937 = vsel %vm902, %v934, %v936
      %v938 = vrot.slane %v392, 2
      %v939 = vrot.slane %v393, 2
      %v940 = vsel %vm902, %v938, %v939
      %v941 = vrot.slane %v394, 2
      %v942 = vsel %vm902, %v939, %v941
      %v943 = vrot.slane %v395, 2
      %v944 = vrot.slane %v396, 2
      %v945 = vsel %vm902, %v943, %v944
      %v946 = vrot.slane %v397, 2
      %v947 = vsel %vm902, %v944, %v946
      %v948 = vrot.slane %v398, 2
      %v949 = vrot.slane %v399, 2
      %v950 = vsel %vm902, %v948, %v949
      %v951 = vrot.slane %v400, 2
      %v952 = vsel %vm902, %v949, %v951
      %v953 = vrot.slane %v401, 2
      %v954 = vrot.slane %v402, 2
      %v955 = vsel %vm902, %v953, %v954
      %v956 = vrot.slane %v403, 2
      %v957 = vsel %vm902, %v954, %v956
      %v958 = vrot.slane %v404, 2
      %v959 = vrot.slane %v405, 2
      %v960 = vsel %vm902, %v958, %v959
      %v961 = vrot.slane %v406, 2
      %v962 = vsel %vm902, %v959, %v961
      %v963 = vrot.slane %v407, 2
      %v964 = vrot.slane %v408, 2
      %v965 = vsel %vm902, %v963, %v964
      %v966 = vrot.slane %v409, 2
      %v967 = vsel %vm902, %v964, %v966
      %v968 = vrot.slane %v410, 2
      %v969 = vrot.slane %v411, 2
      %v970 = vsel %vm902, %v968, %v969
      %v971 = vrot.slane %v412, 2
      %v972 = vsel %vm902, %v969, %v971
      %v973 = vrot.slane %v413, 2
      %v974 = vrot.slane %v414, 2
      %v975 = vsel %vm902, %v973, %v974
      %v976 = vrot.slane %v415, 2
      %v977 = vsel %vm902, %v974, %v976
      %v978 = vrot.slane %v416, 2
      %v979 = vrot.slane %v417, 2
      %v980 = vsel %vm902, %v978, %v979
      %v981 = vrot.slane %v418, 2
      %v982 = vsel %vm902, %v979, %v981
      %v1015 = vpack.c.bf16 %v907, %v905
      %v1016 = vpack.c.bf16 %v912, %v910
      %v1017 = vpack.c.bf16 %v917, %v915
      %v1018 = vpack.c.bf16 %v922, %v920
      %v1019 = vpack.c.bf16 %v927, %v925
      %v1020 = vpack.c.bf16 %v932, %v930
      %v1021 = vpack.c.bf16 %v937, %v935
      %v1022 = vpack.c.bf16 %v942, %v940
      %v1023 = vpack.c.bf16 %v947, %v945
      %v1024 = vpack.c.bf16 %v952, %v950
      %v1025 = vpack.c.bf16 %v957, %v955
      %v1026 = vpack.c.bf16 %v962, %v960
      %v1027 = vpack.c.bf16 %v967, %v965
      %v1028 = vpack.c.bf16 %v972, %v970
      %v1029 = vpack.c.bf16 %v977, %v975
      %v1030 = vpack.c.bf16 %v982, %v980
      %v1031 = vpack.c.bf16 %v346, %v346
      %v1033 = vsel %vm620, %v1015, 0
      %v1036 = vsel %vm620, %v1016, 0
      %v1039 = vsel %vm620, %v1017, 0
      %v1042 = vsel %vm620, %v1018, 0
      %v1045 = vsel %vm620, %v1019, 0
      %v1048 = vsel %vm620, %v1020, 0
      %v1051 = vsel %vm620, %v1021, 0
      %v1054 = vsel %vm620, %v1022, 0
      %v1057 = vsel %vm620, %v1023, 0
      %v1060 = vsel %vm620, %v1024, 0
      %v1063 = vsel %vm620, %v1025, 0
      %v1066 = vsel %vm620, %v1026, 0
      %v1069 = vsel %vm620, %v1027, 0
      %v1072 = vsel %vm620, %v1028, 0
      %v1075 = vsel %vm620, %v1029, 0
      %v1078 = vsel %vm620, %v1030, 0
      %v1081 = vsel %vm669, %v1031, 0
      %1083 = vmatpush.bf16.msra.mxu0 0
      %1084 = vmatpush.bf16.msra.mxu0 0
      %1085 = vmatpush.bf16.msra.mxu0 0
      %1086 = vmatpush.bf16.msra.mxu0 0
      %1087 = vmatpush.bf16.msra.mxu0 0
      %1088 = vmatpush.bf16.msra.mxu0 0
      %1089 = vmatpush.bf16.msra.mxu0 0
      %1090 = vmatpush.bf16.msra.mxu0 %v1081
      %1091 = vmatmul.bf16.gmra.mxu0 %v1033
      %v1092 = vpop.f32.mrf.mxu0
      %v1093 = vadd.f32 0.0, %v1092
      %v1094 = vpop.f32.mrf.mxu0
      %v1095 = vadd.f32 0.0, %v1094
      %1096 = vmatmul.bf16.gmra.mxu0 %v1036
      %v1097 = vpop.f32.mrf.mxu0
      %v1098 = vadd.f32 0.0, %v1097
      %v1099 = vpop.f32.mrf.mxu0
      %v1100 = vadd.f32 0.0, %v1099
      %1101 = vmatmul.bf16.gmra.mxu0 %v1039
      %v1102 = vpop.f32.mrf.mxu0
      %v1103 = vadd.f32 0.0, %v1102
      %v1104 = vpop.f32.mrf.mxu0
      %v1105 = vadd.f32 0.0, %v1104
      %1106 = vmatmul.bf16.gmra.mxu0 %v1042
      %v1107 = vpop.f32.mrf.mxu0
      %v1108 = vadd.f32 0.0, %v1107
      %v1109 = vpop.f32.mrf.mxu0
      %v1110 = vadd.f32 0.0, %v1109
      %1111 = vmatmul.bf16.gmra.mxu0 %v1045
      %v1112 = vpop.f32.mrf.mxu0
      %v1113 = vadd.f32 0.0, %v1112
      %v1114 = vpop.f32.mrf.mxu0
      %v1115 = vadd.f32 0.0, %v1114
      %1116 = vmatmul.bf16.gmra.mxu0 %v1048
      %v1117 = vpop.f32.mrf.mxu0
      %v1118 = vadd.f32 0.0, %v1117
      %v1119 = vpop.f32.mrf.mxu0
      %v1120 = vadd.f32 0.0, %v1119
      %1121 = vmatmul.bf16.gmra.mxu0 %v1051
      %v1122 = vpop.f32.mrf.mxu0
      %v1123 = vadd.f32 0.0, %v1122
      %v1124 = vpop.f32.mrf.mxu0
      %v1125 = vadd.f32 0.0, %v1124
      %1126 = vmatmul.bf16.gmra.mxu0 %v1054
      %v1127 = vpop.f32.mrf.mxu0
      %v1128 = vadd.f32 0.0, %v1127
      %v1129 = vpop.f32.mrf.mxu0
      %v1130 = vadd.f32 0.0, %v1129
      %1131 = vmatmul.bf16.gmra.mxu0 %v1057
      %v1132 = vpop.f32.mrf.mxu0
      %v1133 = vadd.f32 0.0, %v1132
      %v1134 = vpop.f32.mrf.mxu0
      %v1135 = vadd.f32 0.0, %v1134
      %1136 = vmatmul.bf16.gmra.mxu0 %v1060
      %v1137 = vpop.f32.mrf.mxu0
      %v1138 = vadd.f32 0.0, %v1137
      %v1139 = vpop.f32.mrf.mxu0
      %v1140 = vadd.f32 0.0, %v1139
      %1141 = vmatmul.bf16.gmra.mxu0 %v1063
      %v1142 = vpop.f32.mrf.mxu0
      %v1143 = vadd.f32 0.0, %v1142
      %v1144 = vpop.f32.mrf.mxu0
      %v1145 = vadd.f32 0.0, %v1144
      %1146 = vmatmul.bf16.gmra.mxu0 %v1066
      %v1147 = vpop.f32.mrf.mxu0
      %v1148 = vadd.f32 0.0, %v1147
      %v1149 = vpop.f32.mrf.mxu0
      %v1150 = vadd.f32 0.0, %v1149
      %1151 = vmatmul.bf16.gmra.mxu0 %v1069
      %v1152 = vpop.f32.mrf.mxu0
      %v1153 = vadd.f32 0.0, %v1152
      %v1154 = vpop.f32.mrf.mxu0
      %v1155 = vadd.f32 0.0, %v1154
      %1156 = vmatmul.bf16.gmra.mxu0 %v1072
      %v1157 = vpop.f32.mrf.mxu0
      %v1158 = vadd.f32 0.0, %v1157
      %v1159 = vpop.f32.mrf.mxu0
      %v1160 = vadd.f32 0.0, %v1159
      %1161 = vmatmul.bf16.gmra.mxu0 %v1075
      %v1162 = vpop.f32.mrf.mxu0
      %v1163 = vadd.f32 0.0, %v1162
      %v1164 = vpop.f32.mrf.mxu0
      %v1165 = vadd.f32 0.0, %v1164
      %1166 = vmatmul.bf16.gmra.mxu0 %v1078
      %v1167 = vpop.f32.mrf.mxu0
      %v1168 = vadd.f32 0.0, %v1167
      %v1169 = vpop.f32.mrf.mxu0
      %v1170 = vadd.f32 0.0, %v1169
      %1171 = vdwg.mxu0
      %v1172 = vadd.f32 %v823, %v1093
      %v1173 = vadd.f32 %v825, %v1095
      %v1174 = vadd.f32 %v828, %v1098
      %v1175 = vadd.f32 %v830, %v1100
      %v1176 = vadd.f32 %v833, %v1103
      %v1177 = vadd.f32 %v835, %v1105
      %v1178 = vadd.f32 %v838, %v1108
      %v1179 = vadd.f32 %v840, %v1110
      %v1180 = vadd.f32 %v843, %v1113
      %v1181 = vadd.f32 %v845, %v1115
      %v1182 = vadd.f32 %v848, %v1118
      %v1183 = vadd.f32 %v850, %v1120
      %v1184 = vadd.f32 %v853, %v1123
      %v1185 = vadd.f32 %v855, %v1125
      %v1186 = vadd.f32 %v858, %v1128
      %v1187 = vadd.f32 %v860, %v1130
      %v1188 = vadd.f32 %v863, %v1133
      %v1189 = vadd.f32 %v865, %v1135
      %v1190 = vadd.f32 %v868, %v1138
      %v1191 = vadd.f32 %v870, %v1140
      %v1192 = vadd.f32 %v873, %v1143
      %v1193 = vadd.f32 %v875, %v1145
      %v1194 = vadd.f32 %v878, %v1148
      %v1195 = vadd.f32 %v880, %v1150
      %v1196 = vadd.f32 %v883, %v1153
      %v1197 = vadd.f32 %v885, %v1155
      %v1198 = vadd.f32 %v888, %v1158
      %v1199 = vadd.f32 %v890, %v1160
      %v1200 = vadd.f32 %v893, %v1163
      %v1201 = vadd.f32 %v895, %v1165
      %v1202 = vadd.f32 %v898, %v1168
      %v1203 = vadd.f32 %v900, %v1170
      %v1204 = vpack.c.bf16 %v420, %v419
      %v1205 = vpack.c.bf16 %v347, %v347
      %v1207 = vsel %vm620, %v1204, 0
      %v1210 = vsel %vm669, %v1205, 0
      %1212 = vmatpush.bf16.msra.mxu0 0
      %1213 = vmatpush.bf16.msra.mxu0 0
      %1214 = vmatpush.bf16.msra.mxu0 0
      %1215 = vmatpush.bf16.msra.mxu0 0
      %1216 = vmatpush.bf16.msra.mxu0 0
      %1217 = vmatpush.bf16.msra.mxu0 0
      %1218 = vmatpush.bf16.msra.mxu0 0
      %1219 = vmatpush.bf16.msra.mxu0 %v1210
      %1220 = vmatmul.bf16.gmra.mxu0 %v766
      %v1221 = vpop.f32.mrf.mxu0
      %v1222 = vadd.f32 0.0, %v1221
      %v1223 = vpop.f32.mrf.mxu0
      %v1224 = vadd.f32 0.0, %v1223
      %1225 = vmatmul.bf16.gmra.mxu0 %v769
      %v1226 = vpop.f32.mrf.mxu0
      %v1227 = vadd.f32 0.0, %v1226
      %v1228 = vpop.f32.mrf.mxu0
      %v1229 = vadd.f32 0.0, %v1228
      %1230 = vmatmul.bf16.gmra.mxu0 %v772
      %v1231 = vpop.f32.mrf.mxu0
      %v1232 = vadd.f32 0.0, %v1231
      %v1233 = vpop.f32.mrf.mxu0
      %v1234 = vadd.f32 0.0, %v1233
      %1235 = vmatmul.bf16.gmra.mxu0 %v775
      %v1236 = vpop.f32.mrf.mxu0
      %v1237 = vadd.f32 0.0, %v1236
      %v1238 = vpop.f32.mrf.mxu0
      %v1239 = vadd.f32 0.0, %v1238
      %1240 = vmatmul.bf16.gmra.mxu0 %v778
      %v1241 = vpop.f32.mrf.mxu0
      %v1242 = vadd.f32 0.0, %v1241
      %v1243 = vpop.f32.mrf.mxu0
      %v1244 = vadd.f32 0.0, %v1243
      %1245 = vmatmul.bf16.gmra.mxu0 %v781
      %v1246 = vpop.f32.mrf.mxu0
      %v1247 = vadd.f32 0.0, %v1246
      %v1248 = vpop.f32.mrf.mxu0
      %v1249 = vadd.f32 0.0, %v1248
      %1250 = vmatmul.bf16.gmra.mxu0 %v784
      %v1251 = vpop.f32.mrf.mxu0
      %v1252 = vadd.f32 0.0, %v1251
      %v1253 = vpop.f32.mrf.mxu0
      %v1254 = vadd.f32 0.0, %v1253
      %1255 = vmatmul.bf16.gmra.mxu0 %v787
      %v1256 = vpop.f32.mrf.mxu0
      %v1257 = vadd.f32 0.0, %v1256
      %v1258 = vpop.f32.mrf.mxu0
      %v1259 = vadd.f32 0.0, %v1258
      %1260 = vmatmul.bf16.gmra.mxu0 %v790
      %v1261 = vpop.f32.mrf.mxu0
      %v1262 = vadd.f32 0.0, %v1261
      %v1263 = vpop.f32.mrf.mxu0
      %v1264 = vadd.f32 0.0, %v1263
      %1265 = vmatmul.bf16.gmra.mxu0 %v793
      %v1266 = vpop.f32.mrf.mxu0
      %v1267 = vadd.f32 0.0, %v1266
      %v1268 = vpop.f32.mrf.mxu0
      %v1269 = vadd.f32 0.0, %v1268
      %1270 = vmatmul.bf16.gmra.mxu0 %v796
      %v1271 = vpop.f32.mrf.mxu0
      %v1272 = vadd.f32 0.0, %v1271
      %v1273 = vpop.f32.mrf.mxu0
      %v1274 = vadd.f32 0.0, %v1273
      %1275 = vmatmul.bf16.gmra.mxu0 %v799
      %v1276 = vpop.f32.mrf.mxu0
      %v1277 = vadd.f32 0.0, %v1276
      %v1278 = vpop.f32.mrf.mxu0
      %v1279 = vadd.f32 0.0, %v1278
      %1280 = vmatmul.bf16.gmra.mxu0 %v802
      %v1281 = vpop.f32.mrf.mxu0
      %v1282 = vadd.f32 0.0, %v1281
      %v1283 = vpop.f32.mrf.mxu0
      %v1284 = vadd.f32 0.0, %v1283
      %1285 = vmatmul.bf16.gmra.mxu0 %v805
      %v1286 = vpop.f32.mrf.mxu0
      %v1287 = vadd.f32 0.0, %v1286
      %v1288 = vpop.f32.mrf.mxu0
      %v1289 = vadd.f32 0.0, %v1288
      %1290 = vmatmul.bf16.gmra.mxu0 %v808
      %v1291 = vpop.f32.mrf.mxu0
      %v1292 = vadd.f32 0.0, %v1291
      %v1293 = vpop.f32.mrf.mxu0
      %v1294 = vadd.f32 0.0, %v1293
      %1295 = vmatmul.bf16.gmra.mxu0 %v1207
      %v1296 = vpop.f32.mrf.mxu0
      %v1297 = vadd.f32 0.0, %v1296
      %v1298 = vpop.f32.mrf.mxu0
      %v1299 = vadd.f32 0.0, %v1298
      %1300 = vdwg.mxu0
      %v1301 = vadd.f32 %v1172, %v1222
      %v1302 = vadd.f32 %v1173, %v1224
      %v1303 = vadd.f32 %v1174, %v1227
      %v1304 = vadd.f32 %v1175, %v1229
      %v1305 = vadd.f32 %v1176, %v1232
      %v1306 = vadd.f32 %v1177, %v1234
      %v1307 = vadd.f32 %v1178, %v1237
      %v1308 = vadd.f32 %v1179, %v1239
      %v1309 = vadd.f32 %v1180, %v1242
      %v1310 = vadd.f32 %v1181, %v1244
      %v1311 = vadd.f32 %v1182, %v1247
      %v1312 = vadd.f32 %v1183, %v1249
      %v1313 = vadd.f32 %v1184, %v1252
      %v1314 = vadd.f32 %v1185, %v1254
      %v1315 = vadd.f32 %v1186, %v1257
      %v1316 = vadd.f32 %v1187, %v1259
      %v1317 = vadd.f32 %v1188, %v1262
      %v1318 = vadd.f32 %v1189, %v1264
      %v1319 = vadd.f32 %v1190, %v1267
      %v1320 = vadd.f32 %v1191, %v1269
      %v1321 = vadd.f32 %v1192, %v1272
      %v1322 = vadd.f32 %v1193, %v1274
      %v1323 = vadd.f32 %v1194, %v1277
      %v1324 = vadd.f32 %v1195, %v1279
      %v1325 = vadd.f32 %v1196, %v1282
      %v1326 = vadd.f32 %v1197, %v1284
      %v1327 = vadd.f32 %v1198, %v1287
      %v1328 = vadd.f32 %v1199, %v1289
      %v1329 = vadd.f32 %v1200, %v1292
      %v1330 = vadd.f32 %v1201, %v1294
      %v1331 = vadd.f32 %v1202, %v1297
      %v1332 = vadd.f32 %v1203, %v1299
      %v1336 = vrot.slane %v419, 1
      %v1337 = vrot.slane %v420, 1
      %v1338 = vsel %vm490, %v1336, %v1337
      %v1339 = vrot.slane %v421, 1
      %v1340 = vsel %vm490, %v1337, %v1339
      %v1343 = vpack.c.bf16 %v1340, %v1338
      %v1344 = vpack.c.bf16 %v348, %v348
      %v1346 = vsel %vm620, %v1343, 0
      %v1349 = vsel %vm669, %v1344, 0
      %1351 = vmatpush.bf16.msra.mxu0 0
      %1352 = vmatpush.bf16.msra.mxu0 0
      %1353 = vmatpush.bf16.msra.mxu0 0
      %1354 = vmatpush.bf16.msra.mxu0 0
      %1355 = vmatpush.bf16.msra.mxu0 0
      %1356 = vmatpush.bf16.msra.mxu0 0
      %1357 = vmatpush.bf16.msra.mxu0 0
      %1358 = vmatpush.bf16.msra.mxu0 %v1349
      %1359 = vmatmul.bf16.gmra.mxu0 %v625
      %v1360 = vpop.f32.mrf.mxu0
      %v1361 = vadd.f32 0.0, %v1360
      %v1362 = vpop.f32.mrf.mxu0
      %v1363 = vadd.f32 0.0, %v1362
      %1364 = vmatmul.bf16.gmra.mxu0 %v628
      %v1365 = vpop.f32.mrf.mxu0
      %v1366 = vadd.f32 0.0, %v1365
      %v1367 = vpop.f32.mrf.mxu0
      %v1368 = vadd.f32 0.0, %v1367
      %1369 = vmatmul.bf16.gmra.mxu0 %v631
      %v1370 = vpop.f32.mrf.mxu0
      %v1371 = vadd.f32 0.0, %v1370
      %v1372 = vpop.f32.mrf.mxu0
      %v1373 = vadd.f32 0.0, %v1372
      %1374 = vmatmul.bf16.gmra.mxu0 %v634
      %v1375 = vpop.f32.mrf.mxu0
      %v1376 = vadd.f32 0.0, %v1375
      %v1377 = vpop.f32.mrf.mxu0
      %v1378 = vadd.f32 0.0, %v1377
      %1379 = vmatmul.bf16.gmra.mxu0 %v637
      %v1380 = vpop.f32.mrf.mxu0
      %v1381 = vadd.f32 0.0, %v1380
      %v1382 = vpop.f32.mrf.mxu0
      %v1383 = vadd.f32 0.0, %v1382
      %1384 = vmatmul.bf16.gmra.mxu0 %v640
      %v1385 = vpop.f32.mrf.mxu0
      %v1386 = vadd.f32 0.0, %v1385
      %v1387 = vpop.f32.mrf.mxu0
      %v1388 = vadd.f32 0.0, %v1387
      %1389 = vmatmul.bf16.gmra.mxu0 %v643
      %v1390 = vpop.f32.mrf.mxu0
      %v1391 = vadd.f32 0.0, %v1390
      %v1392 = vpop.f32.mrf.mxu0
      %v1393 = vadd.f32 0.0, %v1392
      %1394 = vmatmul.bf16.gmra.mxu0 %v646
      %v1395 = vpop.f32.mrf.mxu0
      %v1396 = vadd.f32 0.0, %v1395
      %v1397 = vpop.f32.mrf.mxu0
      %v1398 = vadd.f32 0.0, %v1397
      %1399 = vmatmul.bf16.gmra.mxu0 %v649
      %v1400 = vpop.f32.mrf.mxu0
      %v1401 = vadd.f32 0.0, %v1400
      %v1402 = vpop.f32.mrf.mxu0
      %v1403 = vadd.f32 0.0, %v1402
      %1404 = vmatmul.bf16.gmra.mxu0 %v652
      %v1405 = vpop.f32.mrf.mxu0
      %v1406 = vadd.f32 0.0, %v1405
      %v1407 = vpop.f32.mrf.mxu0
      %v1408 = vadd.f32 0.0, %v1407
      %1409 = vmatmul.bf16.gmra.mxu0 %v655
      %v1410 = vpop.f32.mrf.mxu0
      %v1411 = vadd.f32 0.0, %v1410
      %v1412 = vpop.f32.mrf.mxu0
      %v1413 = vadd.f32 0.0, %v1412
      %1414 = vmatmul.bf16.gmra.mxu0 %v658
      %v1415 = vpop.f32.mrf.mxu0
      %v1416 = vadd.f32 0.0, %v1415
      %v1417 = vpop.f32.mrf.mxu0
      %v1418 = vadd.f32 0.0, %v1417
      %1419 = vmatmul.bf16.gmra.mxu0 %v661
      %v1420 = vpop.f32.mrf.mxu0
      %v1421 = vadd.f32 0.0, %v1420
      %v1422 = vpop.f32.mrf.mxu0
      %v1423 = vadd.f32 0.0, %v1422
      %1424 = vmatmul.bf16.gmra.mxu0 %v664
      %v1425 = vpop.f32.mrf.mxu0
      %v1426 = vadd.f32 0.0, %v1425
      %v1427 = vpop.f32.mrf.mxu0
      %v1428 = vadd.f32 0.0, %v1427
      %1429 = vmatmul.bf16.gmra.mxu0 %v667
      %v1430 = vpop.f32.mrf.mxu0
      %v1431 = vadd.f32 0.0, %v1430
      %v1432 = vpop.f32.mrf.mxu0
      %v1433 = vadd.f32 0.0, %v1432
      %1434 = vmatmul.bf16.gmra.mxu0 %v1346
      %v1435 = vpop.f32.mrf.mxu0
      %v1436 = vadd.f32 0.0, %v1435
      %v1437 = vpop.f32.mrf.mxu0
      %v1438 = vadd.f32 0.0, %v1437
      %1439 = vdwg.mxu0
      %v1440 = vadd.f32 %v1301, %v1361
      %v1441 = vadd.f32 %v1302, %v1363
      %v1442 = vadd.f32 %v1303, %v1366
      %v1443 = vadd.f32 %v1304, %v1368
      %v1444 = vadd.f32 %v1305, %v1371
      %v1445 = vadd.f32 %v1306, %v1373
      %v1446 = vadd.f32 %v1307, %v1376
      %v1447 = vadd.f32 %v1308, %v1378
      %v1448 = vadd.f32 %v1309, %v1381
      %v1449 = vadd.f32 %v1310, %v1383
      %v1450 = vadd.f32 %v1311, %v1386
      %v1451 = vadd.f32 %v1312, %v1388
      %v1452 = vadd.f32 %v1313, %v1391
      %v1453 = vadd.f32 %v1314, %v1393
      %v1454 = vadd.f32 %v1315, %v1396
      %v1455 = vadd.f32 %v1316, %v1398
      %v1456 = vadd.f32 %v1317, %v1401
      %v1457 = vadd.f32 %v1318, %v1403
      %v1458 = vadd.f32 %v1319, %v1406
      %v1459 = vadd.f32 %v1320, %v1408
      %v1460 = vadd.f32 %v1321, %v1411
      %v1461 = vadd.f32 %v1322, %v1413
      %v1462 = vadd.f32 %v1323, %v1416
      %v1463 = vadd.f32 %v1324, %v1418
      %v1464 = vadd.f32 %v1325, %v1421
      %v1465 = vadd.f32 %v1326, %v1423
      %v1466 = vadd.f32 %v1327, %v1426
      %v1467 = vadd.f32 %v1328, %v1428
      %v1468 = vadd.f32 %v1329, %v1431
      %v1469 = vadd.f32 %v1330, %v1433
      %v1470 = vadd.f32 %v1331, %v1436
      %v1471 = vadd.f32 %v1332, %v1438
      %v1472 = vrot.slane %v419, 2
      %v1473 = vrot.slane %v420, 2
      %v1474 = vsel %vm902, %v1472, %v1473
      %v1475 = vrot.slane %v421, 2
      %v1476 = vsel %vm902, %v1473, %v1475
      %v1479 = vpack.c.bf16 %v1476, %v1474
      %v1480 = vpack.c.bf16 %v349, %v349
      %v1482 = vsel %vm620, %v1479, 0
      %v1485 = vsel %vm669, %v1480, 0
      %1487 = vmatpush.bf16.msra.mxu0 0
      %1488 = vmatpush.bf16.msra.mxu0 0
      %1489 = vmatpush.bf16.msra.mxu0 0
      %1490 = vmatpush.bf16.msra.mxu0 0
      %1491 = vmatpush.bf16.msra.mxu0 0
      %1492 = vmatpush.bf16.msra.mxu0 0
      %1493 = vmatpush.bf16.msra.mxu0 0
      %1494 = vmatpush.bf16.msra.mxu0 %v1485
      %1495 = vmatmul.bf16.gmra.mxu0 %v1036
      %v1496 = vpop.f32.mrf.mxu0
      %v1497 = vadd.f32 0.0, %v1496
      %v1498 = vpop.f32.mrf.mxu0
      %v1499 = vadd.f32 0.0, %v1498
      %1500 = vmatmul.bf16.gmra.mxu0 %v1039
      %v1501 = vpop.f32.mrf.mxu0
      %v1502 = vadd.f32 0.0, %v1501
      %v1503 = vpop.f32.mrf.mxu0
      %v1504 = vadd.f32 0.0, %v1503
      %1505 = vmatmul.bf16.gmra.mxu0 %v1042
      %v1506 = vpop.f32.mrf.mxu0
      %v1507 = vadd.f32 0.0, %v1506
      %v1508 = vpop.f32.mrf.mxu0
      %v1509 = vadd.f32 0.0, %v1508
      %1510 = vmatmul.bf16.gmra.mxu0 %v1045
      %v1511 = vpop.f32.mrf.mxu0
      %v1512 = vadd.f32 0.0, %v1511
      %v1513 = vpop.f32.mrf.mxu0
      %v1514 = vadd.f32 0.0, %v1513
      %1515 = vmatmul.bf16.gmra.mxu0 %v1048
      %v1516 = vpop.f32.mrf.mxu0
      %v1517 = vadd.f32 0.0, %v1516
      %v1518 = vpop.f32.mrf.mxu0
      %v1519 = vadd.f32 0.0, %v1518
      %1520 = vmatmul.bf16.gmra.mxu0 %v1051
      %v1521 = vpop.f32.mrf.mxu0
      %v1522 = vadd.f32 0.0, %v1521
      %v1523 = vpop.f32.mrf.mxu0
      %v1524 = vadd.f32 0.0, %v1523
      %1525 = vmatmul.bf16.gmra.mxu0 %v1054
      %v1526 = vpop.f32.mrf.mxu0
      %v1527 = vadd.f32 0.0, %v1526
      %v1528 = vpop.f32.mrf.mxu0
      %v1529 = vadd.f32 0.0, %v1528
      %1530 = vmatmul.bf16.gmra.mxu0 %v1057
      %v1531 = vpop.f32.mrf.mxu0
      %v1532 = vadd.f32 0.0, %v1531
      %v1533 = vpop.f32.mrf.mxu0
      %v1534 = vadd.f32 0.0, %v1533
      %1535 = vmatmul.bf16.gmra.mxu0 %v1060
      %v1536 = vpop.f32.mrf.mxu0
      %v1537 = vadd.f32 0.0, %v1536
      %v1538 = vpop.f32.mrf.mxu0
      %v1539 = vadd.f32 0.0, %v1538
      %1540 = vmatmul.bf16.gmra.mxu0 %v1063
      %v1541 = vpop.f32.mrf.mxu0
      %v1542 = vadd.f32 0.0, %v1541
      %v1543 = vpop.f32.mrf.mxu0
      %v1544 = vadd.f32 0.0, %v1543
      %1545 = vmatmul.bf16.gmra.mxu0 %v1066
      %v1546 = vpop.f32.mrf.mxu0
      %v1547 = vadd.f32 0.0, %v1546
      %v1548 = vpop.f32.mrf.mxu0
      %v1549 = vadd.f32 0.0, %v1548
      %1550 = vmatmul.bf16.gmra.mxu0 %v1069
      %v1551 = vpop.f32.mrf.mxu0
      %v1552 = vadd.f32 0.0, %v1551
      %v1553 = vpop.f32.mrf.mxu0
      %v1554 = vadd.f32 0.0, %v1553
      %1555 = vmatmul.bf16.gmra.mxu0 %v1072
      %v1556 = vpop.f32.mrf.mxu0
      %v1557 = vadd.f32 0.0, %v1556
      %v1558 = vpop.f32.mrf.mxu0
      %v1559 = vadd.f32 0.0, %v1558
      %1560 = vmatmul.bf16.gmra.mxu0 %v1075
      %v1561 = vpop.f32.mrf.mxu0
      %v1562 = vadd.f32 0.0, %v1561
      %v1563 = vpop.f32.mrf.mxu0
      %v1564 = vadd.f32 0.0, %v1563
      %1565 = vmatmul.bf16.gmra.mxu0 %v1078
      %v1566 = vpop.f32.mrf.mxu0
      %v1567 = vadd.f32 0.0, %v1566
      %v1568 = vpop.f32.mrf.mxu0
      %v1569 = vadd.f32 0.0, %v1568
      %1570 = vmatmul.bf16.gmra.mxu0 %v1482
      %v1571 = vpop.f32.mrf.mxu0
      %v1572 = vadd.f32 0.0, %v1571
      %v1573 = vpop.f32.mrf.mxu0
      %v1574 = vadd.f32 0.0, %v1573
      %1575 = vdwg.mxu0
      %v1576 = vadd.f32 %v1440, %v1497
      %v1577 = vadd.f32 %v1441, %v1499
      %v1578 = vadd.f32 %v1442, %v1502
      %v1579 = vadd.f32 %v1443, %v1504
      %v1580 = vadd.f32 %v1444, %v1507
      %v1581 = vadd.f32 %v1445, %v1509
      %v1582 = vadd.f32 %v1446, %v1512
      %v1583 = vadd.f32 %v1447, %v1514
      %v1584 = vadd.f32 %v1448, %v1517
      %v1585 = vadd.f32 %v1449, %v1519
      %v1586 = vadd.f32 %v1450, %v1522
      %v1587 = vadd.f32 %v1451, %v1524
      %v1588 = vadd.f32 %v1452, %v1527
      %v1589 = vadd.f32 %v1453, %v1529
      %v1590 = vadd.f32 %v1454, %v1532
      %v1591 = vadd.f32 %v1455, %v1534
      %v1592 = vadd.f32 %v1456, %v1537
      %v1593 = vadd.f32 %v1457, %v1539
      %v1594 = vadd.f32 %v1458, %v1542
      %v1595 = vadd.f32 %v1459, %v1544
      %v1596 = vadd.f32 %v1460, %v1547
      %v1597 = vadd.f32 %v1461, %v1549
      %v1598 = vadd.f32 %v1462, %v1552
      %v1599 = vadd.f32 %v1463, %v1554
      %v1600 = vadd.f32 %v1464, %v1557
      %v1601 = vadd.f32 %v1465, %v1559
      %v1602 = vadd.f32 %v1466, %v1562
      %v1603 = vadd.f32 %v1467, %v1564
      %v1604 = vadd.f32 %v1468, %v1567
      %v1605 = vadd.f32 %v1469, %v1569
      %v1606 = vadd.f32 %v1470, %v1572
      %v1607 = vadd.f32 %v1471, %v1574
      %v1608 = vpack.c.bf16 %v423, %v422
      %v1609 = vpack.c.bf16 %v350, %v350
      %v1611 = vsel %vm620, %v1608, 0
      %v1614 = vsel %vm669, %v1609, 0
      %1616 = vmatpush.bf16.msra.mxu0 0
      %1617 = vmatpush.bf16.msra.mxu0 0
      %1618 = vmatpush.bf16.msra.mxu0 0
      %1619 = vmatpush.bf16.msra.mxu0 0
      %1620 = vmatpush.bf16.msra.mxu0 0
      %1621 = vmatpush.bf16.msra.mxu0 0
      %1622 = vmatpush.bf16.msra.mxu0 0
      %1623 = vmatpush.bf16.msra.mxu0 %v1614
      %1624 = vmatmul.bf16.gmra.mxu0 %v769
      %v1625 = vpop.f32.mrf.mxu0
      %v1626 = vadd.f32 0.0, %v1625
      %v1627 = vpop.f32.mrf.mxu0
      %v1628 = vadd.f32 0.0, %v1627
      %1629 = vmatmul.bf16.gmra.mxu0 %v772
      %v1630 = vpop.f32.mrf.mxu0
      %v1631 = vadd.f32 0.0, %v1630
      %v1632 = vpop.f32.mrf.mxu0
      %v1633 = vadd.f32 0.0, %v1632
      %1634 = vmatmul.bf16.gmra.mxu0 %v775
      %v1635 = vpop.f32.mrf.mxu0
      %v1636 = vadd.f32 0.0, %v1635
      %v1637 = vpop.f32.mrf.mxu0
      %v1638 = vadd.f32 0.0, %v1637
      %1639 = vmatmul.bf16.gmra.mxu0 %v778
      %v1640 = vpop.f32.mrf.mxu0
      %v1641 = vadd.f32 0.0, %v1640
      %v1642 = vpop.f32.mrf.mxu0
      %v1643 = vadd.f32 0.0, %v1642
      %1644 = vmatmul.bf16.gmra.mxu0 %v781
      %v1645 = vpop.f32.mrf.mxu0
      %v1646 = vadd.f32 0.0, %v1645
      %v1647 = vpop.f32.mrf.mxu0
      %v1648 = vadd.f32 0.0, %v1647
      %1649 = vmatmul.bf16.gmra.mxu0 %v784
      %v1650 = vpop.f32.mrf.mxu0
      %v1651 = vadd.f32 0.0, %v1650
      %v1652 = vpop.f32.mrf.mxu0
      %v1653 = vadd.f32 0.0, %v1652
      %1654 = vmatmul.bf16.gmra.mxu0 %v787
      %v1655 = vpop.f32.mrf.mxu0
      %v1656 = vadd.f32 0.0, %v1655
      %v1657 = vpop.f32.mrf.mxu0
      %v1658 = vadd.f32 0.0, %v1657
      %1659 = vmatmul.bf16.gmra.mxu0 %v790
      %v1660 = vpop.f32.mrf.mxu0
      %v1661 = vadd.f32 0.0, %v1660
      %v1662 = vpop.f32.mrf.mxu0
      %v1663 = vadd.f32 0.0, %v1662
      %1664 = vmatmul.bf16.gmra.mxu0 %v793
      %v1665 = vpop.f32.mrf.mxu0
      %v1666 = vadd.f32 0.0, %v1665
      %v1667 = vpop.f32.mrf.mxu0
      %v1668 = vadd.f32 0.0, %v1667
      %1669 = vmatmul.bf16.gmra.mxu0 %v796
      %v1670 = vpop.f32.mrf.mxu0
      %v1671 = vadd.f32 0.0, %v1670
      %v1672 = vpop.f32.mrf.mxu0
      %v1673 = vadd.f32 0.0, %v1672
      %1674 = vmatmul.bf16.gmra.mxu0 %v799
      %v1675 = vpop.f32.mrf.mxu0
      %v1676 = vadd.f32 0.0, %v1675
      %v1677 = vpop.f32.mrf.mxu0
      %v1678 = vadd.f32 0.0, %v1677
      %1679 = vmatmul.bf16.gmra.mxu0 %v802
      %v1680 = vpop.f32.mrf.mxu0
      %v1681 = vadd.f32 0.0, %v1680
      %v1682 = vpop.f32.mrf.mxu0
      %v1683 = vadd.f32 0.0, %v1682
      %1684 = vmatmul.bf16.gmra.mxu0 %v805
      %v1685 = vpop.f32.mrf.mxu0
      %v1686 = vadd.f32 0.0, %v1685
      %v1687 = vpop.f32.mrf.mxu0
      %v1688 = vadd.f32 0.0, %v1687
      %1689 = vmatmul.bf16.gmra.mxu0 %v808
      %v1690 = vpop.f32.mrf.mxu0
      %v1691 = vadd.f32 0.0, %v1690
      %v1692 = vpop.f32.mrf.mxu0
      %v1693 = vadd.f32 0.0, %v1692
      %1694 = vmatmul.bf16.gmra.mxu0 %v1207
      %v1695 = vpop.f32.mrf.mxu0
      %v1696 = vadd.f32 0.0, %v1695
      %v1697 = vpop.f32.mrf.mxu0
      %v1698 = vadd.f32 0.0, %v1697
      %1699 = vmatmul.bf16.gmra.mxu0 %v1611
      %v1700 = vpop.f32.mrf.mxu0
      %v1701 = vadd.f32 0.0, %v1700
      %v1702 = vpop.f32.mrf.mxu0
      %v1703 = vadd.f32 0.0, %v1702
      %1704 = vdwg.mxu0
      %v1705 = vadd.f32 %v1576, %v1626
      %v1706 = vadd.f32 %v1577, %v1628
      %v1707 = vadd.f32 %v1578, %v1631
      %v1708 = vadd.f32 %v1579, %v1633
      %v1709 = vadd.f32 %v1580, %v1636
      %v1710 = vadd.f32 %v1581, %v1638
      %v1711 = vadd.f32 %v1582, %v1641
      %v1712 = vadd.f32 %v1583, %v1643
      %v1713 = vadd.f32 %v1584, %v1646
      %v1714 = vadd.f32 %v1585, %v1648
      %v1715 = vadd.f32 %v1586, %v1651
      %v1716 = vadd.f32 %v1587, %v1653
      %v1717 = vadd.f32 %v1588, %v1656
      %v1718 = vadd.f32 %v1589, %v1658
      %v1719 = vadd.f32 %v1590, %v1661
      %v1720 = vadd.f32 %v1591, %v1663
      %v1721 = vadd.f32 %v1592, %v1666
      %v1722 = vadd.f32 %v1593, %v1668
      %v1723 = vadd.f32 %v1594, %v1671
      %v1724 = vadd.f32 %v1595, %v1673
      %v1725 = vadd.f32 %v1596, %v1676
      %v1726 = vadd.f32 %v1597, %v1678
      %v1727 = vadd.f32 %v1598, %v1681
      %v1728 = vadd.f32 %v1599, %v1683
      %v1729 = vadd.f32 %v1600, %v1686
      %v1730 = vadd.f32 %v1601, %v1688
      %v1731 = vadd.f32 %v1602, %v1691
      %v1732 = vadd.f32 %v1603, %v1693
      %v1733 = vadd.f32 %v1604, %v1696
      %v1734 = vadd.f32 %v1605, %v1698
      %v1735 = vadd.f32 %v1606, %v1701
      %v1736 = vadd.f32 %v1607, %v1703
      %v1740 = vrot.slane %v422, 1
      %v1741 = vrot.slane %v423, 1
      %v1742 = vsel %vm490, %v1740, %v1741
      %v1743 = vrot.slane %v424, 1
      %v1744 = vsel %vm490, %v1741, %v1743
      %v1747 = vpack.c.bf16 %v1744, %v1742
      %v1748 = vpack.c.bf16 %v351, %v351
      %v1750 = vsel %vm620, %v1747, 0
      %v1753 = vsel %vm669, %v1748, 0
      %1755 = vmatpush.bf16.msra.mxu0 0
      %1756 = vmatpush.bf16.msra.mxu0 0
      %1757 = vmatpush.bf16.msra.mxu0 0
      %1758 = vmatpush.bf16.msra.mxu0 0
      %1759 = vmatpush.bf16.msra.mxu0 0
      %1760 = vmatpush.bf16.msra.mxu0 0
      %1761 = vmatpush.bf16.msra.mxu0 0
      %1762 = vmatpush.bf16.msra.mxu0 %v1753
      %1763 = vmatmul.bf16.gmra.mxu0 %v628
      %v1764 = vpop.f32.mrf.mxu0
      %v1765 = vadd.f32 0.0, %v1764
      %v1766 = vpop.f32.mrf.mxu0
      %v1767 = vadd.f32 0.0, %v1766
      %1768 = vmatmul.bf16.gmra.mxu0 %v631
      %v1769 = vpop.f32.mrf.mxu0
      %v1770 = vadd.f32 0.0, %v1769
      %v1771 = vpop.f32.mrf.mxu0
      %v1772 = vadd.f32 0.0, %v1771
      %1773 = vmatmul.bf16.gmra.mxu0 %v634
      %v1774 = vpop.f32.mrf.mxu0
      %v1775 = vadd.f32 0.0, %v1774
      %v1776 = vpop.f32.mrf.mxu0
      %v1777 = vadd.f32 0.0, %v1776
      %1778 = vmatmul.bf16.gmra.mxu0 %v637
      %v1779 = vpop.f32.mrf.mxu0
      %v1780 = vadd.f32 0.0, %v1779
      %v1781 = vpop.f32.mrf.mxu0
      %v1782 = vadd.f32 0.0, %v1781
      %1783 = vmatmul.bf16.gmra.mxu0 %v640
      %v1784 = vpop.f32.mrf.mxu0
      %v1785 = vadd.f32 0.0, %v1784
      %v1786 = vpop.f32.mrf.mxu0
      %v1787 = vadd.f32 0.0, %v1786
      %1788 = vmatmul.bf16.gmra.mxu0 %v643
      %v1789 = vpop.f32.mrf.mxu0
      %v1790 = vadd.f32 0.0, %v1789
      %v1791 = vpop.f32.mrf.mxu0
      %v1792 = vadd.f32 0.0, %v1791
      %1793 = vmatmul.bf16.gmra.mxu0 %v646
      %v1794 = vpop.f32.mrf.mxu0
      %v1795 = vadd.f32 0.0, %v1794
      %v1796 = vpop.f32.mrf.mxu0
      %v1797 = vadd.f32 0.0, %v1796
      %1798 = vmatmul.bf16.gmra.mxu0 %v649
      %v1799 = vpop.f32.mrf.mxu0
      %v1800 = vadd.f32 0.0, %v1799
      %v1801 = vpop.f32.mrf.mxu0
      %v1802 = vadd.f32 0.0, %v1801
      %1803 = vmatmul.bf16.gmra.mxu0 %v652
      %v1804 = vpop.f32.mrf.mxu0
      %v1805 = vadd.f32 0.0, %v1804
      %v1806 = vpop.f32.mrf.mxu0
      %v1807 = vadd.f32 0.0, %v1806
      %1808 = vmatmul.bf16.gmra.mxu0 %v655
      %v1809 = vpop.f32.mrf.mxu0
      %v1810 = vadd.f32 0.0, %v1809
      %v1811 = vpop.f32.mrf.mxu0
      %v1812 = vadd.f32 0.0, %v1811
      %1813 = vmatmul.bf16.gmra.mxu0 %v658
      %v1814 = vpop.f32.mrf.mxu0
      %v1815 = vadd.f32 0.0, %v1814
      %v1816 = vpop.f32.mrf.mxu0
      %v1817 = vadd.f32 0.0, %v1816
      %1818 = vmatmul.bf16.gmra.mxu0 %v661
      %v1819 = vpop.f32.mrf.mxu0
      %v1820 = vadd.f32 0.0, %v1819
      %v1821 = vpop.f32.mrf.mxu0
      %v1822 = vadd.f32 0.0, %v1821
      %1823 = vmatmul.bf16.gmra.mxu0 %v664
      %v1824 = vpop.f32.mrf.mxu0
      %v1825 = vadd.f32 0.0, %v1824
      %v1826 = vpop.f32.mrf.mxu0
      %v1827 = vadd.f32 0.0, %v1826
      %1828 = vmatmul.bf16.gmra.mxu0 %v667
      %v1829 = vpop.f32.mrf.mxu0
      %v1830 = vadd.f32 0.0, %v1829
      %v1831 = vpop.f32.mrf.mxu0
      %v1832 = vadd.f32 0.0, %v1831
      %1833 = vmatmul.bf16.gmra.mxu0 %v1346
      %v1834 = vpop.f32.mrf.mxu0
      %v1835 = vadd.f32 0.0, %v1834
      %v1836 = vpop.f32.mrf.mxu0
      %v1837 = vadd.f32 0.0, %v1836
      %1838 = vmatmul.bf16.gmra.mxu0 %v1750
      %v1839 = vpop.f32.mrf.mxu0
      %v1840 = vadd.f32 0.0, %v1839
      %v1841 = vpop.f32.mrf.mxu0
      %v1842 = vadd.f32 0.0, %v1841
      %1843 = vdwg.mxu0
      %v1844 = vadd.f32 %v1705, %v1765
      %v1845 = vadd.f32 %v1706, %v1767
      %v1846 = vadd.f32 %v1707, %v1770
      %v1847 = vadd.f32 %v1708, %v1772
      %v1848 = vadd.f32 %v1709, %v1775
      %v1849 = vadd.f32 %v1710, %v1777
      %v1850 = vadd.f32 %v1711, %v1780
      %v1851 = vadd.f32 %v1712, %v1782
      %v1852 = vadd.f32 %v1713, %v1785
      %v1853 = vadd.f32 %v1714, %v1787
      %v1854 = vadd.f32 %v1715, %v1790
      %v1855 = vadd.f32 %v1716, %v1792
      %v1856 = vadd.f32 %v1717, %v1795
      %v1857 = vadd.f32 %v1718, %v1797
      %v1858 = vadd.f32 %v1719, %v1800
      %v1859 = vadd.f32 %v1720, %v1802
      %v1860 = vadd.f32 %v1721, %v1805
      %v1861 = vadd.f32 %v1722, %v1807
      %v1862 = vadd.f32 %v1723, %v1810
      %v1863 = vadd.f32 %v1724, %v1812
      %v1864 = vadd.f32 %v1725, %v1815
      %v1865 = vadd.f32 %v1726, %v1817
      %v1866 = vadd.f32 %v1727, %v1820
      %v1867 = vadd.f32 %v1728, %v1822
      %v1868 = vadd.f32 %v1729, %v1825
      %v1869 = vadd.f32 %v1730, %v1827
      %v1870 = vadd.f32 %v1731, %v1830
      %v1871 = vadd.f32 %v1732, %v1832
      %v1872 = vadd.f32 %v1733, %v1835
      %v1873 = vadd.f32 %v1734, %v1837
      %v1874 = vadd.f32 %v1735, %v1840
      %v1875 = vadd.f32 %v1736, %v1842
      %v1876 = vrot.slane %v422, 2
      %v1877 = vrot.slane %v423, 2
      %v1878 = vsel %vm902, %v1876, %v1877
      %v1879 = vrot.slane %v424, 2
      %v1880 = vsel %vm902, %v1877, %v1879
      %v1883 = vpack.c.bf16 %v1880, %v1878
      %v1884 = vpack.c.bf16 %v352, %v352
      %v1886 = vsel %vm620, %v1883, 0
      %v1889 = vsel %vm669, %v1884, 0
      %1891 = vmatpush.bf16.msra.mxu0 0
      %1892 = vmatpush.bf16.msra.mxu0 0
      %1893 = vmatpush.bf16.msra.mxu0 0
      %1894 = vmatpush.bf16.msra.mxu0 0
      %1895 = vmatpush.bf16.msra.mxu0 0
      %1896 = vmatpush.bf16.msra.mxu0 0
      %1897 = vmatpush.bf16.msra.mxu0 0
      %1898 = vmatpush.bf16.msra.mxu0 %v1889
      %1899 = vmatmul.bf16.gmra.mxu0 %v1039
      %v1900 = vpop.f32.mrf.mxu0
      %v1901 = vadd.f32 0.0, %v1900
      %v1902 = vpop.f32.mrf.mxu0
      %v1903 = vadd.f32 0.0, %v1902
      %1904 = vmatmul.bf16.gmra.mxu0 %v1042
      %v1905 = vpop.f32.mrf.mxu0
      %v1906 = vadd.f32 0.0, %v1905
      %v1907 = vpop.f32.mrf.mxu0
      %v1908 = vadd.f32 0.0, %v1907
      %1909 = vmatmul.bf16.gmra.mxu0 %v1045
      %v1910 = vpop.f32.mrf.mxu0
      %v1911 = vadd.f32 0.0, %v1910
      %v1912 = vpop.f32.mrf.mxu0
      %v1913 = vadd.f32 0.0, %v1912
      %1914 = vmatmul.bf16.gmra.mxu0 %v1048
      %v1915 = vpop.f32.mrf.mxu0
      %v1916 = vadd.f32 0.0, %v1915
      %v1917 = vpop.f32.mrf.mxu0
      %v1918 = vadd.f32 0.0, %v1917
      %1919 = vmatmul.bf16.gmra.mxu0 %v1051
      %v1920 = vpop.f32.mrf.mxu0
      %v1921 = vadd.f32 0.0, %v1920
      %v1922 = vpop.f32.mrf.mxu0
      %v1923 = vadd.f32 0.0, %v1922
      %1924 = vmatmul.bf16.gmra.mxu0 %v1054
      %v1925 = vpop.f32.mrf.mxu0
      %v1926 = vadd.f32 0.0, %v1925
      %v1927 = vpop.f32.mrf.mxu0
      %v1928 = vadd.f32 0.0, %v1927
      %1929 = vmatmul.bf16.gmra.mxu0 %v1057
      %v1930 = vpop.f32.mrf.mxu0
      %v1931 = vadd.f32 0.0, %v1930
      %v1932 = vpop.f32.mrf.mxu0
      %v1933 = vadd.f32 0.0, %v1932
      %1934 = vmatmul.bf16.gmra.mxu0 %v1060
      %v1935 = vpop.f32.mrf.mxu0
      %v1936 = vadd.f32 0.0, %v1935
      %v1937 = vpop.f32.mrf.mxu0
      %v1938 = vadd.f32 0.0, %v1937
      %1939 = vmatmul.bf16.gmra.mxu0 %v1063
      %v1940 = vpop.f32.mrf.mxu0
      %v1941 = vadd.f32 0.0, %v1940
      %v1942 = vpop.f32.mrf.mxu0
      %v1943 = vadd.f32 0.0, %v1942
      %1944 = vmatmul.bf16.gmra.mxu0 %v1066
      %v1945 = vpop.f32.mrf.mxu0
      %v1946 = vadd.f32 0.0, %v1945
      %v1947 = vpop.f32.mrf.mxu0
      %v1948 = vadd.f32 0.0, %v1947
      %1949 = vmatmul.bf16.gmra.mxu0 %v1069
      %v1950 = vpop.f32.mrf.mxu0
      %v1951 = vadd.f32 0.0, %v1950
      %v1952 = vpop.f32.mrf.mxu0
      %v1953 = vadd.f32 0.0, %v1952
      %1954 = vmatmul.bf16.gmra.mxu0 %v1072
      %v1955 = vpop.f32.mrf.mxu0
      %v1956 = vadd.f32 0.0, %v1955
      %v1957 = vpop.f32.mrf.mxu0
      %v1958 = vadd.f32 0.0, %v1957
      %1959 = vmatmul.bf16.gmra.mxu0 %v1075
      %v1960 = vpop.f32.mrf.mxu0
      %v1961 = vadd.f32 0.0, %v1960
      %v1962 = vpop.f32.mrf.mxu0
      %v1963 = vadd.f32 0.0, %v1962
      %1964 = vmatmul.bf16.gmra.mxu0 %v1078
      %v1965 = vpop.f32.mrf.mxu0
      %v1966 = vadd.f32 0.0, %v1965
      %v1967 = vpop.f32.mrf.mxu0
      %v1968 = vadd.f32 0.0, %v1967
      %1969 = vmatmul.bf16.gmra.mxu0 %v1482
      %v1970 = vpop.f32.mrf.mxu0
      %v1971 = vadd.f32 0.0, %v1970
      %v1972 = vpop.f32.mrf.mxu0
      %v1973 = vadd.f32 0.0, %v1972
      %1974 = vmatmul.bf16.gmra.mxu0 %v1886
      %v1975 = vpop.f32.mrf.mxu0
      %v1976 = vadd.f32 0.0, %v1975
      %v1977 = vpop.f32.mrf.mxu0
      %v1978 = vadd.f32 0.0, %v1977
      %1979 = vdwg.mxu0
      %v1980 = vadd.f32 %v1844, %v1901
      %v1981 = vadd.f32 %v1845, %v1903
      %v1982 = vadd.f32 %v1846, %v1906
      %v1983 = vadd.f32 %v1847, %v1908
      %v1984 = vadd.f32 %v1848, %v1911
      %v1985 = vadd.f32 %v1849, %v1913
      %v1986 = vadd.f32 %v1850, %v1916
      %v1987 = vadd.f32 %v1851, %v1918
      %v1988 = vadd.f32 %v1852, %v1921
      %v1989 = vadd.f32 %v1853, %v1923
      %v1990 = vadd.f32 %v1854, %v1926
      %v1991 = vadd.f32 %v1855, %v1928
      %v1992 = vadd.f32 %v1856, %v1931
      %v1993 = vadd.f32 %v1857, %v1933
      %v1994 = vadd.f32 %v1858, %v1936
      %v1995 = vadd.f32 %v1859, %v1938
      %v1996 = vadd.f32 %v1860, %v1941
      %v1997 = vadd.f32 %v1861, %v1943
      %v1998 = vadd.f32 %v1862, %v1946
      %v1999 = vadd.f32 %v1863, %v1948
      %v2000 = vadd.f32 %v1864, %v1951
      %v2001 = vadd.f32 %v1865, %v1953
      %v2002 = vadd.f32 %v1866, %v1956
      %v2003 = vadd.f32 %v1867, %v1958
      %v2004 = vadd.f32 %v1868, %v1961
      %v2005 = vadd.f32 %v1869, %v1963
      %v2006 = vadd.f32 %v1870, %v1966
      %v2007 = vadd.f32 %v1871, %v1968
      %v2008 = vadd.f32 %v1872, %v1971
      %v2009 = vadd.f32 %v1873, %v1973
      %v2010 = vadd.f32 %v1874, %v1976
      %v2011 = vadd.f32 %v1875, %v1978
      %v2012 = vld [vmem:[%s321] sm:$0xff]
      %v2013 = vld [vmem:[%s321 + $0x8] sm:$0xff]
      %v2014 = vld [vmem:[%s321 + $0x10] sm:$0x3]
      %v2015 = vld [vmem:[%s321 + $0x18] sm:$0xff]
      %v2016 = vld [vmem:[%s321 + $0x20] sm:$0xff]
      %v2017 = vld [vmem:[%s321 + $0x28] sm:$0x3]
      %v2018 = vld [vmem:[%s321 + $0x30] sm:$0xff]
      %v2019 = vld [vmem:[%s321 + $0x38] sm:$0xff]
      %v2020 = vld [vmem:[%s321 + $0x40] sm:$0x3]
      %v2021 = vld [vmem:[%s321 + $0x48] sm:$0xff]
      %v2022 = vld [vmem:[%s321 + $0x50] sm:$0xff]
      %v2023 = vld [vmem:[%s321 + $0x58] sm:$0x3]
      %v2024 = vld [vmem:[%s321 + $0x60] sm:$0xff]
      %v2025 = vld [vmem:[%s321 + $0x68] sm:$0xff]
      %v2026 = vld [vmem:[%s321 + $0x70] sm:$0x3]
      %v2027 = vld [vmem:[%s321 + $0x78] sm:$0xff]
      %v2028 = vld [vmem:[%s321 + $0x80] sm:$0xff]
      %v2029 = vld [vmem:[%s321 + $0x88] sm:$0x3]
      %v2030 = vld [vmem:[%s321 + $0x90] sm:$0xff]
      %v2031 = vld [vmem:[%s321 + $0x98] sm:$0xff]
      %v2032 = vld [vmem:[%s321 + $0xa0] sm:$0x3]
      %v2033 = vld [vmem:[%s321 + $0xa8] sm:$0xff]
      %v2034 = vld [vmem:[%s321 + $0xb0] sm:$0xff]
      %v2035 = vld [vmem:[%s321 + $0xb8] sm:$0x3]
      %v2036 = vld [vmem:[%s321 + $0xc0] sm:$0xff]
      %v2037 = vld [vmem:[%s321 + $0xc8] sm:$0xff]
      %v2038 = vld [vmem:[%s321 + $0xd0] sm:$0x3]
      %v2039 = vld [vmem:[%s321 + $0xd8] sm:$0xff]
      %v2040 = vld [vmem:[%s321 + $0xe0] sm:$0xff]
      %v2041 = vld [vmem:[%s321 + $0xe8] sm:$0x3]
      %v2042 = vld [vmem:[%s321 + $0xf0] sm:$0xff]
      %v2043 = vld [vmem:[%s321 + $0xf8] sm:$0xff]
      %v2044 = vld [vmem:[%s321 + $0x100] sm:$0x3]
      %v2045 = vld [vmem:[%s321 + $0x108] sm:$0xff]
      %v2046 = vld [vmem:[%s321 + $0x110] sm:$0xff]
      %v2047 = vld [vmem:[%s321 + $0x118] sm:$0x3]
      %v2048 = vld [vmem:[%s321 + $0x120] sm:$0xff]
      %v2049 = vld [vmem:[%s321 + $0x128] sm:$0xff]
      %v2050 = vld [vmem:[%s321 + $0x130] sm:$0x3]
      %v2051 = vld [vmem:[%s321 + $0x138] sm:$0xff]
      %v2052 = vld [vmem:[%s321 + $0x140] sm:$0xff]
      %v2053 = vld [vmem:[%s321 + $0x148] sm:$0x3]
      %v2054 = vld [vmem:[%s321 + $0x150] sm:$0xff]
      %v2055 = vld [vmem:[%s321 + $0x158] sm:$0xff]
      %v2056 = vld [vmem:[%s321 + $0x160] sm:$0x3]
      %v2057 = vld [vmem:[%s321 + $0x168] sm:$0xff]
      %v2058 = vld [vmem:[%s321 + $0x170] sm:$0xff]
      %v2059 = vld [vmem:[%s321 + $0x178] sm:$0x3]
      %v2060 = vld [vmem:[%s321 + $0x180] sm:$0xff]
      %v2061 = vld [vmem:[%s321 + $0x188] sm:$0xff]
      %v2062 = vld [vmem:[%s321 + $0x190] sm:$0x3]
      %v2063 = vld [vmem:[%s321 + $0x198] sm:$0xff]
      %v2064 = vld [vmem:[%s321 + $0x1a0] sm:$0xff]
      %v2065 = vld [vmem:[%s321 + $0x1a8] sm:$0x3]
      %v2066 = vpack.c.bf16 %v2013, %v2012
      %v2067 = vpack.c.bf16 %v2016, %v2015
      %v2068 = vpack.c.bf16 %v2019, %v2018
      %v2069 = vpack.c.bf16 %v2022, %v2021
      %v2070 = vpack.c.bf16 %v2025, %v2024
      %v2071 = vpack.c.bf16 %v2028, %v2027
      %v2072 = vpack.c.bf16 %v2031, %v2030
      %v2073 = vpack.c.bf16 %v2034, %v2033
      %v2074 = vpack.c.bf16 %v2037, %v2036
      %v2075 = vpack.c.bf16 %v2040, %v2039
      %v2076 = vpack.c.bf16 %v2043, %v2042
      %v2077 = vpack.c.bf16 %v2046, %v2045
      %v2078 = vpack.c.bf16 %v2049, %v2048
      %v2079 = vpack.c.bf16 %v2052, %v2051
      %v2080 = vpack.c.bf16 %v2055, %v2054
      %v2081 = vpack.c.bf16 %v2058, %v2057
      %v2082 = vpack.c.bf16 %v353, %v353
      %v2084 = vsel %vm620, %v2066, 0
      %v2087 = vsel %vm620, %v2067, 0
      %v2090 = vsel %vm620, %v2068, 0
      %v2093 = vsel %vm620, %v2069, 0
      %v2096 = vsel %vm620, %v2070, 0
      %v2099 = vsel %vm620, %v2071, 0
      %v2102 = vsel %vm620, %v2072, 0
      %v2105 = vsel %vm620, %v2073, 0
      %v2108 = vsel %vm620, %v2074, 0
      %v2111 = vsel %vm620, %v2075, 0
      %v2114 = vsel %vm620, %v2076, 0
      %v2117 = vsel %vm620, %v2077, 0
      %v2120 = vsel %vm620, %v2078, 0
      %v2123 = vsel %vm620, %v2079, 0
      %v2126 = vsel %vm620, %v2080, 0
      %v2129 = vsel %vm620, %v2081, 0
      %v2132 = vsel %vm669, %v2082, 0
      %2134 = vmatpush.bf16.msra.mxu0 0
      %2135 = vmatpush.bf16.msra.mxu0 0
      %2136 = vmatpush.bf16.msra.mxu0 0
      %2137 = vmatpush.bf16.msra.mxu0 0
      %2138 = vmatpush.bf16.msra.mxu0 0
      %2139 = vmatpush.bf16.msra.mxu0 0
      %2140 = vmatpush.bf16.msra.mxu0 0
      %2141 = vmatpush.bf16.msra.mxu0 %v2132
      %2142 = vmatmul.bf16.gmra.mxu0 %v2084
      %v2143 = vpop.f32.mrf.mxu0
      %v2144 = vadd.f32 0.0, %v2143
      %v2145 = vpop.f32.mrf.mxu0
      %v2146 = vadd.f32 0.0, %v2145
      %2147 = vmatmul.bf16.gmra.mxu0 %v2087
      %v2148 = vpop.f32.mrf.mxu0
      %v2149 = vadd.f32 0.0, %v2148
      %v2150 = vpop.f32.mrf.mxu0
      %v2151 = vadd.f32 0.0, %v2150
      %2152 = vmatmul.bf16.gmra.mxu0 %v2090
      %v2153 = vpop.f32.mrf.mxu0
      %v2154 = vadd.f32 0.0, %v2153
      %v2155 = vpop.f32.mrf.mxu0
      %v2156 = vadd.f32 0.0, %v2155
      %2157 = vmatmul.bf16.gmra.mxu0 %v2093
      %v2158 = vpop.f32.mrf.mxu0
      %v2159 = vadd.f32 0.0, %v2158
      %v2160 = vpop.f32.mrf.mxu0
      %v2161 = vadd.f32 0.0, %v2160
      %2162 = vmatmul.bf16.gmra.mxu0 %v2096
      %v2163 = vpop.f32.mrf.mxu0
      %v2164 = vadd.f32 0.0, %v2163
      %v2165 = vpop.f32.mrf.mxu0
      %v2166 = vadd.f32 0.0, %v2165
      %2167 = vmatmul.bf16.gmra.mxu0 %v2099
      %v2168 = vpop.f32.mrf.mxu0
      %v2169 = vadd.f32 0.0, %v2168
      %v2170 = vpop.f32.mrf.mxu0
      %v2171 = vadd.f32 0.0, %v2170
      %2172 = vmatmul.bf16.gmra.mxu0 %v2102
      %v2173 = vpop.f32.mrf.mxu0
      %v2174 = vadd.f32 0.0, %v2173
      %v2175 = vpop.f32.mrf.mxu0
      %v2176 = vadd.f32 0.0, %v2175
      %2177 = vmatmul.bf16.gmra.mxu0 %v2105
      %v2178 = vpop.f32.mrf.mxu0
      %v2179 = vadd.f32 0.0, %v2178
      %v2180 = vpop.f32.mrf.mxu0
      %v2181 = vadd.f32 0.0, %v2180
      %2182 = vmatmul.bf16.gmra.mxu0 %v2108
      %v2183 = vpop.f32.mrf.mxu0
      %v2184 = vadd.f32 0.0, %v2183
      %v2185 = vpop.f32.mrf.mxu0
      %v2186 = vadd.f32 0.0, %v2185
      %2187 = vmatmul.bf16.gmra.mxu0 %v2111
      %v2188 = vpop.f32.mrf.mxu0
      %v2189 = vadd.f32 0.0, %v2188
      %v2190 = vpop.f32.mrf.mxu0
      %v2191 = vadd.f32 0.0, %v2190
      %2192 = vmatmul.bf16.gmra.mxu0 %v2114
      %v2193 = vpop.f32.mrf.mxu0
      %v2194 = vadd.f32 0.0, %v2193
      %v2195 = vpop.f32.mrf.mxu0
      %v2196 = vadd.f32 0.0, %v2195
      %2197 = vmatmul.bf16.gmra.mxu0 %v2117
      %v2198 = vpop.f32.mrf.mxu0
      %v2199 = vadd.f32 0.0, %v2198
      %v2200 = vpop.f32.mrf.mxu0
      %v2201 = vadd.f32 0.0, %v2200
      %2202 = vmatmul.bf16.gmra.mxu0 %v2120
      %v2203 = vpop.f32.mrf.mxu0
      %v2204 = vadd.f32 0.0, %v2203
      %v2205 = vpop.f32.mrf.mxu0
      %v2206 = vadd.f32 0.0, %v2205
      %2207 = vmatmul.bf16.gmra.mxu0 %v2123
      %v2208 = vpop.f32.mrf.mxu0
      %v2209 = vadd.f32 0.0, %v2208
      %v2210 = vpop.f32.mrf.mxu0
      %v2211 = vadd.f32 0.0, %v2210
      %2212 = vmatmul.bf16.gmra.mxu0 %v2126
      %v2213 = vpop.f32.mrf.mxu0
      %v2214 = vadd.f32 0.0, %v2213
      %v2215 = vpop.f32.mrf.mxu0
      %v2216 = vadd.f32 0.0, %v2215
      %2217 = vmatmul.bf16.gmra.mxu0 %v2129
      %v2218 = vpop.f32.mrf.mxu0
      %v2219 = vadd.f32 0.0, %v2218
      %v2220 = vpop.f32.mrf.mxu0
      %v2221 = vadd.f32 0.0, %v2220
      %2222 = vdwg.mxu0
      %v2223 = vadd.f32 %v1980, %v2144
      %v2224 = vadd.f32 %v1981, %v2146
      %v2225 = vadd.f32 %v1982, %v2149
      %v2226 = vadd.f32 %v1983, %v2151
      %v2227 = vadd.f32 %v1984, %v2154
      %v2228 = vadd.f32 %v1985, %v2156
      %v2229 = vadd.f32 %v1986, %v2159
      %v2230 = vadd.f32 %v1987, %v2161
      %v2231 = vadd.f32 %v1988, %v2164
      %v2232 = vadd.f32 %v1989, %v2166
      %v2233 = vadd.f32 %v1990, %v2169
      %v2234 = vadd.f32 %v1991, %v2171
      %v2235 = vadd.f32 %v1992, %v2174
      %v2236 = vadd.f32 %v1993, %v2176
      %v2237 = vadd.f32 %v1994, %v2179
      %v2238 = vadd.f32 %v1995, %v2181
      %v2239 = vadd.f32 %v1996, %v2184
      %v2240 = vadd.f32 %v1997, %v2186
      %v2241 = vadd.f32 %v1998, %v2189
      %v2242 = vadd.f32 %v1999, %v2191
      %v2243 = vadd.f32 %v2000, %v2194
      %v2244 = vadd.f32 %v2001, %v2196
      %v2245 = vadd.f32 %v2002, %v2199
      %v2246 = vadd.f32 %v2003, %v2201
      %v2247 = vadd.f32 %v2004, %v2204
      %v2248 = vadd.f32 %v2005, %v2206
      %v2249 = vadd.f32 %v2006, %v2209
      %v2250 = vadd.f32 %v2007, %v2211
      %v2251 = vadd.f32 %v2008, %v2214
      %v2252 = vadd.f32 %v2009, %v2216
      %v2253 = vadd.f32 %v2010, %v2219
      %v2254 = vadd.f32 %v2011, %v2221
      %v2303 = vrot.slane %v2012, 1
      %v2304 = vrot.slane %v2013, 1
      %v2305 = vsel %vm490, %v2303, %v2304
      %v2306 = vrot.slane %v2014, 1
      %v2307 = vsel %vm490, %v2304, %v2306
      %v2308 = vrot.slane %v2015, 1
      %v2309 = vrot.slane %v2016, 1
      %v2310 = vsel %vm490, %v2308, %v2309
      %v2311 = vrot.slane %v2017, 1
      %v2312 = vsel %vm490, %v2309, %v2311
      %v2313 = vrot.slane %v2018, 1
      %v2314 = vrot.slane %v2019, 1
      %v2315 = vsel %vm490, %v2313, %v2314
      %v2316 = vrot.slane %v2020, 1
      %v2317 = vsel %vm490, %v2314, %v2316
      %v2318 = vrot.slane %v2021, 1
      %v2319 = vrot.slane %v2022, 1
      %v2320 = vsel %vm490, %v2318, %v2319
      %v2321 = vrot.slane %v2023, 1
      %v2322 = vsel %vm490, %v2319, %v2321
      %v2323 = vrot.slane %v2024, 1
      %v2324 = vrot.slane %v2025, 1
      %v2325 = vsel %vm490, %v2323, %v2324
      %v2326 = vrot.slane %v2026, 1
      %v2327 = vsel %vm490, %v2324, %v2326
      %v2328 = vrot.slane %v2027, 1
      %v2329 = vrot.slane %v2028, 1
      %v2330 = vsel %vm490, %v2328, %v2329
      %v2331 = vrot.slane %v2029, 1
      %v2332 = vsel %vm490, %v2329, %v2331
      %v2333 = vrot.slane %v2030, 1
      %v2334 = vrot.slane %v2031, 1
      %v2335 = vsel %vm490, %v2333, %v2334
      %v2336 = vrot.slane %v2032, 1
      %v2337 = vsel %vm490, %v2334, %v2336
      %v2338 = vrot.slane %v2033, 1
      %v2339 = vrot.slane %v2034, 1
      %v2340 = vsel %vm490, %v2338, %v2339
      %v2341 = vrot.slane %v2035, 1
      %v2342 = vsel %vm490, %v2339, %v2341
      %v2343 = vrot.slane %v2036, 1
      %v2344 = vrot.slane %v2037, 1
      %v2345 = vsel %vm490, %v2343, %v2344
      %v2346 = vrot.slane %v2038, 1
      %v2347 = vsel %vm490, %v2344, %v2346
      %v2348 = vrot.slane %v2039, 1
      %v2349 = vrot.slane %v2040, 1
      %v2350 = vsel %vm490, %v2348, %v2349
      %v2351 = vrot.slane %v2041, 1
      %v2352 = vsel %vm490, %v2349, %v2351
      %v2353 = vrot.slane %v2042, 1
      %v2354 = vrot.slane %v2043, 1
      %v2355 = vsel %vm490, %v2353, %v2354
      %v2356 = vrot.slane %v2044, 1
      %v2357 = vsel %vm490, %v2354, %v2356
      %v2358 = vrot.slane %v2045, 1
      %v2359 = vrot.slane %v2046, 1
      %v2360 = vsel %vm490, %v2358, %v2359
      %v2361 = vrot.slane %v2047, 1
      %v2362 = vsel %vm490, %v2359, %v2361
      %v2363 = vrot.slane %v2048, 1
      %v2364 = vrot.slane %v2049, 1
      %v2365 = vsel %vm490, %v2363, %v2364
      %v2366 = vrot.slane %v2050, 1
      %v2367 = vsel %vm490, %v2364, %v2366
      %v2368 = vrot.slane %v2051, 1
      %v2369 = vrot.slane %v2052, 1
      %v2370 = vsel %vm490, %v2368, %v2369
      %v2371 = vrot.slane %v2053, 1
      %v2372 = vsel %vm490, %v2369, %v2371
      %v2373 = vrot.slane %v2054, 1
      %v2374 = vrot.slane %v2055, 1
      %v2375 = vsel %vm490, %v2373, %v2374
      %v2376 = vrot.slane %v2056, 1
      %v2377 = vsel %vm490, %v2374, %v2376
      %v2378 = vrot.slane %v2057, 1
      %v2379 = vrot.slane %v2058, 1
      %v2380 = vsel %vm490, %v2378, %v2379
      %v2381 = vrot.slane %v2059, 1
      %v2382 = vsel %vm490, %v2379, %v2381
      %v2415 = vpack.c.bf16 %v2307, %v2305
      %v2416 = vpack.c.bf16 %v2312, %v2310
      %v2417 = vpack.c.bf16 %v2317, %v2315
      %v2418 = vpack.c.bf16 %v2322, %v2320
      %v2419 = vpack.c.bf16 %v2327, %v2325
      %v2420 = vpack.c.bf16 %v2332, %v2330
      %v2421 = vpack.c.bf16 %v2337, %v2335
      %v2422 = vpack.c.bf16 %v2342, %v2340
      %v2423 = vpack.c.bf16 %v2347, %v2345
      %v2424 = vpack.c.bf16 %v2352, %v2350
      %v2425 = vpack.c.bf16 %v2357, %v2355
      %v2426 = vpack.c.bf16 %v2362, %v2360
      %v2427 = vpack.c.bf16 %v2367, %v2365
      %v2428 = vpack.c.bf16 %v2372, %v2370
      %v2429 = vpack.c.bf16 %v2377, %v2375
      %v2430 = vpack.c.bf16 %v2382, %v2380
      %v2431 = vpack.c.bf16 %v354, %v354
      %v2433 = vsel %vm620, %v2415, 0
      %v2436 = vsel %vm620, %v2416, 0
      %v2439 = vsel %vm620, %v2417, 0
      %v2442 = vsel %vm620, %v2418, 0
      %v2445 = vsel %vm620, %v2419, 0
      %v2448 = vsel %vm620, %v2420, 0
      %v2451 = vsel %vm620, %v2421, 0
      %v2454 = vsel %vm620, %v2422, 0
      %v2457 = vsel %vm620, %v2423, 0
      %v2460 = vsel %vm620, %v2424, 0
      %v2463 = vsel %vm620, %v2425, 0
      %v2466 = vsel %vm620, %v2426, 0
      %v2469 = vsel %vm620, %v2427, 0
      %v2472 = vsel %vm620, %v2428, 0
      %v2475 = vsel %vm620, %v2429, 0
      %v2478 = vsel %vm620, %v2430, 0
      %v2481 = vsel %vm669, %v2431, 0
      %2483 = vmatpush.bf16.msra.mxu0 0
      %2484 = vmatpush.bf16.msra.mxu0 0
      %2485 = vmatpush.bf16.msra.mxu0 0
      %2486 = vmatpush.bf16.msra.mxu0 0
      %2487 = vmatpush.bf16.msra.mxu0 0
      %2488 = vmatpush.bf16.msra.mxu0 0
      %2489 = vmatpush.bf16.msra.mxu0 0
      %2490 = vmatpush.bf16.msra.mxu0 %v2481
      %2491 = vmatmul.bf16.gmra.mxu0 %v2433
      %v2492 = vpop.f32.mrf.mxu0
      %v2493 = vadd.f32 0.0, %v2492
      %v2494 = vpop.f32.mrf.mxu0
      %v2495 = vadd.f32 0.0, %v2494
      %2496 = vmatmul.bf16.gmra.mxu0 %v2436
      %v2497 = vpop.f32.mrf.mxu0
      %v2498 = vadd.f32 0.0, %v2497
      %v2499 = vpop.f32.mrf.mxu0
      %v2500 = vadd.f32 0.0, %v2499
      %2501 = vmatmul.bf16.gmra.mxu0 %v2439
      %v2502 = vpop.f32.mrf.mxu0
      %v2503 = vadd.f32 0.0, %v2502
      %v2504 = vpop.f32.mrf.mxu0
      %v2505 = vadd.f32 0.0, %v2504
      %2506 = vmatmul.bf16.gmra.mxu0 %v2442
      %v2507 = vpop.f32.mrf.mxu0
      %v2508 = vadd.f32 0.0, %v2507
      %v2509 = vpop.f32.mrf.mxu0
      %v2510 = vadd.f32 0.0, %v2509
      %2511 = vmatmul.bf16.gmra.mxu0 %v2445
      %v2512 = vpop.f32.mrf.mxu0
      %v2513 = vadd.f32 0.0, %v2512
      %v2514 = vpop.f32.mrf.mxu0
      %v2515 = vadd.f32 0.0, %v2514
      %2516 = vmatmul.bf16.gmra.mxu0 %v2448
      %v2517 = vpop.f32.mrf.mxu0
      %v2518 = vadd.f32 0.0, %v2517
      %v2519 = vpop.f32.mrf.mxu0
      %v2520 = vadd.f32 0.0, %v2519
      %2521 = vmatmul.bf16.gmra.mxu0 %v2451
      %v2522 = vpop.f32.mrf.mxu0
      %v2523 = vadd.f32 0.0, %v2522
      %v2524 = vpop.f32.mrf.mxu0
      %v2525 = vadd.f32 0.0, %v2524
      %2526 = vmatmul.bf16.gmra.mxu0 %v2454
      %v2527 = vpop.f32.mrf.mxu0
      %v2528 = vadd.f32 0.0, %v2527
      %v2529 = vpop.f32.mrf.mxu0
      %v2530 = vadd.f32 0.0, %v2529
      %2531 = vmatmul.bf16.gmra.mxu0 %v2457
      %v2532 = vpop.f32.mrf.mxu0
      %v2533 = vadd.f32 0.0, %v2532
      %v2534 = vpop.f32.mrf.mxu0
      %v2535 = vadd.f32 0.0, %v2534
      %2536 = vmatmul.bf16.gmra.mxu0 %v2460
      %v2537 = vpop.f32.mrf.mxu0
      %v2538 = vadd.f32 0.0, %v2537
      %v2539 = vpop.f32.mrf.mxu0
      %v2540 = vadd.f32 0.0, %v2539
      %2541 = vmatmul.bf16.gmra.mxu0 %v2463
      %v2542 = vpop.f32.mrf.mxu0
      %v2543 = vadd.f32 0.0, %v2542
      %v2544 = vpop.f32.mrf.mxu0
      %v2545 = vadd.f32 0.0, %v2544
      %2546 = vmatmul.bf16.gmra.mxu0 %v2466
      %v2547 = vpop.f32.mrf.mxu0
      %v2548 = vadd.f32 0.0, %v2547
      %v2549 = vpop.f32.mrf.mxu0
      %v2550 = vadd.f32 0.0, %v2549
      %2551 = vmatmul.bf16.gmra.mxu0 %v2469
      %v2552 = vpop.f32.mrf.mxu0
      %v2553 = vadd.f32 0.0, %v2552
      %v2554 = vpop.f32.mrf.mxu0
      %v2555 = vadd.f32 0.0, %v2554
      %2556 = vmatmul.bf16.gmra.mxu0 %v2472
      %v2557 = vpop.f32.mrf.mxu0
      %v2558 = vadd.f32 0.0, %v2557
      %v2559 = vpop.f32.mrf.mxu0
      %v2560 = vadd.f32 0.0, %v2559
      %2561 = vmatmul.bf16.gmra.mxu0 %v2475
      %v2562 = vpop.f32.mrf.mxu0
      %v2563 = vadd.f32 0.0, %v2562
      %v2564 = vpop.f32.mrf.mxu0
      %v2565 = vadd.f32 0.0, %v2564
      %2566 = vmatmul.bf16.gmra.mxu0 %v2478
      %v2567 = vpop.f32.mrf.mxu0
      %v2568 = vadd.f32 0.0, %v2567
      %v2569 = vpop.f32.mrf.mxu0
      %v2570 = vadd.f32 0.0, %v2569
      %2571 = vdwg.mxu0
      %v2572 = vadd.f32 %v2223, %v2493
      %v2573 = vadd.f32 %v2224, %v2495
      %v2574 = vadd.f32 %v2225, %v2498
      %v2575 = vadd.f32 %v2226, %v2500
      %v2576 = vadd.f32 %v2227, %v2503
      %v2577 = vadd.f32 %v2228, %v2505
      %v2578 = vadd.f32 %v2229, %v2508
      %v2579 = vadd.f32 %v2230, %v2510
      %v2580 = vadd.f32 %v2231, %v2513
      %v2581 = vadd.f32 %v2232, %v2515
      %v2582 = vadd.f32 %v2233, %v2518
      %v2583 = vadd.f32 %v2234, %v2520
      %v2584 = vadd.f32 %v2235, %v2523
      %v2585 = vadd.f32 %v2236, %v2525
      %v2586 = vadd.f32 %v2237, %v2528
      %v2587 = vadd.f32 %v2238, %v2530
      %v2588 = vadd.f32 %v2239, %v2533
      %v2589 = vadd.f32 %v2240, %v2535
      %v2590 = vadd.f32 %v2241, %v2538
      %v2591 = vadd.f32 %v2242, %v2540
      %v2592 = vadd.f32 %v2243, %v2543
      %v2593 = vadd.f32 %v2244, %v2545
      %v2594 = vadd.f32 %v2245, %v2548
      %v2595 = vadd.f32 %v2246, %v2550
      %v2596 = vadd.f32 %v2247, %v2553
      %v2597 = vadd.f32 %v2248, %v2555
      %v2598 = vadd.f32 %v2249, %v2558
      %v2599 = vadd.f32 %v2250, %v2560
      %v2600 = vadd.f32 %v2251, %v2563
      %v2601 = vadd.f32 %v2252, %v2565
      %v2602 = vadd.f32 %v2253, %v2568
      %v2603 = vadd.f32 %v2254, %v2570
      %v2604 = vrot.slane %v2012, 2
      %v2605 = vrot.slane %v2013, 2
      %v2606 = vsel %vm902, %v2604, %v2605
      %v2607 = vrot.slane %v2014, 2
      %v2608 = vsel %vm902, %v2605, %v2607
      %v2609 = vrot.slane %v2015, 2
      %v2610 = vrot.slane %v2016, 2
      %v2611 = vsel %vm902, %v2609, %v2610
      %v2612 = vrot.slane %v2017, 2
      %v2613 = vsel %vm902, %v2610, %v2612
      %v2614 = vrot.slane %v2018, 2
      %v2615 = vrot.slane %v2019, 2
      %v2616 = vsel %vm902, %v2614, %v2615
      %v2617 = vrot.slane %v2020, 2
      %v2618 = vsel %vm902, %v2615, %v2617
      %v2619 = vrot.slane %v2021, 2
      %v2620 = vrot.slane %v2022, 2
      %v2621 = vsel %vm902, %v2619, %v2620
      %v2622 = vrot.slane %v2023, 2
      %v2623 = vsel %vm902, %v2620, %v2622
      %v2624 = vrot.slane %v2024, 2
      %v2625 = vrot.slane %v2025, 2
      %v2626 = vsel %vm902, %v2624, %v2625
      %v2627 = vrot.slane %v2026, 2
      %v2628 = vsel %vm902, %v2625, %v2627
      %v2629 = vrot.slane %v2027, 2
      %v2630 = vrot.slane %v2028, 2
      %v2631 = vsel %vm902, %v2629, %v2630
      %v2632 = vrot.slane %v2029, 2
      %v2633 = vsel %vm902, %v2630, %v2632
      %v2634 = vrot.slane %v2030, 2
      %v2635 = vrot.slane %v2031, 2
      %v2636 = vsel %vm902, %v2634, %v2635
      %v2637 = vrot.slane %v2032, 2
      %v2638 = vsel %vm902, %v2635, %v2637
      %v2639 = vrot.slane %v2033, 2
      %v2640 = vrot.slane %v2034, 2
      %v2641 = vsel %vm902, %v2639, %v2640
      %v2642 = vrot.slane %v2035, 2
      %v2643 = vsel %vm902, %v2640, %v2642
      %v2644 = vrot.slane %v2036, 2
      %v2645 = vrot.slane %v2037, 2
      %v2646 = vsel %vm902, %v2644, %v2645
      %v2647 = vrot.slane %v2038, 2
      %v2648 = vsel %vm902, %v2645, %v2647
      %v2649 = vrot.slane %v2039, 2
      %v2650 = vrot.slane %v2040, 2
      %v2651 = vsel %vm902, %v2649, %v2650
      %v2652 = vrot.slane %v2041, 2
      %v2653 = vsel %vm902, %v2650, %v2652
      %v2654 = vrot.slane %v2042, 2
      %v2655 = vrot.slane %v2043, 2
      %v2656 = vsel %vm902, %v2654, %v2655
      %v2657 = vrot.slane %v2044, 2
      %v2658 = vsel %vm902, %v2655, %v2657
      %v2659 = vrot.slane %v2045, 2
      %v2660 = vrot.slane %v2046, 2
      %v2661 = vsel %vm902, %v2659, %v2660
      %v2662 = vrot.slane %v2047, 2
      %v2663 = vsel %vm902, %v2660, %v2662
      %v2664 = vrot.slane %v2048, 2
      %v2665 = vrot.slane %v2049, 2
      %v2666 = vsel %vm902, %v2664, %v2665
      %v2667 = vrot.slane %v2050, 2
      %v2668 = vsel %vm902, %v2665, %v2667
      %v2669 = vrot.slane %v2051, 2
      %v2670 = vrot.slane %v2052, 2
      %v2671 = vsel %vm902, %v2669, %v2670
      %v2672 = vrot.slane %v2053, 2
      %v2673 = vsel %vm902, %v2670, %v2672
      %v2674 = vrot.slane %v2054, 2
      %v2675 = vrot.slane %v2055, 2
      %v2676 = vsel %vm902, %v2674, %v2675
      %v2677 = vrot.slane %v2056, 2
      %v2678 = vsel %vm902, %v2675, %v2677
      %v2679 = vrot.slane %v2057, 2
      %v2680 = vrot.slane %v2058, 2
      %v2681 = vsel %vm902, %v2679, %v2680
      %v2682 = vrot.slane %v2059, 2
      %v2683 = vsel %vm902, %v2680, %v2682
      %v2716 = vpack.c.bf16 %v2608, %v2606
      %v2717 = vpack.c.bf16 %v2613, %v2611
      %v2718 = vpack.c.bf16 %v2618, %v2616
      %v2719 = vpack.c.bf16 %v2623, %v2621
      %v2720 = vpack.c.bf16 %v2628, %v2626
      %v2721 = vpack.c.bf16 %v2633, %v2631
      %v2722 = vpack.c.bf16 %v2638, %v2636
      %v2723 = vpack.c.bf16 %v2643, %v2641
      %v2724 = vpack.c.bf16 %v2648, %v2646
      %v2725 = vpack.c.bf16 %v2653, %v2651
      %v2726 = vpack.c.bf16 %v2658, %v2656
      %v2727 = vpack.c.bf16 %v2663, %v2661
      %v2728 = vpack.c.bf16 %v2668, %v2666
      %v2729 = vpack.c.bf16 %v2673, %v2671
      %v2730 = vpack.c.bf16 %v2678, %v2676
      %v2731 = vpack.c.bf16 %v2683, %v2681
      %v2732 = vpack.c.bf16 %v355, %v355
      %v2734 = vsel %vm620, %v2716, 0
      %v2737 = vsel %vm620, %v2717, 0
      %v2740 = vsel %vm620, %v2718, 0
      %v2743 = vsel %vm620, %v2719, 0
      %v2746 = vsel %vm620, %v2720, 0
      %v2749 = vsel %vm620, %v2721, 0
      %v2752 = vsel %vm620, %v2722, 0
      %v2755 = vsel %vm620, %v2723, 0
      %v2758 = vsel %vm620, %v2724, 0
      %v2761 = vsel %vm620, %v2725, 0
      %v2764 = vsel %vm620, %v2726, 0
      %v2767 = vsel %vm620, %v2727, 0
      %v2770 = vsel %vm620, %v2728, 0
      %v2773 = vsel %vm620, %v2729, 0
      %v2776 = vsel %vm620, %v2730, 0
      %v2779 = vsel %vm620, %v2731, 0
      %v2782 = vsel %vm669, %v2732, 0
      %2784 = vmatpush.bf16.msra.mxu0 0
      %2785 = vmatpush.bf16.msra.mxu0 0
      %2786 = vmatpush.bf16.msra.mxu0 0
      %2787 = vmatpush.bf16.msra.mxu0 0
      %2788 = vmatpush.bf16.msra.mxu0 0
      %2789 = vmatpush.bf16.msra.mxu0 0
      %2790 = vmatpush.bf16.msra.mxu0 0
      %2791 = vmatpush.bf16.msra.mxu0 %v2782
      %2792 = vmatmul.bf16.gmra.mxu0 %v2734
      %v2793 = vpop.f32.mrf.mxu0
      %v2794 = vadd.f32 0.0, %v2793
      %v2795 = vpop.f32.mrf.mxu0
      %v2796 = vadd.f32 0.0, %v2795
      %2797 = vmatmul.bf16.gmra.mxu0 %v2737
      %v2798 = vpop.f32.mrf.mxu0
      %v2799 = vadd.f32 0.0, %v2798
      %v2800 = vpop.f32.mrf.mxu0
      %v2801 = vadd.f32 0.0, %v2800
      %2802 = vmatmul.bf16.gmra.mxu0 %v2740
      %v2803 = vpop.f32.mrf.mxu0
      %v2804 = vadd.f32 0.0, %v2803
      %v2805 = vpop.f32.mrf.mxu0
      %v2806 = vadd.f32 0.0, %v2805
      %2807 = vmatmul.bf16.gmra.mxu0 %v2743
      %v2808 = vpop.f32.mrf.mxu0
      %v2809 = vadd.f32 0.0, %v2808
      %v2810 = vpop.f32.mrf.mxu0
      %v2811 = vadd.f32 0.0, %v2810
      %2812 = vmatmul.bf16.gmra.mxu0 %v2746
      %v2813 = vpop.f32.mrf.mxu0
      %v2814 = vadd.f32 0.0, %v2813
      %v2815 = vpop.f32.mrf.mxu0
      %v2816 = vadd.f32 0.0, %v2815
      %2817 = vmatmul.bf16.gmra.mxu0 %v2749
      %v2818 = vpop.f32.mrf.mxu0
      %v2819 = vadd.f32 0.0, %v2818
      %v2820 = vpop.f32.mrf.mxu0
      %v2821 = vadd.f32 0.0, %v2820
      %2822 = vmatmul.bf16.gmra.mxu0 %v2752
      %v2823 = vpop.f32.mrf.mxu0
      %v2824 = vadd.f32 0.0, %v2823
      %v2825 = vpop.f32.mrf.mxu0
      %v2826 = vadd.f32 0.0, %v2825
      %2827 = vmatmul.bf16.gmra.mxu0 %v2755
      %v2828 = vpop.f32.mrf.mxu0
      %v2829 = vadd.f32 0.0, %v2828
      %v2830 = vpop.f32.mrf.mxu0
      %v2831 = vadd.f32 0.0, %v2830
      %2832 = vmatmul.bf16.gmra.mxu0 %v2758
      %v2833 = vpop.f32.mrf.mxu0
      %v2834 = vadd.f32 0.0, %v2833
      %v2835 = vpop.f32.mrf.mxu0
      %v2836 = vadd.f32 0.0, %v2835
      %2837 = vmatmul.bf16.gmra.mxu0 %v2761
      %v2838 = vpop.f32.mrf.mxu0
      %v2839 = vadd.f32 0.0, %v2838
      %v2840 = vpop.f32.mrf.mxu0
      %v2841 = vadd.f32 0.0, %v2840
      %2842 = vmatmul.bf16.gmra.mxu0 %v2764
      %v2843 = vpop.f32.mrf.mxu0
      %v2844 = vadd.f32 0.0, %v2843
      %v2845 = vpop.f32.mrf.mxu0
      %v2846 = vadd.f32 0.0, %v2845
      %2847 = vmatmul.bf16.gmra.mxu0 %v2767
      %v2848 = vpop.f32.mrf.mxu0
      %v2849 = vadd.f32 0.0, %v2848
      %v2850 = vpop.f32.mrf.mxu0
      %v2851 = vadd.f32 0.0, %v2850
      %2852 = vmatmul.bf16.gmra.mxu0 %v2770
      %v2853 = vpop.f32.mrf.mxu0
      %v2854 = vadd.f32 0.0, %v2853
      %v2855 = vpop.f32.mrf.mxu0
      %v2856 = vadd.f32 0.0, %v2855
      %2857 = vmatmul.bf16.gmra.mxu0 %v2773
      %v2858 = vpop.f32.mrf.mxu0
      %v2859 = vadd.f32 0.0, %v2858
      %v2860 = vpop.f32.mrf.mxu0
      %v2861 = vadd.f32 0.0, %v2860
      %2862 = vmatmul.bf16.gmra.mxu0 %v2776
      %v2863 = vpop.f32.mrf.mxu0
      %v2864 = vadd.f32 0.0, %v2863
      %v2865 = vpop.f32.mrf.mxu0
      %v2866 = vadd.f32 0.0, %v2865
      %2867 = vmatmul.bf16.gmra.mxu0 %v2779
      %v2868 = vpop.f32.mrf.mxu0
      %v2869 = vadd.f32 0.0, %v2868
      %v2870 = vpop.f32.mrf.mxu0
      %v2871 = vadd.f32 0.0, %v2870
      %2872 = vdwg.mxu0
      %v2873 = vadd.f32 %v2572, %v2794
      %v2874 = vadd.f32 %v2573, %v2796
      %v2875 = vadd.f32 %v2574, %v2799
      %v2876 = vadd.f32 %v2575, %v2801
      %v2877 = vadd.f32 %v2576, %v2804
      %v2878 = vadd.f32 %v2577, %v2806
      %v2879 = vadd.f32 %v2578, %v2809
      %v2880 = vadd.f32 %v2579, %v2811
      %v2881 = vadd.f32 %v2580, %v2814
      %v2882 = vadd.f32 %v2581, %v2816
      %v2883 = vadd.f32 %v2582, %v2819
      %v2884 = vadd.f32 %v2583, %v2821
      %v2885 = vadd.f32 %v2584, %v2824
      %v2886 = vadd.f32 %v2585, %v2826
      %v2887 = vadd.f32 %v2586, %v2829
      %v2888 = vadd.f32 %v2587, %v2831
      %v2889 = vadd.f32 %v2588, %v2834
      %v2890 = vadd.f32 %v2589, %v2836
      %v2891 = vadd.f32 %v2590, %v2839
      %v2892 = vadd.f32 %v2591, %v2841
      %v2893 = vadd.f32 %v2592, %v2844
      %v2894 = vadd.f32 %v2593, %v2846
      %v2895 = vadd.f32 %v2594, %v2849
      %v2896 = vadd.f32 %v2595, %v2851
      %v2897 = vadd.f32 %v2596, %v2854
      %v2898 = vadd.f32 %v2597, %v2856
      %v2899 = vadd.f32 %v2598, %v2859
      %v2900 = vadd.f32 %v2599, %v2861
      %v2901 = vadd.f32 %v2600, %v2864
      %v2902 = vadd.f32 %v2601, %v2866
      %v2903 = vadd.f32 %v2602, %v2869
      %v2904 = vadd.f32 %v2603, %v2871
      %v2905 = vpack.c.bf16 %v2061, %v2060
      %v2906 = vpack.c.bf16 %v356, %v356
      %v2908 = vsel %vm620, %v2905, 0
      %v2911 = vsel %vm669, %v2906, 0
      %2913 = vmatpush.bf16.msra.mxu0 0
      %2914 = vmatpush.bf16.msra.mxu0 0
      %2915 = vmatpush.bf16.msra.mxu0 0
      %2916 = vmatpush.bf16.msra.mxu0 0
      %2917 = vmatpush.bf16.msra.mxu0 0
      %2918 = vmatpush.bf16.msra.mxu0 0
      %2919 = vmatpush.bf16.msra.mxu0 0
      %2920 = vmatpush.bf16.msra.mxu0 %v2911
      %2921 = vmatmul.bf16.gmra.mxu0 %v2087
      %v2922 = vpop.f32.mrf.mxu0
      %v2923 = vadd.f32 0.0, %v2922
      %v2924 = vpop.f32.mrf.mxu0
      %v2925 = vadd.f32 0.0, %v2924
      %2926 = vmatmul.bf16.gmra.mxu0 %v2090
      %v2927 = vpop.f32.mrf.mxu0
      %v2928 = vadd.f32 0.0, %v2927
      %v2929 = vpop.f32.mrf.mxu0
      %v2930 = vadd.f32 0.0, %v2929
      %2931 = vmatmul.bf16.gmra.mxu0 %v2093
      %v2932 = vpop.f32.mrf.mxu0
      %v2933 = vadd.f32 0.0, %v2932
      %v2934 = vpop.f32.mrf.mxu0
      %v2935 = vadd.f32 0.0, %v2934
      %2936 = vmatmul.bf16.gmra.mxu0 %v2096
      %v2937 = vpop.f32.mrf.mxu0
      %v2938 = vadd.f32 0.0, %v2937
      %v2939 = vpop.f32.mrf.mxu0
      %v2940 = vadd.f32 0.0, %v2939
      %2941 = vmatmul.bf16.gmra.mxu0 %v2099
      %v2942 = vpop.f32.mrf.mxu0
      %v2943 = vadd.f32 0.0, %v2942
      %v2944 = vpop.f32.mrf.mxu0
      %v2945 = vadd.f32 0.0, %v2944
      %2946 = vmatmul.bf16.gmra.mxu0 %v2102
      %v2947 = vpop.f32.mrf.mxu0
      %v2948 = vadd.f32 0.0, %v2947
      %v2949 = vpop.f32.mrf.mxu0
      %v2950 = vadd.f32 0.0, %v2949
      %2951 = vmatmul.bf16.gmra.mxu0 %v2105
      %v2952 = vpop.f32.mrf.mxu0
      %v2953 = vadd.f32 0.0, %v2952
      %v2954 = vpop.f32.mrf.mxu0
      %v2955 = vadd.f32 0.0, %v2954
      %2956 = vmatmul.bf16.gmra.mxu0 %v2108
      %v2957 = vpop.f32.mrf.mxu0
      %v2958 = vadd.f32 0.0, %v2957
      %v2959 = vpop.f32.mrf.mxu0
      %v2960 = vadd.f32 0.0, %v2959
      %2961 = vmatmul.bf16.gmra.mxu0 %v2111
      %v2962 = vpop.f32.mrf.mxu0
      %v2963 = vadd.f32 0.0, %v2962
      %v2964 = vpop.f32.mrf.mxu0
      %v2965 = vadd.f32 0.0, %v2964
      %2966 = vmatmul.bf16.gmra.mxu0 %v2114
      %v2967 = vpop.f32.mrf.mxu0
      %v2968 = vadd.f32 0.0, %v2967
      %v2969 = vpop.f32.mrf.mxu0
      %v2970 = vadd.f32 0.0, %v2969
      %2971 = vmatmul.bf16.gmra.mxu0 %v2117
      %v2972 = vpop.f32.mrf.mxu0
      %v2973 = vadd.f32 0.0, %v2972
      %v2974 = vpop.f32.mrf.mxu0
      %v2975 = vadd.f32 0.0, %v2974
      %2976 = vmatmul.bf16.gmra.mxu0 %v2120
      %v2977 = vpop.f32.mrf.mxu0
      %v2978 = vadd.f32 0.0, %v2977
      %v2979 = vpop.f32.mrf.mxu0
      %v2980 = vadd.f32 0.0, %v2979
      %2981 = vmatmul.bf16.gmra.mxu0 %v2123
      %v2982 = vpop.f32.mrf.mxu0
      %v2983 = vadd.f32 0.0, %v2982
      %v2984 = vpop.f32.mrf.mxu0
      %v2985 = vadd.f32 0.0, %v2984
      %2986 = vmatmul.bf16.gmra.mxu0 %v2126
      %v2987 = vpop.f32.mrf.mxu0
      %v2988 = vadd.f32 0.0, %v2987
      %v2989 = vpop.f32.mrf.mxu0
      %v2990 = vadd.f32 0.0, %v2989
      %2991 = vmatmul.bf16.gmra.mxu0 %v2129
      %v2992 = vpop.f32.mrf.mxu0
      %v2993 = vadd.f32 0.0, %v2992
      %v2994 = vpop.f32.mrf.mxu0
      %v2995 = vadd.f32 0.0, %v2994
      %2996 = vmatmul.bf16.gmra.mxu0 %v2908
      %v2997 = vpop.f32.mrf.mxu0
      %v2998 = vadd.f32 0.0, %v2997
      %v2999 = vpop.f32.mrf.mxu0
      %v3000 = vadd.f32 0.0, %v2999
      %3001 = vdwg.mxu0
      %v3002 = vadd.f32 %v2873, %v2923
      %v3003 = vadd.f32 %v2874, %v2925
      %v3004 = vadd.f32 %v2875, %v2928
      %v3005 = vadd.f32 %v2876, %v2930
      %v3006 = vadd.f32 %v2877, %v2933
      %v3007 = vadd.f32 %v2878, %v2935
      %v3008 = vadd.f32 %v2879, %v2938
      %v3009 = vadd.f32 %v2880, %v2940
      %v3010 = vadd.f32 %v2881, %v2943
      %v3011 = vadd.f32 %v2882, %v2945
      %v3012 = vadd.f32 %v2883, %v2948
      %v3013 = vadd.f32 %v2884, %v2950
      %v3014 = vadd.f32 %v2885, %v2953
      %v3015 = vadd.f32 %v2886, %v2955
      %v3016 = vadd.f32 %v2887, %v2958
      %v3017 = vadd.f32 %v2888, %v2960
      %v3018 = vadd.f32 %v2889, %v2963
      %v3019 = vadd.f32 %v2890, %v2965
      %v3020 = vadd.f32 %v2891, %v2968
      %v3021 = vadd.f32 %v2892, %v2970
      %v3022 = vadd.f32 %v2893, %v2973
      %v3023 = vadd.f32 %v2894, %v2975
      %v3024 = vadd.f32 %v2895, %v2978
      %v3025 = vadd.f32 %v2896, %v2980
      %v3026 = vadd.f32 %v2897, %v2983
      %v3027 = vadd.f32 %v2898, %v2985
      %v3028 = vadd.f32 %v2899, %v2988
      %v3029 = vadd.f32 %v2900, %v2990
      %v3030 = vadd.f32 %v2901, %v2993
      %v3031 = vadd.f32 %v2902, %v2995
      %v3032 = vadd.f32 %v2903, %v2998
      %v3033 = vadd.f32 %v2904, %v3000
      %v3037 = vrot.slane %v2060, 1
      %v3038 = vrot.slane %v2061, 1
      %v3039 = vsel %vm490, %v3037, %v3038
      %v3040 = vrot.slane %v2062, 1
      %v3041 = vsel %vm490, %v3038, %v3040
      %v3044 = vpack.c.bf16 %v3041, %v3039
      %v3045 = vpack.c.bf16 %v357, %v357
      %v3047 = vsel %vm620, %v3044, 0
      %v3050 = vsel %vm669, %v3045, 0
      %3052 = vmatpush.bf16.msra.mxu0 0
      %3053 = vmatpush.bf16.msra.mxu0 0
      %3054 = vmatpush.bf16.msra.mxu0 0
      %3055 = vmatpush.bf16.msra.mxu0 0
      %3056 = vmatpush.bf16.msra.mxu0 0
      %3057 = vmatpush.bf16.msra.mxu0 0
      %3058 = vmatpush.bf16.msra.mxu0 0
      %3059 = vmatpush.bf16.msra.mxu0 %v3050
      %3060 = vmatmul.bf16.gmra.mxu0 %v2436
      %v3061 = vpop.f32.mrf.mxu0
      %v3062 = vadd.f32 0.0, %v3061
      %v3063 = vpop.f32.mrf.mxu0
      %v3064 = vadd.f32 0.0, %v3063
      %3065 = vmatmul.bf16.gmra.mxu0 %v2439
      %v3066 = vpop.f32.mrf.mxu0
      %v3067 = vadd.f32 0.0, %v3066
      %v3068 = vpop.f32.mrf.mxu0
      %v3069 = vadd.f32 0.0, %v3068
      %3070 = vmatmul.bf16.gmra.mxu0 %v2442
      %v3071 = vpop.f32.mrf.mxu0
      %v3072 = vadd.f32 0.0, %v3071
      %v3073 = vpop.f32.mrf.mxu0
      %v3074 = vadd.f32 0.0, %v3073
      %3075 = vmatmul.bf16.gmra.mxu0 %v2445
      %v3076 = vpop.f32.mrf.mxu0
      %v3077 = vadd.f32 0.0, %v3076
      %v3078 = vpop.f32.mrf.mxu0
      %v3079 = vadd.f32 0.0, %v3078
      %3080 = vmatmul.bf16.gmra.mxu0 %v2448
      %v3081 = vpop.f32.mrf.mxu0
      %v3082 = vadd.f32 0.0, %v3081
      %v3083 = vpop.f32.mrf.mxu0
      %v3084 = vadd.f32 0.0, %v3083
      %3085 = vmatmul.bf16.gmra.mxu0 %v2451
      %v3086 = vpop.f32.mrf.mxu0
      %v3087 = vadd.f32 0.0, %v3086
      %v3088 = vpop.f32.mrf.mxu0
      %v3089 = vadd.f32 0.0, %v3088
      %3090 = vmatmul.bf16.gmra.mxu0 %v2454
      %v3091 = vpop.f32.mrf.mxu0
      %v3092 = vadd.f32 0.0, %v3091
      %v3093 = vpop.f32.mrf.mxu0
      %v3094 = vadd.f32 0.0, %v3093
      %3095 = vmatmul.bf16.gmra.mxu0 %v2457
      %v3096 = vpop.f32.mrf.mxu0
      %v3097 = vadd.f32 0.0, %v3096
      %v3098 = vpop.f32.mrf.mxu0
      %v3099 = vadd.f32 0.0, %v3098
      %3100 = vmatmul.bf16.gmra.mxu0 %v2460
      %v3101 = vpop.f32.mrf.mxu0
      %v3102 = vadd.f32 0.0, %v3101
      %v3103 = vpop.f32.mrf.mxu0
      %v3104 = vadd.f32 0.0, %v3103
      %3105 = vmatmul.bf16.gmra.mxu0 %v2463
      %v3106 = vpop.f32.mrf.mxu0
      %v3107 = vadd.f32 0.0, %v3106
      %v3108 = vpop.f32.mrf.mxu0
      %v3109 = vadd.f32 0.0, %v3108
      %3110 = vmatmul.bf16.gmra.mxu0 %v2466
      %v3111 = vpop.f32.mrf.mxu0
      %v3112 = vadd.f32 0.0, %v3111
      %v3113 = vpop.f32.mrf.mxu0
      %v3114 = vadd.f32 0.0, %v3113
      %3115 = vmatmul.bf16.gmra.mxu0 %v2469
      %v3116 = vpop.f32.mrf.mxu0
      %v3117 = vadd.f32 0.0, %v3116
      %v3118 = vpop.f32.mrf.mxu0
      %v3119 = vadd.f32 0.0, %v3118
      %3120 = vmatmul.bf16.gmra.mxu0 %v2472
      %v3121 = vpop.f32.mrf.mxu0
      %v3122 = vadd.f32 0.0, %v3121
      %v3123 = vpop.f32.mrf.mxu0
      %v3124 = vadd.f32 0.0, %v3123
      %3125 = vmatmul.bf16.gmra.mxu0 %v2475
      %v3126 = vpop.f32.mrf.mxu0
      %v3127 = vadd.f32 0.0, %v3126
      %v3128 = vpop.f32.mrf.mxu0
      %v3129 = vadd.f32 0.0, %v3128
      %3130 = vmatmul.bf16.gmra.mxu0 %v2478
      %v3131 = vpop.f32.mrf.mxu0
      %v3132 = vadd.f32 0.0, %v3131
      %v3133 = vpop.f32.mrf.mxu0
      %v3134 = vadd.f32 0.0, %v3133
      %3135 = vmatmul.bf16.gmra.mxu0 %v3047
      %v3136 = vpop.f32.mrf.mxu0
      %v3137 = vadd.f32 0.0, %v3136
      %v3138 = vpop.f32.mrf.mxu0
      %v3139 = vadd.f32 0.0, %v3138
      %3140 = vdwg.mxu0
      %v3141 = vadd.f32 %v3002, %v3062
      %v3142 = vadd.f32 %v3003, %v3064
      %v3143 = vadd.f32 %v3004, %v3067
      %v3144 = vadd.f32 %v3005, %v3069
      %v3145 = vadd.f32 %v3006, %v3072
      %v3146 = vadd.f32 %v3007, %v3074
      %v3147 = vadd.f32 %v3008, %v3077
      %v3148 = vadd.f32 %v3009, %v3079
      %v3149 = vadd.f32 %v3010, %v3082
      %v3150 = vadd.f32 %v3011, %v3084
      %v3151 = vadd.f32 %v3012, %v3087
      %v3152 = vadd.f32 %v3013, %v3089
      %v3153 = vadd.f32 %v3014, %v3092
      %v3154 = vadd.f32 %v3015, %v3094
      %v3155 = vadd.f32 %v3016, %v3097
      %v3156 = vadd.f32 %v3017, %v3099
      %v3157 = vadd.f32 %v3018, %v3102
      %v3158 = vadd.f32 %v3019, %v3104
      %v3159 = vadd.f32 %v3020, %v3107
      %v3160 = vadd.f32 %v3021, %v3109
      %v3161 = vadd.f32 %v3022, %v3112
      %v3162 = vadd.f32 %v3023, %v3114
      %v3163 = vadd.f32 %v3024, %v3117
      %v3164 = vadd.f32 %v3025, %v3119
      %v3165 = vadd.f32 %v3026, %v3122
      %v3166 = vadd.f32 %v3027, %v3124
      %v3167 = vadd.f32 %v3028, %v3127
      %v3168 = vadd.f32 %v3029, %v3129
      %v3169 = vadd.f32 %v3030, %v3132
      %v3170 = vadd.f32 %v3031, %v3134
      %v3171 = vadd.f32 %v3032, %v3137
      %v3172 = vadd.f32 %v3033, %v3139
      %v3173 = vrot.slane %v2060, 2
      %v3174 = vrot.slane %v2061, 2
      %v3175 = vsel %vm902, %v3173, %v3174
      %v3176 = vrot.slane %v2062, 2
      %v3177 = vsel %vm902, %v3174, %v3176
      %v3180 = vpack.c.bf16 %v3177, %v3175
      %v3181 = vpack.c.bf16 %v358, %v358
      %v3183 = vsel %vm620, %v3180, 0
      %v3186 = vsel %vm669, %v3181, 0
      %3188 = vmatpush.bf16.msra.mxu0 0
      %3189 = vmatpush.bf16.msra.mxu0 0
      %3190 = vmatpush.bf16.msra.mxu0 0
      %3191 = vmatpush.bf16.msra.mxu0 0
      %3192 = vmatpush.bf16.msra.mxu0 0
      %3193 = vmatpush.bf16.msra.mxu0 0
      %3194 = vmatpush.bf16.msra.mxu0 0
      %3195 = vmatpush.bf16.msra.mxu0 %v3186
      %3196 = vmatmul.bf16.gmra.mxu0 %v2737
      %v3197 = vpop.f32.mrf.mxu0
      %v3198 = vadd.f32 0.0, %v3197
      %v3199 = vpop.f32.mrf.mxu0
      %v3200 = vadd.f32 0.0, %v3199
      %3201 = vmatmul.bf16.gmra.mxu0 %v2740
      %v3202 = vpop.f32.mrf.mxu0
      %v3203 = vadd.f32 0.0, %v3202
      %v3204 = vpop.f32.mrf.mxu0
      %v3205 = vadd.f32 0.0, %v3204
      %3206 = vmatmul.bf16.gmra.mxu0 %v2743
      %v3207 = vpop.f32.mrf.mxu0
      %v3208 = vadd.f32 0.0, %v3207
      %v3209 = vpop.f32.mrf.mxu0
      %v3210 = vadd.f32 0.0, %v3209
      %3211 = vmatmul.bf16.gmra.mxu0 %v2746
      %v3212 = vpop.f32.mrf.mxu0
      %v3213 = vadd.f32 0.0, %v3212
      %v3214 = vpop.f32.mrf.mxu0
      %v3215 = vadd.f32 0.0, %v3214
      %3216 = vmatmul.bf16.gmra.mxu0 %v2749
      %v3217 = vpop.f32.mrf.mxu0
      %v3218 = vadd.f32 0.0, %v3217
      %v3219 = vpop.f32.mrf.mxu0
      %v3220 = vadd.f32 0.0, %v3219
      %3221 = vmatmul.bf16.gmra.mxu0 %v2752
      %v3222 = vpop.f32.mrf.mxu0
      %v3223 = vadd.f32 0.0, %v3222
      %v3224 = vpop.f32.mrf.mxu0
      %v3225 = vadd.f32 0.0, %v3224
      %3226 = vmatmul.bf16.gmra.mxu0 %v2755
      %v3227 = vpop.f32.mrf.mxu0
      %v3228 = vadd.f32 0.0, %v3227
      %v3229 = vpop.f32.mrf.mxu0
      %v3230 = vadd.f32 0.0, %v3229
      %3231 = vmatmul.bf16.gmra.mxu0 %v2758
      %v3232 = vpop.f32.mrf.mxu0
      %v3233 = vadd.f32 0.0, %v3232
      %v3234 = vpop.f32.mrf.mxu0
      %v3235 = vadd.f32 0.0, %v3234
      %3236 = vmatmul.bf16.gmra.mxu0 %v2761
      %v3237 = vpop.f32.mrf.mxu0
      %v3238 = vadd.f32 0.0, %v3237
      %v3239 = vpop.f32.mrf.mxu0
      %v3240 = vadd.f32 0.0, %v3239
      %3241 = vmatmul.bf16.gmra.mxu0 %v2764
      %v3242 = vpop.f32.mrf.mxu0
      %v3243 = vadd.f32 0.0, %v3242
      %v3244 = vpop.f32.mrf.mxu0
      %v3245 = vadd.f32 0.0, %v3244
      %3246 = vmatmul.bf16.gmra.mxu0 %v2767
      %v3247 = vpop.f32.mrf.mxu0
      %v3248 = vadd.f32 0.0, %v3247
      %v3249 = vpop.f32.mrf.mxu0
      %v3250 = vadd.f32 0.0, %v3249
      %3251 = vmatmul.bf16.gmra.mxu0 %v2770
      %v3252 = vpop.f32.mrf.mxu0
      %v3253 = vadd.f32 0.0, %v3252
      %v3254 = vpop.f32.mrf.mxu0
      %v3255 = vadd.f32 0.0, %v3254
      %3256 = vmatmul.bf16.gmra.mxu0 %v2773
      %v3257 = vpop.f32.mrf.mxu0
      %v3258 = vadd.f32 0.0, %v3257
      %v3259 = vpop.f32.mrf.mxu0
      %v3260 = vadd.f32 0.0, %v3259
      %3261 = vmatmul.bf16.gmra.mxu0 %v2776
      %v3262 = vpop.f32.mrf.mxu0
      %v3263 = vadd.f32 0.0, %v3262
      %v3264 = vpop.f32.mrf.mxu0
      %v3265 = vadd.f32 0.0, %v3264
      %3266 = vmatmul.bf16.gmra.mxu0 %v2779
      %v3267 = vpop.f32.mrf.mxu0
      %v3268 = vadd.f32 0.0, %v3267
      %v3269 = vpop.f32.mrf.mxu0
      %v3270 = vadd.f32 0.0, %v3269
      %3271 = vmatmul.bf16.gmra.mxu0 %v3183
      %v3272 = vpop.f32.mrf.mxu0
      %v3273 = vadd.f32 0.0, %v3272
      %v3274 = vpop.f32.mrf.mxu0
      %v3275 = vadd.f32 0.0, %v3274
      %3276 = vdwg.mxu0
      %v3277 = vadd.f32 %v3141, %v3198
      %v3278 = vadd.f32 %v3142, %v3200
      %v3279 = vadd.f32 %v3143, %v3203
      %v3280 = vadd.f32 %v3144, %v3205
      %v3281 = vadd.f32 %v3145, %v3208
      %v3282 = vadd.f32 %v3146, %v3210
      %v3283 = vadd.f32 %v3147, %v3213
      %v3284 = vadd.f32 %v3148, %v3215
      %v3285 = vadd.f32 %v3149, %v3218
      %v3286 = vadd.f32 %v3150, %v3220
      %v3287 = vadd.f32 %v3151, %v3223
      %v3288 = vadd.f32 %v3152, %v3225
      %v3289 = vadd.f32 %v3153, %v3228
      %v3290 = vadd.f32 %v3154, %v3230
      %v3291 = vadd.f32 %v3155, %v3233
      %v3292 = vadd.f32 %v3156, %v3235
      %v3293 = vadd.f32 %v3157, %v3238
      %v3294 = vadd.f32 %v3158, %v3240
      %v3295 = vadd.f32 %v3159, %v3243
      %v3296 = vadd.f32 %v3160, %v3245
      %v3297 = vadd.f32 %v3161, %v3248
      %v3298 = vadd.f32 %v3162, %v3250
      %v3299 = vadd.f32 %v3163, %v3253
      %v3300 = vadd.f32 %v3164, %v3255
      %v3301 = vadd.f32 %v3165, %v3258
      %v3302 = vadd.f32 %v3166, %v3260
      %v3303 = vadd.f32 %v3167, %v3263
      %v3304 = vadd.f32 %v3168, %v3265
      %v3305 = vadd.f32 %v3169, %v3268
      %v3306 = vadd.f32 %v3170, %v3270
      %v3307 = vadd.f32 %v3171, %v3273
      %v3308 = vadd.f32 %v3172, %v3275
      %v3309 = vpack.c.bf16 %v2064, %v2063
      %v3310 = vpack.c.bf16 %v359, %v359
      %v3312 = vsel %vm620, %v3309, 0
      %v3315 = vsel %vm669, %v3310, 0
      %3317 = vmatpush.bf16.msra.mxu0 0
      %3318 = vmatpush.bf16.msra.mxu0 0
      %3319 = vmatpush.bf16.msra.mxu0 0
      %3320 = vmatpush.bf16.msra.mxu0 0
      %3321 = vmatpush.bf16.msra.mxu0 0
      %3322 = vmatpush.bf16.msra.mxu0 0
      %3323 = vmatpush.bf16.msra.mxu0 0
      %3324 = vmatpush.bf16.msra.mxu0 %v3315
      %3325 = vmatmul.bf16.gmra.mxu0 %v2090
      %v3326 = vpop.f32.mrf.mxu0
      %v3327 = vadd.f32 0.0, %v3326
      %v3328 = vpop.f32.mrf.mxu0
      %v3329 = vadd.f32 0.0, %v3328
      %3330 = vmatmul.bf16.gmra.mxu0 %v2093
      %v3331 = vpop.f32.mrf.mxu0
      %v3332 = vadd.f32 0.0, %v3331
      %v3333 = vpop.f32.mrf.mxu0
      %v3334 = vadd.f32 0.0, %v3333
      %3335 = vmatmul.bf16.gmra.mxu0 %v2096
      %v3336 = vpop.f32.mrf.mxu0
      %v3337 = vadd.f32 0.0, %v3336
      %v3338 = vpop.f32.mrf.mxu0
      %v3339 = vadd.f32 0.0, %v3338
      %3340 = vmatmul.bf16.gmra.mxu0 %v2099
      %v3341 = vpop.f32.mrf.mxu0
      %v3342 = vadd.f32 0.0, %v3341
      %v3343 = vpop.f32.mrf.mxu0
      %v3344 = vadd.f32 0.0, %v3343
      %3345 = vmatmul.bf16.gmra.mxu0 %v2102
      %v3346 = vpop.f32.mrf.mxu0
      %v3347 = vadd.f32 0.0, %v3346
      %v3348 = vpop.f32.mrf.mxu0
      %v3349 = vadd.f32 0.0, %v3348
      %3350 = vmatmul.bf16.gmra.mxu0 %v2105
      %v3351 = vpop.f32.mrf.mxu0
      %v3352 = vadd.f32 0.0, %v3351
      %v3353 = vpop.f32.mrf.mxu0
      %v3354 = vadd.f32 0.0, %v3353
      %3355 = vmatmul.bf16.gmra.mxu0 %v2108
      %v3356 = vpop.f32.mrf.mxu0
      %v3357 = vadd.f32 0.0, %v3356
      %v3358 = vpop.f32.mrf.mxu0
      %v3359 = vadd.f32 0.0, %v3358
      %3360 = vmatmul.bf16.gmra.mxu0 %v2111
      %v3361 = vpop.f32.mrf.mxu0
      %v3362 = vadd.f32 0.0, %v3361
      %v3363 = vpop.f32.mrf.mxu0
      %v3364 = vadd.f32 0.0, %v3363
      %3365 = vmatmul.bf16.gmra.mxu0 %v2114
      %v3366 = vpop.f32.mrf.mxu0
      %v3367 = vadd.f32 0.0, %v3366
      %v3368 = vpop.f32.mrf.mxu0
      %v3369 = vadd.f32 0.0, %v3368
      %3370 = vmatmul.bf16.gmra.mxu0 %v2117
      %v3371 = vpop.f32.mrf.mxu0
      %v3372 = vadd.f32 0.0, %v3371
      %v3373 = vpop.f32.mrf.mxu0
      %v3374 = vadd.f32 0.0, %v3373
      %3375 = vmatmul.bf16.gmra.mxu0 %v2120
      %v3376 = vpop.f32.mrf.mxu0
      %v3377 = vadd.f32 0.0, %v3376
      %v3378 = vpop.f32.mrf.mxu0
      %v3379 = vadd.f32 0.0, %v3378
      %3380 = vmatmul.bf16.gmra.mxu0 %v2123
      %v3381 = vpop.f32.mrf.mxu0
      %v3382 = vadd.f32 0.0, %v3381
      %v3383 = vpop.f32.mrf.mxu0
      %v3384 = vadd.f32 0.0, %v3383
      %3385 = vmatmul.bf16.gmra.mxu0 %v2126
      %v3386 = vpop.f32.mrf.mxu0
      %v3387 = vadd.f32 0.0, %v3386
      %v3388 = vpop.f32.mrf.mxu0
      %v3389 = vadd.f32 0.0, %v3388
      %3390 = vmatmul.bf16.gmra.mxu0 %v2129
      %v3391 = vpop.f32.mrf.mxu0
      %v3392 = vadd.f32 0.0, %v3391
      %v3393 = vpop.f32.mrf.mxu0
      %v3394 = vadd.f32 0.0, %v3393
      %3395 = vmatmul.bf16.gmra.mxu0 %v2908
      %v3396 = vpop.f32.mrf.mxu0
      %v3397 = vadd.f32 0.0, %v3396
      %v3398 = vpop.f32.mrf.mxu0
      %v3399 = vadd.f32 0.0, %v3398
      %3400 = vmatmul.bf16.gmra.mxu0 %v3312
      %v3401 = vpop.f32.mrf.mxu0
      %v3402 = vadd.f32 0.0, %v3401
      %v3403 = vpop.f32.mrf.mxu0
      %v3404 = vadd.f32 0.0, %v3403
      %3405 = vdwg.mxu0
      %v3406 = vadd.f32 %v3277, %v3327
      %v3407 = vadd.f32 %v3278, %v3329
      %v3408 = vadd.f32 %v3279, %v3332
      %v3409 = vadd.f32 %v3280, %v3334
      %v3410 = vadd.f32 %v3281, %v3337
      %v3411 = vadd.f32 %v3282, %v3339
      %v3412 = vadd.f32 %v3283, %v3342
      %v3413 = vadd.f32 %v3284, %v3344
      %v3414 = vadd.f32 %v3285, %v3347
      %v3415 = vadd.f32 %v3286, %v3349
      %v3416 = vadd.f32 %v3287, %v3352
      %v3417 = vadd.f32 %v3288, %v3354
      %v3418 = vadd.f32 %v3289, %v3357
      %v3419 = vadd.f32 %v3290, %v3359
      %v3420 = vadd.f32 %v3291, %v3362
      %v3421 = vadd.f32 %v3292, %v3364
      %v3422 = vadd.f32 %v3293, %v3367
      %v3423 = vadd.f32 %v3294, %v3369
      %v3424 = vadd.f32 %v3295, %v3372
      %v3425 = vadd.f32 %v3296, %v3374
      %v3426 = vadd.f32 %v3297, %v3377
      %v3427 = vadd.f32 %v3298, %v3379
      %v3428 = vadd.f32 %v3299, %v3382
      %v3429 = vadd.f32 %v3300, %v3384
      %v3430 = vadd.f32 %v3301, %v3387
      %v3431 = vadd.f32 %v3302, %v3389
      %v3432 = vadd.f32 %v3303, %v3392
      %v3433 = vadd.f32 %v3304, %v3394
      %v3434 = vadd.f32 %v3305, %v3397
      %v3435 = vadd.f32 %v3306, %v3399
      %v3436 = vadd.f32 %v3307, %v3402
      %v3437 = vadd.f32 %v3308, %v3404
      %v3441 = vrot.slane %v2063, 1
      %v3442 = vrot.slane %v2064, 1
      %v3443 = vsel %vm490, %v3441, %v3442
      %v3444 = vrot.slane %v2065, 1
      %v3445 = vsel %vm490, %v3442, %v3444
      %v3448 = vpack.c.bf16 %v3445, %v3443
      %v3449 = vpack.c.bf16 %v360, %v360
      %v3451 = vsel %vm620, %v3448, 0
      %v3454 = vsel %vm669, %v3449, 0
      %3456 = vmatpush.bf16.msra.mxu0 0
      %3457 = vmatpush.bf16.msra.mxu0 0
      %3458 = vmatpush.bf16.msra.mxu0 0
      %3459 = vmatpush.bf16.msra.mxu0 0
      %3460 = vmatpush.bf16.msra.mxu0 0
      %3461 = vmatpush.bf16.msra.mxu0 0
      %3462 = vmatpush.bf16.msra.mxu0 0
      %3463 = vmatpush.bf16.msra.mxu0 %v3454
      %3464 = vmatmul.bf16.gmra.mxu0 %v2439
      %v3465 = vpop.f32.mrf.mxu0
      %v3466 = vadd.f32 0.0, %v3465
      %v3467 = vpop.f32.mrf.mxu0
      %v3468 = vadd.f32 0.0, %v3467
      %3469 = vmatmul.bf16.gmra.mxu0 %v2442
      %v3470 = vpop.f32.mrf.mxu0
      %v3471 = vadd.f32 0.0, %v3470
      %v3472 = vpop.f32.mrf.mxu0
      %v3473 = vadd.f32 0.0, %v3472
      %3474 = vmatmul.bf16.gmra.mxu0 %v2445
      %v3475 = vpop.f32.mrf.mxu0
      %v3476 = vadd.f32 0.0, %v3475
      %v3477 = vpop.f32.mrf.mxu0
      %v3478 = vadd.f32 0.0, %v3477
      %3479 = vmatmul.bf16.gmra.mxu0 %v2448
      %v3480 = vpop.f32.mrf.mxu0
      %v3481 = vadd.f32 0.0, %v3480
      %v3482 = vpop.f32.mrf.mxu0
      %v3483 = vadd.f32 0.0, %v3482
      %3484 = vmatmul.bf16.gmra.mxu0 %v2451
      %v3485 = vpop.f32.mrf.mxu0
      %v3486 = vadd.f32 0.0, %v3485
      %v3487 = vpop.f32.mrf.mxu0
      %v3488 = vadd.f32 0.0, %v3487
      %3489 = vmatmul.bf16.gmra.mxu0 %v2454
      %v3490 = vpop.f32.mrf.mxu0
      %v3491 = vadd.f32 0.0, %v3490
      %v3492 = vpop.f32.mrf.mxu0
      %v3493 = vadd.f32 0.0, %v3492
      %3494 = vmatmul.bf16.gmra.mxu0 %v2457
      %v3495 = vpop.f32.mrf.mxu0
      %v3496 = vadd.f32 0.0, %v3495
      %v3497 = vpop.f32.mrf.mxu0
      %v3498 = vadd.f32 0.0, %v3497
      %3499 = vmatmul.bf16.gmra.mxu0 %v2460
      %v3500 = vpop.f32.mrf.mxu0
      %v3501 = vadd.f32 0.0, %v3500
      %v3502 = vpop.f32.mrf.mxu0
      %v3503 = vadd.f32 0.0, %v3502
      %3504 = vmatmul.bf16.gmra.mxu0 %v2463
      %v3505 = vpop.f32.mrf.mxu0
      %v3506 = vadd.f32 0.0, %v3505
      %v3507 = vpop.f32.mrf.mxu0
      %v3508 = vadd.f32 0.0, %v3507
      %3509 = vmatmul.bf16.gmra.mxu0 %v2466
      %v3510 = vpop.f32.mrf.mxu0
      %v3511 = vadd.f32 0.0, %v3510
      %v3512 = vpop.f32.mrf.mxu0
      %v3513 = vadd.f32 0.0, %v3512
      %3514 = vmatmul.bf16.gmra.mxu0 %v2469
      %v3515 = vpop.f32.mrf.mxu0
      %v3516 = vadd.f32 0.0, %v3515
      %v3517 = vpop.f32.mrf.mxu0
      %v3518 = vadd.f32 0.0, %v3517
      %3519 = vmatmul.bf16.gmra.mxu0 %v2472
      %v3520 = vpop.f32.mrf.mxu0
      %v3521 = vadd.f32 0.0, %v3520
      %v3522 = vpop.f32.mrf.mxu0
      %v3523 = vadd.f32 0.0, %v3522
      %3524 = vmatmul.bf16.gmra.mxu0 %v2475
      %v3525 = vpop.f32.mrf.mxu0
      %v3526 = vadd.f32 0.0, %v3525
      %v3527 = vpop.f32.mrf.mxu0
      %v3528 = vadd.f32 0.0, %v3527
      %3529 = vmatmul.bf16.gmra.mxu0 %v2478
      %v3530 = vpop.f32.mrf.mxu0
      %v3531 = vadd.f32 0.0, %v3530
      %v3532 = vpop.f32.mrf.mxu0
      %v3533 = vadd.f32 0.0, %v3532
      %3534 = vmatmul.bf16.gmra.mxu0 %v3047
      %v3535 = vpop.f32.mrf.mxu0
      %v3536 = vadd.f32 0.0, %v3535
      %v3537 = vpop.f32.mrf.mxu0
      %v3538 = vadd.f32 0.0, %v3537
      %3539 = vmatmul.bf16.gmra.mxu0 %v3451
      %v3540 = vpop.f32.mrf.mxu0
      %v3541 = vadd.f32 0.0, %v3540
      %v3542 = vpop.f32.mrf.mxu0
      %v3543 = vadd.f32 0.0, %v3542
      %3544 = vdwg.mxu0
      %v3545 = vadd.f32 %v3406, %v3466
      %v3546 = vadd.f32 %v3407, %v3468
      %v3547 = vadd.f32 %v3408, %v3471
      %v3548 = vadd.f32 %v3409, %v3473
      %v3549 = vadd.f32 %v3410, %v3476
      %v3550 = vadd.f32 %v3411, %v3478
      %v3551 = vadd.f32 %v3412, %v3481
      %v3552 = vadd.f32 %v3413, %v3483
      %v3553 = vadd.f32 %v3414, %v3486
      %v3554 = vadd.f32 %v3415, %v3488
      %v3555 = vadd.f32 %v3416, %v3491
      %v3556 = vadd.f32 %v3417, %v3493
      %v3557 = vadd.f32 %v3418, %v3496
      %v3558 = vadd.f32 %v3419, %v3498
      %v3559 = vadd.f32 %v3420, %v3501
      %v3560 = vadd.f32 %v3421, %v3503
      %v3561 = vadd.f32 %v3422, %v3506
      %v3562 = vadd.f32 %v3423, %v3508
      %v3563 = vadd.f32 %v3424, %v3511
      %v3564 = vadd.f32 %v3425, %v3513
      %v3565 = vadd.f32 %v3426, %v3516
      %v3566 = vadd.f32 %v3427, %v3518
      %v3567 = vadd.f32 %v3428, %v3521
      %v3568 = vadd.f32 %v3429, %v3523
      %v3569 = vadd.f32 %v3430, %v3526
      %v3570 = vadd.f32 %v3431, %v3528
      %v3571 = vadd.f32 %v3432, %v3531
      %v3572 = vadd.f32 %v3433, %v3533
      %v3573 = vadd.f32 %v3434, %v3536
      %v3574 = vadd.f32 %v3435, %v3538
      %v3575 = vadd.f32 %v3436, %v3541
      %v3576 = vadd.f32 %v3437, %v3543
      %v3577 = vrot.slane %v2063, 2
      %v3578 = vrot.slane %v2064, 2
      %v3579 = vsel %vm902, %v3577, %v3578
      %v3580 = vrot.slane %v2065, 2
      %v3581 = vsel %vm902, %v3578, %v3580
      %v3584 = vpack.c.bf16 %v3581, %v3579
      %v3585 = vpack.c.bf16 %v361, %v361
      %v3587 = vsel %vm620, %v3584, 0
      %v3590 = vsel %vm669, %v3585, 0
      %3592 = vmatpush.bf16.msra.mxu0 0
      %3593 = vmatpush.bf16.msra.mxu0 0
      %3594 = vmatpush.bf16.msra.mxu0 0
      %3595 = vmatpush.bf16.msra.mxu0 0
      %3596 = vmatpush.bf16.msra.mxu0 0
      %3597 = vmatpush.bf16.msra.mxu0 0
      %3598 = vmatpush.bf16.msra.mxu0 0
      %3599 = vmatpush.bf16.msra.mxu0 %v3590
      %3600 = vmatmul.bf16.gmra.mxu0 %v2740
      %v3601 = vpop.f32.mrf.mxu0
      %v3602 = vadd.f32 0.0, %v3601
      %v3603 = vpop.f32.mrf.mxu0
      %v3604 = vadd.f32 0.0, %v3603
      %3605 = vmatmul.bf16.gmra.mxu0 %v2743
      %v3606 = vpop.f32.mrf.mxu0
      %v3607 = vadd.f32 0.0, %v3606
      %v3608 = vpop.f32.mrf.mxu0
      %v3609 = vadd.f32 0.0, %v3608
      %3610 = vmatmul.bf16.gmra.mxu0 %v2746
      %v3611 = vpop.f32.mrf.mxu0
      %v3612 = vadd.f32 0.0, %v3611
      %v3613 = vpop.f32.mrf.mxu0
      %v3614 = vadd.f32 0.0, %v3613
      %3615 = vmatmul.bf16.gmra.mxu0 %v2749
      %v3616 = vpop.f32.mrf.mxu0
      %v3617 = vadd.f32 0.0, %v3616
      %v3618 = vpop.f32.mrf.mxu0
      %v3619 = vadd.f32 0.0, %v3618
      %3620 = vmatmul.bf16.gmra.mxu0 %v2752
      %v3621 = vpop.f32.mrf.mxu0
      %v3622 = vadd.f32 0.0, %v3621
      %v3623 = vpop.f32.mrf.mxu0
      %v3624 = vadd.f32 0.0, %v3623
      %3625 = vmatmul.bf16.gmra.mxu0 %v2755
      %v3626 = vpop.f32.mrf.mxu0
      %v3627 = vadd.f32 0.0, %v3626
      %v3628 = vpop.f32.mrf.mxu0
      %v3629 = vadd.f32 0.0, %v3628
      %3630 = vmatmul.bf16.gmra.mxu0 %v2758
      %v3631 = vpop.f32.mrf.mxu0
      %v3632 = vadd.f32 0.0, %v3631
      %v3633 = vpop.f32.mrf.mxu0
      %v3634 = vadd.f32 0.0, %v3633
      %3635 = vmatmul.bf16.gmra.mxu0 %v2761
      %v3636 = vpop.f32.mrf.mxu0
      %v3637 = vadd.f32 0.0, %v3636
      %v3638 = vpop.f32.mrf.mxu0
      %v3639 = vadd.f32 0.0, %v3638
      %3640 = vmatmul.bf16.gmra.mxu0 %v2764
      %v3641 = vpop.f32.mrf.mxu0
      %v3642 = vadd.f32 0.0, %v3641
      %v3643 = vpop.f32.mrf.mxu0
      %v3644 = vadd.f32 0.0, %v3643
      %3645 = vmatmul.bf16.gmra.mxu0 %v2767
      %v3646 = vpop.f32.mrf.mxu0
      %v3647 = vadd.f32 0.0, %v3646
      %v3648 = vpop.f32.mrf.mxu0
      %v3649 = vadd.f32 0.0, %v3648
      %3650 = vmatmul.bf16.gmra.mxu0 %v2770
      %v3651 = vpop.f32.mrf.mxu0
      %v3652 = vadd.f32 0.0, %v3651
      %v3653 = vpop.f32.mrf.mxu0
      %v3654 = vadd.f32 0.0, %v3653
      %3655 = vmatmul.bf16.gmra.mxu0 %v2773
      %v3656 = vpop.f32.mrf.mxu0
      %v3657 = vadd.f32 0.0, %v3656
      %v3658 = vpop.f32.mrf.mxu0
      %v3659 = vadd.f32 0.0, %v3658
      %3660 = vmatmul.bf16.gmra.mxu0 %v2776
      %v3661 = vpop.f32.mrf.mxu0
      %v3662 = vadd.f32 0.0, %v3661
      %v3663 = vpop.f32.mrf.mxu0
      %v3664 = vadd.f32 0.0, %v3663
      %3665 = vmatmul.bf16.gmra.mxu0 %v2779
      %v3666 = vpop.f32.mrf.mxu0
      %v3667 = vadd.f32 0.0, %v3666
      %v3668 = vpop.f32.mrf.mxu0
      %v3669 = vadd.f32 0.0, %v3668
      %3670 = vmatmul.bf16.gmra.mxu0 %v3183
      %v3671 = vpop.f32.mrf.mxu0
      %v3672 = vadd.f32 0.0, %v3671
      %v3673 = vpop.f32.mrf.mxu0
      %v3674 = vadd.f32 0.0, %v3673
      %3675 = vmatmul.bf16.gmra.mxu0 %v3587
      %v3676 = vpop.f32.mrf.mxu0
      %v3677 = vadd.f32 0.0, %v3676
      %v3678 = vpop.f32.mrf.mxu0
      %v3679 = vadd.f32 0.0, %v3678
      %3680 = vdwg.mxu0
      %v3681 = vadd.f32 %v3545, %v3602
      %v3682 = vadd.f32 %v3546, %v3604
      %v3683 = vadd.f32 %v3547, %v3607
      %v3684 = vadd.f32 %v3548, %v3609
      %v3685 = vadd.f32 %v3549, %v3612
      %v3686 = vadd.f32 %v3550, %v3614
      %v3687 = vadd.f32 %v3551, %v3617
      %v3688 = vadd.f32 %v3552, %v3619
      %v3689 = vadd.f32 %v3553, %v3622
      %v3690 = vadd.f32 %v3554, %v3624
      %v3691 = vadd.f32 %v3555, %v3627
      %v3692 = vadd.f32 %v3556, %v3629
      %v3693 = vadd.f32 %v3557, %v3632
      %v3694 = vadd.f32 %v3558, %v3634
      %v3695 = vadd.f32 %v3559, %v3637
      %v3696 = vadd.f32 %v3560, %v3639
      %v3697 = vadd.f32 %v3561, %v3642
      %v3698 = vadd.f32 %v3562, %v3644
      %v3699 = vadd.f32 %v3563, %v3647
      %v3700 = vadd.f32 %v3564, %v3649
      %v3701 = vadd.f32 %v3565, %v3652
      %v3702 = vadd.f32 %v3566, %v3654
      %v3703 = vadd.f32 %v3567, %v3657
      %v3704 = vadd.f32 %v3568, %v3659
      %v3705 = vadd.f32 %v3569, %v3662
      %v3706 = vadd.f32 %v3570, %v3664
      %v3707 = vadd.f32 %v3571, %v3667
      %v3708 = vadd.f32 %v3572, %v3669
      %v3709 = vadd.f32 %v3573, %v3672
      %v3710 = vadd.f32 %v3574, %v3674
      %v3711 = vadd.f32 %v3575, %v3677
      %v3712 = vadd.f32 %v3576, %v3679
      %v3713 = vld [vmem:[%s332] sm:$0xff]
      %v3714 = vld [vmem:[%s332 + $0x8] sm:$0xff]
      %v3715 = vld [vmem:[%s332 + $0x10] sm:$0x3]
      %v3716 = vld [vmem:[%s332 + $0x18] sm:$0xff]
      %v3717 = vld [vmem:[%s332 + $0x20] sm:$0xff]
      %v3718 = vld [vmem:[%s332 + $0x28] sm:$0x3]
      %v3719 = vld [vmem:[%s332 + $0x30] sm:$0xff]
      %v3720 = vld [vmem:[%s332 + $0x38] sm:$0xff]
      %v3721 = vld [vmem:[%s332 + $0x40] sm:$0x3]
      %v3722 = vld [vmem:[%s332 + $0x48] sm:$0xff]
      %v3723 = vld [vmem:[%s332 + $0x50] sm:$0xff]
      %v3724 = vld [vmem:[%s332 + $0x58] sm:$0x3]
      %v3725 = vld [vmem:[%s332 + $0x60] sm:$0xff]
      %v3726 = vld [vmem:[%s332 + $0x68] sm:$0xff]
      %v3727 = vld [vmem:[%s332 + $0x70] sm:$0x3]
      %v3728 = vld [vmem:[%s332 + $0x78] sm:$0xff]
      %v3729 = vld [vmem:[%s332 + $0x80] sm:$0xff]
      %v3730 = vld [vmem:[%s332 + $0x88] sm:$0x3]
      %v3731 = vld [vmem:[%s332 + $0x90] sm:$0xff]
      %v3732 = vld [vmem:[%s332 + $0x98] sm:$0xff]
      %v3733 = vld [vmem:[%s332 + $0xa0] sm:$0x3]
      %v3734 = vld [vmem:[%s332 + $0xa8] sm:$0xff]
      %v3735 = vld [vmem:[%s332 + $0xb0] sm:$0xff]
      %v3736 = vld [vmem:[%s332 + $0xb8] sm:$0x3]
      %v3737 = vld [vmem:[%s332 + $0xc0] sm:$0xff]
      %v3738 = vld [vmem:[%s332 + $0xc8] sm:$0xff]
      %v3739 = vld [vmem:[%s332 + $0xd0] sm:$0x3]
      %v3740 = vld [vmem:[%s332 + $0xd8] sm:$0xff]
      %v3741 = vld [vmem:[%s332 + $0xe0] sm:$0xff]
      %v3742 = vld [vmem:[%s332 + $0xe8] sm:$0x3]
      %v3743 = vld [vmem:[%s332 + $0xf0] sm:$0xff]
      %v3744 = vld [vmem:[%s332 + $0xf8] sm:$0xff]
      %v3745 = vld [vmem:[%s332 + $0x100] sm:$0x3]
      %v3746 = vld [vmem:[%s332 + $0x108] sm:$0xff]
      %v3747 = vld [vmem:[%s332 + $0x110] sm:$0xff]
      %v3748 = vld [vmem:[%s332 + $0x118] sm:$0x3]
      %v3749 = vld [vmem:[%s332 + $0x120] sm:$0xff]
      %v3750 = vld [vmem:[%s332 + $0x128] sm:$0xff]
      %v3751 = vld [vmem:[%s332 + $0x130] sm:$0x3]
      %v3752 = vld [vmem:[%s332 + $0x138] sm:$0xff]
      %v3753 = vld [vmem:[%s332 + $0x140] sm:$0xff]
      %v3754 = vld [vmem:[%s332 + $0x148] sm:$0x3]
      %v3755 = vld [vmem:[%s332 + $0x150] sm:$0xff]
      %v3756 = vld [vmem:[%s332 + $0x158] sm:$0xff]
      %v3757 = vld [vmem:[%s332 + $0x160] sm:$0x3]
      %v3758 = vld [vmem:[%s332 + $0x168] sm:$0xff]
      %v3759 = vld [vmem:[%s332 + $0x170] sm:$0xff]
      %v3760 = vld [vmem:[%s332 + $0x178] sm:$0x3]
      %v3761 = vld [vmem:[%s332 + $0x180] sm:$0xff]
      %v3762 = vld [vmem:[%s332 + $0x188] sm:$0xff]
      %v3763 = vld [vmem:[%s332 + $0x190] sm:$0x3]
      %v3764 = vld [vmem:[%s332 + $0x198] sm:$0xff]
      %v3765 = vld [vmem:[%s332 + $0x1a0] sm:$0xff]
      %v3766 = vld [vmem:[%s332 + $0x1a8] sm:$0x3]
      %v3767 = vpack.c.bf16 %v3714, %v3713
      %v3768 = vpack.c.bf16 %v3717, %v3716
      %v3769 = vpack.c.bf16 %v3720, %v3719
      %v3770 = vpack.c.bf16 %v3723, %v3722
      %v3771 = vpack.c.bf16 %v3726, %v3725
      %v3772 = vpack.c.bf16 %v3729, %v3728
      %v3773 = vpack.c.bf16 %v3732, %v3731
      %v3774 = vpack.c.bf16 %v3735, %v3734
      %v3775 = vpack.c.bf16 %v3738, %v3737
      %v3776 = vpack.c.bf16 %v3741, %v3740
      %v3777 = vpack.c.bf16 %v3744, %v3743
      %v3778 = vpack.c.bf16 %v3747, %v3746
      %v3779 = vpack.c.bf16 %v3750, %v3749
      %v3780 = vpack.c.bf16 %v3753, %v3752
      %v3781 = vpack.c.bf16 %v3756, %v3755
      %v3782 = vpack.c.bf16 %v3759, %v3758
      %v3783 = vpack.c.bf16 %v362, %v362
      %v3785 = vsel %vm620, %v3767, 0
      %v3788 = vsel %vm620, %v3768, 0
      %v3791 = vsel %vm620, %v3769, 0
      %v3794 = vsel %vm620, %v3770, 0
      %v3797 = vsel %vm620, %v3771, 0
      %v3800 = vsel %vm620, %v3772, 0
      %v3803 = vsel %vm620, %v3773, 0
      %v3806 = vsel %vm620, %v3774, 0
      %v3809 = vsel %vm620, %v3775, 0
      %v3812 = vsel %vm620, %v3776, 0
      %v3815 = vsel %vm620, %v3777, 0
      %v3818 = vsel %vm620, %v3778, 0
      %v3821 = vsel %vm620, %v3779, 0
      %v3824 = vsel %vm620, %v3780, 0
      %v3827 = vsel %vm620, %v3781, 0
      %v3830 = vsel %vm620, %v3782, 0
      %v3833 = vsel %vm669, %v3783, 0
      %3835 = vmatpush.bf16.msra.mxu0 0
      %3836 = vmatpush.bf16.msra.mxu0 0
      %3837 = vmatpush.bf16.msra.mxu0 0
      %3838 = vmatpush.bf16.msra.mxu0 0
      %3839 = vmatpush.bf16.msra.mxu0 0
      %3840 = vmatpush.bf16.msra.mxu0 0
      %3841 = vmatpush.bf16.msra.mxu0 0
      %3842 = vmatpush.bf16.msra.mxu0 %v3833
      %3843 = vmatmul.bf16.gmra.mxu0 %v3785
      %v3844 = vpop.f32.mrf.mxu0
      %v3845 = vadd.f32 0.0, %v3844
      %v3846 = vpop.f32.mrf.mxu0
      %v3847 = vadd.f32 0.0, %v3846
      %3848 = vmatmul.bf16.gmra.mxu0 %v3788
      %v3849 = vpop.f32.mrf.mxu0
      %v3850 = vadd.f32 0.0, %v3849
      %v3851 = vpop.f32.mrf.mxu0
      %v3852 = vadd.f32 0.0, %v3851
      %3853 = vmatmul.bf16.gmra.mxu0 %v3791
      %v3854 = vpop.f32.mrf.mxu0
      %v3855 = vadd.f32 0.0, %v3854
      %v3856 = vpop.f32.mrf.mxu0
      %v3857 = vadd.f32 0.0, %v3856
      %3858 = vmatmul.bf16.gmra.mxu0 %v3794
      %v3859 = vpop.f32.mrf.mxu0
      %v3860 = vadd.f32 0.0, %v3859
      %v3861 = vpop.f32.mrf.mxu0
      %v3862 = vadd.f32 0.0, %v3861
      %3863 = vmatmul.bf16.gmra.mxu0 %v3797
      %v3864 = vpop.f32.mrf.mxu0
      %v3865 = vadd.f32 0.0, %v3864
      %v3866 = vpop.f32.mrf.mxu0
      %v3867 = vadd.f32 0.0, %v3866
      %3868 = vmatmul.bf16.gmra.mxu0 %v3800
      %v3869 = vpop.f32.mrf.mxu0
      %v3870 = vadd.f32 0.0, %v3869
      %v3871 = vpop.f32.mrf.mxu0
      %v3872 = vadd.f32 0.0, %v3871
      %3873 = vmatmul.bf16.gmra.mxu0 %v3803
      %v3874 = vpop.f32.mrf.mxu0
      %v3875 = vadd.f32 0.0, %v3874
      %v3876 = vpop.f32.mrf.mxu0
      %v3877 = vadd.f32 0.0, %v3876
      %3878 = vmatmul.bf16.gmra.mxu0 %v3806
      %v3879 = vpop.f32.mrf.mxu0
      %v3880 = vadd.f32 0.0, %v3879
      %v3881 = vpop.f32.mrf.mxu0
      %v3882 = vadd.f32 0.0, %v3881
      %3883 = vmatmul.bf16.gmra.mxu0 %v3809
      %v3884 = vpop.f32.mrf.mxu0
      %v3885 = vadd.f32 0.0, %v3884
      %v3886 = vpop.f32.mrf.mxu0
      %v3887 = vadd.f32 0.0, %v3886
      %3888 = vmatmul.bf16.gmra.mxu0 %v3812
      %v3889 = vpop.f32.mrf.mxu0
      %v3890 = vadd.f32 0.0, %v3889
      %v3891 = vpop.f32.mrf.mxu0
      %v3892 = vadd.f32 0.0, %v3891
      %3893 = vmatmul.bf16.gmra.mxu0 %v3815
      %v3894 = vpop.f32.mrf.mxu0
      %v3895 = vadd.f32 0.0, %v3894
      %v3896 = vpop.f32.mrf.mxu0
      %v3897 = vadd.f32 0.0, %v3896
      %3898 = vmatmul.bf16.gmra.mxu0 %v3818
      %v3899 = vpop.f32.mrf.mxu0
      %v3900 = vadd.f32 0.0, %v3899
      %v3901 = vpop.f32.mrf.mxu0
      %v3902 = vadd.f32 0.0, %v3901
      %3903 = vmatmul.bf16.gmra.mxu0 %v3821
      %v3904 = vpop.f32.mrf.mxu0
      %v3905 = vadd.f32 0.0, %v3904
      %v3906 = vpop.f32.mrf.mxu0
      %v3907 = vadd.f32 0.0, %v3906
      %3908 = vmatmul.bf16.gmra.mxu0 %v3824
      %v3909 = vpop.f32.mrf.mxu0
      %v3910 = vadd.f32 0.0, %v3909
      %v3911 = vpop.f32.mrf.mxu0
      %v3912 = vadd.f32 0.0, %v3911
      %3913 = vmatmul.bf16.gmra.mxu0 %v3827
      %v3914 = vpop.f32.mrf.mxu0
      %v3915 = vadd.f32 0.0, %v3914
      %v3916 = vpop.f32.mrf.mxu0
      %v3917 = vadd.f32 0.0, %v3916
      %3918 = vmatmul.bf16.gmra.mxu0 %v3830
      %v3919 = vpop.f32.mrf.mxu0
      %v3920 = vadd.f32 0.0, %v3919
      %v3921 = vpop.f32.mrf.mxu0
      %v3922 = vadd.f32 0.0, %v3921
      %3923 = vdwg.mxu0
      %v3924 = vadd.f32 %v3681, %v3845
      %v3925 = vadd.f32 %v3682, %v3847
      %v3926 = vadd.f32 %v3683, %v3850
      %v3927 = vadd.f32 %v3684, %v3852
      %v3928 = vadd.f32 %v3685, %v3855
      %v3929 = vadd.f32 %v3686, %v3857
      %v3930 = vadd.f32 %v3687, %v3860
      %v3931 = vadd.f32 %v3688, %v3862
      %v3932 = vadd.f32 %v3689, %v3865
      %v3933 = vadd.f32 %v3690, %v3867
      %v3934 = vadd.f32 %v3691, %v3870
      %v3935 = vadd.f32 %v3692, %v3872
      %v3936 = vadd.f32 %v3693, %v3875
      %v3937 = vadd.f32 %v3694, %v3877
      %v3938 = vadd.f32 %v3695, %v3880
      %v3939 = vadd.f32 %v3696, %v3882
      %v3940 = vadd.f32 %v3697, %v3885
      %v3941 = vadd.f32 %v3698, %v3887
      %v3942 = vadd.f32 %v3699, %v3890
      %v3943 = vadd.f32 %v3700, %v3892
      %v3944 = vadd.f32 %v3701, %v3895
      %v3945 = vadd.f32 %v3702, %v3897
      %v3946 = vadd.f32 %v3703, %v3900
      %v3947 = vadd.f32 %v3704, %v3902
      %v3948 = vadd.f32 %v3705, %v3905
      %v3949 = vadd.f32 %v3706, %v3907
      %v3950 = vadd.f32 %v3707, %v3910
      %v3951 = vadd.f32 %v3708, %v3912
      %v3952 = vadd.f32 %v3709, %v3915
      %v3953 = vadd.f32 %v3710, %v3917
      %v3954 = vadd.f32 %v3711, %v3920
      %v3955 = vadd.f32 %v3712, %v3922
      %v4004 = vrot.slane %v3713, 1
      %v4005 = vrot.slane %v3714, 1
      %v4006 = vsel %vm490, %v4004, %v4005
      %v4007 = vrot.slane %v3715, 1
      %v4008 = vsel %vm490, %v4005, %v4007
      %v4009 = vrot.slane %v3716, 1
      %v4010 = vrot.slane %v3717, 1
      %v4011 = vsel %vm490, %v4009, %v4010
      %v4012 = vrot.slane %v3718, 1
      %v4013 = vsel %vm490, %v4010, %v4012
      %v4014 = vrot.slane %v3719, 1
      %v4015 = vrot.slane %v3720, 1
      %v4016 = vsel %vm490, %v4014, %v4015
      %v4017 = vrot.slane %v3721, 1
      %v4018 = vsel %vm490, %v4015, %v4017
      %v4019 = vrot.slane %v3722, 1
      %v4020 = vrot.slane %v3723, 1
      %v4021 = vsel %vm490, %v4019, %v4020
      %v4022 = vrot.slane %v3724, 1
      %v4023 = vsel %vm490, %v4020, %v4022
      %v4024 = vrot.slane %v3725, 1
      %v4025 = vrot.slane %v3726, 1
      %v4026 = vsel %vm490, %v4024, %v4025
      %v4027 = vrot.slane %v3727, 1
      %v4028 = vsel %vm490, %v4025, %v4027
      %v4029 = vrot.slane %v3728, 1
      %v4030 = vrot.slane %v3729, 1
      %v4031 = vsel %vm490, %v4029, %v4030
      %v4032 = vrot.slane %v3730, 1
      %v4033 = vsel %vm490, %v4030, %v4032
      %v4034 = vrot.slane %v3731, 1
      %v4035 = vrot.slane %v3732, 1
      %v4036 = vsel %vm490, %v4034, %v4035
      %v4037 = vrot.slane %v3733, 1
      %v4038 = vsel %vm490, %v4035, %v4037
      %v4039 = vrot.slane %v3734, 1
      %v4040 = vrot.slane %v3735, 1
      %v4041 = vsel %vm490, %v4039, %v4040
      %v4042 = vrot.slane %v3736, 1
      %v4043 = vsel %vm490, %v4040, %v4042
      %v4044 = vrot.slane %v3737, 1
      %v4045 = vrot.slane %v3738, 1
      %v4046 = vsel %vm490, %v4044, %v4045
      %v4047 = vrot.slane %v3739, 1
      %v4048 = vsel %vm490, %v4045, %v4047
      %v4049 = vrot.slane %v3740, 1
      %v4050 = vrot.slane %v3741, 1
      %v4051 = vsel %vm490, %v4049, %v4050
      %v4052 = vrot.slane %v3742, 1
      %v4053 = vsel %vm490, %v4050, %v4052
      %v4054 = vrot.slane %v3743, 1
      %v4055 = vrot.slane %v3744, 1
      %v4056 = vsel %vm490, %v4054, %v4055
      %v4057 = vrot.slane %v3745, 1
      %v4058 = vsel %vm490, %v4055, %v4057
      %v4059 = vrot.slane %v3746, 1
      %v4060 = vrot.slane %v3747, 1
      %v4061 = vsel %vm490, %v4059, %v4060
      %v4062 = vrot.slane %v3748, 1
      %v4063 = vsel %vm490, %v4060, %v4062
      %v4064 = vrot.slane %v3749, 1
      %v4065 = vrot.slane %v3750, 1
      %v4066 = vsel %vm490, %v4064, %v4065
      %v4067 = vrot.slane %v3751, 1
      %v4068 = vsel %vm490, %v4065, %v4067
      %v4069 = vrot.slane %v3752, 1
      %v4070 = vrot.slane %v3753, 1
      %v4071 = vsel %vm490, %v4069, %v4070
      %v4072 = vrot.slane %v3754, 1
      %v4073 = vsel %vm490, %v4070, %v4072
      %v4074 = vrot.slane %v3755, 1
      %v4075 = vrot.slane %v3756, 1
      %v4076 = vsel %vm490, %v4074, %v4075
      %v4077 = vrot.slane %v3757, 1
      %v4078 = vsel %vm490, %v4075, %v4077
      %v4079 = vrot.slane %v3758, 1
      %v4080 = vrot.slane %v3759, 1
      %v4081 = vsel %vm490, %v4079, %v4080
      %v4082 = vrot.slane %v3760, 1
      %v4083 = vsel %vm490, %v4080, %v4082
      %v4116 = vpack.c.bf16 %v4008, %v4006
      %v4117 = vpack.c.bf16 %v4013, %v4011
      %v4118 = vpack.c.bf16 %v4018, %v4016
      %v4119 = vpack.c.bf16 %v4023, %v4021
      %v4120 = vpack.c.bf16 %v4028, %v4026
      %v4121 = vpack.c.bf16 %v4033, %v4031
      %v4122 = vpack.c.bf16 %v4038, %v4036
      %v4123 = vpack.c.bf16 %v4043, %v4041
      %v4124 = vpack.c.bf16 %v4048, %v4046
      %v4125 = vpack.c.bf16 %v4053, %v4051
      %v4126 = vpack.c.bf16 %v4058, %v4056
      %v4127 = vpack.c.bf16 %v4063, %v4061
      %v4128 = vpack.c.bf16 %v4068, %v4066
      %v4129 = vpack.c.bf16 %v4073, %v4071
      %v4130 = vpack.c.bf16 %v4078, %v4076
      %v4131 = vpack.c.bf16 %v4083, %v4081
      %v4132 = vpack.c.bf16 %v363, %v363
      %v4134 = vsel %vm620, %v4116, 0
      %v4137 = vsel %vm620, %v4117, 0
      %v4140 = vsel %vm620, %v4118, 0
      %v4143 = vsel %vm620, %v4119, 0
      %v4146 = vsel %vm620, %v4120, 0
      %v4149 = vsel %vm620, %v4121, 0
      %v4152 = vsel %vm620, %v4122, 0
      %v4155 = vsel %vm620, %v4123, 0
      %v4158 = vsel %vm620, %v4124, 0
      %v4161 = vsel %vm620, %v4125, 0
      %v4164 = vsel %vm620, %v4126, 0
      %v4167 = vsel %vm620, %v4127, 0
      %v4170 = vsel %vm620, %v4128, 0
      %v4173 = vsel %vm620, %v4129, 0
      %v4176 = vsel %vm620, %v4130, 0
      %v4179 = vsel %vm620, %v4131, 0
      %v4182 = vsel %vm669, %v4132, 0
      %4184 = vmatpush.bf16.msra.mxu0 0
      %4185 = vmatpush.bf16.msra.mxu0 0
      %4186 = vmatpush.bf16.msra.mxu0 0
      %4187 = vmatpush.bf16.msra.mxu0 0
      %4188 = vmatpush.bf16.msra.mxu0 0
      %4189 = vmatpush.bf16.msra.mxu0 0
      %4190 = vmatpush.bf16.msra.mxu0 0
      %4191 = vmatpush.bf16.msra.mxu0 %v4182
      %4192 = vmatmul.bf16.gmra.mxu0 %v4134
      %v4193 = vpop.f32.mrf.mxu0
      %v4194 = vadd.f32 0.0, %v4193
      %v4195 = vpop.f32.mrf.mxu0
      %v4196 = vadd.f32 0.0, %v4195
      %4197 = vmatmul.bf16.gmra.mxu0 %v4137
      %v4198 = vpop.f32.mrf.mxu0
      %v4199 = vadd.f32 0.0, %v4198
      %v4200 = vpop.f32.mrf.mxu0
      %v4201 = vadd.f32 0.0, %v4200
      %4202 = vmatmul.bf16.gmra.mxu0 %v4140
      %v4203 = vpop.f32.mrf.mxu0
      %v4204 = vadd.f32 0.0, %v4203
      %v4205 = vpop.f32.mrf.mxu0
      %v4206 = vadd.f32 0.0, %v4205
      %4207 = vmatmul.bf16.gmra.mxu0 %v4143
      %v4208 = vpop.f32.mrf.mxu0
      %v4209 = vadd.f32 0.0, %v4208
      %v4210 = vpop.f32.mrf.mxu0
      %v4211 = vadd.f32 0.0, %v4210
      %4212 = vmatmul.bf16.gmra.mxu0 %v4146
      %v4213 = vpop.f32.mrf.mxu0
      %v4214 = vadd.f32 0.0, %v4213
      %v4215 = vpop.f32.mrf.mxu0
      %v4216 = vadd.f32 0.0, %v4215
      %4217 = vmatmul.bf16.gmra.mxu0 %v4149
      %v4218 = vpop.f32.mrf.mxu0
      %v4219 = vadd.f32 0.0, %v4218
      %v4220 = vpop.f32.mrf.mxu0
      %v4221 = vadd.f32 0.0, %v4220
      %4222 = vmatmul.bf16.gmra.mxu0 %v4152
      %v4223 = vpop.f32.mrf.mxu0
      %v4224 = vadd.f32 0.0, %v4223
      %v4225 = vpop.f32.mrf.mxu0
      %v4226 = vadd.f32 0.0, %v4225
      %4227 = vmatmul.bf16.gmra.mxu0 %v4155
      %v4228 = vpop.f32.mrf.mxu0
      %v4229 = vadd.f32 0.0, %v4228
      %v4230 = vpop.f32.mrf.mxu0
      %v4231 = vadd.f32 0.0, %v4230
      %4232 = vmatmul.bf16.gmra.mxu0 %v4158
      %v4233 = vpop.f32.mrf.mxu0
      %v4234 = vadd.f32 0.0, %v4233
      %v4235 = vpop.f32.mrf.mxu0
      %v4236 = vadd.f32 0.0, %v4235
      %4237 = vmatmul.bf16.gmra.mxu0 %v4161
      %v4238 = vpop.f32.mrf.mxu0
      %v4239 = vadd.f32 0.0, %v4238
      %v4240 = vpop.f32.mrf.mxu0
      %v4241 = vadd.f32 0.0, %v4240
      %4242 = vmatmul.bf16.gmra.mxu0 %v4164
      %v4243 = vpop.f32.mrf.mxu0
      %v4244 = vadd.f32 0.0, %v4243
      %v4245 = vpop.f32.mrf.mxu0
      %v4246 = vadd.f32 0.0, %v4245
      %4247 = vmatmul.bf16.gmra.mxu0 %v4167
      %v4248 = vpop.f32.mrf.mxu0
      %v4249 = vadd.f32 0.0, %v4248
      %v4250 = vpop.f32.mrf.mxu0
      %v4251 = vadd.f32 0.0, %v4250
      %4252 = vmatmul.bf16.gmra.mxu0 %v4170
      %v4253 = vpop.f32.mrf.mxu0
      %v4254 = vadd.f32 0.0, %v4253
      %v4255 = vpop.f32.mrf.mxu0
      %v4256 = vadd.f32 0.0, %v4255
      %4257 = vmatmul.bf16.gmra.mxu0 %v4173
      %v4258 = vpop.f32.mrf.mxu0
      %v4259 = vadd.f32 0.0, %v4258
      %v4260 = vpop.f32.mrf.mxu0
      %v4261 = vadd.f32 0.0, %v4260
      %4262 = vmatmul.bf16.gmra.mxu0 %v4176
      %v4263 = vpop.f32.mrf.mxu0
      %v4264 = vadd.f32 0.0, %v4263
      %v4265 = vpop.f32.mrf.mxu0
      %v4266 = vadd.f32 0.0, %v4265
      %4267 = vmatmul.bf16.gmra.mxu0 %v4179
      %v4268 = vpop.f32.mrf.mxu0
      %v4269 = vadd.f32 0.0, %v4268
      %v4270 = vpop.f32.mrf.mxu0
      %v4271 = vadd.f32 0.0, %v4270
      %4272 = vdwg.mxu0
      %v4273 = vadd.f32 %v3924, %v4194
      %v4274 = vadd.f32 %v3925, %v4196
      %v4275 = vadd.f32 %v3926, %v4199
      %v4276 = vadd.f32 %v3927, %v4201
      %v4277 = vadd.f32 %v3928, %v4204
      %v4278 = vadd.f32 %v3929, %v4206
      %v4279 = vadd.f32 %v3930, %v4209
      %v4280 = vadd.f32 %v3931, %v4211
      %v4281 = vadd.f32 %v3932, %v4214
      %v4282 = vadd.f32 %v3933, %v4216
      %v4283 = vadd.f32 %v3934, %v4219
      %v4284 = vadd.f32 %v3935, %v4221
      %v4285 = vadd.f32 %v3936, %v4224
      %v4286 = vadd.f32 %v3937, %v4226
      %v4287 = vadd.f32 %v3938, %v4229
      %v4288 = vadd.f32 %v3939, %v4231
      %v4289 = vadd.f32 %v3940, %v4234
      %v4290 = vadd.f32 %v3941, %v4236
      %v4291 = vadd.f32 %v3942, %v4239
      %v4292 = vadd.f32 %v3943, %v4241
      %v4293 = vadd.f32 %v3944, %v4244
      %v4294 = vadd.f32 %v3945, %v4246
      %v4295 = vadd.f32 %v3946, %v4249
      %v4296 = vadd.f32 %v3947, %v4251
      %v4297 = vadd.f32 %v3948, %v4254
      %v4298 = vadd.f32 %v3949, %v4256
      %v4299 = vadd.f32 %v3950, %v4259
      %v4300 = vadd.f32 %v3951, %v4261
      %v4301 = vadd.f32 %v3952, %v4264
      %v4302 = vadd.f32 %v3953, %v4266
      %v4303 = vadd.f32 %v3954, %v4269
      %v4304 = vadd.f32 %v3955, %v4271
      %v4305 = vrot.slane %v3713, 2
      %v4306 = vrot.slane %v3714, 2
      %v4307 = vsel %vm902, %v4305, %v4306
      %v4308 = vrot.slane %v3715, 2
      %v4309 = vsel %vm902, %v4306, %v4308
      %v4310 = vrot.slane %v3716, 2
      %v4311 = vrot.slane %v3717, 2
      %v4312 = vsel %vm902, %v4310, %v4311
      %v4313 = vrot.slane %v3718, 2
      %v4314 = vsel %vm902, %v4311, %v4313
      %v4315 = vrot.slane %v3719, 2
      %v4316 = vrot.slane %v3720, 2
      %v4317 = vsel %vm902, %v4315, %v4316
      %v4318 = vrot.slane %v3721, 2
      %v4319 = vsel %vm902, %v4316, %v4318
      %v4320 = vrot.slane %v3722, 2
      %v4321 = vrot.slane %v3723, 2
      %v4322 = vsel %vm902, %v4320, %v4321
      %v4323 = vrot.slane %v3724, 2
      %v4324 = vsel %vm902, %v4321, %v4323
      %v4325 = vrot.slane %v3725, 2
      %v4326 = vrot.slane %v3726, 2
      %v4327 = vsel %vm902, %v4325, %v4326
      %v4328 = vrot.slane %v3727, 2
      %v4329 = vsel %vm902, %v4326, %v4328
      %v4330 = vrot.slane %v3728, 2
      %v4331 = vrot.slane %v3729, 2
      %v4332 = vsel %vm902, %v4330, %v4331
      %v4333 = vrot.slane %v3730, 2
      %v4334 = vsel %vm902, %v4331, %v4333
      %v4335 = vrot.slane %v3731, 2
      %v4336 = vrot.slane %v3732, 2
      %v4337 = vsel %vm902, %v4335, %v4336
      %v4338 = vrot.slane %v3733, 2
      %v4339 = vsel %vm902, %v4336, %v4338
      %v4340 = vrot.slane %v3734, 2
      %v4341 = vrot.slane %v3735, 2
      %v4342 = vsel %vm902, %v4340, %v4341
      %v4343 = vrot.slane %v3736, 2
      %v4344 = vsel %vm902, %v4341, %v4343
      %v4345 = vrot.slane %v3737, 2
      %v4346 = vrot.slane %v3738, 2
      %v4347 = vsel %vm902, %v4345, %v4346
      %v4348 = vrot.slane %v3739, 2
      %v4349 = vsel %vm902, %v4346, %v4348
      %v4350 = vrot.slane %v3740, 2
      %v4351 = vrot.slane %v3741, 2
      %v4352 = vsel %vm902, %v4350, %v4351
      %v4353 = vrot.slane %v3742, 2
      %v4354 = vsel %vm902, %v4351, %v4353
      %v4355 = vrot.slane %v3743, 2
      %v4356 = vrot.slane %v3744, 2
      %v4357 = vsel %vm902, %v4355, %v4356
      %v4358 = vrot.slane %v3745, 2
      %v4359 = vsel %vm902, %v4356, %v4358
      %v4360 = vrot.slane %v3746, 2
      %v4361 = vrot.slane %v3747, 2
      %v4362 = vsel %vm902, %v4360, %v4361
      %v4363 = vrot.slane %v3748, 2
      %v4364 = vsel %vm902, %v4361, %v4363
      %v4365 = vrot.slane %v3749, 2
      %v4366 = vrot.slane %v3750, 2
      %v4367 = vsel %vm902, %v4365, %v4366
      %v4368 = vrot.slane %v3751, 2
      %v4369 = vsel %vm902, %v4366, %v4368
      %v4370 = vrot.slane %v3752, 2
      %v4371 = vrot.slane %v3753, 2
      %v4372 = vsel %vm902, %v4370, %v4371
      %v4373 = vrot.slane %v3754, 2
      %v4374 = vsel %vm902, %v4371, %v4373
      %v4375 = vrot.slane %v3755, 2
      %v4376 = vrot.slane %v3756, 2
      %v4377 = vsel %vm902, %v4375, %v4376
      %v4378 = vrot.slane %v3757, 2
      %v4379 = vsel %vm902, %v4376, %v4378
      %v4380 = vrot.slane %v3758, 2
      %v4381 = vrot.slane %v3759, 2
      %v4382 = vsel %vm902, %v4380, %v4381
      %v4383 = vrot.slane %v3760, 2
      %v4384 = vsel %vm902, %v4381, %v4383
      %v4417 = vpack.c.bf16 %v4309, %v4307
      %v4418 = vpack.c.bf16 %v4314, %v4312
      %v4419 = vpack.c.bf16 %v4319, %v4317
      %v4420 = vpack.c.bf16 %v4324, %v4322
      %v4421 = vpack.c.bf16 %v4329, %v4327
      %v4422 = vpack.c.bf16 %v4334, %v4332
      %v4423 = vpack.c.bf16 %v4339, %v4337
      %v4424 = vpack.c.bf16 %v4344, %v4342
      %v4425 = vpack.c.bf16 %v4349, %v4347
      %v4426 = vpack.c.bf16 %v4354, %v4352
      %v4427 = vpack.c.bf16 %v4359, %v4357
      %v4428 = vpack.c.bf16 %v4364, %v4362
      %v4429 = vpack.c.bf16 %v4369, %v4367
      %v4430 = vpack.c.bf16 %v4374, %v4372
      %v4431 = vpack.c.bf16 %v4379, %v4377
      %v4432 = vpack.c.bf16 %v4384, %v4382
      %v4433 = vpack.c.bf16 %v364, %v364
      %v4435 = vsel %vm620, %v4417, 0
      %v4438 = vsel %vm620, %v4418, 0
      %v4441 = vsel %vm620, %v4419, 0
      %v4444 = vsel %vm620, %v4420, 0
      %v4447 = vsel %vm620, %v4421, 0
      %v4450 = vsel %vm620, %v4422, 0
      %v4453 = vsel %vm620, %v4423, 0
      %v4456 = vsel %vm620, %v4424, 0
      %v4459 = vsel %vm620, %v4425, 0
      %v4462 = vsel %vm620, %v4426, 0
      %v4465 = vsel %vm620, %v4427, 0
      %v4468 = vsel %vm620, %v4428, 0
      %v4471 = vsel %vm620, %v4429, 0
      %v4474 = vsel %vm620, %v4430, 0
      %v4477 = vsel %vm620, %v4431, 0
      %v4480 = vsel %vm620, %v4432, 0
      %v4483 = vsel %vm669, %v4433, 0
      %4485 = vmatpush.bf16.msra.mxu0 0
      %4486 = vmatpush.bf16.msra.mxu0 0
      %4487 = vmatpush.bf16.msra.mxu0 0
      %4488 = vmatpush.bf16.msra.mxu0 0
      %4489 = vmatpush.bf16.msra.mxu0 0
      %4490 = vmatpush.bf16.msra.mxu0 0
      %4491 = vmatpush.bf16.msra.mxu0 0
      %4492 = vmatpush.bf16.msra.mxu0 %v4483
      %4493 = vmatmul.bf16.gmra.mxu0 %v4435
      %v4494 = vpop.f32.mrf.mxu0
      %v4495 = vadd.f32 0.0, %v4494
      %v4496 = vpop.f32.mrf.mxu0
      %v4497 = vadd.f32 0.0, %v4496
      %4498 = vmatmul.bf16.gmra.mxu0 %v4438
      %v4499 = vpop.f32.mrf.mxu0
      %v4500 = vadd.f32 0.0, %v4499
      %v4501 = vpop.f32.mrf.mxu0
      %v4502 = vadd.f32 0.0, %v4501
      %4503 = vmatmul.bf16.gmra.mxu0 %v4441
      %v4504 = vpop.f32.mrf.mxu0
      %v4505 = vadd.f32 0.0, %v4504
      %v4506 = vpop.f32.mrf.mxu0
      %v4507 = vadd.f32 0.0, %v4506
      %4508 = vmatmul.bf16.gmra.mxu0 %v4444
      %v4509 = vpop.f32.mrf.mxu0
      %v4510 = vadd.f32 0.0, %v4509
      %v4511 = vpop.f32.mrf.mxu0
      %v4512 = vadd.f32 0.0, %v4511
      %4513 = vmatmul.bf16.gmra.mxu0 %v4447
      %v4514 = vpop.f32.mrf.mxu0
      %v4515 = vadd.f32 0.0, %v4514
      %v4516 = vpop.f32.mrf.mxu0
      %v4517 = vadd.f32 0.0, %v4516
      %4518 = vmatmul.bf16.gmra.mxu0 %v4450
      %v4519 = vpop.f32.mrf.mxu0
      %v4520 = vadd.f32 0.0, %v4519
      %v4521 = vpop.f32.mrf.mxu0
      %v4522 = vadd.f32 0.0, %v4521
      %4523 = vmatmul.bf16.gmra.mxu0 %v4453
      %v4524 = vpop.f32.mrf.mxu0
      %v4525 = vadd.f32 0.0, %v4524
      %v4526 = vpop.f32.mrf.mxu0
      %v4527 = vadd.f32 0.0, %v4526
      %4528 = vmatmul.bf16.gmra.mxu0 %v4456
      %v4529 = vpop.f32.mrf.mxu0
      %v4530 = vadd.f32 0.0, %v4529
      %v4531 = vpop.f32.mrf.mxu0
      %v4532 = vadd.f32 0.0, %v4531
      %4533 = vmatmul.bf16.gmra.mxu0 %v4459
      %v4534 = vpop.f32.mrf.mxu0
      %v4535 = vadd.f32 0.0, %v4534
      %v4536 = vpop.f32.mrf.mxu0
      %v4537 = vadd.f32 0.0, %v4536
      %4538 = vmatmul.bf16.gmra.mxu0 %v4462
      %v4539 = vpop.f32.mrf.mxu0
      %v4540 = vadd.f32 0.0, %v4539
      %v4541 = vpop.f32.mrf.mxu0
      %v4542 = vadd.f32 0.0, %v4541
      %4543 = vmatmul.bf16.gmra.mxu0 %v4465
      %v4544 = vpop.f32.mrf.mxu0
      %v4545 = vadd.f32 0.0, %v4544
      %v4546 = vpop.f32.mrf.mxu0
      %v4547 = vadd.f32 0.0, %v4546
      %4548 = vmatmul.bf16.gmra.mxu0 %v4468
      %v4549 = vpop.f32.mrf.mxu0
      %v4550 = vadd.f32 0.0, %v4549
      %v4551 = vpop.f32.mrf.mxu0
      %v4552 = vadd.f32 0.0, %v4551
      %4553 = vmatmul.bf16.gmra.mxu0 %v4471
      %v4554 = vpop.f32.mrf.mxu0
      %v4555 = vadd.f32 0.0, %v4554
      %v4556 = vpop.f32.mrf.mxu0
      %v4557 = vadd.f32 0.0, %v4556
      %4558 = vmatmul.bf16.gmra.mxu0 %v4474
      %v4559 = vpop.f32.mrf.mxu0
      %v4560 = vadd.f32 0.0, %v4559
      %v4561 = vpop.f32.mrf.mxu0
      %v4562 = vadd.f32 0.0, %v4561
      %4563 = vmatmul.bf16.gmra.mxu0 %v4477
      %v4564 = vpop.f32.mrf.mxu0
      %v4565 = vadd.f32 0.0, %v4564
      %v4566 = vpop.f32.mrf.mxu0
      %v4567 = vadd.f32 0.0, %v4566
      %4568 = vmatmul.bf16.gmra.mxu0 %v4480
      %v4569 = vpop.f32.mrf.mxu0
      %v4570 = vadd.f32 0.0, %v4569
      %v4571 = vpop.f32.mrf.mxu0
      %v4572 = vadd.f32 0.0, %v4571
      %4573 = vdwg.mxu0
      %v4574 = vadd.f32 %v4273, %v4495
      %v4575 = vadd.f32 %v4274, %v4497
      %v4576 = vadd.f32 %v4275, %v4500
      %v4577 = vadd.f32 %v4276, %v4502
      %v4578 = vadd.f32 %v4277, %v4505
      %v4579 = vadd.f32 %v4278, %v4507
      %v4580 = vadd.f32 %v4279, %v4510
      %v4581 = vadd.f32 %v4280, %v4512
      %v4582 = vadd.f32 %v4281, %v4515
      %v4583 = vadd.f32 %v4282, %v4517
      %v4584 = vadd.f32 %v4283, %v4520
      %v4585 = vadd.f32 %v4284, %v4522
      %v4586 = vadd.f32 %v4285, %v4525
      %v4587 = vadd.f32 %v4286, %v4527
      %v4588 = vadd.f32 %v4287, %v4530
      %v4589 = vadd.f32 %v4288, %v4532
      %v4590 = vadd.f32 %v4289, %v4535
      %v4591 = vadd.f32 %v4290, %v4537
      %v4592 = vadd.f32 %v4291, %v4540
      %v4593 = vadd.f32 %v4292, %v4542
      %v4594 = vadd.f32 %v4293, %v4545
      %v4595 = vadd.f32 %v4294, %v4547
      %v4596 = vadd.f32 %v4295, %v4550
      %v4597 = vadd.f32 %v4296, %v4552
      %v4598 = vadd.f32 %v4297, %v4555
      %v4599 = vadd.f32 %v4298, %v4557
      %v4600 = vadd.f32 %v4299, %v4560
      %v4601 = vadd.f32 %v4300, %v4562
      %v4602 = vadd.f32 %v4301, %v4565
      %v4603 = vadd.f32 %v4302, %v4567
      %v4604 = vadd.f32 %v4303, %v4570
      %v4605 = vadd.f32 %v4304, %v4572
      %v4606 = vpack.c.bf16 %v3762, %v3761
      %v4607 = vpack.c.bf16 %v365, %v365
      %v4609 = vsel %vm620, %v4606, 0
      %v4612 = vsel %vm669, %v4607, 0
      %4614 = vmatpush.bf16.msra.mxu0 0
      %4615 = vmatpush.bf16.msra.mxu0 0
      %4616 = vmatpush.bf16.msra.mxu0 0
      %4617 = vmatpush.bf16.msra.mxu0 0
      %4618 = vmatpush.bf16.msra.mxu0 0
      %4619 = vmatpush.bf16.msra.mxu0 0
      %4620 = vmatpush.bf16.msra.mxu0 0
      %4621 = vmatpush.bf16.msra.mxu0 %v4612
      %4622 = vmatmul.bf16.gmra.mxu0 %v3788
      %v4623 = vpop.f32.mrf.mxu0
      %v4624 = vadd.f32 0.0, %v4623
      %v4625 = vpop.f32.mrf.mxu0
      %v4626 = vadd.f32 0.0, %v4625
      %4627 = vmatmul.bf16.gmra.mxu0 %v3791
      %v4628 = vpop.f32.mrf.mxu0
      %v4629 = vadd.f32 0.0, %v4628
      %v4630 = vpop.f32.mrf.mxu0
      %v4631 = vadd.f32 0.0, %v4630
      %4632 = vmatmul.bf16.gmra.mxu0 %v3794
      %v4633 = vpop.f32.mrf.mxu0
      %v4634 = vadd.f32 0.0, %v4633
      %v4635 = vpop.f32.mrf.mxu0
      %v4636 = vadd.f32 0.0, %v4635
      %4637 = vmatmul.bf16.gmra.mxu0 %v3797
      %v4638 = vpop.f32.mrf.mxu0
      %v4639 = vadd.f32 0.0, %v4638
      %v4640 = vpop.f32.mrf.mxu0
      %v4641 = vadd.f32 0.0, %v4640
      %4642 = vmatmul.bf16.gmra.mxu0 %v3800
      %v4643 = vpop.f32.mrf.mxu0
      %v4644 = vadd.f32 0.0, %v4643
      %v4645 = vpop.f32.mrf.mxu0
      %v4646 = vadd.f32 0.0, %v4645
      %4647 = vmatmul.bf16.gmra.mxu0 %v3803
      %v4648 = vpop.f32.mrf.mxu0
      %v4649 = vadd.f32 0.0, %v4648
      %v4650 = vpop.f32.mrf.mxu0
      %v4651 = vadd.f32 0.0, %v4650
      %4652 = vmatmul.bf16.gmra.mxu0 %v3806
      %v4653 = vpop.f32.mrf.mxu0
      %v4654 = vadd.f32 0.0, %v4653
      %v4655 = vpop.f32.mrf.mxu0
      %v4656 = vadd.f32 0.0, %v4655
      %4657 = vmatmul.bf16.gmra.mxu0 %v3809
      %v4658 = vpop.f32.mrf.mxu0
      %v4659 = vadd.f32 0.0, %v4658
      %v4660 = vpop.f32.mrf.mxu0
      %v4661 = vadd.f32 0.0, %v4660
      %4662 = vmatmul.bf16.gmra.mxu0 %v3812
      %v4663 = vpop.f32.mrf.mxu0
      %v4664 = vadd.f32 0.0, %v4663
      %v4665 = vpop.f32.mrf.mxu0
      %v4666 = vadd.f32 0.0, %v4665
      %4667 = vmatmul.bf16.gmra.mxu0 %v3815
      %v4668 = vpop.f32.mrf.mxu0
      %v4669 = vadd.f32 0.0, %v4668
      %v4670 = vpop.f32.mrf.mxu0
      %v4671 = vadd.f32 0.0, %v4670
      %4672 = vmatmul.bf16.gmra.mxu0 %v3818
      %v4673 = vpop.f32.mrf.mxu0
      %v4674 = vadd.f32 0.0, %v4673
      %v4675 = vpop.f32.mrf.mxu0
      %v4676 = vadd.f32 0.0, %v4675
      %4677 = vmatmul.bf16.gmra.mxu0 %v3821
      %v4678 = vpop.f32.mrf.mxu0
      %v4679 = vadd.f32 0.0, %v4678
      %v4680 = vpop.f32.mrf.mxu0
      %v4681 = vadd.f32 0.0, %v4680
      %4682 = vmatmul.bf16.gmra.mxu0 %v3824
      %v4683 = vpop.f32.mrf.mxu0
      %v4684 = vadd.f32 0.0, %v4683
      %v4685 = vpop.f32.mrf.mxu0
      %v4686 = vadd.f32 0.0, %v4685
      %4687 = vmatmul.bf16.gmra.mxu0 %v3827
      %v4688 = vpop.f32.mrf.mxu0
      %v4689 = vadd.f32 0.0, %v4688
      %v4690 = vpop.f32.mrf.mxu0
      %v4691 = vadd.f32 0.0, %v4690
      %4692 = vmatmul.bf16.gmra.mxu0 %v3830
      %v4693 = vpop.f32.mrf.mxu0
      %v4694 = vadd.f32 0.0, %v4693
      %v4695 = vpop.f32.mrf.mxu0
      %v4696 = vadd.f32 0.0, %v4695
      %4697 = vmatmul.bf16.gmra.mxu0 %v4609
      %v4698 = vpop.f32.mrf.mxu0
      %v4699 = vadd.f32 0.0, %v4698
      %v4700 = vpop.f32.mrf.mxu0
      %v4701 = vadd.f32 0.0, %v4700
      %4702 = vdwg.mxu0
      %v4703 = vadd.f32 %v4574, %v4624
      %v4704 = vadd.f32 %v4575, %v4626
      %v4705 = vadd.f32 %v4576, %v4629
      %v4706 = vadd.f32 %v4577, %v4631
      %v4707 = vadd.f32 %v4578, %v4634
      %v4708 = vadd.f32 %v4579, %v4636
      %v4709 = vadd.f32 %v4580, %v4639
      %v4710 = vadd.f32 %v4581, %v4641
      %v4711 = vadd.f32 %v4582, %v4644
      %v4712 = vadd.f32 %v4583, %v4646
      %v4713 = vadd.f32 %v4584, %v4649
      %v4714 = vadd.f32 %v4585, %v4651
      %v4715 = vadd.f32 %v4586, %v4654
      %v4716 = vadd.f32 %v4587, %v4656
      %v4717 = vadd.f32 %v4588, %v4659
      %v4718 = vadd.f32 %v4589, %v4661
      %v4719 = vadd.f32 %v4590, %v4664
      %v4720 = vadd.f32 %v4591, %v4666
      %v4721 = vadd.f32 %v4592, %v4669
      %v4722 = vadd.f32 %v4593, %v4671
      %v4723 = vadd.f32 %v4594, %v4674
      %v4724 = vadd.f32 %v4595, %v4676
      %v4725 = vadd.f32 %v4596, %v4679
      %v4726 = vadd.f32 %v4597, %v4681
      %v4727 = vadd.f32 %v4598, %v4684
      %v4728 = vadd.f32 %v4599, %v4686
      %v4729 = vadd.f32 %v4600, %v4689
      %v4730 = vadd.f32 %v4601, %v4691
      %v4731 = vadd.f32 %v4602, %v4694
      %v4732 = vadd.f32 %v4603, %v4696
      %v4733 = vadd.f32 %v4604, %v4699
      %v4734 = vadd.f32 %v4605, %v4701
      %v4738 = vrot.slane %v3761, 1
      %v4739 = vrot.slane %v3762, 1
      %v4740 = vsel %vm490, %v4738, %v4739
      %v4741 = vrot.slane %v3763, 1
      %v4742 = vsel %vm490, %v4739, %v4741
      %v4745 = vpack.c.bf16 %v4742, %v4740
      %v4746 = vpack.c.bf16 %v366, %v366
      %v4748 = vsel %vm620, %v4745, 0
      %v4751 = vsel %vm669, %v4746, 0
      %4753 = vmatpush.bf16.msra.mxu0 0
      %4754 = vmatpush.bf16.msra.mxu0 0
      %4755 = vmatpush.bf16.msra.mxu0 0
      %4756 = vmatpush.bf16.msra.mxu0 0
      %4757 = vmatpush.bf16.msra.mxu0 0
      %4758 = vmatpush.bf16.msra.mxu0 0
      %4759 = vmatpush.bf16.msra.mxu0 0
      %4760 = vmatpush.bf16.msra.mxu0 %v4751
      %4761 = vmatmul.bf16.gmra.mxu0 %v4137
      %v4762 = vpop.f32.mrf.mxu0
      %v4763 = vadd.f32 0.0, %v4762
      %v4764 = vpop.f32.mrf.mxu0
      %v4765 = vadd.f32 0.0, %v4764
      %4766 = vmatmul.bf16.gmra.mxu0 %v4140
      %v4767 = vpop.f32.mrf.mxu0
      %v4768 = vadd.f32 0.0, %v4767
      %v4769 = vpop.f32.mrf.mxu0
      %v4770 = vadd.f32 0.0, %v4769
      %4771 = vmatmul.bf16.gmra.mxu0 %v4143
      %v4772 = vpop.f32.mrf.mxu0
      %v4773 = vadd.f32 0.0, %v4772
      %v4774 = vpop.f32.mrf.mxu0
      %v4775 = vadd.f32 0.0, %v4774
      %4776 = vmatmul.bf16.gmra.mxu0 %v4146
      %v4777 = vpop.f32.mrf.mxu0
      %v4778 = vadd.f32 0.0, %v4777
      %v4779 = vpop.f32.mrf.mxu0
      %v4780 = vadd.f32 0.0, %v4779
      %4781 = vmatmul.bf16.gmra.mxu0 %v4149
      %v4782 = vpop.f32.mrf.mxu0
      %v4783 = vadd.f32 0.0, %v4782
      %v4784 = vpop.f32.mrf.mxu0
      %v4785 = vadd.f32 0.0, %v4784
      %4786 = vmatmul.bf16.gmra.mxu0 %v4152
      %v4787 = vpop.f32.mrf.mxu0
      %v4788 = vadd.f32 0.0, %v4787
      %v4789 = vpop.f32.mrf.mxu0
      %v4790 = vadd.f32 0.0, %v4789
      %4791 = vmatmul.bf16.gmra.mxu0 %v4155
      %v4792 = vpop.f32.mrf.mxu0
      %v4793 = vadd.f32 0.0, %v4792
      %v4794 = vpop.f32.mrf.mxu0
      %v4795 = vadd.f32 0.0, %v4794
      %4796 = vmatmul.bf16.gmra.mxu0 %v4158
      %v4797 = vpop.f32.mrf.mxu0
      %v4798 = vadd.f32 0.0, %v4797
      %v4799 = vpop.f32.mrf.mxu0
      %v4800 = vadd.f32 0.0, %v4799
      %4801 = vmatmul.bf16.gmra.mxu0 %v4161
      %v4802 = vpop.f32.mrf.mxu0
      %v4803 = vadd.f32 0.0, %v4802
      %v4804 = vpop.f32.mrf.mxu0
      %v4805 = vadd.f32 0.0, %v4804
      %4806 = vmatmul.bf16.gmra.mxu0 %v4164
      %v4807 = vpop.f32.mrf.mxu0
      %v4808 = vadd.f32 0.0, %v4807
      %v4809 = vpop.f32.mrf.mxu0
      %v4810 = vadd.f32 0.0, %v4809
      %4811 = vmatmul.bf16.gmra.mxu0 %v4167
      %v4812 = vpop.f32.mrf.mxu0
      %v4813 = vadd.f32 0.0, %v4812
      %v4814 = vpop.f32.mrf.mxu0
      %v4815 = vadd.f32 0.0, %v4814
      %4816 = vmatmul.bf16.gmra.mxu0 %v4170
      %v4817 = vpop.f32.mrf.mxu0
      %v4818 = vadd.f32 0.0, %v4817
      %v4819 = vpop.f32.mrf.mxu0
      %v4820 = vadd.f32 0.0, %v4819
      %4821 = vmatmul.bf16.gmra.mxu0 %v4173
      %v4822 = vpop.f32.mrf.mxu0
      %v4823 = vadd.f32 0.0, %v4822
      %v4824 = vpop.f32.mrf.mxu0
      %v4825 = vadd.f32 0.0, %v4824
      %4826 = vmatmul.bf16.gmra.mxu0 %v4176
      %v4827 = vpop.f32.mrf.mxu0
      %v4828 = vadd.f32 0.0, %v4827
      %v4829 = vpop.f32.mrf.mxu0
      %v4830 = vadd.f32 0.0, %v4829
      %4831 = vmatmul.bf16.gmra.mxu0 %v4179
      %v4832 = vpop.f32.mrf.mxu0
      %v4833 = vadd.f32 0.0, %v4832
      %v4834 = vpop.f32.mrf.mxu0
      %v4835 = vadd.f32 0.0, %v4834
      %4836 = vmatmul.bf16.gmra.mxu0 %v4748
      %v4837 = vpop.f32.mrf.mxu0
      %v4838 = vadd.f32 0.0, %v4837
      %v4839 = vpop.f32.mrf.mxu0
      %v4840 = vadd.f32 0.0, %v4839
      %4841 = vdwg.mxu0
      %v4842 = vadd.f32 %v4703, %v4763
      %v4843 = vadd.f32 %v4704, %v4765
      %v4844 = vadd.f32 %v4705, %v4768
      %v4845 = vadd.f32 %v4706, %v4770
      %v4846 = vadd.f32 %v4707, %v4773
      %v4847 = vadd.f32 %v4708, %v4775
      %v4848 = vadd.f32 %v4709, %v4778
      %v4849 = vadd.f32 %v4710, %v4780
      %v4850 = vadd.f32 %v4711, %v4783
      %v4851 = vadd.f32 %v4712, %v4785
      %v4852 = vadd.f32 %v4713, %v4788
      %v4853 = vadd.f32 %v4714, %v4790
      %v4854 = vadd.f32 %v4715, %v4793
      %v4855 = vadd.f32 %v4716, %v4795
      %v4856 = vadd.f32 %v4717, %v4798
      %v4857 = vadd.f32 %v4718, %v4800
      %v4858 = vadd.f32 %v4719, %v4803
      %v4859 = vadd.f32 %v4720, %v4805
      %v4860 = vadd.f32 %v4721, %v4808
      %v4861 = vadd.f32 %v4722, %v4810
      %v4862 = vadd.f32 %v4723, %v4813
      %v4863 = vadd.f32 %v4724, %v4815
      %v4864 = vadd.f32 %v4725, %v4818
      %v4865 = vadd.f32 %v4726, %v4820
      %v4866 = vadd.f32 %v4727, %v4823
      %v4867 = vadd.f32 %v4728, %v4825
      %v4868 = vadd.f32 %v4729, %v4828
      %v4869 = vadd.f32 %v4730, %v4830
      %v4870 = vadd.f32 %v4731, %v4833
      %v4871 = vadd.f32 %v4732, %v4835
      %v4872 = vadd.f32 %v4733, %v4838
      %v4873 = vadd.f32 %v4734, %v4840
      %v4874 = vrot.slane %v3761, 2
      %v4875 = vrot.slane %v3762, 2
      %v4876 = vsel %vm902, %v4874, %v4875
      %v4877 = vrot.slane %v3763, 2
      %v4878 = vsel %vm902, %v4875, %v4877
      %v4881 = vpack.c.bf16 %v4878, %v4876
      %v4882 = vpack.c.bf16 %v367, %v367
      %v4884 = vsel %vm620, %v4881, 0
      %v4887 = vsel %vm669, %v4882, 0
      %4889 = vmatpush.bf16.msra.mxu0 0
      %4890 = vmatpush.bf16.msra.mxu0 0
      %4891 = vmatpush.bf16.msra.mxu0 0
      %4892 = vmatpush.bf16.msra.mxu0 0
      %4893 = vmatpush.bf16.msra.mxu0 0
      %4894 = vmatpush.bf16.msra.mxu0 0
      %4895 = vmatpush.bf16.msra.mxu0 0
      %4896 = vmatpush.bf16.msra.mxu0 %v4887
      %4897 = vmatmul.bf16.gmra.mxu0 %v4438
      %v4898 = vpop.f32.mrf.mxu0
      %v4899 = vadd.f32 0.0, %v4898
      %v4900 = vpop.f32.mrf.mxu0
      %v4901 = vadd.f32 0.0, %v4900
      %4902 = vmatmul.bf16.gmra.mxu0 %v4441
      %v4903 = vpop.f32.mrf.mxu0
      %v4904 = vadd.f32 0.0, %v4903
      %v4905 = vpop.f32.mrf.mxu0
      %v4906 = vadd.f32 0.0, %v4905
      %4907 = vmatmul.bf16.gmra.mxu0 %v4444
      %v4908 = vpop.f32.mrf.mxu0
      %v4909 = vadd.f32 0.0, %v4908
      %v4910 = vpop.f32.mrf.mxu0
      %v4911 = vadd.f32 0.0, %v4910
      %4912 = vmatmul.bf16.gmra.mxu0 %v4447
      %v4913 = vpop.f32.mrf.mxu0
      %v4914 = vadd.f32 0.0, %v4913
      %v4915 = vpop.f32.mrf.mxu0
      %v4916 = vadd.f32 0.0, %v4915
      %4917 = vmatmul.bf16.gmra.mxu0 %v4450
      %v4918 = vpop.f32.mrf.mxu0
      %v4919 = vadd.f32 0.0, %v4918
      %v4920 = vpop.f32.mrf.mxu0
      %v4921 = vadd.f32 0.0, %v4920
      %4922 = vmatmul.bf16.gmra.mxu0 %v4453
      %v4923 = vpop.f32.mrf.mxu0
      %v4924 = vadd.f32 0.0, %v4923
      %v4925 = vpop.f32.mrf.mxu0
      %v4926 = vadd.f32 0.0, %v4925
      %4927 = vmatmul.bf16.gmra.mxu0 %v4456
      %v4928 = vpop.f32.mrf.mxu0
      %v4929 = vadd.f32 0.0, %v4928
      %v4930 = vpop.f32.mrf.mxu0
      %v4931 = vadd.f32 0.0, %v4930
      %4932 = vmatmul.bf16.gmra.mxu0 %v4459
      %v4933 = vpop.f32.mrf.mxu0
      %v4934 = vadd.f32 0.0, %v4933
      %v4935 = vpop.f32.mrf.mxu0
      %v4936 = vadd.f32 0.0, %v4935
      %4937 = vmatmul.bf16.gmra.mxu0 %v4462
      %v4938 = vpop.f32.mrf.mxu0
      %v4939 = vadd.f32 0.0, %v4938
      %v4940 = vpop.f32.mrf.mxu0
      %v4941 = vadd.f32 0.0, %v4940
      %4942 = vmatmul.bf16.gmra.mxu0 %v4465
      %v4943 = vpop.f32.mrf.mxu0
      %v4944 = vadd.f32 0.0, %v4943
      %v4945 = vpop.f32.mrf.mxu0
      %v4946 = vadd.f32 0.0, %v4945
      %4947 = vmatmul.bf16.gmra.mxu0 %v4468
      %v4948 = vpop.f32.mrf.mxu0
      %v4949 = vadd.f32 0.0, %v4948
      %v4950 = vpop.f32.mrf.mxu0
      %v4951 = vadd.f32 0.0, %v4950
      %4952 = vmatmul.bf16.gmra.mxu0 %v4471
      %v4953 = vpop.f32.mrf.mxu0
      %v4954 = vadd.f32 0.0, %v4953
      %v4955 = vpop.f32.mrf.mxu0
      %v4956 = vadd.f32 0.0, %v4955
      %4957 = vmatmul.bf16.gmra.mxu0 %v4474
      %v4958 = vpop.f32.mrf.mxu0
      %v4959 = vadd.f32 0.0, %v4958
      %v4960 = vpop.f32.mrf.mxu0
      %v4961 = vadd.f32 0.0, %v4960
      %4962 = vmatmul.bf16.gmra.mxu0 %v4477
      %v4963 = vpop.f32.mrf.mxu0
      %v4964 = vadd.f32 0.0, %v4963
      %v4965 = vpop.f32.mrf.mxu0
      %v4966 = vadd.f32 0.0, %v4965
      %4967 = vmatmul.bf16.gmra.mxu0 %v4480
      %v4968 = vpop.f32.mrf.mxu0
      %v4969 = vadd.f32 0.0, %v4968
      %v4970 = vpop.f32.mrf.mxu0
      %v4971 = vadd.f32 0.0, %v4970
      %4972 = vmatmul.bf16.gmra.mxu0 %v4884
      %v4973 = vpop.f32.mrf.mxu0
      %v4974 = vadd.f32 0.0, %v4973
      %v4975 = vpop.f32.mrf.mxu0
      %v4976 = vadd.f32 0.0, %v4975
      %4977 = vdwg.mxu0
      %v4978 = vadd.f32 %v4842, %v4899
      %v4979 = vadd.f32 %v4843, %v4901
      %v4980 = vadd.f32 %v4844, %v4904
      %v4981 = vadd.f32 %v4845, %v4906
      %v4982 = vadd.f32 %v4846, %v4909
      %v4983 = vadd.f32 %v4847, %v4911
      %v4984 = vadd.f32 %v4848, %v4914
      %v4985 = vadd.f32 %v4849, %v4916
      %v4986 = vadd.f32 %v4850, %v4919
      %v4987 = vadd.f32 %v4851, %v4921
      %v4988 = vadd.f32 %v4852, %v4924
      %v4989 = vadd.f32 %v4853, %v4926
      %v4990 = vadd.f32 %v4854, %v4929
      %v4991 = vadd.f32 %v4855, %v4931
      %v4992 = vadd.f32 %v4856, %v4934
      %v4993 = vadd.f32 %v4857, %v4936
      %v4994 = vadd.f32 %v4858, %v4939
      %v4995 = vadd.f32 %v4859, %v4941
      %v4996 = vadd.f32 %v4860, %v4944
      %v4997 = vadd.f32 %v4861, %v4946
      %v4998 = vadd.f32 %v4862, %v4949
      %v4999 = vadd.f32 %v4863, %v4951
      %v5000 = vadd.f32 %v4864, %v4954
      %v5001 = vadd.f32 %v4865, %v4956
      %v5002 = vadd.f32 %v4866, %v4959
      %v5003 = vadd.f32 %v4867, %v4961
      %v5004 = vadd.f32 %v4868, %v4964
      %v5005 = vadd.f32 %v4869, %v4966
      %v5006 = vadd.f32 %v4870, %v4969
      %v5007 = vadd.f32 %v4871, %v4971
      %v5008 = vadd.f32 %v4872, %v4974
      %v5009 = vadd.f32 %v4873, %v4976
      %v5010 = vpack.c.bf16 %v3765, %v3764
      %v5011 = vpack.c.bf16 %v368, %v368
      %v5013 = vsel %vm620, %v5010, 0
      %v5016 = vsel %vm669, %v5011, 0
      %5018 = vmatpush.bf16.msra.mxu0 0
      %5019 = vmatpush.bf16.msra.mxu0 0
      %5020 = vmatpush.bf16.msra.mxu0 0
      %5021 = vmatpush.bf16.msra.mxu0 0
      %5022 = vmatpush.bf16.msra.mxu0 0
      %5023 = vmatpush.bf16.msra.mxu0 0
      %5024 = vmatpush.bf16.msra.mxu0 0
      %5025 = vmatpush.bf16.msra.mxu0 %v5016
      %5026 = vmatmul.bf16.gmra.mxu0 %v3791
      %v5027 = vpop.f32.mrf.mxu0
      %v5028 = vadd.f32 0.0, %v5027
      %v5029 = vpop.f32.mrf.mxu0
      %v5030 = vadd.f32 0.0, %v5029
      %5031 = vmatmul.bf16.gmra.mxu0 %v3794
      %v5032 = vpop.f32.mrf.mxu0
      %v5033 = vadd.f32 0.0, %v5032
      %v5034 = vpop.f32.mrf.mxu0
      %v5035 = vadd.f32 0.0, %v5034
      %5036 = vmatmul.bf16.gmra.mxu0 %v3797
      %v5037 = vpop.f32.mrf.mxu0
      %v5038 = vadd.f32 0.0, %v5037
      %v5039 = vpop.f32.mrf.mxu0
      %v5040 = vadd.f32 0.0, %v5039
      %5041 = vmatmul.bf16.gmra.mxu0 %v3800
      %v5042 = vpop.f32.mrf.mxu0
      %v5043 = vadd.f32 0.0, %v5042
      %v5044 = vpop.f32.mrf.mxu0
      %v5045 = vadd.f32 0.0, %v5044
      %5046 = vmatmul.bf16.gmra.mxu0 %v3803
      %v5047 = vpop.f32.mrf.mxu0
      %v5048 = vadd.f32 0.0, %v5047
      %v5049 = vpop.f32.mrf.mxu0
      %v5050 = vadd.f32 0.0, %v5049
      %5051 = vmatmul.bf16.gmra.mxu0 %v3806
      %v5052 = vpop.f32.mrf.mxu0
      %v5053 = vadd.f32 0.0, %v5052
      %v5054 = vpop.f32.mrf.mxu0
      %v5055 = vadd.f32 0.0, %v5054
      %5056 = vmatmul.bf16.gmra.mxu0 %v3809
      %v5057 = vpop.f32.mrf.mxu0
      %v5058 = vadd.f32 0.0, %v5057
      %v5059 = vpop.f32.mrf.mxu0
      %v5060 = vadd.f32 0.0, %v5059
      %5061 = vmatmul.bf16.gmra.mxu0 %v3812
      %v5062 = vpop.f32.mrf.mxu0
      %v5063 = vadd.f32 0.0, %v5062
      %v5064 = vpop.f32.mrf.mxu0
      %v5065 = vadd.f32 0.0, %v5064
      %5066 = vmatmul.bf16.gmra.mxu0 %v3815
      %v5067 = vpop.f32.mrf.mxu0
      %v5068 = vadd.f32 0.0, %v5067
      %v5069 = vpop.f32.mrf.mxu0
      %v5070 = vadd.f32 0.0, %v5069
      %5071 = vmatmul.bf16.gmra.mxu0 %v3818
      %v5072 = vpop.f32.mrf.mxu0
      %v5073 = vadd.f32 0.0, %v5072
      %v5074 = vpop.f32.mrf.mxu0
      %v5075 = vadd.f32 0.0, %v5074
      %5076 = vmatmul.bf16.gmra.mxu0 %v3821
      %v5077 = vpop.f32.mrf.mxu0
      %v5078 = vadd.f32 0.0, %v5077
      %v5079 = vpop.f32.mrf.mxu0
      %v5080 = vadd.f32 0.0, %v5079
      %5081 = vmatmul.bf16.gmra.mxu0 %v3824
      %v5082 = vpop.f32.mrf.mxu0
      %v5083 = vadd.f32 0.0, %v5082
      %v5084 = vpop.f32.mrf.mxu0
      %v5085 = vadd.f32 0.0, %v5084
      %5086 = vmatmul.bf16.gmra.mxu0 %v3827
      %v5087 = vpop.f32.mrf.mxu0
      %v5088 = vadd.f32 0.0, %v5087
      %v5089 = vpop.f32.mrf.mxu0
      %v5090 = vadd.f32 0.0, %v5089
      %5091 = vmatmul.bf16.gmra.mxu0 %v3830
      %v5092 = vpop.f32.mrf.mxu0
      %v5093 = vadd.f32 0.0, %v5092
      %v5094 = vpop.f32.mrf.mxu0
      %v5095 = vadd.f32 0.0, %v5094
      %5096 = vmatmul.bf16.gmra.mxu0 %v4609
      %v5097 = vpop.f32.mrf.mxu0
      %v5098 = vadd.f32 0.0, %v5097
      %v5099 = vpop.f32.mrf.mxu0
      %v5100 = vadd.f32 0.0, %v5099
      %5101 = vmatmul.bf16.gmra.mxu0 %v5013
      %v5102 = vpop.f32.mrf.mxu0
      %v5103 = vadd.f32 0.0, %v5102
      %v5104 = vpop.f32.mrf.mxu0
      %v5105 = vadd.f32 0.0, %v5104
      %5106 = vdwg.mxu0
      %v5107 = vadd.f32 %v4978, %v5028
      %v5108 = vadd.f32 %v4979, %v5030
      %v5109 = vadd.f32 %v4980, %v5033
      %v5110 = vadd.f32 %v4981, %v5035
      %v5111 = vadd.f32 %v4982, %v5038
      %v5112 = vadd.f32 %v4983, %v5040
      %v5113 = vadd.f32 %v4984, %v5043
      %v5114 = vadd.f32 %v4985, %v5045
      %v5115 = vadd.f32 %v4986, %v5048
      %v5116 = vadd.f32 %v4987, %v5050
      %v5117 = vadd.f32 %v4988, %v5053
      %v5118 = vadd.f32 %v4989, %v5055
      %v5119 = vadd.f32 %v4990, %v5058
      %v5120 = vadd.f32 %v4991, %v5060
      %v5121 = vadd.f32 %v4992, %v5063
      %v5122 = vadd.f32 %v4993, %v5065
      %v5123 = vadd.f32 %v4994, %v5068
      %v5124 = vadd.f32 %v4995, %v5070
      %v5125 = vadd.f32 %v4996, %v5073
      %v5126 = vadd.f32 %v4997, %v5075
      %v5127 = vadd.f32 %v4998, %v5078
      %v5128 = vadd.f32 %v4999, %v5080
      %v5129 = vadd.f32 %v5000, %v5083
      %v5130 = vadd.f32 %v5001, %v5085
      %v5131 = vadd.f32 %v5002, %v5088
      %v5132 = vadd.f32 %v5003, %v5090
      %v5133 = vadd.f32 %v5004, %v5093
      %v5134 = vadd.f32 %v5005, %v5095
      %v5135 = vadd.f32 %v5006, %v5098
      %v5136 = vadd.f32 %v5007, %v5100
      %v5137 = vadd.f32 %v5008, %v5103
      %v5138 = vadd.f32 %v5009, %v5105
      %v5142 = vrot.slane %v3764, 1
      %v5143 = vrot.slane %v3765, 1
      %v5144 = vsel %vm490, %v5142, %v5143
      %v5145 = vrot.slane %v3766, 1
      %v5146 = vsel %vm490, %v5143, %v5145
      %v5149 = vpack.c.bf16 %v5146, %v5144
      %v5150 = vpack.c.bf16 %v369, %v369
      %v5152 = vsel %vm620, %v5149, 0
      %v5155 = vsel %vm669, %v5150, 0
      %5157 = vmatpush.bf16.msra.mxu0 0
      %5158 = vmatpush.bf16.msra.mxu0 0
      %5159 = vmatpush.bf16.msra.mxu0 0
      %5160 = vmatpush.bf16.msra.mxu0 0
      %5161 = vmatpush.bf16.msra.mxu0 0
      %5162 = vmatpush.bf16.msra.mxu0 0
      %5163 = vmatpush.bf16.msra.mxu0 0
      %5164 = vmatpush.bf16.msra.mxu0 %v5155
      %5165 = vmatmul.bf16.gmra.mxu0 %v4140
      %v5166 = vpop.f32.mrf.mxu0
      %v5167 = vadd.f32 0.0, %v5166
      %v5168 = vpop.f32.mrf.mxu0
      %v5169 = vadd.f32 0.0, %v5168
      %5170 = vmatmul.bf16.gmra.mxu0 %v4143
      %v5171 = vpop.f32.mrf.mxu0
      %v5172 = vadd.f32 0.0, %v5171
      %v5173 = vpop.f32.mrf.mxu0
      %v5174 = vadd.f32 0.0, %v5173
      %5175 = vmatmul.bf16.gmra.mxu0 %v4146
      %v5176 = vpop.f32.mrf.mxu0
      %v5177 = vadd.f32 0.0, %v5176
      %v5178 = vpop.f32.mrf.mxu0
      %v5179 = vadd.f32 0.0, %v5178
      %5180 = vmatmul.bf16.gmra.mxu0 %v4149
      %v5181 = vpop.f32.mrf.mxu0
      %v5182 = vadd.f32 0.0, %v5181
      %v5183 = vpop.f32.mrf.mxu0
      %v5184 = vadd.f32 0.0, %v5183
      %5185 = vmatmul.bf16.gmra.mxu0 %v4152
      %v5186 = vpop.f32.mrf.mxu0
      %v5187 = vadd.f32 0.0, %v5186
      %v5188 = vpop.f32.mrf.mxu0
      %v5189 = vadd.f32 0.0, %v5188
      %5190 = vmatmul.bf16.gmra.mxu0 %v4155
      %v5191 = vpop.f32.mrf.mxu0
      %v5192 = vadd.f32 0.0, %v5191
      %v5193 = vpop.f32.mrf.mxu0
      %v5194 = vadd.f32 0.0, %v5193
      %5195 = vmatmul.bf16.gmra.mxu0 %v4158
      %v5196 = vpop.f32.mrf.mxu0
      %v5197 = vadd.f32 0.0, %v5196
      %v5198 = vpop.f32.mrf.mxu0
      %v5199 = vadd.f32 0.0, %v5198
      %5200 = vmatmul.bf16.gmra.mxu0 %v4161
      %v5201 = vpop.f32.mrf.mxu0
      %v5202 = vadd.f32 0.0, %v5201
      %v5203 = vpop.f32.mrf.mxu0
      %v5204 = vadd.f32 0.0, %v5203
      %5205 = vmatmul.bf16.gmra.mxu0 %v4164
      %v5206 = vpop.f32.mrf.mxu0
      %v5207 = vadd.f32 0.0, %v5206
      %v5208 = vpop.f32.mrf.mxu0
      %v5209 = vadd.f32 0.0, %v5208
      %5210 = vmatmul.bf16.gmra.mxu0 %v4167
      %v5211 = vpop.f32.mrf.mxu0
      %v5212 = vadd.f32 0.0, %v5211
      %v5213 = vpop.f32.mrf.mxu0
      %v5214 = vadd.f32 0.0, %v5213
      %5215 = vmatmul.bf16.gmra.mxu0 %v4170
      %v5216 = vpop.f32.mrf.mxu0
      %v5217 = vadd.f32 0.0, %v5216
      %v5218 = vpop.f32.mrf.mxu0
      %v5219 = vadd.f32 0.0, %v5218
      %5220 = vmatmul.bf16.gmra.mxu0 %v4173
      %v5221 = vpop.f32.mrf.mxu0
      %v5222 = vadd.f32 0.0, %v5221
      %v5223 = vpop.f32.mrf.mxu0
      %v5224 = vadd.f32 0.0, %v5223
      %5225 = vmatmul.bf16.gmra.mxu0 %v4176
      %v5226 = vpop.f32.mrf.mxu0
      %v5227 = vadd.f32 0.0, %v5226
      %v5228 = vpop.f32.mrf.mxu0
      %v5229 = vadd.f32 0.0, %v5228
      %5230 = vmatmul.bf16.gmra.mxu0 %v4179
      %v5231 = vpop.f32.mrf.mxu0
      %v5232 = vadd.f32 0.0, %v5231
      %v5233 = vpop.f32.mrf.mxu0
      %v5234 = vadd.f32 0.0, %v5233
      %5235 = vmatmul.bf16.gmra.mxu0 %v4748
      %v5236 = vpop.f32.mrf.mxu0
      %v5237 = vadd.f32 0.0, %v5236
      %v5238 = vpop.f32.mrf.mxu0
      %v5239 = vadd.f32 0.0, %v5238
      %5240 = vmatmul.bf16.gmra.mxu0 %v5152
      %v5241 = vpop.f32.mrf.mxu0
      %v5242 = vadd.f32 0.0, %v5241
      %v5243 = vpop.f32.mrf.mxu0
      %v5244 = vadd.f32 0.0, %v5243
      %5245 = vdwg.mxu0
      %v5246 = vadd.f32 %v5107, %v5167
      %v5247 = vadd.f32 %v5108, %v5169
      %v5248 = vadd.f32 %v5109, %v5172
      %v5249 = vadd.f32 %v5110, %v5174
      %v5250 = vadd.f32 %v5111, %v5177
      %v5251 = vadd.f32 %v5112, %v5179
      %v5252 = vadd.f32 %v5113, %v5182
      %v5253 = vadd.f32 %v5114, %v5184
      %v5254 = vadd.f32 %v5115, %v5187
      %v5255 = vadd.f32 %v5116, %v5189
      %v5256 = vadd.f32 %v5117, %v5192
      %v5257 = vadd.f32 %v5118, %v5194
      %v5258 = vadd.f32 %v5119, %v5197
      %v5259 = vadd.f32 %v5120, %v5199
      %v5260 = vadd.f32 %v5121, %v5202
      %v5261 = vadd.f32 %v5122, %v5204
      %v5262 = vadd.f32 %v5123, %v5207
      %v5263 = vadd.f32 %v5124, %v5209
      %v5264 = vadd.f32 %v5125, %v5212
      %v5265 = vadd.f32 %v5126, %v5214
      %v5266 = vadd.f32 %v5127, %v5217
      %v5267 = vadd.f32 %v5128, %v5219
      %v5268 = vadd.f32 %v5129, %v5222
      %v5269 = vadd.f32 %v5130, %v5224
      %v5270 = vadd.f32 %v5131, %v5227
      %v5271 = vadd.f32 %v5132, %v5229
      %v5272 = vadd.f32 %v5133, %v5232
      %v5273 = vadd.f32 %v5134, %v5234
      %v5274 = vadd.f32 %v5135, %v5237
      %v5275 = vadd.f32 %v5136, %v5239
      %v5276 = vadd.f32 %v5137, %v5242
      %v5277 = vadd.f32 %v5138, %v5244
      %v5278 = vrot.slane %v3764, 2
      %v5279 = vrot.slane %v3765, 2
      %v5280 = vsel %vm902, %v5278, %v5279
      %v5281 = vrot.slane %v3766, 2
      %v5282 = vsel %vm902, %v5279, %v5281
      %v5285 = vpack.c.bf16 %v5282, %v5280
      %v5286 = vpack.c.bf16 %v370, %v370
      %v5288 = vsel %vm620, %v5285, 0
      %v5291 = vsel %vm669, %v5286, 0
      %5293 = vmatpush.bf16.msra.mxu0 0
      %5294 = vmatpush.bf16.msra.mxu0 0
      %5295 = vmatpush.bf16.msra.mxu0 0
      %5296 = vmatpush.bf16.msra.mxu0 0
      %5297 = vmatpush.bf16.msra.mxu0 0
      %5298 = vmatpush.bf16.msra.mxu0 0
      %5299 = vmatpush.bf16.msra.mxu0 0
      %5300 = vmatpush.bf16.msra.mxu0 %v5291
      %5301 = vmatmul.bf16.gmra.mxu0 %v4441
      %v5302 = vpop.f32.mrf.mxu0
      %v5303 = vadd.f32 0.0, %v5302
      %v5304 = vpop.f32.mrf.mxu0
      %v5305 = vadd.f32 0.0, %v5304
      %5306 = vmatmul.bf16.gmra.mxu0 %v4444
      %v5307 = vpop.f32.mrf.mxu0
      %v5308 = vadd.f32 0.0, %v5307
      %v5309 = vpop.f32.mrf.mxu0
      %v5310 = vadd.f32 0.0, %v5309
      %5311 = vmatmul.bf16.gmra.mxu0 %v4447
      %v5312 = vpop.f32.mrf.mxu0
      %v5313 = vadd.f32 0.0, %v5312
      %v5314 = vpop.f32.mrf.mxu0
      %v5315 = vadd.f32 0.0, %v5314
      %5316 = vmatmul.bf16.gmra.mxu0 %v4450
      %v5317 = vpop.f32.mrf.mxu0
      %v5318 = vadd.f32 0.0, %v5317
      %v5319 = vpop.f32.mrf.mxu0
      %v5320 = vadd.f32 0.0, %v5319
      %5321 = vmatmul.bf16.gmra.mxu0 %v4453
      %v5322 = vpop.f32.mrf.mxu0
      %v5323 = vadd.f32 0.0, %v5322
      %v5324 = vpop.f32.mrf.mxu0
      %v5325 = vadd.f32 0.0, %v5324
      %5326 = vmatmul.bf16.gmra.mxu0 %v4456
      %v5327 = vpop.f32.mrf.mxu0
      %v5328 = vadd.f32 0.0, %v5327
      %v5329 = vpop.f32.mrf.mxu0
      %v5330 = vadd.f32 0.0, %v5329
      %5331 = vmatmul.bf16.gmra.mxu0 %v4459
      %v5332 = vpop.f32.mrf.mxu0
      %v5333 = vadd.f32 0.0, %v5332
      %v5334 = vpop.f32.mrf.mxu0
      %v5335 = vadd.f32 0.0, %v5334
      %5336 = vmatmul.bf16.gmra.mxu0 %v4462
      %v5337 = vpop.f32.mrf.mxu0
      %v5338 = vadd.f32 0.0, %v5337
      %v5339 = vpop.f32.mrf.mxu0
      %v5340 = vadd.f32 0.0, %v5339
      %5341 = vmatmul.bf16.gmra.mxu0 %v4465
      %v5342 = vpop.f32.mrf.mxu0
      %v5343 = vadd.f32 0.0, %v5342
      %v5344 = vpop.f32.mrf.mxu0
      %v5345 = vadd.f32 0.0, %v5344
      %5346 = vmatmul.bf16.gmra.mxu0 %v4468
      %v5347 = vpop.f32.mrf.mxu0
      %v5348 = vadd.f32 0.0, %v5347
      %v5349 = vpop.f32.mrf.mxu0
      %v5350 = vadd.f32 0.0, %v5349
      %5351 = vmatmul.bf16.gmra.mxu0 %v4471
      %v5352 = vpop.f32.mrf.mxu0
      %v5353 = vadd.f32 0.0, %v5352
      %v5354 = vpop.f32.mrf.mxu0
      %v5355 = vadd.f32 0.0, %v5354
      %5356 = vmatmul.bf16.gmra.mxu0 %v4474
      %v5357 = vpop.f32.mrf.mxu0
      %v5358 = vadd.f32 0.0, %v5357
      %v5359 = vpop.f32.mrf.mxu0
      %v5360 = vadd.f32 0.0, %v5359
      %5361 = vmatmul.bf16.gmra.mxu0 %v4477
      %v5362 = vpop.f32.mrf.mxu0
      %v5363 = vadd.f32 0.0, %v5362
      %v5364 = vpop.f32.mrf.mxu0
      %v5365 = vadd.f32 0.0, %v5364
      %5366 = vmatmul.bf16.gmra.mxu0 %v4480
      %v5367 = vpop.f32.mrf.mxu0
      %v5368 = vadd.f32 0.0, %v5367
      %v5369 = vpop.f32.mrf.mxu0
      %v5370 = vadd.f32 0.0, %v5369
      %5371 = vmatmul.bf16.gmra.mxu0 %v4884
      %v5372 = vpop.f32.mrf.mxu0
      %v5373 = vadd.f32 0.0, %v5372
      %v5374 = vpop.f32.mrf.mxu0
      %v5375 = vadd.f32 0.0, %v5374
      %5376 = vmatmul.bf16.gmra.mxu0 %v5288
      %v5377 = vpop.f32.mrf.mxu0
      %v5378 = vadd.f32 0.0, %v5377
      %v5379 = vpop.f32.mrf.mxu0
      %v5380 = vadd.f32 0.0, %v5379
      %5381 = vdwg.mxu0
      %v5382 = vadd.f32 %v5246, %v5303
      %v5383 = vadd.f32 %v5247, %v5305
      %v5384 = vadd.f32 %v5248, %v5308
      %v5385 = vadd.f32 %v5249, %v5310
      %v5386 = vadd.f32 %v5250, %v5313
      %v5387 = vadd.f32 %v5251, %v5315
      %v5388 = vadd.f32 %v5252, %v5318
      %v5389 = vadd.f32 %v5253, %v5320
      %v5390 = vadd.f32 %v5254, %v5323
      %v5391 = vadd.f32 %v5255, %v5325
      %v5392 = vadd.f32 %v5256, %v5328
      %v5393 = vadd.f32 %v5257, %v5330
      %v5394 = vadd.f32 %v5258, %v5333
      %v5395 = vadd.f32 %v5259, %v5335
      %v5396 = vadd.f32 %v5260, %v5338
      %v5397 = vadd.f32 %v5261, %v5340
      %v5398 = vadd.f32 %v5262, %v5343
      %v5399 = vadd.f32 %v5263, %v5345
      %v5400 = vadd.f32 %v5264, %v5348
      %v5401 = vadd.f32 %v5265, %v5350
      %v5402 = vadd.f32 %v5266, %v5353
      %v5403 = vadd.f32 %v5267, %v5355
      %v5404 = vadd.f32 %v5268, %v5358
      %v5405 = vadd.f32 %v5269, %v5360
      %v5406 = vadd.f32 %v5270, %v5363
      %v5407 = vadd.f32 %v5271, %v5365
      %v5408 = vadd.f32 %v5272, %v5368
      %v5409 = vadd.f32 %v5273, %v5370
      %v5410 = vadd.f32 %v5274, %v5373
      %v5411 = vadd.f32 %v5275, %v5375
      %v5412 = vadd.f32 %v5276, %v5378
      %v5413 = vadd.f32 %v5277, %v5380
      %v5414 = vld [vmem:[%s4] sm:$0x1]
      %v5416 = vperm.slane %v5414, 0
      %v5418 = vadd.f32 %v5382, %v5416
      %v5419 = vadd.f32 %v5383, %v5416
      %v5420 = vadd.f32 %v5384, %v5416
      %v5421 = vadd.f32 %v5385, %v5416
      %v5422 = vadd.f32 %v5386, %v5416
      %v5423 = vadd.f32 %v5387, %v5416
      %v5424 = vadd.f32 %v5388, %v5416
      %v5425 = vadd.f32 %v5389, %v5416
      %v5426 = vadd.f32 %v5390, %v5416
      %v5427 = vadd.f32 %v5391, %v5416
      %v5428 = vadd.f32 %v5392, %v5416
      %v5429 = vadd.f32 %v5393, %v5416
      %v5430 = vadd.f32 %v5394, %v5416
      %v5431 = vadd.f32 %v5395, %v5416
      %v5432 = vadd.f32 %v5396, %v5416
      %v5433 = vadd.f32 %v5397, %v5416
      %v5434 = vadd.f32 %v5398, %v5416
      %v5435 = vadd.f32 %v5399, %v5416
      %v5436 = vadd.f32 %v5400, %v5416
      %v5437 = vadd.f32 %v5401, %v5416
      %v5438 = vadd.f32 %v5402, %v5416
      %v5439 = vadd.f32 %v5403, %v5416
      %v5440 = vadd.f32 %v5404, %v5416
      %v5441 = vadd.f32 %v5405, %v5416
      %v5442 = vadd.f32 %v5406, %v5416
      %v5443 = vadd.f32 %v5407, %v5416
      %v5444 = vadd.f32 %v5408, %v5416
      %v5445 = vadd.f32 %v5409, %v5416
      %v5446 = vadd.f32 %v5410, %v5416
      %v5447 = vadd.f32 %v5411, %v5416
      %v5448 = vadd.f32 %v5412, %v5416
      %v5449 = vadd.f32 %v5413, %v5416
      %v5450 = vmax.f32 %v5418, 0.0
      %v5451 = vmax.f32 %v5419, 0.0
      %v5452 = vmax.f32 %v5420, 0.0
      %v5453 = vmax.f32 %v5421, 0.0
      %v5454 = vmax.f32 %v5422, 0.0
      %v5455 = vmax.f32 %v5423, 0.0
      %v5456 = vmax.f32 %v5424, 0.0
      %v5457 = vmax.f32 %v5425, 0.0
      %v5458 = vmax.f32 %v5426, 0.0
      %v5459 = vmax.f32 %v5427, 0.0
      %v5460 = vmax.f32 %v5428, 0.0
      %v5461 = vmax.f32 %v5429, 0.0
      %v5462 = vmax.f32 %v5430, 0.0
      %v5463 = vmax.f32 %v5431, 0.0
      %v5464 = vmax.f32 %v5432, 0.0
      %v5465 = vmax.f32 %v5433, 0.0
      %v5466 = vmax.f32 %v5434, 0.0
      %v5467 = vmax.f32 %v5435, 0.0
      %v5468 = vmax.f32 %v5436, 0.0
      %v5469 = vmax.f32 %v5437, 0.0
      %v5470 = vmax.f32 %v5438, 0.0
      %v5471 = vmax.f32 %v5439, 0.0
      %v5472 = vmax.f32 %v5440, 0.0
      %v5473 = vmax.f32 %v5441, 0.0
      %v5474 = vmax.f32 %v5442, 0.0
      %v5475 = vmax.f32 %v5443, 0.0
      %v5476 = vmax.f32 %v5444, 0.0
      %v5477 = vmax.f32 %v5445, 0.0
      %v5478 = vmax.f32 %v5446, 0.0
      %v5479 = vmax.f32 %v5447, 0.0
      %v5480 = vmax.f32 %v5448, 0.0
      %v5481 = vmax.f32 %v5449, 0.0
      %vm5482 = vcmask 130048
      %5483 = vst.msk [vmem:[%s342] sm:$0xff] %vm5482, %v5450
      %5484 = vst.msk [vmem:[%s342 + $0x8] sm:$0xff] %vm5482, %v5451
      %5485 = vst.msk [vmem:[%s342 + $0x10] sm:$0xff] %vm5482, %v5452
      %5486 = vst.msk [vmem:[%s342 + $0x18] sm:$0xff] %vm5482, %v5453
      %5487 = vst.msk [vmem:[%s342 + $0x20] sm:$0xff] %vm5482, %v5454
      %5488 = vst.msk [vmem:[%s342 + $0x28] sm:$0xff] %vm5482, %v5455
      %5489 = vst.msk [vmem:[%s342 + $0x30] sm:$0xff] %vm5482, %v5456
      %5490 = vst.msk [vmem:[%s342 + $0x38] sm:$0xff] %vm5482, %v5457
      %5491 = vst.msk [vmem:[%s342 + $0x40] sm:$0xff] %vm5482, %v5458
      %5492 = vst.msk [vmem:[%s342 + $0x48] sm:$0xff] %vm5482, %v5459
      %5493 = vst.msk [vmem:[%s342 + $0x50] sm:$0xff] %vm5482, %v5460
      %5494 = vst.msk [vmem:[%s342 + $0x58] sm:$0xff] %vm5482, %v5461
      %5495 = vst.msk [vmem:[%s342 + $0x60] sm:$0xff] %vm5482, %v5462
      %5496 = vst.msk [vmem:[%s342 + $0x68] sm:$0xff] %vm5482, %v5463
      %5497 = vst.msk [vmem:[%s342 + $0x70] sm:$0xff] %vm5482, %v5464
      %5498 = vst.msk [vmem:[%s342 + $0x78] sm:$0xff] %vm5482, %v5465
      %5499 = vst.msk [vmem:[%s342 + $0x80] sm:$0xff] %vm5482, %v5466
      %5500 = vst.msk [vmem:[%s342 + $0x88] sm:$0xff] %vm5482, %v5467
      %5501 = vst.msk [vmem:[%s342 + $0x90] sm:$0xff] %vm5482, %v5468
      %5502 = vst.msk [vmem:[%s342 + $0x98] sm:$0xff] %vm5482, %v5469
      %5503 = vst.msk [vmem:[%s342 + $0xa0] sm:$0xff] %vm5482, %v5470
      %5504 = vst.msk [vmem:[%s342 + $0xa8] sm:$0xff] %vm5482, %v5471
      %5505 = vst.msk [vmem:[%s342 + $0xb0] sm:$0xff] %vm5482, %v5472
      %5506 = vst.msk [vmem:[%s342 + $0xb8] sm:$0xff] %vm5482, %v5473
      %5507 = vst.msk [vmem:[%s342 + $0xc0] sm:$0xff] %vm5482, %v5474
      %5508 = vst.msk [vmem:[%s342 + $0xc8] sm:$0xff] %vm5482, %v5475
      %5509 = vst.msk [vmem:[%s342 + $0xd0] sm:$0xff] %vm5482, %v5476
      %5510 = vst.msk [vmem:[%s342 + $0xd8] sm:$0xff] %vm5482, %v5477
      %5511 = vst.msk [vmem:[%s342 + $0xe0] sm:$0xff] %vm5482, %v5478
      %5512 = vst.msk [vmem:[%s342 + $0xe8] sm:$0xff] %vm5482, %v5479
      %5513 = vst.msk [vmem:[%s342 + $0xf0] sm:$0xff] %vm5482, %v5480
      %5514 = vst.msk [vmem:[%s342 + $0xf8] sm:$0xff] %vm5482, %v5481
      %p5515 = scmp.lt.s32.totalorder %s20, 1
      %s5516 = scalar_select %p5515, %s20, 1
      %p5517 = scmp.lt.s32.totalorder %s21, 15
      %s5518 = scalar_select %p5517, %s21, 15
      %s5519 = smul.addr %s5518, 32
      %s5520 = smul.addr %s5516, 512
      %s5521 = sadd.s32 %s5519, %s5520
      %s5522 = smul.addr %s5521, 8
      %s5523 = scalar_lea.vmem %s5, %s5522
      // Predicated region
      $region41: #{resconv_block_forward.4} parent=39 // pred_check
        %p5524 = pneg %p178
      $region42: #{resconv_block_forward.4} parent=39 // pred_check_branch
        %5526 = sbr.rel (%p5524) target = $region44
      $region43: #{resconv_block_forward.4} parent=39 // pred_region
        _
      $region44: #{resconv_block_forward.4} parent=39 // pred_fallthru
        _
    $region40: #{resconv_block_forward.4} parent=5 // pred_fallthru
      _
    %p5527 = scmp.le.s32.totalorder 2, %s11
    // Predicated region
    $region45: #{resconv_block_forward.4} parent=5 // pred_check
      %p5528 = pneg %p5527
    $region46: #{resconv_block_forward.4} parent=5 // pred_check_branch
      %5530 = sbr.rel (%p5528) target = $region48
    $region47: #{resconv_block_forward.4} parent=5 // pred_region
      %s5531 = ssub.s32 %s11, 2
      // Predicated region
      $region49: #{resconv_block_forward.4} parent=47 // pred_check
        %p5532 = pneg %p184
      $region50: #{resconv_block_forward.4} parent=47 // pred_check_branch
        %5534 = sbr.rel (%p5532) target = $region52
      $region51: #{resconv_block_forward.4} parent=47 // pred_region
        %p5535 = scmp.lt.s32.totalorder %s22, 1
        %s5536 = scalar_select %p5535, %s22, 1
        %p5537 = scmp.lt.s32.totalorder %s23, 15
        %s5538 = scalar_select %p5537, %s23, 15
        %s5539 = smul.addr %s5538, 32
        %s5540 = smul.addr %s5536, 512
        %s5541 = sadd.s32 %s5539, %s5540
        %s5542 = smul.addr %s5541, 8
        %s5543 = scalar_lea.vmem %s5, %s5542
      $region52: #{resconv_block_forward.4} parent=47 // pred_fallthru
        _
    $region48: #{resconv_block_forward.4} parent=5 // pred_fallthru
      _
  $region6: #{resconv_block_forward.4} parent=0 // loop_footer
    %s15 = sadd.s32 1, %s11
  $region7: #{resconv_block_forward.4} parent=0 // loop_footer_branch
    %10 = sbr.rel target = $region3
  $region8: #{resconv_block_forward.4} parent=0 // loop_exit
    _

// kernel: resconv_block_forward.5
$region0: #{resconv_block_forward.5}
  #allocation0 [shape = 'u32[]', space=smem, size = 0x4, offset = 0x4, fixed_abs, tag = 'smem constant byte address 0x4 - core index']
  #allocation1 [shape = 'u32[72,128]{1,0:T(1,128)}', space=vmem, size = 0x9000, scoped, tag = 'internal scratch']
  %s0 = inlined_call_operand.vmem [shape: f32[2,18,18,18,16], index: 0, kind: input, shape index: {}, may-alias: {0,1,2}]
  %s1 = inlined_call_operand.vmem [shape: f32[2,18,18,18,16], index: 1, kind: input, shape index: {}, may-alias: {0,1,2}]
  %s2 = inlined_call_operand.vmem [shape: f32[2,18,18,18,16], index: 2, kind: input, shape index: {}, may-alias: {0,1,2}]
  %s3 = inlined_call_operand.vmem [shape: f32[3,3,3,16,16], index: 3, kind: input, shape index: {}]
  %s4 = inlined_call_operand.vmem [shape: f32[1,16], index: 4, kind: input, shape index: {}]
  %s5 = inlined_call_operand.vmem [shape: f32[2,16,16,16,16], index: 5, kind: input, shape index: {}]
  %s6 = inlined_call_operand.vmem [shape: f32[2,16,16,16,16], index: 6, kind: output, shape index: {}]
  %s7 = sld [smem:[#allocation0]]
  $region57: #{resconv_block_forward.5} parent=0
    _
  %s9 = ssub.s32 1, %s7
  %s10 = scalar_select 0, %s9, %s7
  loop: start=0, step=1, limit=34
  $region2: #{resconv_block_forward.5} parent=0 // loop_pre_header
    _
  $region3: #{resconv_block_forward.5} parent=0 // loop_header
    %s12 = sphi 0, %s16
    %p13 = scmp.ge.s32.totalorder %s12, 34
    %s19 = sphi 0, %s31
    %s20 = sphi 0, %s27
    %s21 = sphi 0, %s19
    %s22 = sphi 0, %s20
    %s23 = sphi 0, %s21
    %s24 = sphi 0, %s22
    %s36 = sphi 0, %s38
    %s39 = sphi 0, %s36
    %s40 = sphi 0, %s39
    %s56 = sphi 0, %s40
    %s66 = sphi 0, %s68
    %s69 = sphi 0, %s66
    %s70 = sphi 0, %s69
    %s86 = sphi 0, %s70
    %s96 = sphi 0, %s98
    %s99 = sphi 0, %s96
    %s100 = sphi 0, %s99
    %s116 = sphi 0, %s100
    %s120 = sphi 0, %s120
    %s122 = sphi 0, %s120
    %s123 = sphi 0, %s122
    %s137 = sphi 0, %s123
    %s141 = sphi 0, %s141
    %s143 = sphi 0, %s141
    %s144 = sphi 0, %s143
    %s158 = sphi 0, %s144
    %s166 = sphi 0, %s168
    %s169 = sphi 0, %s166
    %s170 = sphi 0, %s169
    %s186 = sphi 0, %s170
    %s194 = sphi 0, %s196
    %s197 = sphi 0, %s194
    %s198 = sphi 0, %s197
    %s214 = sphi 0, %s198
  $region4: #{resconv_block_forward.5} parent=0 // loop_header_branch
    %15 = sbr.rel (%p13) target = $region8
  $region5: #{resconv_block_forward.5} parent=0 // loop_body
    %s17 = ssub.s32 %s12, 1
    %s18 = ssub.s32 %s12, 2
    %s25 = sadd.s32 1, %s20
    %p26 = scmp.ge.s32.totalorder %s25, 16
    %s27 = scalar_select %p26, 0, %s25
    %s28 = sadd.s32 1, %s19
    %s29 = scalar_select %p26, %s28, %s19
    %p30 = scmp.ge.s32.totalorder %s29, 2
    %s31 = scalar_select %p30, 0, %s29
    %s32 = ssub.s32 %s19, %s31
    %s33 = ssub.s32 %s20, %s27
    %s34 = sor.u32 %s32, %s33
    %p35 = scmp.eq.s32.totalorder %s34, 0
    %s37 = sadd.s32 %s36, 1
    %s38 = scalar_select %p35, %s36, %s37
    %p41 = pneg %p35
    %p42 = scmp.eq.s32.totalorder %s12, 31
    %p43 = por %p41, %p42
    %p44 = scmp.ne.s32.totalorder %s36, %s39
    %p45 = scmp.eq.s32.totalorder %s12, 0
    %p46 = por %p44, %p45
    %p47 = scmp.ne.s32.totalorder %s36, %s39
    %p48 = scmp.eq.s32.totalorder %s17, 31
    %p49 = por %p47, %p48
    %p50 = scmp.ne.s32.totalorder %s39, %s40
    %p51 = scmp.eq.s32.totalorder %s17, 0
    %p52 = por %p50, %p51
    %p53 = scmp.ne.s32.totalorder %s39, %s40
    %p54 = scmp.eq.s32.totalorder %s18, 31
    %p55 = por %p53, %p54
    %p57 = scmp.ne.s32.totalorder %s40, %s56
    %p58 = scmp.eq.s32.totalorder %s18, 0
    %p59 = por %p57, %p58
    %s60 = sadd.s32 %s20, 1
    %s61 = sadd.s32 %s27, 1
    %s62 = ssub.s32 %s19, %s31
    %s63 = ssub.s32 %s60, %s61
    %s64 = sor.u32 %s62, %s63
    %p65 = scmp.eq.s32.totalorder %s64, 0
    %s67 = sadd.s32 %s66, 1
    %s68 = scalar_select %p65, %s66, %s67
    %p71 = pneg %p65
    %p72 = scmp.eq.s32.totalorder %s12, 31
    %p73 = por %p71, %p72
    %p74 = scmp.ne.s32.totalorder %s66, %s69
    %p75 = scmp.eq.s32.totalorder %s12, 0
    %p76 = por %p74, %p75
    %p77 = scmp.ne.s32.totalorder %s66, %s69
    %p78 = scmp.eq.s32.totalorder %s17, 31
    %p79 = por %p77, %p78
    %p80 = scmp.ne.s32.totalorder %s69, %s70
    %p81 = scmp.eq.s32.totalorder %s17, 0
    %p82 = por %p80, %p81
    %p83 = scmp.ne.s32.totalorder %s69, %s70
    %p84 = scmp.eq.s32.totalorder %s18, 31
    %p85 = por %p83, %p84
    %p87 = scmp.ne.s32.totalorder %s70, %s86
    %p88 = scmp.eq.s32.totalorder %s18, 0
    %p89 = por %p87, %p88
    %s90 = sadd.s32 %s20, 2
    %s91 = sadd.s32 %s27, 2
    %s92 = ssub.s32 %s19, %s31
    %s93 = ssub.s32 %s90, %s91
    %s94 = sor.u32 %s92, %s93
    %p95 = scmp.eq.s32.totalorder %s94, 0
    %s97 = sadd.s32 %s96, 1
    %s98 = scalar_select %p95, %s96, %s97
    %p101 = pneg %p95
    %p102 = scmp.eq.s32.totalorder %s12, 31
    %p103 = por %p101, %p102
    %p104 = scmp.ne.s32.totalorder %s96, %s99
    %p105 = scmp.eq.s32.totalorder %s12, 0
    %p106 = por %p104, %p105
    %p107 = scmp.ne.s32.totalorder %s96, %s99
    %p108 = scmp.eq.s32.totalorder %s17, 31
    %p109 = por %p107, %p108
    %p110 = scmp.ne.s32.totalorder %s99, %s100
    %p111 = scmp.eq.s32.totalorder %s17, 0
    %p112 = por %p110, %p111
    %p113 = scmp.ne.s32.totalorder %s99, %s100
    %p114 = scmp.eq.s32.totalorder %s18, 31
    %p115 = por %p113, %p114
    %p117 = scmp.ne.s32.totalorder %s100, %s116
    %p118 = scmp.eq.s32.totalorder %s18, 0
    %p119 = por %p117, %p118
    %s121 = sadd.s32 %s120, 1
    %p124 = scmp.eq.s32.totalorder %s12, 31
    %p125 = scmp.ne.s32.totalorder %s120, %s122
    %p126 = scmp.eq.s32.totalorder %s12, 0
    %p127 = por %p125, %p126
    %p128 = scmp.ne.s32.totalorder %s120, %s122
    %p129 = scmp.eq.s32.totalorder %s17, 31
    %p130 = por %p128, %p129
    %p131 = scmp.ne.s32.totalorder %s122, %s123
    %p132 = scmp.eq.s32.totalorder %s17, 0
    %p133 = por %p131, %p132
    %p134 = scmp.ne.s32.totalorder %s122, %s123
    %p135 = scmp.eq.s32.totalorder %s18, 31
    %p136 = por %p134, %p135
    %p138 = scmp.ne.s32.totalorder %s123, %s137
    %p139 = scmp.eq.s32.totalorder %s18, 0
    %p140 = por %p138, %p139
    %s142 = sadd.s32 %s141, 1
    %p145 = scmp.eq.s32.totalorder %s12, 31
    %p146 = scmp.ne.s32.totalorder %s141, %s143
    %p147 = scmp.eq.s32.totalorder %s12, 0
    %p148 = por %p146, %p147
    %p149 = scmp.ne.s32.totalorder %s141, %s143
    %p150 = scmp.eq.s32.totalorder %s17, 31
    %p151 = por %p149, %p150
    %p152 = scmp.ne.s32.totalorder %s143, %s144
    %p153 = scmp.eq.s32.totalorder %s17, 0
    %p154 = por %p152, %p153
    %p155 = scmp.ne.s32.totalorder %s143, %s144
    %p156 = scmp.eq.s32.totalorder %s18, 31
    %p157 = por %p155, %p156
    %p159 = scmp.ne.s32.totalorder %s144, %s158
    %p160 = scmp.eq.s32.totalorder %s18, 0
    %p161 = por %p159, %p160
    %s162 = ssub.s32 %s19, %s31
    %s163 = ssub.s32 %s20, %s27
    %s164 = sor.u32 %s162, %s163
    %p165 = scmp.eq.s32.totalorder %s164, 0
    %s167 = sadd.s32 %s166, 1
    %s168 = scalar_select %p165, %s166, %s167
    %p171 = pneg %p165
    %p172 = scmp.eq.s32.totalorder %s12, 31
    %p173 = por %p171, %p172
    %p174 = scmp.ne.s32.totalorder %s166, %s169
    %p175 = scmp.eq.s32.totalorder %s12, 0
    %p176 = por %p174, %p175
    %p177 = scmp.ne.s32.totalorder %s166, %s169
    %p178 = scmp.eq.s32.totalorder %s17, 31
    %p179 = por %p177, %p178
    %p180 = scmp.ne.s32.totalorder %s169, %s170
    %p181 = scmp.eq.s32.totalorder %s17, 0
    %p182 = por %p180, %p181
    %p183 = scmp.ne.s32.totalorder %s169, %s170
    %p184 = scmp.eq.s32.totalorder %s18, 31
    %p185 = por %p183, %p184
    %p187 = scmp.ne.s32.totalorder %s170, %s186
    %p188 = scmp.eq.s32.totalorder %s18, 0
    %p189 = por %p187, %p188
    %s190 = ssub.s32 %s19, %s31
    %s191 = ssub.s32 %s20, %s27
    %s192 = sor.u32 %s190, %s191
    %p193 = scmp.eq.s32.totalorder %s192, 0
    %s195 = sadd.s32 %s194, 1
    %s196 = scalar_select %p193, %s194, %s195
    %p199 = pneg %p193
    %p200 = scmp.eq.s32.totalorder %s12, 31
    %p201 = por %p199, %p200
    %p202 = scmp.ne.s32.totalorder %s194, %s197
    %p203 = scmp.eq.s32.totalorder %s12, 0
    %p204 = por %p202, %p203
    %p205 = scmp.ne.s32.totalorder %s194, %s197
    %p206 = scmp.eq.s32.totalorder %s17, 31
    %p207 = por %p205, %p206
    %p208 = scmp.ne.s32.totalorder %s197, %s198
    %p209 = scmp.eq.s32.totalorder %s17, 0
    %p210 = por %p208, %p209
    %p211 = scmp.ne.s32.totalorder %s197, %s198
    %p212 = scmp.eq.s32.totalorder %s18, 31
    %p213 = por %p211, %p212
    %p215 = scmp.ne.s32.totalorder %s198, %s214
    %p216 = scmp.eq.s32.totalorder %s18, 0
    %p217 = por %p215, %p216
    %p218 = scmp.le.s32.totalorder 1, %s12
    %p219 = scmp.lt.s32.totalorder %s12, 33
    %p220 = pnand %p218, %p219
    %p221 = pneg %p220
    // Predicated region
    $region9: #{resconv_block_forward.5} parent=5 // pred_check
      _
    $region10: #{resconv_block_forward.5} parent=5 // pred_check_branch
      %223 = sbr.rel (%p220) target = $region12
    $region11: #{resconv_block_forward.5} parent=5 // pred_region
      %s224 = ssub.s32 %s12, 1
      // Predicated region
      $region13: #{resconv_block_forward.5} parent=11 // pred_check
        %p225 = pneg %p133
      $region14: #{resconv_block_forward.5} parent=11 // pred_check_branch
        %227 = sbr.rel (%p225) target = $region16
      $region15: #{resconv_block_forward.5} parent=11 // pred_region
        _
      $region16: #{resconv_block_forward.5} parent=11 // pred_fallthru
        _
      // Predicated region
      $region17: #{resconv_block_forward.5} parent=11 // pred_check
        %p228 = pneg %p154
      $region18: #{resconv_block_forward.5} parent=11 // pred_check_branch
        %230 = sbr.rel (%p228) target = $region20
      $region19: #{resconv_block_forward.5} parent=11 // pred_region
        _
      $region20: #{resconv_block_forward.5} parent=11 // pred_fallthru
        _
    $region12: #{resconv_block_forward.5} parent=5 // pred_fallthru
      _
    %p231 = scmp.lt.s32.totalorder %s12, 32
    // Predicated region
    $region21: #{resconv_block_forward.5} parent=5 // pred_check
      %p232 = pneg %p231
    $region22: #{resconv_block_forward.5} parent=5 // pred_check_branch
      %234 = sbr.rel (%p232) target = $region24
    $region23: #{resconv_block_forward.5} parent=5 // pred_region
      // Predicated region
      $region25: #{resconv_block_forward.5} parent=23 // pred_check
        %p235 = pneg %p46
      $region26: #{resconv_block_forward.5} parent=23 // pred_check_branch
        %237 = sbr.rel (%p235) target = $region28
      $region27: #{resconv_block_forward.5} parent=23 // pred_region
        %p238 = scmp.lt.s32.totalorder %s19, 1
        %s239 = scalar_select %p238, %s19, 1
        %p240 = scmp.lt.s32.totalorder %s20, 17
        %s241 = scalar_select %p240, %s20, 17
        %s242 = smul.addr %s241, 54
        %s243 = smul.addr %s239, 972
        %s244 = sadd.s32 %s242, %s243
        %s245 = smul.addr %s244, 8
        %s246 = scalar_lea.vmem %s0, %s245
      $region28: #{resconv_block_forward.5} parent=23 // pred_fallthru
        _
      // Predicated region
      $region29: #{resconv_block_forward.5} parent=23 // pred_check
        %p247 = pneg %p76
      $region30: #{resconv_block_forward.5} parent=23 // pred_check_branch
        %249 = sbr.rel (%p247) target = $region32
      $region31: #{resconv_block_forward.5} parent=23 // pred_region
        %s250 = sadd.s32 %s20, 1
        %p251 = scmp.lt.s32.totalorder %s19, 1
        %s252 = scalar_select %p251, %s19, 1
        %p253 = scmp.lt.s32.totalorder %s250, 17
        %s254 = scalar_select %p253, %s250, 17
        %s255 = smul.addr %s254, 54
        %s256 = smul.addr %s252, 972
        %s257 = sadd.s32 %s255, %s256
        %s258 = smul.addr %s257, 8
        %s259 = scalar_lea.vmem %s1, %s258
        %s260 = sadd.s32 %s20, 1
      $region32: #{resconv_block_forward.5} parent=23 // pred_fallthru
        _
      // Predicated region
      $region33: #{resconv_block_forward.5} parent=23 // pred_check
        %p261 = pneg %p106
      $region34: #{resconv_block_forward.5} parent=23 // pred_check_branch
        %263 = sbr.rel (%p261) target = $region36
      $region35: #{resconv_block_forward.5} parent=23 // pred_region
        %s264 = sadd.s32 %s20, 2
        %p265 = scmp.lt.s32.totalorder %s19, 1
        %s266 = scalar_select %p265, %s19, 1
        %p267 = scmp.lt.s32.totalorder %s264, 17
        %s268 = scalar_select %p267, %s264, 17
        %s269 = smul.addr %s268, 54
        %s270 = smul.addr %s266, 972
        %s271 = sadd.s32 %s269, %s270
        %s272 = smul.addr %s271, 8
        %s273 = scalar_lea.vmem %s2, %s272
        %s274 = sadd.s32 %s20, 2
      $region36: #{resconv_block_forward.5} parent=23 // pred_fallthru
        _
      // Predicated region
      $region37: #{resconv_block_forward.5} parent=23 // pred_check
        %p275 = pneg %p176
      $region38: #{resconv_block_forward.5} parent=23 // pred_check_branch
        %277 = sbr.rel (%p275) target = $region40
      $region39: #{resconv_block_forward.5} parent=23 // pred_region
        %p278 = scmp.lt.s32.totalorder %s19, 1
        %s279 = scalar_select %p278, %s19, 1
        %p280 = scmp.lt.s32.totalorder %s20, 15
        %s281 = scalar_select %p280, %s20, 15
        %s282 = smul.addr %s281, 32
        %s283 = smul.addr %s279, 512
        %s284 = sadd.s32 %s282, %s283
        %s285 = smul.addr %s284, 8
        %s286 = scalar_lea.vmem %s5, %s285
      $region40: #{resconv_block_forward.5} parent=23 // pred_fallthru
        _
    $region24: #{resconv_block_forward.5} parent=5 // pred_fallthru
      _
    %p287 = scmp.le.s32.totalorder 1, %s12
    %p288 = scmp.lt.s32.totalorder %s12, 33
    %p289 = pnand %p287, %p288
    %p290 = pneg %p289
    // Predicated region
    $region41: #{resconv_block_forward.5} parent=5 // pred_check
      _
    $region42: #{resconv_block_forward.5} parent=5 // pred_check_branch
      %292 = sbr.rel (%p289) target = $region44
    $region43: #{resconv_block_forward.5} parent=5 // pred_region
      %s293 = ssub.s32 %s12, 1
      %p294 = scmp.lt.s32.totalorder %s21, 1
      %s295 = scalar_select %p294, %s21, 1
      %p296 = scmp.lt.s32.totalorder %s22, 17
      %s297 = scalar_select %p296, %s22, 17
      %s298 = smul.addr %s297, 54
      %s299 = smul.addr %s295, 972
      %s300 = sadd.s32 %s298, %s299
      %s301 = smul.addr %s300, 8
      %s302 = scalar_lea.vmem %s0, %s301
      %p303 = pneg %p52
      %p304 = pneg %p49
      %s305 = sadd.s32 %s22, 1
      %p306 = scmp.lt.s32.totalorder %s21, 1
      %s307 = scalar_select %p306, %s21, 1
      %p308 = scmp.lt.s32.totalorder %s305, 17
      %s309 = scalar_select %p308, %s305, 17
      %s310 = smul.addr %s309, 54
      %s311 = smul.addr %s307, 972
      %s312 = sadd.s32 %s310, %s311
      %s313 = smul.addr %s312, 8
      %s314 = scalar_lea.vmem %s1, %s313
      %p315 = pneg %p82
      %p316 = pneg %p79
      %s317 = sadd.s32 %s22, 2
      %p318 = scmp.lt.s32.totalorder %s21, 1
      %s319 = scalar_select %p318, %s21, 1
      %p320 = scmp.lt.s32.totalorder %s317, 17
      %s321 = scalar_select %p320, %s317, 17
      %s322 = smul.addr %s321, 54
      %s323 = smul.addr %s319, 972
      %s324 = sadd.s32 %s322, %s323
      %s325 = smul.addr %s324, 8
      %s326 = scalar_lea.vmem %s2, %s325
      %p327 = pneg %p112
      %p328 = pneg %p109
      %p329 = pneg %p133
      %p330 = pneg %p130
      %p331 = pneg %p154
      %p332 = pneg %p151
      %p333 = scmp.lt.s32.totalorder %s21, 1
      %s334 = scalar_select %p333, %s21, 1
      %p335 = scmp.lt.s32.totalorder %s22, 15
      %s336 = scalar_select %p335, %s22, 15
      %s337 = smul.addr %s336, 32
      %s338 = smul.addr %s334, 512
      %s339 = sadd.s32 %s337, %s338
      %s340 = smul.addr %s339, 8
      %s341 = scalar_lea.vmem %s5, %s340
      %p342 = pneg %p182
      %p343 = pneg %p179
      %p344 = pneg %p210
      %p345 = pneg %p207
      %p346 = scmp.lt.s32.totalorder %s21, 1
      %s347 = scalar_select %p346, %s21, 1
      %p348 = scmp.lt.s32.totalorder %s22, 15
      %s349 = scalar_select %p348, %s22, 15
      %s350 = smul.addr %s349, 32
      %s351 = smul.addr %s347, 512
      %s352 = sadd.s32 %s350, %s351
      %s353 = smul.addr %s352, 8
      %s354 = scalar_lea.vmem %s6, %s353
      %p355 = scmp.lt.s32.totalorder %s21, 1
      %s356 = scalar_select %p355, %s21, 1
      %p357 = scmp.lt.s32.totalorder %s22, 17
      %s358 = scalar_select %p357, %s22, 17
      %s359 = smul.addr %s358, 54
      %s360 = smul.addr %s356, 972
      %s361 = sadd.s32 %s359, %s360
      %s362 = smul.addr %s361, 8
      %s363 = scalar_lea.vmem %s0, %s362
      %s364 = sadd.s32 %s22, 1
      %p365 = scmp.lt.s32.totalorder %s21, 1
      %s366 = scalar_select %p365, %s21, 1
      %p367 = scmp.lt.s32.totalorder %s364, 17
      %s368 = scalar_select %p367, %s364, 17
      %s369 = smul.addr %s368, 54
      %s370 = smul.addr %s366, 972
      %s371 = sadd.s32 %s369, %s370
      %s372 = smul.addr %s371, 8
      %s373 = scalar_lea.vmem %s1, %s372
      %s374 = sadd.s32 %s22, 1
      %s375 = sadd.s32 %s22, 2
      %p376 = scmp.lt.s32.totalorder %s21, 1
      %s377 = scalar_select %p376, %s21, 1
      %p378 = scmp.lt.s32.totalorder %s375, 17
      %s379 = scalar_select %p378, %s375, 17
      %s380 = smul.addr %s379, 54
      %s381 = smul.addr %s377, 972
      %s382 = sadd.s32 %s380, %s381
      %s383 = smul.addr %s382, 8
      %s384 = scalar_lea.vmem %s2, %s383
      %s385 = sadd.s32 %s22, 2
      %p386 = scmp.lt.s32.totalorder %s21, 1
      %s387 = scalar_select %p386, %s21, 1
      %p388 = scmp.lt.s32.totalorder %s22, 15
      %s389 = scalar_select %p388, %s22, 15
      %s390 = smul.addr %s389, 32
      %s391 = smul.addr %s387, 512
      %s392 = sadd.s32 %s390, %s391
      %s393 = smul.addr %s392, 8
      %s394 = scalar_lea.vmem %s5, %s393
      %p395 = scmp.lt.s32.totalorder %s21, 1
      %s396 = scalar_select %p395, %s21, 1
      %p397 = scmp.lt.s32.totalorder %s22, 15
      %s398 = scalar_select %p397, %s22, 15
      %s399 = smul.addr %s398, 32
      %s400 = smul.addr %s396, 512
      %s401 = sadd.s32 %s399, %s400
      %s402 = smul.addr %s401, 8
      %s403 = scalar_lea.vmem %s6, %s402
      %v405 = vld [vmem:[%s3] sm:$0xff]
      %v406 = vld [vmem:[%s3 + $0x8] sm:$0xff]
      %v407 = vld [vmem:[%s3 + $0x10] sm:$0xff]
      %v408 = vld [vmem:[%s3 + $0x18] sm:$0xff]
      %v409 = vld [vmem:[%s3 + $0x20] sm:$0xff]
      %v410 = vld [vmem:[%s3 + $0x28] sm:$0xff]
      %v411 = vld [vmem:[%s3 + $0x30] sm:$0xff]
      %v412 = vld [vmem:[%s3 + $0x38] sm:$0xff]
      %v413 = vld [vmem:[%s3 + $0x40] sm:$0xff]
      %v414 = vld [vmem:[%s3 + $0x48] sm:$0xff]
      %v415 = vld [vmem:[%s3 + $0x50] sm:$0xff]
      %v416 = vld [vmem:[%s3 + $0x58] sm:$0xff]
      %v417 = vld [vmem:[%s3 + $0x60] sm:$0xff]
      %v418 = vld [vmem:[%s3 + $0x68] sm:$0xff]
      %v419 = vld [vmem:[%s3 + $0x70] sm:$0xff]
      %v420 = vld [vmem:[%s3 + $0x78] sm:$0xff]
      %v421 = vld [vmem:[%s3 + $0x80] sm:$0xff]
      %v422 = vld [vmem:[%s3 + $0x88] sm:$0xff]
      %v423 = vld [vmem:[%s3 + $0x90] sm:$0xff]
      %v424 = vld [vmem:[%s3 + $0x98] sm:$0xff]
      %v425 = vld [vmem:[%s3 + $0xa0] sm:$0xff]
      %v426 = vld [vmem:[%s3 + $0xa8] sm:$0xff]
      %v427 = vld [vmem:[%s3 + $0xb0] sm:$0xff]
      %v428 = vld [vmem:[%s3 + $0xb8] sm:$0xff]
      %v429 = vld [vmem:[%s3 + $0xc0] sm:$0xff]
      %v430 = vld [vmem:[%s3 + $0xc8] sm:$0xff]
      %v431 = vld [vmem:[%s3 + $0xd0] sm:$0xff]
      %v432 = vld [vmem:[%s3 + $0xd8] sm:$0xff]
      %v433 = vld [vmem:[%s3 + $0xe0] sm:$0xff]
      %v434 = vld [vmem:[%s3 + $0xe8] sm:$0xff]
      %v435 = vld [vmem:[%s3 + $0xf0] sm:$0xff]
      %v436 = vld [vmem:[%s3 + $0xf8] sm:$0xff]
      %v437 = vld [vmem:[%s3 + $0x100] sm:$0xff]
      %v438 = vld [vmem:[%s3 + $0x108] sm:$0xff]
      %v439 = vld [vmem:[%s3 + $0x110] sm:$0xff]
      %v440 = vld [vmem:[%s3 + $0x118] sm:$0xff]
      %v441 = vld [vmem:[%s3 + $0x120] sm:$0xff]
      %v442 = vld [vmem:[%s3 + $0x128] sm:$0xff]
      %v443 = vld [vmem:[%s3 + $0x130] sm:$0xff]
      %v444 = vld [vmem:[%s3 + $0x138] sm:$0xff]
      %v445 = vld [vmem:[%s3 + $0x140] sm:$0xff]
      %v446 = vld [vmem:[%s3 + $0x148] sm:$0xff]
      %v447 = vld [vmem:[%s3 + $0x150] sm:$0xff]
      %v448 = vld [vmem:[%s3 + $0x158] sm:$0xff]
      %v449 = vld [vmem:[%s3 + $0x160] sm:$0xff]
      %v450 = vld [vmem:[%s3 + $0x168] sm:$0xff]
      %v451 = vld [vmem:[%s3 + $0x170] sm:$0xff]
      %v452 = vld [vmem:[%s3 + $0x178] sm:$0xff]
      %v453 = vld [vmem:[%s3 + $0x180] sm:$0xff]
      %v454 = vld [vmem:[%s3 + $0x188] sm:$0xff]
      %v455 = vld [vmem:[%s3 + $0x190] sm:$0xff]
      %v456 = vld [vmem:[%s3 + $0x198] sm:$0xff]
      %v457 = vld [vmem:[%s3 + $0x1a0] sm:$0xff]
      %v458 = vld [vmem:[%s3 + $0x1a8] sm:$0xff]
      %v459 = vld [vmem:[%s363] sm:$0xff]
      %v460 = vld [vmem:[%s363 + $0x8] sm:$0xff]
      %v461 = vld [vmem:[%s363 + $0x10] sm:$0x3]
      %v462 = vld [vmem:[%s363 + $0x18] sm:$0xff]
      %v463 = vld [vmem:[%s363 + $0x20] sm:$0xff]
      %v464 = vld [vmem:[%s363 + $0x28] sm:$0x3]
      %v465 = vld [vmem:[%s363 + $0x30] sm:$0xff]
      %v466 = vld [vmem:[%s363 + $0x38] sm:$0xff]
      %v467 = vld [vmem:[%s363 + $0x40] sm:$0x3]
      %v468 = vld [vmem:[%s363 + $0x48] sm:$0xff]
      %v469 = vld [vmem:[%s363 + $0x50] sm:$0xff]
      %v470 = vld [vmem:[%s363 + $0x58] sm:$0x3]
      %v471 = vld [vmem:[%s363 + $0x60] sm:$0xff]
      %v472 = vld [vmem:[%s363 + $0x68] sm:$0xff]
      %v473 = vld [vmem:[%s363 + $0x70] sm:$0x3]
      %v474 = vld [vmem:[%s363 + $0x78] sm:$0xff]
      %v475 = vld [vmem:[%s363 + $0x80] sm:$0xff]
      %v476 = vld [vmem:[%s363 + $0x88] sm:$0x3]
      %v477 = vld [vmem:[%s363 + $0x90] sm:$0xff]
      %v478 = vld [vmem:[%s363 + $0x98] sm:$0xff]
      %v479 = vld [vmem:[%s363 + $0xa0] sm:$0x3]
      %v480 = vld [vmem:[%s363 + $0xa8] sm:$0xff]
      %v481 = vld [vmem:[%s363 + $0xb0] sm:$0xff]
      %v482 = vld [vmem:[%s363 + $0xb8] sm:$0x3]
      %v483 = vld [vmem:[%s363 + $0xc0] sm:$0xff]
      %v484 = vld [vmem:[%s363 + $0xc8] sm:$0xff]
      %v485 = vld [vmem:[%s363 + $0xd0] sm:$0x3]
      %v486 = vld [vmem:[%s363 + $0xd8] sm:$0xff]
      %v487 = vld [vmem:[%s363 + $0xe0] sm:$0xff]
      %v488 = vld [vmem:[%s363 + $0xe8] sm:$0x3]
      %v489 = vld [vmem:[%s363 + $0xf0] sm:$0xff]
      %v490 = vld [vmem:[%s363 + $0xf8] sm:$0xff]
      %v491 = vld [vmem:[%s363 + $0x100] sm:$0x3]
      %v492 = vld [vmem:[%s363 + $0x108] sm:$0xff]
      %v493 = vld [vmem:[%s363 + $0x110] sm:$0xff]
      %v494 = vld [vmem:[%s363 + $0x118] sm:$0x3]
      %v495 = vld [vmem:[%s363 + $0x120] sm:$0xff]
      %v496 = vld [vmem:[%s363 + $0x128] sm:$0xff]
      %v497 = vld [vmem:[%s363 + $0x130] sm:$0x3]
      %v498 = vld [vmem:[%s363 + $0x138] sm:$0xff]
      %v499 = vld [vmem:[%s363 + $0x140] sm:$0xff]
      %v500 = vld [vmem:[%s363 + $0x148] sm:$0x3]
      %v501 = vld [vmem:[%s363 + $0x150] sm:$0xff]
      %v502 = vld [vmem:[%s363 + $0x158] sm:$0xff]
      %v503 = vld [vmem:[%s363 + $0x160] sm:$0x3]
      %v504 = vld [vmem:[%s363 + $0x168] sm:$0xff]
      %v505 = vld [vmem:[%s363 + $0x170] sm:$0xff]
      %v506 = vld [vmem:[%s363 + $0x178] sm:$0x3]
      %v507 = vld [vmem:[%s363 + $0x180] sm:$0xff]
      %v508 = vld [vmem:[%s363 + $0x188] sm:$0xff]
      %v509 = vld [vmem:[%s363 + $0x190] sm:$0x3]
      %v510 = vld [vmem:[%s363 + $0x198] sm:$0xff]
      %v511 = vld [vmem:[%s363 + $0x1a0] sm:$0xff]
      %v512 = vld [vmem:[%s363 + $0x1a8] sm:$0x3]
      %v513 = vpack.c.bf16 %v460, %v459
      %v514 = vpack.c.bf16 %v463, %v462
      %v515 = vpack.c.bf16 %v466, %v465
      %v516 = vpack.c.bf16 %v469, %v468
      %v517 = vpack.c.bf16 %v472, %v471
      %v518 = vpack.c.bf16 %v475, %v474
      %v519 = vpack.c.bf16 %v478, %v477
      %v520 = vpack.c.bf16 %v481, %v480
      %v521 = vpack.c.bf16 %v484, %v483
      %v522 = vpack.c.bf16 %v487, %v486
      %v523 = vpack.c.bf16 %v490, %v489
      %v524 = vpack.c.bf16 %v493, %v492
      %v525 = vpack.c.bf16 %v496, %v495
      %v526 = vpack.c.bf16 %v499, %v498
      %v527 = vpack.c.bf16 %v502, %v501
      %v528 = vpack.c.bf16 %v505, %v504
      %v529 = vpack.c.bf16 %v406, %v405
      %vm578 = vcmask 1046528
      %v579 = vrot.slane %v459, 1
      %v580 = vrot.slane %v460, 1
      %v581 = vsel %vm578, %v579, %v580
      %v582 = vrot.slane %v461, 1
      %v583 = vsel %vm578, %v580, %v582
      %v584 = vrot.slane %v462, 1
      %v585 = vrot.slane %v463, 1
      %v586 = vsel %vm578, %v584, %v585
      %v587 = vrot.slane %v464, 1
      %v588 = vsel %vm578, %v585, %v587
      %v589 = vrot.slane %v465, 1
      %v590 = vrot.slane %v466, 1
      %v591 = vsel %vm578, %v589, %v590
      %v592 = vrot.slane %v467, 1
      %v593 = vsel %vm578, %v590, %v592
      %v594 = vrot.slane %v468, 1
      %v595 = vrot.slane %v469, 1
      %v596 = vsel %vm578, %v594, %v595
      %v597 = vrot.slane %v470, 1
      %v598 = vsel %vm578, %v595, %v597
      %v599 = vrot.slane %v471, 1
      %v600 = vrot.slane %v472, 1
      %v601 = vsel %vm578, %v599, %v600
      %v602 = vrot.slane %v473, 1
      %v603 = vsel %vm578, %v600, %v602
      %v604 = vrot.slane %v474, 1
      %v605 = vrot.slane %v475, 1
      %v606 = vsel %vm578, %v604, %v605
      %v607 = vrot.slane %v476, 1
      %v608 = vsel %vm578, %v605, %v607
      %v609 = vrot.slane %v477, 1
      %v610 = vrot.slane %v478, 1
      %v611 = vsel %vm578, %v609, %v610
      %v612 = vrot.slane %v479, 1
      %v613 = vsel %vm578, %v610, %v612
      %v614 = vrot.slane %v480, 1
      %v615 = vrot.slane %v481, 1
      %v616 = vsel %vm578, %v614, %v615
      %v617 = vrot.slane %v482, 1
      %v618 = vsel %vm578, %v615, %v617
      %v619 = vrot.slane %v483, 1
      %v620 = vrot.slane %v484, 1
      %v621 = vsel %vm578, %v619, %v620
      %v622 = vrot.slane %v485, 1
      %v623 = vsel %vm578, %v620, %v622
      %v624 = vrot.slane %v486, 1
      %v625 = vrot.slane %v487, 1
      %v626 = vsel %vm578, %v624, %v625
      %v627 = vrot.slane %v488, 1
      %v628 = vsel %vm578, %v625, %v627
      %v629 = vrot.slane %v489, 1
      %v630 = vrot.slane %v490, 1
      %v631 = vsel %vm578, %v629, %v630
      %v632 = vrot.slane %v491, 1
      %v633 = vsel %vm578, %v630, %v632
      %v634 = vrot.slane %v492, 1
      %v635 = vrot.slane %v493, 1
      %v636 = vsel %vm578, %v634, %v635
      %v637 = vrot.slane %v494, 1
      %v638 = vsel %vm578, %v635, %v637
      %v639 = vrot.slane %v495, 1
      %v640 = vrot.slane %v496, 1
      %v641 = vsel %vm578, %v639, %v640
      %v642 = vrot.slane %v497, 1
      %v643 = vsel %vm578, %v640, %v642
      %v644 = vrot.slane %v498, 1
      %v645 = vrot.slane %v499, 1
      %v646 = vsel %vm578, %v644, %v645
      %v647 = vrot.slane %v500, 1
      %v648 = vsel %vm578, %v645, %v647
      %v649 = vrot.slane %v501, 1
      %v650 = vrot.slane %v502, 1
      %v651 = vsel %vm578, %v649, %v650
      %v652 = vrot.slane %v503, 1
      %v653 = vsel %vm578, %v650, %v652
      %v654 = vrot.slane %v504, 1
      %v655 = vrot.slane %v505, 1
      %v656 = vsel %vm578, %v654, %v655
      %v657 = vrot.slane %v506, 1
      %v658 = vsel %vm578, %v655, %v657
      %v691 = vpack.c.bf16 %v583, %v581
      %v692 = vpack.c.bf16 %v588, %v586
      %v693 = vpack.c.bf16 %v593, %v591
      %v694 = vpack.c.bf16 %v598, %v596
      %v695 = vpack.c.bf16 %v603, %v601
      %v696 = vpack.c.bf16 %v608, %v606
      %v697 = vpack.c.bf16 %v613, %v611
      %v698 = vpack.c.bf16 %v618, %v616
      %v699 = vpack.c.bf16 %v623, %v621
      %v700 = vpack.c.bf16 %v628, %v626
      %v701 = vpack.c.bf16 %v633, %v631
      %v702 = vpack.c.bf16 %v638, %v636
      %v703 = vpack.c.bf16 %v643, %v641
      %v704 = vpack.c.bf16 %v648, %v646
      %v705 = vpack.c.bf16 %v653, %v651
      %v706 = vpack.c.bf16 %v658, %v656
      %v707 = vpack.c.bf16 %v408, %v407
      %vm708 = vcmask 130048
      %v710 = vsel %vm708, %v691, 0
      %v713 = vsel %vm708, %v692, 0
      %v716 = vsel %vm708, %v693, 0
      %v719 = vsel %vm708, %v694, 0
      %v722 = vsel %vm708, %v695, 0
      %v725 = vsel %vm708, %v696, 0
      %v728 = vsel %vm708, %v697, 0
      %v731 = vsel %vm708, %v698, 0
      %v734 = vsel %vm708, %v699, 0
      %v737 = vsel %vm708, %v700, 0
      %v740 = vsel %vm708, %v701, 0
      %v743 = vsel %vm708, %v702, 0
      %v746 = vsel %vm708, %v703, 0
      %v749 = vsel %vm708, %v704, 0
      %v752 = vsel %vm708, %v705, 0
      %v755 = vsel %vm708, %v706, 0
      %757 = vmatpush.bf16.msra.mxu0 0
      %758 = vmatpush.bf16.msra.mxu0 0
      %759 = vmatpush.bf16.msra.mxu0 0
      %760 = vmatpush.bf16.msra.mxu0 0
      %761 = vmatpush.bf16.msra.mxu0 0
      %762 = vmatpush.bf16.msra.mxu0 0
      %763 = vmatpush.bf16.msra.mxu0 0
      %764 = vmatpush.bf16.msra.mxu0 %v707
      %765 = vmatmul.bf16.gmra.mxu0 %v710
      %v766 = vpop.f32.mrf.mxu0
      %v767 = vadd.f32 0.0, %v766
      %v768 = vpop.f32.mrf.mxu0
      %v769 = vadd.f32 0.0, %v768
      %770 = vmatmul.bf16.gmra.mxu0 %v713
      %v771 = vpop.f32.mrf.mxu0
      %v772 = vadd.f32 0.0, %v771
      %v773 = vpop.f32.mrf.mxu0
      %v774 = vadd.f32 0.0, %v773
      %775 = vmatmul.bf16.gmra.mxu0 %v716
      %v776 = vpop.f32.mrf.mxu0
      %v777 = vadd.f32 0.0, %v776
      %v778 = vpop.f32.mrf.mxu0
      %v779 = vadd.f32 0.0, %v778
      %780 = vmatmul.bf16.gmra.mxu0 %v719
      %v781 = vpop.f32.mrf.mxu0
      %v782 = vadd.f32 0.0, %v781
      %v783 = vpop.f32.mrf.mxu0
      %v784 = vadd.f32 0.0, %v783
      %785 = vmatmul.bf16.gmra.mxu0 %v722
      %v786 = vpop.f32.mrf.mxu0
      %v787 = vadd.f32 0.0, %v786
      %v788 = vpop.f32.mrf.mxu0
      %v789 = vadd.f32 0.0, %v788
      %790 = vmatmul.bf16.gmra.mxu0 %v725
      %v791 = vpop.f32.mrf.mxu0
      %v792 = vadd.f32 0.0, %v791
      %v793 = vpop.f32.mrf.mxu0
      %v794 = vadd.f32 0.0, %v793
      %795 = vmatmul.bf16.gmra.mxu0 %v728
      %v796 = vpop.f32.mrf.mxu0
      %v797 = vadd.f32 0.0, %v796
      %v798 = vpop.f32.mrf.mxu0
      %v799 = vadd.f32 0.0, %v798
      %800 = vmatmul.bf16.gmra.mxu0 %v731
      %v801 = vpop.f32.mrf.mxu0
      %v802 = vadd.f32 0.0, %v801
      %v803 = vpop.f32.mrf.mxu0
      %v804 = vadd.f32 0.0, %v803
      %805 = vmatmul.bf16.gmra.mxu0 %v734
      %v806 = vpop.f32.mrf.mxu0
      %v807 = vadd.f32 0.0, %v806
      %v808 = vpop.f32.mrf.mxu0
      %v809 = vadd.f32 0.0, %v808
      %810 = vmatmul.bf16.gmra.mxu0 %v737
      %v811 = vpop.f32.mrf.mxu0
      %v812 = vadd.f32 0.0, %v811
      %v813 = vpop.f32.mrf.mxu0
      %v814 = vadd.f32 0.0, %v813
      %815 = vmatmul.bf16.gmra.mxu0 %v740
      %v816 = vpop.f32.mrf.mxu0
      %v817 = vadd.f32 0.0, %v816
      %v818 = vpop.f32.mrf.mxu0
      %v819 = vadd.f32 0.0, %v818
      %820 = vmatmul.bf16.gmra.mxu0 %v743
      %v821 = vpop.f32.mrf.mxu0
      %v822 = vadd.f32 0.0, %v821
      %v823 = vpop.f32.mrf.mxu0
      %v824 = vadd.f32 0.0, %v823
      %825 = vmatmul.bf16.gmra.mxu0 %v746
      %v826 = vpop.f32.mrf.mxu0
      %v827 = vadd.f32 0.0, %v826
      %v828 = vpop.f32.mrf.mxu0
      %v829 = vadd.f32 0.0, %v828
      %830 = vmatmul.bf16.gmra.mxu0 %v749
      %v831 = vpop.f32.mrf.mxu0
      %v832 = vadd.f32 0.0, %v831
      %v833 = vpop.f32.mrf.mxu0
      %v834 = vadd.f32 0.0, %v833
      %835 = vmatmul.bf16.gmra.mxu0 %v752
      %v836 = vpop.f32.mrf.mxu0
      %v837 = vadd.f32 0.0, %v836
      %v838 = vpop.f32.mrf.mxu0
      %v839 = vadd.f32 0.0, %v838
      %840 = vmatmul.bf16.gmra.mxu0 %v755
      %v841 = vpop.f32.mrf.mxu0
      %v842 = vadd.f32 0.0, %v841
      %v843 = vpop.f32.mrf.mxu0
      %v844 = vadd.f32 0.0, %v843
      %845 = vdwg.mxu0
      %v847 = vsel %vm708, %v513, 0
      %v850 = vsel %vm708, %v514, 0
      %v853 = vsel %vm708, %v515, 0
      %v856 = vsel %vm708, %v516, 0
      %v859 = vsel %vm708, %v517, 0
      %v862 = vsel %vm708, %v518, 0
      %v865 = vsel %vm708, %v519, 0
      %v868 = vsel %vm708, %v520, 0
      %v871 = vsel %vm708, %v521, 0
      %v874 = vsel %vm708, %v522, 0
      %v877 = vsel %vm708, %v523, 0
      %v880 = vsel %vm708, %v524, 0
      %v883 = vsel %vm708, %v525, 0
      %v886 = vsel %vm708, %v526, 0
      %v889 = vsel %vm708, %v527, 0
      %v892 = vsel %vm708, %v528, 0
      %894 = vmatpush.bf16.msra.mxu0 0
      %895 = vmatpush.bf16.msra.mxu0 0
      %896 = vmatpush.bf16.msra.mxu0 0
      %897 = vmatpush.bf16.msra.mxu0 0
      %898 = vmatpush.bf16.msra.mxu0 0
      %899 = vmatpush.bf16.msra.mxu0 0
      %900 = vmatpush.bf16.msra.mxu0 0
      %901 = vmatpush.bf16.msra.mxu0 %v529
      %902 = vmatmul.bf16.gmra.mxu0 %v847
      %v903 = vpop.f32.mrf.mxu0
      %v904 = vadd.f32 %v767, %v903
      %v905 = vpop.f32.mrf.mxu0
      %v906 = vadd.f32 %v769, %v905
      %907 = vmatmul.bf16.gmra.mxu0 %v850
      %v908 = vpop.f32.mrf.mxu0
      %v909 = vadd.f32 %v772, %v908
      %v910 = vpop.f32.mrf.mxu0
      %v911 = vadd.f32 %v774, %v910
      %912 = vmatmul.bf16.gmra.mxu0 %v853
      %v913 = vpop.f32.mrf.mxu0
      %v914 = vadd.f32 %v777, %v913
      %v915 = vpop.f32.mrf.mxu0
      %v916 = vadd.f32 %v779, %v915
      %917 = vmatmul.bf16.gmra.mxu0 %v856
      %v918 = vpop.f32.mrf.mxu0
      %v919 = vadd.f32 %v782, %v918
      %v920 = vpop.f32.mrf.mxu0
      %v921 = vadd.f32 %v784, %v920
      %922 = vmatmul.bf16.gmra.mxu0 %v859
      %v923 = vpop.f32.mrf.mxu0
      %v924 = vadd.f32 %v787, %v923
      %v925 = vpop.f32.mrf.mxu0
      %v926 = vadd.f32 %v789, %v925
      %927 = vmatmul.bf16.gmra.mxu0 %v862
      %v928 = vpop.f32.mrf.mxu0
      %v929 = vadd.f32 %v792, %v928
      %v930 = vpop.f32.mrf.mxu0
      %v931 = vadd.f32 %v794, %v930
      %932 = vmatmul.bf16.gmra.mxu0 %v865
      %v933 = vpop.f32.mrf.mxu0
      %v934 = vadd.f32 %v797, %v933
      %v935 = vpop.f32.mrf.mxu0
      %v936 = vadd.f32 %v799, %v935
      %937 = vmatmul.bf16.gmra.mxu0 %v868
      %v938 = vpop.f32.mrf.mxu0
      %v939 = vadd.f32 %v802, %v938
      %v940 = vpop.f32.mrf.mxu0
      %v941 = vadd.f32 %v804, %v940
      %942 = vmatmul.bf16.gmra.mxu0 %v871
      %v943 = vpop.f32.mrf.mxu0
      %v944 = vadd.f32 %v807, %v943
      %v945 = vpop.f32.mrf.mxu0
      %v946 = vadd.f32 %v809, %v945
      %947 = vmatmul.bf16.gmra.mxu0 %v874
      %v948 = vpop.f32.mrf.mxu0
      %v949 = vadd.f32 %v812, %v948
      %v950 = vpop.f32.mrf.mxu0
      %v951 = vadd.f32 %v814, %v950
      %952 = vmatmul.bf16.gmra.mxu0 %v877
      %v953 = vpop.f32.mrf.mxu0
      %v954 = vadd.f32 %v817, %v953
      %v955 = vpop.f32.mrf.mxu0
      %v956 = vadd.f32 %v819, %v955
      %957 = vmatmul.bf16.gmra.mxu0 %v880
      %v958 = vpop.f32.mrf.mxu0
      %v959 = vadd.f32 %v822, %v958
      %v960 = vpop.f32.mrf.mxu0
      %v961 = vadd.f32 %v824, %v960
      %962 = vmatmul.bf16.gmra.mxu0 %v883
      %v963 = vpop.f32.mrf.mxu0
      %v964 = vadd.f32 %v827, %v963
      %v965 = vpop.f32.mrf.mxu0
      %v966 = vadd.f32 %v829, %v965
      %967 = vmatmul.bf16.gmra.mxu0 %v886
      %v968 = vpop.f32.mrf.mxu0
      %v969 = vadd.f32 %v832, %v968
      %v970 = vpop.f32.mrf.mxu0
      %v971 = vadd.f32 %v834, %v970
      %972 = vmatmul.bf16.gmra.mxu0 %v889
      %v973 = vpop.f32.mrf.mxu0
      %v974 = vadd.f32 %v837, %v973
      %v975 = vpop.f32.mrf.mxu0
      %v976 = vadd.f32 %v839, %v975
      %977 = vmatmul.bf16.gmra.mxu0 %v892
      %v978 = vpop.f32.mrf.mxu0
      %v979 = vadd.f32 %v842, %v978
      %v980 = vpop.f32.mrf.mxu0
      %v981 = vadd.f32 %v844, %v980
      %982 = vdwg.mxu0
      %vm983 = vcmask 1045504
      %v984 = vrot.slane %v459, 2
      %v985 = vrot.slane %v460, 2
      %v986 = vsel %vm983, %v984, %v985
      %v987 = vrot.slane %v461, 2
      %v988 = vsel %vm983, %v985, %v987
      %v989 = vrot.slane %v462, 2
      %v990 = vrot.slane %v463, 2
      %v991 = vsel %vm983, %v989, %v990
      %v992 = vrot.slane %v464, 2
      %v993 = vsel %vm983, %v990, %v992
      %v994 = vrot.slane %v465, 2
      %v995 = vrot.slane %v466, 2
      %v996 = vsel %vm983, %v994, %v995
      %v997 = vrot.slane %v467, 2
      %v998 = vsel %vm983, %v995, %v997
      %v999 = vrot.slane %v468, 2
      %v1000 = vrot.slane %v469, 2
      %v1001 = vsel %vm983, %v999, %v1000
      %v1002 = vrot.slane %v470, 2
      %v1003 = vsel %vm983, %v1000, %v1002
      %v1004 = vrot.slane %v471, 2
      %v1005 = vrot.slane %v472, 2
      %v1006 = vsel %vm983, %v1004, %v1005
      %v1007 = vrot.slane %v473, 2
      %v1008 = vsel %vm983, %v1005, %v1007
      %v1009 = vrot.slane %v474, 2
      %v1010 = vrot.slane %v475, 2
      %v1011 = vsel %vm983, %v1009, %v1010
      %v1012 = vrot.slane %v476, 2
      %v1013 = vsel %vm983, %v1010, %v1012
      %v1014 = vrot.slane %v477, 2
      %v1015 = vrot.slane %v478, 2
      %v1016 = vsel %vm983, %v1014, %v1015
      %v1017 = vrot.slane %v479, 2
      %v1018 = vsel %vm983, %v1015, %v1017
      %v1019 = vrot.slane %v480, 2
      %v1020 = vrot.slane %v481, 2
      %v1021 = vsel %vm983, %v1019, %v1020
      %v1022 = vrot.slane %v482, 2
      %v1023 = vsel %vm983, %v1020, %v1022
      %v1024 = vrot.slane %v483, 2
      %v1025 = vrot.slane %v484, 2
      %v1026 = vsel %vm983, %v1024, %v1025
      %v1027 = vrot.slane %v485, 2
      %v1028 = vsel %vm983, %v1025, %v1027
      %v1029 = vrot.slane %v486, 2
      %v1030 = vrot.slane %v487, 2
      %v1031 = vsel %vm983, %v1029, %v1030
      %v1032 = vrot.slane %v488, 2
      %v1033 = vsel %vm983, %v1030, %v1032
      %v1034 = vrot.slane %v489, 2
      %v1035 = vrot.slane %v490, 2
      %v1036 = vsel %vm983, %v1034, %v1035
      %v1037 = vrot.slane %v491, 2
      %v1038 = vsel %vm983, %v1035, %v1037
      %v1039 = vrot.slane %v492, 2
      %v1040 = vrot.slane %v493, 2
      %v1041 = vsel %vm983, %v1039, %v1040
      %v1042 = vrot.slane %v494, 2
      %v1043 = vsel %vm983, %v1040, %v1042
      %v1044 = vrot.slane %v495, 2
      %v1045 = vrot.slane %v496, 2
      %v1046 = vsel %vm983, %v1044, %v1045
      %v1047 = vrot.slane %v497, 2
      %v1048 = vsel %vm983, %v1045, %v1047
      %v1049 = vrot.slane %v498, 2
      %v1050 = vrot.slane %v499, 2
      %v1051 = vsel %vm983, %v1049, %v1050
      %v1052 = vrot.slane %v500, 2
      %v1053 = vsel %vm983, %v1050, %v1052
      %v1054 = vrot.slane %v501, 2
      %v1055 = vrot.slane %v502, 2
      %v1056 = vsel %vm983, %v1054, %v1055
      %v1057 = vrot.slane %v503, 2
      %v1058 = vsel %vm983, %v1055, %v1057
      %v1059 = vrot.slane %v504, 2
      %v1060 = vrot.slane %v505, 2
      %v1061 = vsel %vm983, %v1059, %v1060
      %v1062 = vrot.slane %v506, 2
      %v1063 = vsel %vm983, %v1060, %v1062
      %v1096 = vpack.c.bf16 %v988, %v986
      %v1097 = vpack.c.bf16 %v993, %v991
      %v1098 = vpack.c.bf16 %v998, %v996
      %v1099 = vpack.c.bf16 %v1003, %v1001
      %v1100 = vpack.c.bf16 %v1008, %v1006
      %v1101 = vpack.c.bf16 %v1013, %v1011
      %v1102 = vpack.c.bf16 %v1018, %v1016
      %v1103 = vpack.c.bf16 %v1023, %v1021
      %v1104 = vpack.c.bf16 %v1028, %v1026
      %v1105 = vpack.c.bf16 %v1033, %v1031
      %v1106 = vpack.c.bf16 %v1038, %v1036
      %v1107 = vpack.c.bf16 %v1043, %v1041
      %v1108 = vpack.c.bf16 %v1048, %v1046
      %v1109 = vpack.c.bf16 %v1053, %v1051
      %v1110 = vpack.c.bf16 %v1058, %v1056
      %v1111 = vpack.c.bf16 %v1063, %v1061
      %v1112 = vpack.c.bf16 %v410, %v409
      %v1114 = vsel %vm708, %v1096, 0
      %v1117 = vsel %vm708, %v1097, 0
      %v1120 = vsel %vm708, %v1098, 0
      %v1123 = vsel %vm708, %v1099, 0
      %v1126 = vsel %vm708, %v1100, 0
      %v1129 = vsel %vm708, %v1101, 0
      %v1132 = vsel %vm708, %v1102, 0
      %v1135 = vsel %vm708, %v1103, 0
      %v1138 = vsel %vm708, %v1104, 0
      %v1141 = vsel %vm708, %v1105, 0
      %v1144 = vsel %vm708, %v1106, 0
      %v1147 = vsel %vm708, %v1107, 0
      %v1150 = vsel %vm708, %v1108, 0
      %v1153 = vsel %vm708, %v1109, 0
      %v1156 = vsel %vm708, %v1110, 0
      %v1159 = vsel %vm708, %v1111, 0
      %1161 = vmatpush.bf16.msra.mxu0 0
      %1162 = vmatpush.bf16.msra.mxu0 0
      %1163 = vmatpush.bf16.msra.mxu0 0
      %1164 = vmatpush.bf16.msra.mxu0 0
      %1165 = vmatpush.bf16.msra.mxu0 0
      %1166 = vmatpush.bf16.msra.mxu0 0
      %1167 = vmatpush.bf16.msra.mxu0 0
      %1168 = vmatpush.bf16.msra.mxu0 %v1112
      %1169 = vmatmul.bf16.gmra.mxu0 %v1114
      %v1170 = vpop.f32.mrf.mxu0
      %v1171 = vadd.f32 0.0, %v1170
      %v1172 = vpop.f32.mrf.mxu0
      %v1173 = vadd.f32 0.0, %v1172
      %1174 = vmatmul.bf16.gmra.mxu0 %v1117
      %v1175 = vpop.f32.mrf.mxu0
      %v1176 = vadd.f32 0.0, %v1175
      %v1177 = vpop.f32.mrf.mxu0
      %v1178 = vadd.f32 0.0, %v1177
      %1179 = vmatmul.bf16.gmra.mxu0 %v1120
      %v1180 = vpop.f32.mrf.mxu0
      %v1181 = vadd.f32 0.0, %v1180
      %v1182 = vpop.f32.mrf.mxu0
      %v1183 = vadd.f32 0.0, %v1182
      %1184 = vmatmul.bf16.gmra.mxu0 %v1123
      %v1185 = vpop.f32.mrf.mxu0
      %v1186 = vadd.f32 0.0, %v1185
      %v1187 = vpop.f32.mrf.mxu0
      %v1188 = vadd.f32 0.0, %v1187
      %1189 = vmatmul.bf16.gmra.mxu0 %v1126
      %v1190 = vpop.f32.mrf.mxu0
      %v1191 = vadd.f32 0.0, %v1190
      %v1192 = vpop.f32.mrf.mxu0
      %v1193 = vadd.f32 0.0, %v1192
      %1194 = vmatmul.bf16.gmra.mxu0 %v1129
      %v1195 = vpop.f32.mrf.mxu0
      %v1196 = vadd.f32 0.0, %v1195
      %v1197 = vpop.f32.mrf.mxu0
      %v1198 = vadd.f32 0.0, %v1197
      %1199 = vmatmul.bf16.gmra.mxu0 %v1132
      %v1200 = vpop.f32.mrf.mxu0
      %v1201 = vadd.f32 0.0, %v1200
      %v1202 = vpop.f32.mrf.mxu0
      %v1203 = vadd.f32 0.0, %v1202
      %1204 = vmatmul.bf16.gmra.mxu0 %v1135
      %v1205 = vpop.f32.mrf.mxu0
      %v1206 = vadd.f32 0.0, %v1205
      %v1207 = vpop.f32.mrf.mxu0
      %v1208 = vadd.f32 0.0, %v1207
      %1209 = vmatmul.bf16.gmra.mxu0 %v1138
      %v1210 = vpop.f32.mrf.mxu0
      %v1211 = vadd.f32 0.0, %v1210
      %v1212 = vpop.f32.mrf.mxu0
      %v1213 = vadd.f32 0.0, %v1212
      %1214 = vmatmul.bf16.gmra.mxu0 %v1141
      %v1215 = vpop.f32.mrf.mxu0
      %v1216 = vadd.f32 0.0, %v1215
      %v1217 = vpop.f32.mrf.mxu0
      %v1218 = vadd.f32 0.0, %v1217
      %1219 = vmatmul.bf16.gmra.mxu0 %v1144
      %v1220 = vpop.f32.mrf.mxu0
      %v1221 = vadd.f32 0.0, %v1220
      %v1222 = vpop.f32.mrf.mxu0
      %v1223 = vadd.f32 0.0, %v1222
      %1224 = vmatmul.bf16.gmra.mxu0 %v1147
      %v1225 = vpop.f32.mrf.mxu0
      %v1226 = vadd.f32 0.0, %v1225
      %v1227 = vpop.f32.mrf.mxu0
      %v1228 = vadd.f32 0.0, %v1227
      %1229 = vmatmul.bf16.gmra.mxu0 %v1150
      %v1230 = vpop.f32.mrf.mxu0
      %v1231 = vadd.f32 0.0, %v1230
      %v1232 = vpop.f32.mrf.mxu0
      %v1233 = vadd.f32 0.0, %v1232
      %1234 = vmatmul.bf16.gmra.mxu0 %v1153
      %v1235 = vpop.f32.mrf.mxu0
      %v1236 = vadd.f32 0.0, %v1235
      %v1237 = vpop.f32.mrf.mxu0
      %v1238 = vadd.f32 0.0, %v1237
      %1239 = vmatmul.bf16.gmra.mxu0 %v1156
      %v1240 = vpop.f32.mrf.mxu0
      %v1241 = vadd.f32 0.0, %v1240
      %v1242 = vpop.f32.mrf.mxu0
      %v1243 = vadd.f32 0.0, %v1242
      %1244 = vmatmul.bf16.gmra.mxu0 %v1159
      %v1245 = vpop.f32.mrf.mxu0
      %v1246 = vadd.f32 0.0, %v1245
      %v1247 = vpop.f32.mrf.mxu0
      %v1248 = vadd.f32 0.0, %v1247
      %1249 = vdwg.mxu0
      %v1250 = vadd.f32 %v904, %v1171
      %v1251 = vadd.f32 %v906, %v1173
      %v1252 = vadd.f32 %v909, %v1176
      %v1253 = vadd.f32 %v911, %v1178
      %v1254 = vadd.f32 %v914, %v1181
      %v1255 = vadd.f32 %v916, %v1183
      %v1256 = vadd.f32 %v919, %v1186
      %v1257 = vadd.f32 %v921, %v1188
      %v1258 = vadd.f32 %v924, %v1191
      %v1259 = vadd.f32 %v926, %v1193
      %v1260 = vadd.f32 %v929, %v1196
      %v1261 = vadd.f32 %v931, %v1198
      %v1262 = vadd.f32 %v934, %v1201
      %v1263 = vadd.f32 %v936, %v1203
      %v1264 = vadd.f32 %v939, %v1206
      %v1265 = vadd.f32 %v941, %v1208
      %v1266 = vadd.f32 %v944, %v1211
      %v1267 = vadd.f32 %v946, %v1213
      %v1268 = vadd.f32 %v949, %v1216
      %v1269 = vadd.f32 %v951, %v1218
      %v1270 = vadd.f32 %v954, %v1221
      %v1271 = vadd.f32 %v956, %v1223
      %v1272 = vadd.f32 %v959, %v1226
      %v1273 = vadd.f32 %v961, %v1228
      %v1274 = vadd.f32 %v964, %v1231
      %v1275 = vadd.f32 %v966, %v1233
      %v1276 = vadd.f32 %v969, %v1236
      %v1277 = vadd.f32 %v971, %v1238
      %v1278 = vadd.f32 %v974, %v1241
      %v1279 = vadd.f32 %v976, %v1243
      %v1280 = vadd.f32 %v979, %v1246
      %v1281 = vadd.f32 %v981, %v1248
      %v1282 = vpack.c.bf16 %v508, %v507
      %v1283 = vpack.c.bf16 %v412, %v411
      %v1285 = vsel %vm708, %v1282, 0
      %1287 = vmatpush.bf16.msra.mxu0 0
      %1288 = vmatpush.bf16.msra.mxu0 0
      %1289 = vmatpush.bf16.msra.mxu0 0
      %1290 = vmatpush.bf16.msra.mxu0 0
      %1291 = vmatpush.bf16.msra.mxu0 0
      %1292 = vmatpush.bf16.msra.mxu0 0
      %1293 = vmatpush.bf16.msra.mxu0 0
      %1294 = vmatpush.bf16.msra.mxu0 %v1283
      %1295 = vmatmul.bf16.gmra.mxu0 %v850
      %v1296 = vpop.f32.mrf.mxu0
      %v1297 = vadd.f32 0.0, %v1296
      %v1298 = vpop.f32.mrf.mxu0
      %v1299 = vadd.f32 0.0, %v1298
      %1300 = vmatmul.bf16.gmra.mxu0 %v853
      %v1301 = vpop.f32.mrf.mxu0
      %v1302 = vadd.f32 0.0, %v1301
      %v1303 = vpop.f32.mrf.mxu0
      %v1304 = vadd.f32 0.0, %v1303
      %1305 = vmatmul.bf16.gmra.mxu0 %v856
      %v1306 = vpop.f32.mrf.mxu0
      %v1307 = vadd.f32 0.0, %v1306
      %v1308 = vpop.f32.mrf.mxu0
      %v1309 = vadd.f32 0.0, %v1308
      %1310 = vmatmul.bf16.gmra.mxu0 %v859
      %v1311 = vpop.f32.mrf.mxu0
      %v1312 = vadd.f32 0.0, %v1311
      %v1313 = vpop.f32.mrf.mxu0
      %v1314 = vadd.f32 0.0, %v1313
      %1315 = vmatmul.bf16.gmra.mxu0 %v862
      %v1316 = vpop.f32.mrf.mxu0
      %v1317 = vadd.f32 0.0, %v1316
      %v1318 = vpop.f32.mrf.mxu0
      %v1319 = vadd.f32 0.0, %v1318
      %1320 = vmatmul.bf16.gmra.mxu0 %v865
      %v1321 = vpop.f32.mrf.mxu0
      %v1322 = vadd.f32 0.0, %v1321
      %v1323 = vpop.f32.mrf.mxu0
      %v1324 = vadd.f32 0.0, %v1323
      %1325 = vmatmul.bf16.gmra.mxu0 %v868
      %v1326 = vpop.f32.mrf.mxu0
      %v1327 = vadd.f32 0.0, %v1326
      %v1328 = vpop.f32.mrf.mxu0
      %v1329 = vadd.f32 0.0, %v1328
      %1330 = vmatmul.bf16.gmra.mxu0 %v871
      %v1331 = vpop.f32.mrf.mxu0
      %v1332 = vadd.f32 0.0, %v1331
      %v1333 = vpop.f32.mrf.mxu0
      %v1334 = vadd.f32 0.0, %v1333
      %1335 = vmatmul.bf16.gmra.mxu0 %v874
      %v1336 = vpop.f32.mrf.mxu0
      %v1337 = vadd.f32 0.0, %v1336
      %v1338 = vpop.f32.mrf.mxu0
      %v1339 = vadd.f32 0.0, %v1338
      %1340 = vmatmul.bf16.gmra.mxu0 %v877
      %v1341 = vpop.f32.mrf.mxu0
      %v1342 = vadd.f32 0.0, %v1341
      %v1343 = vpop.f32.mrf.mxu0
      %v1344 = vadd.f32 0.0, %v1343
      %1345 = vmatmul.bf16.gmra.mxu0 %v880
      %v1346 = vpop.f32.mrf.mxu0
      %v1347 = vadd.f32 0.0, %v1346
      %v1348 = vpop.f32.mrf.mxu0
      %v1349 = vadd.f32 0.0, %v1348
      %1350 = vmatmul.bf16.gmra.mxu0 %v883
      %v1351 = vpop.f32.mrf.mxu0
      %v1352 = vadd.f32 0.0, %v1351
      %v1353 = vpop.f32.mrf.mxu0
      %v1354 = vadd.f32 0.0, %v1353
      %1355 = vmatmul.bf16.gmra.mxu0 %v886
      %v1356 = vpop.f32.mrf.mxu0
      %v1357 = vadd.f32 0.0, %v1356
      %v1358 = vpop.f32.mrf.mxu0
      %v1359 = vadd.f32 0.0, %v1358
      %1360 = vmatmul.bf16.gmra.mxu0 %v889
      %v1361 = vpop.f32.mrf.mxu0
      %v1362 = vadd.f32 0.0, %v1361
      %v1363 = vpop.f32.mrf.mxu0
      %v1364 = vadd.f32 0.0, %v1363
      %1365 = vmatmul.bf16.gmra.mxu0 %v892
      %v1366 = vpop.f32.mrf.mxu0
      %v1367 = vadd.f32 0.0, %v1366
      %v1368 = vpop.f32.mrf.mxu0
      %v1369 = vadd.f32 0.0, %v1368
      %1370 = vmatmul.bf16.gmra.mxu0 %v1285
      %v1371 = vpop.f32.mrf.mxu0
      %v1372 = vadd.f32 0.0, %v1371
      %v1373 = vpop.f32.mrf.mxu0
      %v1374 = vadd.f32 0.0, %v1373
      %1375 = vdwg.mxu0
      %v1376 = vadd.f32 %v1250, %v1297
      %v1377 = vadd.f32 %v1251, %v1299
      %v1378 = vadd.f32 %v1252, %v1302
      %v1379 = vadd.f32 %v1253, %v1304
      %v1380 = vadd.f32 %v1254, %v1307
      %v1381 = vadd.f32 %v1255, %v1309
      %v1382 = vadd.f32 %v1256, %v1312
      %v1383 = vadd.f32 %v1257, %v1314
      %v1384 = vadd.f32 %v1258, %v1317
      %v1385 = vadd.f32 %v1259, %v1319
      %v1386 = vadd.f32 %v1260, %v1322
      %v1387 = vadd.f32 %v1261, %v1324
      %v1388 = vadd.f32 %v1262, %v1327
      %v1389 = vadd.f32 %v1263, %v1329
      %v1390 = vadd.f32 %v1264, %v1332
      %v1391 = vadd.f32 %v1265, %v1334
      %v1392 = vadd.f32 %v1266, %v1337
      %v1393 = vadd.f32 %v1267, %v1339
      %v1394 = vadd.f32 %v1268, %v1342
      %v1395 = vadd.f32 %v1269, %v1344
      %v1396 = vadd.f32 %v1270, %v1347
      %v1397 = vadd.f32 %v1271, %v1349
      %v1398 = vadd.f32 %v1272, %v1352
      %v1399 = vadd.f32 %v1273, %v1354
      %v1400 = vadd.f32 %v1274, %v1357
      %v1401 = vadd.f32 %v1275, %v1359
      %v1402 = vadd.f32 %v1276, %v1362
      %v1403 = vadd.f32 %v1277, %v1364
      %v1404 = vadd.f32 %v1278, %v1367
      %v1405 = vadd.f32 %v1279, %v1369
      %v1406 = vadd.f32 %v1280, %v1372
      %v1407 = vadd.f32 %v1281, %v1374
      %v1411 = vrot.slane %v507, 1
      %v1412 = vrot.slane %v508, 1
      %v1413 = vsel %vm578, %v1411, %v1412
      %v1414 = vrot.slane %v509, 1
      %v1415 = vsel %vm578, %v1412, %v1414
      %v1418 = vpack.c.bf16 %v1415, %v1413
      %v1419 = vpack.c.bf16 %v414, %v413
      %v1421 = vsel %vm708, %v1418, 0
      %1423 = vmatpush.bf16.msra.mxu0 0
      %1424 = vmatpush.bf16.msra.mxu0 0
      %1425 = vmatpush.bf16.msra.mxu0 0
      %1426 = vmatpush.bf16.msra.mxu0 0
      %1427 = vmatpush.bf16.msra.mxu0 0
      %1428 = vmatpush.bf16.msra.mxu0 0
      %1429 = vmatpush.bf16.msra.mxu0 0
      %1430 = vmatpush.bf16.msra.mxu0 %v1419
      %1431 = vmatmul.bf16.gmra.mxu0 %v713
      %v1432 = vpop.f32.mrf.mxu0
      %v1433 = vadd.f32 0.0, %v1432
      %v1434 = vpop.f32.mrf.mxu0
      %v1435 = vadd.f32 0.0, %v1434
      %1436 = vmatmul.bf16.gmra.mxu0 %v716
      %v1437 = vpop.f32.mrf.mxu0
      %v1438 = vadd.f32 0.0, %v1437
      %v1439 = vpop.f32.mrf.mxu0
      %v1440 = vadd.f32 0.0, %v1439
      %1441 = vmatmul.bf16.gmra.mxu0 %v719
      %v1442 = vpop.f32.mrf.mxu0
      %v1443 = vadd.f32 0.0, %v1442
      %v1444 = vpop.f32.mrf.mxu0
      %v1445 = vadd.f32 0.0, %v1444
      %1446 = vmatmul.bf16.gmra.mxu0 %v722
      %v1447 = vpop.f32.mrf.mxu0
      %v1448 = vadd.f32 0.0, %v1447
      %v1449 = vpop.f32.mrf.mxu0
      %v1450 = vadd.f32 0.0, %v1449
      %1451 = vmatmul.bf16.gmra.mxu0 %v725
      %v1452 = vpop.f32.mrf.mxu0
      %v1453 = vadd.f32 0.0, %v1452
      %v1454 = vpop.f32.mrf.mxu0
      %v1455 = vadd.f32 0.0, %v1454
      %1456 = vmatmul.bf16.gmra.mxu0 %v728
      %v1457 = vpop.f32.mrf.mxu0
      %v1458 = vadd.f32 0.0, %v1457
      %v1459 = vpop.f32.mrf.mxu0
      %v1460 = vadd.f32 0.0, %v1459
      %1461 = vmatmul.bf16.gmra.mxu0 %v731
      %v1462 = vpop.f32.mrf.mxu0
      %v1463 = vadd.f32 0.0, %v1462
      %v1464 = vpop.f32.mrf.mxu0
      %v1465 = vadd.f32 0.0, %v1464
      %1466 = vmatmul.bf16.gmra.mxu0 %v734
      %v1467 = vpop.f32.mrf.mxu0
      %v1468 = vadd.f32 0.0, %v1467
      %v1469 = vpop.f32.mrf.mxu0
      %v1470 = vadd.f32 0.0, %v1469
      %1471 = vmatmul.bf16.gmra.mxu0 %v737
      %v1472 = vpop.f32.mrf.mxu0
      %v1473 = vadd.f32 0.0, %v1472
      %v1474 = vpop.f32.mrf.mxu0
      %v1475 = vadd.f32 0.0, %v1474
      %1476 = vmatmul.bf16.gmra.mxu0 %v740
      %v1477 = vpop.f32.mrf.mxu0
      %v1478 = vadd.f32 0.0, %v1477
      %v1479 = vpop.f32.mrf.mxu0
      %v1480 = vadd.f32 0.0, %v1479
      %1481 = vmatmul.bf16.gmra.mxu0 %v743
      %v1482 = vpop.f32.mrf.mxu0
      %v1483 = vadd.f32 0.0, %v1482
      %v1484 = vpop.f32.mrf.mxu0
      %v1485 = vadd.f32 0.0, %v1484
      %1486 = vmatmul.bf16.gmra.mxu0 %v746
      %v1487 = vpop.f32.mrf.mxu0
      %v1488 = vadd.f32 0.0, %v1487
      %v1489 = vpop.f32.mrf.mxu0
      %v1490 = vadd.f32 0.0, %v1489
      %1491 = vmatmul.bf16.gmra.mxu0 %v749
      %v1492 = vpop.f32.mrf.mxu0
      %v1493 = vadd.f32 0.0, %v1492
      %v1494 = vpop.f32.mrf.mxu0
      %v1495 = vadd.f32 0.0, %v1494
      %1496 = vmatmul.bf16.gmra.mxu0 %v752
      %v1497 = vpop.f32.mrf.mxu0
      %v1498 = vadd.f32 0.0, %v1497
      %v1499 = vpop.f32.mrf.mxu0
      %v1500 = vadd.f32 0.0, %v1499
      %1501 = vmatmul.bf16.gmra.mxu0 %v755
      %v1502 = vpop.f32.mrf.mxu0
      %v1503 = vadd.f32 0.0, %v1502
      %v1504 = vpop.f32.mrf.mxu0
      %v1505 = vadd.f32 0.0, %v1504
      %1506 = vmatmul.bf16.gmra.mxu0 %v1421
      %v1507 = vpop.f32.mrf.mxu0
      %v1508 = vadd.f32 0.0, %v1507
      %v1509 = vpop.f32.mrf.mxu0
      %v1510 = vadd.f32 0.0, %v1509
      %1511 = vdwg.mxu0
      %v1512 = vadd.f32 %v1376, %v1433
      %v1513 = vadd.f32 %v1377, %v1435
      %v1514 = vadd.f32 %v1378, %v1438
      %v1515 = vadd.f32 %v1379, %v1440
      %v1516 = vadd.f32 %v1380, %v1443
      %v1517 = vadd.f32 %v1381, %v1445
      %v1518 = vadd.f32 %v1382, %v1448
      %v1519 = vadd.f32 %v1383, %v1450
      %v1520 = vadd.f32 %v1384, %v1453
      %v1521 = vadd.f32 %v1385, %v1455
      %v1522 = vadd.f32 %v1386, %v1458
      %v1523 = vadd.f32 %v1387, %v1460
      %v1524 = vadd.f32 %v1388, %v1463
      %v1525 = vadd.f32 %v1389, %v1465
      %v1526 = vadd.f32 %v1390, %v1468
      %v1527 = vadd.f32 %v1391, %v1470
      %v1528 = vadd.f32 %v1392, %v1473
      %v1529 = vadd.f32 %v1393, %v1475
      %v1530 = vadd.f32 %v1394, %v1478
      %v1531 = vadd.f32 %v1395, %v1480
      %v1532 = vadd.f32 %v1396, %v1483
      %v1533 = vadd.f32 %v1397, %v1485
      %v1534 = vadd.f32 %v1398, %v1488
      %v1535 = vadd.f32 %v1399, %v1490
      %v1536 = vadd.f32 %v1400, %v1493
      %v1537 = vadd.f32 %v1401, %v1495
      %v1538 = vadd.f32 %v1402, %v1498
      %v1539 = vadd.f32 %v1403, %v1500
      %v1540 = vadd.f32 %v1404, %v1503
      %v1541 = vadd.f32 %v1405, %v1505
      %v1542 = vadd.f32 %v1406, %v1508
      %v1543 = vadd.f32 %v1407, %v1510
      %v1544 = vrot.slane %v507, 2
      %v1545 = vrot.slane %v508, 2
      %v1546 = vsel %vm983, %v1544, %v1545
      %v1547 = vrot.slane %v509, 2
      %v1548 = vsel %vm983, %v1545, %v1547
      %v1551 = vpack.c.bf16 %v1548, %v1546
      %v1552 = vpack.c.bf16 %v416, %v415
      %v1554 = vsel %vm708, %v1551, 0
      %1556 = vmatpush.bf16.msra.mxu0 0
      %1557 = vmatpush.bf16.msra.mxu0 0
      %1558 = vmatpush.bf16.msra.mxu0 0
      %1559 = vmatpush.bf16.msra.mxu0 0
      %1560 = vmatpush.bf16.msra.mxu0 0
      %1561 = vmatpush.bf16.msra.mxu0 0
      %1562 = vmatpush.bf16.msra.mxu0 0
      %1563 = vmatpush.bf16.msra.mxu0 %v1552
      %1564 = vmatmul.bf16.gmra.mxu0 %v1117
      %v1565 = vpop.f32.mrf.mxu0
      %v1566 = vadd.f32 0.0, %v1565
      %v1567 = vpop.f32.mrf.mxu0
      %v1568 = vadd.f32 0.0, %v1567
      %1569 = vmatmul.bf16.gmra.mxu0 %v1120
      %v1570 = vpop.f32.mrf.mxu0
      %v1571 = vadd.f32 0.0, %v1570
      %v1572 = vpop.f32.mrf.mxu0
      %v1573 = vadd.f32 0.0, %v1572
      %1574 = vmatmul.bf16.gmra.mxu0 %v1123
      %v1575 = vpop.f32.mrf.mxu0
      %v1576 = vadd.f32 0.0, %v1575
      %v1577 = vpop.f32.mrf.mxu0
      %v1578 = vadd.f32 0.0, %v1577
      %1579 = vmatmul.bf16.gmra.mxu0 %v1126
      %v1580 = vpop.f32.mrf.mxu0
      %v1581 = vadd.f32 0.0, %v1580
      %v1582 = vpop.f32.mrf.mxu0
      %v1583 = vadd.f32 0.0, %v1582
      %1584 = vmatmul.bf16.gmra.mxu0 %v1129
      %v1585 = vpop.f32.mrf.mxu0
      %v1586 = vadd.f32 0.0, %v1585
      %v1587 = vpop.f32.mrf.mxu0
      %v1588 = vadd.f32 0.0, %v1587
      %1589 = vmatmul.bf16.gmra.mxu0 %v1132
      %v1590 = vpop.f32.mrf.mxu0
      %v1591 = vadd.f32 0.0, %v1590
      %v1592 = vpop.f32.mrf.mxu0
      %v1593 = vadd.f32 0.0, %v1592
      %1594 = vmatmul.bf16.gmra.mxu0 %v1135
      %v1595 = vpop.f32.mrf.mxu0
      %v1596 = vadd.f32 0.0, %v1595
      %v1597 = vpop.f32.mrf.mxu0
      %v1598 = vadd.f32 0.0, %v1597
      %1599 = vmatmul.bf16.gmra.mxu0 %v1138
      %v1600 = vpop.f32.mrf.mxu0
      %v1601 = vadd.f32 0.0, %v1600
      %v1602 = vpop.f32.mrf.mxu0
      %v1603 = vadd.f32 0.0, %v1602
      %1604 = vmatmul.bf16.gmra.mxu0 %v1141
      %v1605 = vpop.f32.mrf.mxu0
      %v1606 = vadd.f32 0.0, %v1605
      %v1607 = vpop.f32.mrf.mxu0
      %v1608 = vadd.f32 0.0, %v1607
      %1609 = vmatmul.bf16.gmra.mxu0 %v1144
      %v1610 = vpop.f32.mrf.mxu0
      %v1611 = vadd.f32 0.0, %v1610
      %v1612 = vpop.f32.mrf.mxu0
      %v1613 = vadd.f32 0.0, %v1612
      %1614 = vmatmul.bf16.gmra.mxu0 %v1147
      %v1615 = vpop.f32.mrf.mxu0
      %v1616 = vadd.f32 0.0, %v1615
      %v1617 = vpop.f32.mrf.mxu0
      %v1618 = vadd.f32 0.0, %v1617
      %1619 = vmatmul.bf16.gmra.mxu0 %v1150
      %v1620 = vpop.f32.mrf.mxu0
      %v1621 = vadd.f32 0.0, %v1620
      %v1622 = vpop.f32.mrf.mxu0
      %v1623 = vadd.f32 0.0, %v1622
      %1624 = vmatmul.bf16.gmra.mxu0 %v1153
      %v1625 = vpop.f32.mrf.mxu0
      %v1626 = vadd.f32 0.0, %v1625
      %v1627 = vpop.f32.mrf.mxu0
      %v1628 = vadd.f32 0.0, %v1627
      %1629 = vmatmul.bf16.gmra.mxu0 %v1156
      %v1630 = vpop.f32.mrf.mxu0
      %v1631 = vadd.f32 0.0, %v1630
      %v1632 = vpop.f32.mrf.mxu0
      %v1633 = vadd.f32 0.0, %v1632
      %1634 = vmatmul.bf16.gmra.mxu0 %v1159
      %v1635 = vpop.f32.mrf.mxu0
      %v1636 = vadd.f32 0.0, %v1635
      %v1637 = vpop.f32.mrf.mxu0
      %v1638 = vadd.f32 0.0, %v1637
      %1639 = vmatmul.bf16.gmra.mxu0 %v1554
      %v1640 = vpop.f32.mrf.mxu0
      %v1641 = vadd.f32 0.0, %v1640
      %v1642 = vpop.f32.mrf.mxu0
      %v1643 = vadd.f32 0.0, %v1642
      %1644 = vdwg.mxu0
      %v1645 = vadd.f32 %v1512, %v1566
      %v1646 = vadd.f32 %v1513, %v1568
      %v1647 = vadd.f32 %v1514, %v1571
      %v1648 = vadd.f32 %v1515, %v1573
      %v1649 = vadd.f32 %v1516, %v1576
      %v1650 = vadd.f32 %v1517, %v1578
      %v1651 = vadd.f32 %v1518, %v1581
      %v1652 = vadd.f32 %v1519, %v1583
      %v1653 = vadd.f32 %v1520, %v1586
      %v1654 = vadd.f32 %v1521, %v1588
      %v1655 = vadd.f32 %v1522, %v1591
      %v1656 = vadd.f32 %v1523, %v1593
      %v1657 = vadd.f32 %v1524, %v1596
      %v1658 = vadd.f32 %v1525, %v1598
      %v1659 = vadd.f32 %v1526, %v1601
      %v1660 = vadd.f32 %v1527, %v1603
      %v1661 = vadd.f32 %v1528, %v1606
      %v1662 = vadd.f32 %v1529, %v1608
      %v1663 = vadd.f32 %v1530, %v1611
      %v1664 = vadd.f32 %v1531, %v1613
      %v1665 = vadd.f32 %v1532, %v1616
      %v1666 = vadd.f32 %v1533, %v1618
      %v1667 = vadd.f32 %v1534, %v1621
      %v1668 = vadd.f32 %v1535, %v1623
      %v1669 = vadd.f32 %v1536, %v1626
      %v1670 = vadd.f32 %v1537, %v1628
      %v1671 = vadd.f32 %v1538, %v1631
      %v1672 = vadd.f32 %v1539, %v1633
      %v1673 = vadd.f32 %v1540, %v1636
      %v1674 = vadd.f32 %v1541, %v1638
      %v1675 = vadd.f32 %v1542, %v1641
      %v1676 = vadd.f32 %v1543, %v1643
      %v1677 = vpack.c.bf16 %v511, %v510
      %v1678 = vpack.c.bf16 %v418, %v417
      %v1680 = vsel %vm708, %v1677, 0
      %1682 = vmatpush.bf16.msra.mxu0 0
      %1683 = vmatpush.bf16.msra.mxu0 0
      %1684 = vmatpush.bf16.msra.mxu0 0
      %1685 = vmatpush.bf16.msra.mxu0 0
      %1686 = vmatpush.bf16.msra.mxu0 0
      %1687 = vmatpush.bf16.msra.mxu0 0
      %1688 = vmatpush.bf16.msra.mxu0 0
      %1689 = vmatpush.bf16.msra.mxu0 %v1678
      %1690 = vmatmul.bf16.gmra.mxu0 %v853
      %v1691 = vpop.f32.mrf.mxu0
      %v1692 = vadd.f32 0.0, %v1691
      %v1693 = vpop.f32.mrf.mxu0
      %v1694 = vadd.f32 0.0, %v1693
      %1695 = vmatmul.bf16.gmra.mxu0 %v856
      %v1696 = vpop.f32.mrf.mxu0
      %v1697 = vadd.f32 0.0, %v1696
      %v1698 = vpop.f32.mrf.mxu0
      %v1699 = vadd.f32 0.0, %v1698
      %1700 = vmatmul.bf16.gmra.mxu0 %v859
      %v1701 = vpop.f32.mrf.mxu0
      %v1702 = vadd.f32 0.0, %v1701
      %v1703 = vpop.f32.mrf.mxu0
      %v1704 = vadd.f32 0.0, %v1703
      %1705 = vmatmul.bf16.gmra.mxu0 %v862
      %v1706 = vpop.f32.mrf.mxu0
      %v1707 = vadd.f32 0.0, %v1706
      %v1708 = vpop.f32.mrf.mxu0
      %v1709 = vadd.f32 0.0, %v1708
      %1710 = vmatmul.bf16.gmra.mxu0 %v865
      %v1711 = vpop.f32.mrf.mxu0
      %v1712 = vadd.f32 0.0, %v1711
      %v1713 = vpop.f32.mrf.mxu0
      %v1714 = vadd.f32 0.0, %v1713
      %1715 = vmatmul.bf16.gmra.mxu0 %v868
      %v1716 = vpop.f32.mrf.mxu0
      %v1717 = vadd.f32 0.0, %v1716
      %v1718 = vpop.f32.mrf.mxu0
      %v1719 = vadd.f32 0.0, %v1718
      %1720 = vmatmul.bf16.gmra.mxu0 %v871
      %v1721 = vpop.f32.mrf.mxu0
      %v1722 = vadd.f32 0.0, %v1721
      %v1723 = vpop.f32.mrf.mxu0
      %v1724 = vadd.f32 0.0, %v1723
      %1725 = vmatmul.bf16.gmra.mxu0 %v874
      %v1726 = vpop.f32.mrf.mxu0
      %v1727 = vadd.f32 0.0, %v1726
      %v1728 = vpop.f32.mrf.mxu0
      %v1729 = vadd.f32 0.0, %v1728
      %1730 = vmatmul.bf16.gmra.mxu0 %v877
      %v1731 = vpop.f32.mrf.mxu0
      %v1732 = vadd.f32 0.0, %v1731
      %v1733 = vpop.f32.mrf.mxu0
      %v1734 = vadd.f32 0.0, %v1733
      %1735 = vmatmul.bf16.gmra.mxu0 %v880
      %v1736 = vpop.f32.mrf.mxu0
      %v1737 = vadd.f32 0.0, %v1736
      %v1738 = vpop.f32.mrf.mxu0
      %v1739 = vadd.f32 0.0, %v1738
      %1740 = vmatmul.bf16.gmra.mxu0 %v883
      %v1741 = vpop.f32.mrf.mxu0
      %v1742 = vadd.f32 0.0, %v1741
      %v1743 = vpop.f32.mrf.mxu0
      %v1744 = vadd.f32 0.0, %v1743
      %1745 = vmatmul.bf16.gmra.mxu0 %v886
      %v1746 = vpop.f32.mrf.mxu0
      %v1747 = vadd.f32 0.0, %v1746
      %v1748 = vpop.f32.mrf.mxu0
      %v1749 = vadd.f32 0.0, %v1748
      %1750 = vmatmul.bf16.gmra.mxu0 %v889
      %v1751 = vpop.f32.mrf.mxu0
      %v1752 = vadd.f32 0.0, %v1751
      %v1753 = vpop.f32.mrf.mxu0
      %v1754 = vadd.f32 0.0, %v1753
      %1755 = vmatmul.bf16.gmra.mxu0 %v892
      %v1756 = vpop.f32.mrf.mxu0
      %v1757 = vadd.f32 0.0, %v1756
      %v1758 = vpop.f32.mrf.mxu0
      %v1759 = vadd.f32 0.0, %v1758
      %1760 = vmatmul.bf16.gmra.mxu0 %v1285
      %v1761 = vpop.f32.mrf.mxu0
      %v1762 = vadd.f32 0.0, %v1761
      %v1763 = vpop.f32.mrf.mxu0
      %v1764 = vadd.f32 0.0, %v1763
      %1765 = vmatmul.bf16.gmra.mxu0 %v1680
      %v1766 = vpop.f32.mrf.mxu0
      %v1767 = vadd.f32 0.0, %v1766
      %v1768 = vpop.f32.mrf.mxu0
      %v1769 = vadd.f32 0.0, %v1768
      %1770 = vdwg.mxu0
      %v1771 = vadd.f32 %v1645, %v1692
      %v1772 = vadd.f32 %v1646, %v1694
      %v1773 = vadd.f32 %v1647, %v1697
      %v1774 = vadd.f32 %v1648, %v1699
      %v1775 = vadd.f32 %v1649, %v1702
      %v1776 = vadd.f32 %v1650, %v1704
      %v1777 = vadd.f32 %v1651, %v1707
      %v1778 = vadd.f32 %v1652, %v1709
      %v1779 = vadd.f32 %v1653, %v1712
      %v1780 = vadd.f32 %v1654, %v1714
      %v1781 = vadd.f32 %v1655, %v1717
      %v1782 = vadd.f32 %v1656, %v1719
      %v1783 = vadd.f32 %v1657, %v1722
      %v1784 = vadd.f32 %v1658, %v1724
      %v1785 = vadd.f32 %v1659, %v1727
      %v1786 = vadd.f32 %v1660, %v1729
      %v1787 = vadd.f32 %v1661, %v1732
      %v1788 = vadd.f32 %v1662, %v1734
      %v1789 = vadd.f32 %v1663, %v1737
      %v1790 = vadd.f32 %v1664, %v1739
      %v1791 = vadd.f32 %v1665, %v1742
      %v1792 = vadd.f32 %v1666, %v1744
      %v1793 = vadd.f32 %v1667, %v1747
      %v1794 = vadd.f32 %v1668, %v1749
      %v1795 = vadd.f32 %v1669, %v1752
      %v1796 = vadd.f32 %v1670, %v1754
      %v1797 = vadd.f32 %v1671, %v1757
      %v1798 = vadd.f32 %v1672, %v1759
      %v1799 = vadd.f32 %v1673, %v1762
      %v1800 = vadd.f32 %v1674, %v1764
      %v1801 = vadd.f32 %v1675, %v1767
      %v1802 = vadd.f32 %v1676, %v1769
      %v1806 = vrot.slane %v510, 1
      %v1807 = vrot.slane %v511, 1
      %v1808 = vsel %vm578, %v1806, %v1807
      %v1809 = vrot.slane %v512, 1
      %v1810 = vsel %vm578, %v1807, %v1809
      %v1813 = vpack.c.bf16 %v1810, %v1808
      %v1814 = vpack.c.bf16 %v420, %v419
      %v1816 = vsel %vm708, %v1813, 0
      %1818 = vmatpush.bf16.msra.mxu0 0
      %1819 = vmatpush.bf16.msra.mxu0 0
      %1820 = vmatpush.bf16.msra.mxu0 0
      %1821 = vmatpush.bf16.msra.mxu0 0
      %1822 = vmatpush.bf16.msra.mxu0 0
      %1823 = vmatpush.bf16.msra.mxu0 0
      %1824 = vmatpush.bf16.msra.mxu0 0
      %1825 = vmatpush.bf16.msra.mxu0 %v1814
      %1826 = vmatmul.bf16.gmra.mxu0 %v716
      %v1827 = vpop.f32.mrf.mxu0
      %v1828 = vadd.f32 0.0, %v1827
      %v1829 = vpop.f32.mrf.mxu0
      %v1830 = vadd.f32 0.0, %v1829
      %1831 = vmatmul.bf16.gmra.mxu0 %v719
      %v1832 = vpop.f32.mrf.mxu0
      %v1833 = vadd.f32 0.0, %v1832
      %v1834 = vpop.f32.mrf.mxu0
      %v1835 = vadd.f32 0.0, %v1834
      %1836 = vmatmul.bf16.gmra.mxu0 %v722
      %v1837 = vpop.f32.mrf.mxu0
      %v1838 = vadd.f32 0.0, %v1837
      %v1839 = vpop.f32.mrf.mxu0
      %v1840 = vadd.f32 0.0, %v1839
      %1841 = vmatmul.bf16.gmra.mxu0 %v725
      %v1842 = vpop.f32.mrf.mxu0
      %v1843 = vadd.f32 0.0, %v1842
      %v1844 = vpop.f32.mrf.mxu0
      %v1845 = vadd.f32 0.0, %v1844
      %1846 = vmatmul.bf16.gmra.mxu0 %v728
      %v1847 = vpop.f32.mrf.mxu0
      %v1848 = vadd.f32 0.0, %v1847
      %v1849 = vpop.f32.mrf.mxu0
      %v1850 = vadd.f32 0.0, %v1849
      %1851 = vmatmul.bf16.gmra.mxu0 %v731
      %v1852 = vpop.f32.mrf.mxu0
      %v1853 = vadd.f32 0.0, %v1852
      %v1854 = vpop.f32.mrf.mxu0
      %v1855 = vadd.f32 0.0, %v1854
      %1856 = vmatmul.bf16.gmra.mxu0 %v734
      %v1857 = vpop.f32.mrf.mxu0
      %v1858 = vadd.f32 0.0, %v1857
      %v1859 = vpop.f32.mrf.mxu0
      %v1860 = vadd.f32 0.0, %v1859
      %1861 = vmatmul.bf16.gmra.mxu0 %v737
      %v1862 = vpop.f32.mrf.mxu0
      %v1863 = vadd.f32 0.0, %v1862
      %v1864 = vpop.f32.mrf.mxu0
      %v1865 = vadd.f32 0.0, %v1864
      %1866 = vmatmul.bf16.gmra.mxu0 %v740
      %v1867 = vpop.f32.mrf.mxu0
      %v1868 = vadd.f32 0.0, %v1867
      %v1869 = vpop.f32.mrf.mxu0
      %v1870 = vadd.f32 0.0, %v1869
      %1871 = vmatmul.bf16.gmra.mxu0 %v743
      %v1872 = vpop.f32.mrf.mxu0
      %v1873 = vadd.f32 0.0, %v1872
      %v1874 = vpop.f32.mrf.mxu0
      %v1875 = vadd.f32 0.0, %v1874
      %1876 = vmatmul.bf16.gmra.mxu0 %v746
      %v1877 = vpop.f32.mrf.mxu0
      %v1878 = vadd.f32 0.0, %v1877
      %v1879 = vpop.f32.mrf.mxu0
      %v1880 = vadd.f32 0.0, %v1879
      %1881 = vmatmul.bf16.gmra.mxu0 %v749
      %v1882 = vpop.f32.mrf.mxu0
      %v1883 = vadd.f32 0.0, %v1882
      %v1884 = vpop.f32.mrf.mxu0
      %v1885 = vadd.f32 0.0, %v1884
      %1886 = vmatmul.bf16.gmra.mxu0 %v752
      %v1887 = vpop.f32.mrf.mxu0
      %v1888 = vadd.f32 0.0, %v1887
      %v1889 = vpop.f32.mrf.mxu0
      %v1890 = vadd.f32 0.0, %v1889
      %1891 = vmatmul.bf16.gmra.mxu0 %v755
      %v1892 = vpop.f32.mrf.mxu0
      %v1893 = vadd.f32 0.0, %v1892
      %v1894 = vpop.f32.mrf.mxu0
      %v1895 = vadd.f32 0.0, %v1894
      %1896 = vmatmul.bf16.gmra.mxu0 %v1421
      %v1897 = vpop.f32.mrf.mxu0
      %v1898 = vadd.f32 0.0, %v1897
      %v1899 = vpop.f32.mrf.mxu0
      %v1900 = vadd.f32 0.0, %v1899
      %1901 = vmatmul.bf16.gmra.mxu0 %v1816
      %v1902 = vpop.f32.mrf.mxu0
      %v1903 = vadd.f32 0.0, %v1902
      %v1904 = vpop.f32.mrf.mxu0
      %v1905 = vadd.f32 0.0, %v1904
      %1906 = vdwg.mxu0
      %v1907 = vadd.f32 %v1771, %v1828
      %v1908 = vadd.f32 %v1772, %v1830
      %v1909 = vadd.f32 %v1773, %v1833
      %v1910 = vadd.f32 %v1774, %v1835
      %v1911 = vadd.f32 %v1775, %v1838
      %v1912 = vadd.f32 %v1776, %v1840
      %v1913 = vadd.f32 %v1777, %v1843
      %v1914 = vadd.f32 %v1778, %v1845
      %v1915 = vadd.f32 %v1779, %v1848
      %v1916 = vadd.f32 %v1780, %v1850
      %v1917 = vadd.f32 %v1781, %v1853
      %v1918 = vadd.f32 %v1782, %v1855
      %v1919 = vadd.f32 %v1783, %v1858
      %v1920 = vadd.f32 %v1784, %v1860
      %v1921 = vadd.f32 %v1785, %v1863
      %v1922 = vadd.f32 %v1786, %v1865
      %v1923 = vadd.f32 %v1787, %v1868
      %v1924 = vadd.f32 %v1788, %v1870
      %v1925 = vadd.f32 %v1789, %v1873
      %v1926 = vadd.f32 %v1790, %v1875
      %v1927 = vadd.f32 %v1791, %v1878
      %v1928 = vadd.f32 %v1792, %v1880
      %v1929 = vadd.f32 %v1793, %v1883
      %v1930 = vadd.f32 %v1794, %v1885
      %v1931 = vadd.f32 %v1795, %v1888
      %v1932 = vadd.f32 %v1796, %v1890
      %v1933 = vadd.f32 %v1797, %v1893
      %v1934 = vadd.f32 %v1798, %v1895
      %v1935 = vadd.f32 %v1799, %v1898
      %v1936 = vadd.f32 %v1800, %v1900
      %v1937 = vadd.f32 %v1801, %v1903
      %v1938 = vadd.f32 %v1802, %v1905
      %v1939 = vrot.slane %v510, 2
      %v1940 = vrot.slane %v511, 2
      %v1941 = vsel %vm983, %v1939, %v1940
      %v1942 = vrot.slane %v512, 2
      %v1943 = vsel %vm983, %v1940, %v1942
      %v1946 = vpack.c.bf16 %v1943, %v1941
      %v1947 = vpack.c.bf16 %v422, %v421
      %v1949 = vsel %vm708, %v1946, 0
      %1951 = vmatpush.bf16.msra.mxu0 0
      %1952 = vmatpush.bf16.msra.mxu0 0
      %1953 = vmatpush.bf16.msra.mxu0 0
      %1954 = vmatpush.bf16.msra.mxu0 0
      %1955 = vmatpush.bf16.msra.mxu0 0
      %1956 = vmatpush.bf16.msra.mxu0 0
      %1957 = vmatpush.bf16.msra.mxu0 0
      %1958 = vmatpush.bf16.msra.mxu0 %v1947
      %1959 = vmatmul.bf16.gmra.mxu0 %v1120
      %v1960 = vpop.f32.mrf.mxu0
      %v1961 = vadd.f32 0.0, %v1960
      %v1962 = vpop.f32.mrf.mxu0
      %v1963 = vadd.f32 0.0, %v1962
      %1964 = vmatmul.bf16.gmra.mxu0 %v1123
      %v1965 = vpop.f32.mrf.mxu0
      %v1966 = vadd.f32 0.0, %v1965
      %v1967 = vpop.f32.mrf.mxu0
      %v1968 = vadd.f32 0.0, %v1967
      %1969 = vmatmul.bf16.gmra.mxu0 %v1126
      %v1970 = vpop.f32.mrf.mxu0
      %v1971 = vadd.f32 0.0, %v1970
      %v1972 = vpop.f32.mrf.mxu0
      %v1973 = vadd.f32 0.0, %v1972
      %1974 = vmatmul.bf16.gmra.mxu0 %v1129
      %v1975 = vpop.f32.mrf.mxu0
      %v1976 = vadd.f32 0.0, %v1975
      %v1977 = vpop.f32.mrf.mxu0
      %v1978 = vadd.f32 0.0, %v1977
      %1979 = vmatmul.bf16.gmra.mxu0 %v1132
      %v1980 = vpop.f32.mrf.mxu0
      %v1981 = vadd.f32 0.0, %v1980
      %v1982 = vpop.f32.mrf.mxu0
      %v1983 = vadd.f32 0.0, %v1982
      %1984 = vmatmul.bf16.gmra.mxu0 %v1135
      %v1985 = vpop.f32.mrf.mxu0
      %v1986 = vadd.f32 0.0, %v1985
      %v1987 = vpop.f32.mrf.mxu0
      %v1988 = vadd.f32 0.0, %v1987
      %1989 = vmatmul.bf16.gmra.mxu0 %v1138
      %v1990 = vpop.f32.mrf.mxu0
      %v1991 = vadd.f32 0.0, %v1990
      %v1992 = vpop.f32.mrf.mxu0
      %v1993 = vadd.f32 0.0, %v1992
      %1994 = vmatmul.bf16.gmra.mxu0 %v1141
      %v1995 = vpop.f32.mrf.mxu0
      %v1996 = vadd.f32 0.0, %v1995
      %v1997 = vpop.f32.mrf.mxu0
      %v1998 = vadd.f32 0.0, %v1997
      %1999 = vmatmul.bf16.gmra.mxu0 %v1144
      %v2000 = vpop.f32.mrf.mxu0
      %v2001 = vadd.f32 0.0, %v2000
      %v2002 = vpop.f32.mrf.mxu0
      %v2003 = vadd.f32 0.0, %v2002
      %2004 = vmatmul.bf16.gmra.mxu0 %v1147
      %v2005 = vpop.f32.mrf.mxu0
      %v2006 = vadd.f32 0.0, %v2005
      %v2007 = vpop.f32.mrf.mxu0
      %v2008 = vadd.f32 0.0, %v2007
      %2009 = vmatmul.bf16.gmra.mxu0 %v1150
      %v2010 = vpop.f32.mrf.mxu0
      %v2011 = vadd.f32 0.0, %v2010
      %v2012 = vpop.f32.mrf.mxu0
      %v2013 = vadd.f32 0.0, %v2012
      %2014 = vmatmul.bf16.gmra.mxu0 %v1153
      %v2015 = vpop.f32.mrf.mxu0
      %v2016 = vadd.f32 0.0, %v2015
      %v2017 = vpop.f32.mrf.mxu0
      %v2018 = vadd.f32 0.0, %v2017
      %2019 = vmatmul.bf16.gmra.mxu0 %v1156
      %v2020 = vpop.f32.mrf.mxu0
      %v2021 = vadd.f32 0.0, %v2020
      %v2022 = vpop.f32.mrf.mxu0
      %v2023 = vadd.f32 0.0, %v2022
      %2024 = vmatmul.bf16.gmra.mxu0 %v1159
      %v2025 = vpop.f32.mrf.mxu0
      %v2026 = vadd.f32 0.0, %v2025
      %v2027 = vpop.f32.mrf.mxu0
      %v2028 = vadd.f32 0.0, %v2027
      %2029 = vmatmul.bf16.gmra.mxu0 %v1554
      %v2030 = vpop.f32.mrf.mxu0
      %v2031 = vadd.f32 0.0, %v2030
      %v2032 = vpop.f32.mrf.mxu0
      %v2033 = vadd.f32 0.0, %v2032
      %2034 = vmatmul.bf16.gmra.mxu0 %v1949
      %v2035 = vpop.f32.mrf.mxu0
      %v2036 = vadd.f32 0.0, %v2035
      %v2037 = vpop.f32.mrf.mxu0
      %v2038 = vadd.f32 0.0, %v2037
      %2039 = vdwg.mxu0
      %v2040 = vadd.f32 %v1907, %v1961
      %v2041 = vadd.f32 %v1908, %v1963
      %v2042 = vadd.f32 %v1909, %v1966
      %v2043 = vadd.f32 %v1910, %v1968
      %v2044 = vadd.f32 %v1911, %v1971
      %v2045 = vadd.f32 %v1912, %v1973
      %v2046 = vadd.f32 %v1913, %v1976
      %v2047 = vadd.f32 %v1914, %v1978
      %v2048 = vadd.f32 %v1915, %v1981
      %v2049 = vadd.f32 %v1916, %v1983
      %v2050 = vadd.f32 %v1917, %v1986
      %v2051 = vadd.f32 %v1918, %v1988
      %v2052 = vadd.f32 %v1919, %v1991
      %v2053 = vadd.f32 %v1920, %v1993
      %v2054 = vadd.f32 %v1921, %v1996
      %v2055 = vadd.f32 %v1922, %v1998
      %v2056 = vadd.f32 %v1923, %v2001
      %v2057 = vadd.f32 %v1924, %v2003
      %v2058 = vadd.f32 %v1925, %v2006
      %v2059 = vadd.f32 %v1926, %v2008
      %v2060 = vadd.f32 %v1927, %v2011
      %v2061 = vadd.f32 %v1928, %v2013
      %v2062 = vadd.f32 %v1929, %v2016
      %v2063 = vadd.f32 %v1930, %v2018
      %v2064 = vadd.f32 %v1931, %v2021
      %v2065 = vadd.f32 %v1932, %v2023
      %v2066 = vadd.f32 %v1933, %v2026
      %v2067 = vadd.f32 %v1934, %v2028
      %v2068 = vadd.f32 %v1935, %v2031
      %v2069 = vadd.f32 %v1936, %v2033
      %v2070 = vadd.f32 %v1937, %v2036
      %v2071 = vadd.f32 %v1938, %v2038
      %v2072 = vld [vmem:[%s373] sm:$0xff]
      %v2073 = vld [vmem:[%s373 + $0x8] sm:$0xff]
      %v2074 = vld [vmem:[%s373 + $0x10] sm:$0x3]
      %v2075 = vld [vmem:[%s373 + $0x18] sm:$0xff]
      %v2076 = vld [vmem:[%s373 + $0x20] sm:$0xff]
      %v2077 = vld [vmem:[%s373 + $0x28] sm:$0x3]
      %v2078 = vld [vmem:[%s373 + $0x30] sm:$0xff]
      %v2079 = vld [vmem:[%s373 + $0x38] sm:$0xff]
      %v2080 = vld [vmem:[%s373 + $0x40] sm:$0x3]
      %v2081 = vld [vmem:[%s373 + $0x48] sm:$0xff]
      %v2082 = vld [vmem:[%s373 + $0x50] sm:$0xff]
      %v2083 = vld [vmem:[%s373 + $0x58] sm:$0x3]
      %v2084 = vld [vmem:[%s373 + $0x60] sm:$0xff]
      %v2085 = vld [vmem:[%s373 + $0x68] sm:$0xff]
      %v2086 = vld [vmem:[%s373 + $0x70] sm:$0x3]
      %v2087 = vld [vmem:[%s373 + $0x78] sm:$0xff]
      %v2088 = vld [vmem:[%s373 + $0x80] sm:$0xff]
      %v2089 = vld [vmem:[%s373 + $0x88] sm:$0x3]
      %v2090 = vld [vmem:[%s373 + $0x90] sm:$0xff]
      %v2091 = vld [vmem:[%s373 + $0x98] sm:$0xff]
      %v2092 = vld [vmem:[%s373 + $0xa0] sm:$0x3]
      %v2093 = vld [vmem:[%s373 + $0xa8] sm:$0xff]
      %v2094 = vld [vmem:[%s373 + $0xb0] sm:$0xff]
      %v2095 = vld [vmem:[%s373 + $0xb8] sm:$0x3]
      %v2096 = vld [vmem:[%s373 + $0xc0] sm:$0xff]
      %v2097 = vld [vmem:[%s373 + $0xc8] sm:$0xff]
      %v2098 = vld [vmem:[%s373 + $0xd0] sm:$0x3]
      %v2099 = vld [vmem:[%s373 + $0xd8] sm:$0xff]
      %v2100 = vld [vmem:[%s373 + $0xe0] sm:$0xff]
      %v2101 = vld [vmem:[%s373 + $0xe8] sm:$0x3]
      %v2102 = vld [vmem:[%s373 + $0xf0] sm:$0xff]
      %v2103 = vld [vmem:[%s373 + $0xf8] sm:$0xff]
      %v2104 = vld [vmem:[%s373 + $0x100] sm:$0x3]
      %v2105 = vld [vmem:[%s373 + $0x108] sm:$0xff]
      %v2106 = vld [vmem:[%s373 + $0x110] sm:$0xff]
      %v2107 = vld [vmem:[%s373 + $0x118] sm:$0x3]
      %v2108 = vld [vmem:[%s373 + $0x120] sm:$0xff]
      %v2109 = vld [vmem:[%s373 + $0x128] sm:$0xff]
      %v2110 = vld [vmem:[%s373 + $0x130] sm:$0x3]
      %v2111 = vld [vmem:[%s373 + $0x138] sm:$0xff]
      %v2112 = vld [vmem:[%s373 + $0x140] sm:$0xff]
      %v2113 = vld [vmem:[%s373 + $0x148] sm:$0x3]
      %v2114 = vld [vmem:[%s373 + $0x150] sm:$0xff]
      %v2115 = vld [vmem:[%s373 + $0x158] sm:$0xff]
      %v2116 = vld [vmem:[%s373 + $0x160] sm:$0x3]
      %v2117 = vld [vmem:[%s373 + $0x168] sm:$0xff]
      %v2118 = vld [vmem:[%s373 + $0x170] sm:$0xff]
      %v2119 = vld [vmem:[%s373 + $0x178] sm:$0x3]
      %v2120 = vld [vmem:[%s373 + $0x180] sm:$0xff]
      %v2121 = vld [vmem:[%s373 + $0x188] sm:$0xff]
      %v2122 = vld [vmem:[%s373 + $0x190] sm:$0x3]
      %v2123 = vld [vmem:[%s373 + $0x198] sm:$0xff]
      %v2124 = vld [vmem:[%s373 + $0x1a0] sm:$0xff]
      %v2125 = vld [vmem:[%s373 + $0x1a8] sm:$0x3]
      %v2126 = vpack.c.bf16 %v2073, %v2072
      %v2127 = vpack.c.bf16 %v2076, %v2075
      %v2128 = vpack.c.bf16 %v2079, %v2078
      %v2129 = vpack.c.bf16 %v2082, %v2081
      %v2130 = vpack.c.bf16 %v2085, %v2084
      %v2131 = vpack.c.bf16 %v2088, %v2087
      %v2132 = vpack.c.bf16 %v2091, %v2090
      %v2133 = vpack.c.bf16 %v2094, %v2093
      %v2134 = vpack.c.bf16 %v2097, %v2096
      %v2135 = vpack.c.bf16 %v2100, %v2099
      %v2136 = vpack.c.bf16 %v2103, %v2102
      %v2137 = vpack.c.bf16 %v2106, %v2105
      %v2138 = vpack.c.bf16 %v2109, %v2108
      %v2139 = vpack.c.bf16 %v2112, %v2111
      %v2140 = vpack.c.bf16 %v2115, %v2114
      %v2141 = vpack.c.bf16 %v2118, %v2117
      %v2142 = vpack.c.bf16 %v424, %v423
      %v2144 = vsel %vm708, %v2126, 0
      %v2147 = vsel %vm708, %v2127, 0
      %v2150 = vsel %vm708, %v2128, 0
      %v2153 = vsel %vm708, %v2129, 0
      %v2156 = vsel %vm708, %v2130, 0
      %v2159 = vsel %vm708, %v2131, 0
      %v2162 = vsel %vm708, %v2132, 0
      %v2165 = vsel %vm708, %v2133, 0
      %v2168 = vsel %vm708, %v2134, 0
      %v2171 = vsel %vm708, %v2135, 0
      %v2174 = vsel %vm708, %v2136, 0
      %v2177 = vsel %vm708, %v2137, 0
      %v2180 = vsel %vm708, %v2138, 0
      %v2183 = vsel %vm708, %v2139, 0
      %v2186 = vsel %vm708, %v2140, 0
      %v2189 = vsel %vm708, %v2141, 0
      %2191 = vmatpush.bf16.msra.mxu0 0
      %2192 = vmatpush.bf16.msra.mxu0 0
      %2193 = vmatpush.bf16.msra.mxu0 0
      %2194 = vmatpush.bf16.msra.mxu0 0
      %2195 = vmatpush.bf16.msra.mxu0 0
      %2196 = vmatpush.bf16.msra.mxu0 0
      %2197 = vmatpush.bf16.msra.mxu0 0
      %2198 = vmatpush.bf16.msra.mxu0 %v2142
      %2199 = vmatmul.bf16.gmra.mxu0 %v2144
      %v2200 = vpop.f32.mrf.mxu0
      %v2201 = vadd.f32 0.0, %v2200
      %v2202 = vpop.f32.mrf.mxu0
      %v2203 = vadd.f32 0.0, %v2202
      %2204 = vmatmul.bf16.gmra.mxu0 %v2147
      %v2205 = vpop.f32.mrf.mxu0
      %v2206 = vadd.f32 0.0, %v2205
      %v2207 = vpop.f32.mrf.mxu0
      %v2208 = vadd.f32 0.0, %v2207
      %2209 = vmatmul.bf16.gmra.mxu0 %v2150
      %v2210 = vpop.f32.mrf.mxu0
      %v2211 = vadd.f32 0.0, %v2210
      %v2212 = vpop.f32.mrf.mxu0
      %v2213 = vadd.f32 0.0, %v2212
      %2214 = vmatmul.bf16.gmra.mxu0 %v2153
      %v2215 = vpop.f32.mrf.mxu0
      %v2216 = vadd.f32 0.0, %v2215
      %v2217 = vpop.f32.mrf.mxu0
      %v2218 = vadd.f32 0.0, %v2217
      %2219 = vmatmul.bf16.gmra.mxu0 %v2156
      %v2220 = vpop.f32.mrf.mxu0
      %v2221 = vadd.f32 0.0, %v2220
      %v2222 = vpop.f32.mrf.mxu0
      %v2223 = vadd.f32 0.0, %v2222
      %2224 = vmatmul.bf16.gmra.mxu0 %v2159
      %v2225 = vpop.f32.mrf.mxu0
      %v2226 = vadd.f32 0.0, %v2225
      %v2227 = vpop.f32.mrf.mxu0
      %v2228 = vadd.f32 0.0, %v2227
      %2229 = vmatmul.bf16.gmra.mxu0 %v2162
      %v2230 = vpop.f32.mrf.mxu0
      %v2231 = vadd.f32 0.0, %v2230
      %v2232 = vpop.f32.mrf.mxu0
      %v2233 = vadd.f32 0.0, %v2232
      %2234 = vmatmul.bf16.gmra.mxu0 %v2165
      %v2235 = vpop.f32.mrf.mxu0
      %v2236 = vadd.f32 0.0, %v2235
      %v2237 = vpop.f32.mrf.mxu0
      %v2238 = vadd.f32 0.0, %v2237
      %2239 = vmatmul.bf16.gmra.mxu0 %v2168
      %v2240 = vpop.f32.mrf.mxu0
      %v2241 = vadd.f32 0.0, %v2240
      %v2242 = vpop.f32.mrf.mxu0
      %v2243 = vadd.f32 0.0, %v2242
      %2244 = vmatmul.bf16.gmra.mxu0 %v2171
      %v2245 = vpop.f32.mrf.mxu0
      %v2246 = vadd.f32 0.0, %v2245
      %v2247 = vpop.f32.mrf.mxu0
      %v2248 = vadd.f32 0.0, %v2247
      %2249 = vmatmul.bf16.gmra.mxu0 %v2174
      %v2250 = vpop.f32.mrf.mxu0
      %v2251 = vadd.f32 0.0, %v2250
      %v2252 = vpop.f32.mrf.mxu0
      %v2253 = vadd.f32 0.0, %v2252
      %2254 = vmatmul.bf16.gmra.mxu0 %v2177
      %v2255 = vpop.f32.mrf.mxu0
      %v2256 = vadd.f32 0.0, %v2255
      %v2257 = vpop.f32.mrf.mxu0
      %v2258 = vadd.f32 0.0, %v2257
      %2259 = vmatmul.bf16.gmra.mxu0 %v2180
      %v2260 = vpop.f32.mrf.mxu0
      %v2261 = vadd.f32 0.0, %v2260
      %v2262 = vpop.f32.mrf.mxu0
      %v2263 = vadd.f32 0.0, %v2262
      %2264 = vmatmul.bf16.gmra.mxu0 %v2183
      %v2265 = vpop.f32.mrf.mxu0
      %v2266 = vadd.f32 0.0, %v2265
      %v2267 = vpop.f32.mrf.mxu0
      %v2268 = vadd.f32 0.0, %v2267
      %2269 = vmatmul.bf16.gmra.mxu0 %v2186
      %v2270 = vpop.f32.mrf.mxu0
      %v2271 = vadd.f32 0.0, %v2270
      %v2272 = vpop.f32.mrf.mxu0
      %v2273 = vadd.f32 0.0, %v2272
      %2274 = vmatmul.bf16.gmra.mxu0 %v2189
      %v2275 = vpop.f32.mrf.mxu0
      %v2276 = vadd.f32 0.0, %v2275
      %v2277 = vpop.f32.mrf.mxu0
      %v2278 = vadd.f32 0.0, %v2277
      %2279 = vdwg.mxu0
      %v2280 = vadd.f32 %v2040, %v2201
      %v2281 = vadd.f32 %v2041, %v2203
      %v2282 = vadd.f32 %v2042, %v2206
      %v2283 = vadd.f32 %v2043, %v2208
      %v2284 = vadd.f32 %v2044, %v2211
      %v2285 = vadd.f32 %v2045, %v2213
      %v2286 = vadd.f32 %v2046, %v2216
      %v2287 = vadd.f32 %v2047, %v2218
      %v2288 = vadd.f32 %v2048, %v2221
      %v2289 = vadd.f32 %v2049, %v2223
      %v2290 = vadd.f32 %v2050, %v2226
      %v2291 = vadd.f32 %v2051, %v2228
      %v2292 = vadd.f32 %v2052, %v2231
      %v2293 = vadd.f32 %v2053, %v2233
      %v2294 = vadd.f32 %v2054, %v2236
      %v2295 = vadd.f32 %v2055, %v2238
      %v2296 = vadd.f32 %v2056, %v2241
      %v2297 = vadd.f32 %v2057, %v2243
      %v2298 = vadd.f32 %v2058, %v2246
      %v2299 = vadd.f32 %v2059, %v2248
      %v2300 = vadd.f32 %v2060, %v2251
      %v2301 = vadd.f32 %v2061, %v2253
      %v2302 = vadd.f32 %v2062, %v2256
      %v2303 = vadd.f32 %v2063, %v2258
      %v2304 = vadd.f32 %v2064, %v2261
      %v2305 = vadd.f32 %v2065, %v2263
      %v2306 = vadd.f32 %v2066, %v2266
      %v2307 = vadd.f32 %v2067, %v2268
      %v2308 = vadd.f32 %v2068, %v2271
      %v2309 = vadd.f32 %v2069, %v2273
      %v2310 = vadd.f32 %v2070, %v2276
      %v2311 = vadd.f32 %v2071, %v2278
      %v2360 = vrot.slane %v2072, 1
      %v2361 = vrot.slane %v2073, 1
      %v2362 = vsel %vm578, %v2360, %v2361
      %v2363 = vrot.slane %v2074, 1
      %v2364 = vsel %vm578, %v2361, %v2363
      %v2365 = vrot.slane %v2075, 1
      %v2366 = vrot.slane %v2076, 1
      %v2367 = vsel %vm578, %v2365, %v2366
      %v2368 = vrot.slane %v2077, 1
      %v2369 = vsel %vm578, %v2366, %v2368
      %v2370 = vrot.slane %v2078, 1
      %v2371 = vrot.slane %v2079, 1
      %v2372 = vsel %vm578, %v2370, %v2371
      %v2373 = vrot.slane %v2080, 1
      %v2374 = vsel %vm578, %v2371, %v2373
      %v2375 = vrot.slane %v2081, 1
      %v2376 = vrot.slane %v2082, 1
      %v2377 = vsel %vm578, %v2375, %v2376
      %v2378 = vrot.slane %v2083, 1
      %v2379 = vsel %vm578, %v2376, %v2378
      %v2380 = vrot.slane %v2084, 1
      %v2381 = vrot.slane %v2085, 1
      %v2382 = vsel %vm578, %v2380, %v2381
      %v2383 = vrot.slane %v2086, 1
      %v2384 = vsel %vm578, %v2381, %v2383
      %v2385 = vrot.slane %v2087, 1
      %v2386 = vrot.slane %v2088, 1
      %v2387 = vsel %vm578, %v2385, %v2386
      %v2388 = vrot.slane %v2089, 1
      %v2389 = vsel %vm578, %v2386, %v2388
      %v2390 = vrot.slane %v2090, 1
      %v2391 = vrot.slane %v2091, 1
      %v2392 = vsel %vm578, %v2390, %v2391
      %v2393 = vrot.slane %v2092, 1
      %v2394 = vsel %vm578, %v2391, %v2393
      %v2395 = vrot.slane %v2093, 1
      %v2396 = vrot.slane %v2094, 1
      %v2397 = vsel %vm578, %v2395, %v2396
      %v2398 = vrot.slane %v2095, 1
      %v2399 = vsel %vm578, %v2396, %v2398
      %v2400 = vrot.slane %v2096, 1
      %v2401 = vrot.slane %v2097, 1
      %v2402 = vsel %vm578, %v2400, %v2401
      %v2403 = vrot.slane %v2098, 1
      %v2404 = vsel %vm578, %v2401, %v2403
      %v2405 = vrot.slane %v2099, 1
      %v2406 = vrot.slane %v2100, 1
      %v2407 = vsel %vm578, %v2405, %v2406
      %v2408 = vrot.slane %v2101, 1
      %v2409 = vsel %vm578, %v2406, %v2408
      %v2410 = vrot.slane %v2102, 1
      %v2411 = vrot.slane %v2103, 1
      %v2412 = vsel %vm578, %v2410, %v2411
      %v2413 = vrot.slane %v2104, 1
      %v2414 = vsel %vm578, %v2411, %v2413
      %v2415 = vrot.slane %v2105, 1
      %v2416 = vrot.slane %v2106, 1
      %v2417 = vsel %vm578, %v2415, %v2416
      %v2418 = vrot.slane %v2107, 1
      %v2419 = vsel %vm578, %v2416, %v2418
      %v2420 = vrot.slane %v2108, 1
      %v2421 = vrot.slane %v2109, 1
      %v2422 = vsel %vm578, %v2420, %v2421
      %v2423 = vrot.slane %v2110, 1
      %v2424 = vsel %vm578, %v2421, %v2423
      %v2425 = vrot.slane %v2111, 1
      %v2426 = vrot.slane %v2112, 1
      %v2427 = vsel %vm578, %v2425, %v2426
      %v2428 = vrot.slane %v2113, 1
      %v2429 = vsel %vm578, %v2426, %v2428
      %v2430 = vrot.slane %v2114, 1
      %v2431 = vrot.slane %v2115, 1
      %v2432 = vsel %vm578, %v2430, %v2431
      %v2433 = vrot.slane %v2116, 1
      %v2434 = vsel %vm578, %v2431, %v2433
      %v2435 = vrot.slane %v2117, 1
      %v2436 = vrot.slane %v2118, 1
      %v2437 = vsel %vm578, %v2435, %v2436
      %v2438 = vrot.slane %v2119, 1
      %v2439 = vsel %vm578, %v2436, %v2438
      %v2472 = vpack.c.bf16 %v2364, %v2362
      %v2473 = vpack.c.bf16 %v2369, %v2367
      %v2474 = vpack.c.bf16 %v2374, %v2372
      %v2475 = vpack.c.bf16 %v2379, %v2377
      %v2476 = vpack.c.bf16 %v2384, %v2382
      %v2477 = vpack.c.bf16 %v2389, %v2387
      %v2478 = vpack.c.bf16 %v2394, %v2392
      %v2479 = vpack.c.bf16 %v2399, %v2397
      %v2480 = vpack.c.bf16 %v2404, %v2402
      %v2481 = vpack.c.bf16 %v2409, %v2407
      %v2482 = vpack.c.bf16 %v2414, %v2412
      %v2483 = vpack.c.bf16 %v2419, %v2417
      %v2484 = vpack.c.bf16 %v2424, %v2422
      %v2485 = vpack.c.bf16 %v2429, %v2427
      %v2486 = vpack.c.bf16 %v2434, %v2432
      %v2487 = vpack.c.bf16 %v2439, %v2437
      %v2488 = vpack.c.bf16 %v426, %v425
      %v2490 = vsel %vm708, %v2472, 0
      %v2493 = vsel %vm708, %v2473, 0
      %v2496 = vsel %vm708, %v2474, 0
      %v2499 = vsel %vm708, %v2475, 0
      %v2502 = vsel %vm708, %v2476, 0
      %v2505 = vsel %vm708, %v2477, 0
      %v2508 = vsel %vm708, %v2478, 0
      %v2511 = vsel %vm708, %v2479, 0
      %v2514 = vsel %vm708, %v2480, 0
      %v2517 = vsel %vm708, %v2481, 0
      %v2520 = vsel %vm708, %v2482, 0
      %v2523 = vsel %vm708, %v2483, 0
      %v2526 = vsel %vm708, %v2484, 0
      %v2529 = vsel %vm708, %v2485, 0
      %v2532 = vsel %vm708, %v2486, 0
      %v2535 = vsel %vm708, %v2487, 0
      %2537 = vmatpush.bf16.msra.mxu0 0
      %2538 = vmatpush.bf16.msra.mxu0 0
      %2539 = vmatpush.bf16.msra.mxu0 0
      %2540 = vmatpush.bf16.msra.mxu0 0
      %2541 = vmatpush.bf16.msra.mxu0 0
      %2542 = vmatpush.bf16.msra.mxu0 0
      %2543 = vmatpush.bf16.msra.mxu0 0
      %2544 = vmatpush.bf16.msra.mxu0 %v2488
      %2545 = vmatmul.bf16.gmra.mxu0 %v2490
      %v2546 = vpop.f32.mrf.mxu0
      %v2547 = vadd.f32 0.0, %v2546
      %v2548 = vpop.f32.mrf.mxu0
      %v2549 = vadd.f32 0.0, %v2548
      %2550 = vmatmul.bf16.gmra.mxu0 %v2493
      %v2551 = vpop.f32.mrf.mxu0
      %v2552 = vadd.f32 0.0, %v2551
      %v2553 = vpop.f32.mrf.mxu0
      %v2554 = vadd.f32 0.0, %v2553
      %2555 = vmatmul.bf16.gmra.mxu0 %v2496
      %v2556 = vpop.f32.mrf.mxu0
      %v2557 = vadd.f32 0.0, %v2556
      %v2558 = vpop.f32.mrf.mxu0
      %v2559 = vadd.f32 0.0, %v2558
      %2560 = vmatmul.bf16.gmra.mxu0 %v2499
      %v2561 = vpop.f32.mrf.mxu0
      %v2562 = vadd.f32 0.0, %v2561
      %v2563 = vpop.f32.mrf.mxu0
      %v2564 = vadd.f32 0.0, %v2563
      %2565 = vmatmul.bf16.gmra.mxu0 %v2502
      %v2566 = vpop.f32.mrf.mxu0
      %v2567 = vadd.f32 0.0, %v2566
      %v2568 = vpop.f32.mrf.mxu0
      %v2569 = vadd.f32 0.0, %v2568
      %2570 = vmatmul.bf16.gmra.mxu0 %v2505
      %v2571 = vpop.f32.mrf.mxu0
      %v2572 = vadd.f32 0.0, %v2571
      %v2573 = vpop.f32.mrf.mxu0
      %v2574 = vadd.f32 0.0, %v2573
      %2575 = vmatmul.bf16.gmra.mxu0 %v2508
      %v2576 = vpop.f32.mrf.mxu0
      %v2577 = vadd.f32 0.0, %v2576
      %v2578 = vpop.f32.mrf.mxu0
      %v2579 = vadd.f32 0.0, %v2578
      %2580 = vmatmul.bf16.gmra.mxu0 %v2511
      %v2581 = vpop.f32.mrf.mxu0
      %v2582 = vadd.f32 0.0, %v2581
      %v2583 = vpop.f32.mrf.mxu0
      %v2584 = vadd.f32 0.0, %v2583
      %2585 = vmatmul.bf16.gmra.mxu0 %v2514
      %v2586 = vpop.f32.mrf.mxu0
      %v2587 = vadd.f32 0.0, %v2586
      %v2588 = vpop.f32.mrf.mxu0
      %v2589 = vadd.f32 0.0, %v2588
      %2590 = vmatmul.bf16.gmra.mxu0 %v2517
      %v2591 = vpop.f32.mrf.mxu0
      %v2592 = vadd.f32 0.0, %v2591
      %v2593 = vpop.f32.mrf.mxu0
      %v2594 = vadd.f32 0.0, %v2593
      %2595 = vmatmul.bf16.gmra.mxu0 %v2520
      %v2596 = vpop.f32.mrf.mxu0
      %v2597 = vadd.f32 0.0, %v2596
      %v2598 = vpop.f32.mrf.mxu0
      %v2599 = vadd.f32 0.0, %v2598
      %2600 = vmatmul.bf16.gmra.mxu0 %v2523
      %v2601 = vpop.f32.mrf.mxu0
      %v2602 = vadd.f32 0.0, %v2601
      %v2603 = vpop.f32.mrf.mxu0
      %v2604 = vadd.f32 0.0, %v2603
      %2605 = vmatmul.bf16.gmra.mxu0 %v2526
      %v2606 = vpop.f32.mrf.mxu0
      %v2607 = vadd.f32 0.0, %v2606
      %v2608 = vpop.f32.mrf.mxu0
      %v2609 = vadd.f32 0.0, %v2608
      %2610 = vmatmul.bf16.gmra.mxu0 %v2529
      %v2611 = vpop.f32.mrf.mxu0
      %v2612 = vadd.f32 0.0, %v2611
      %v2613 = vpop.f32.mrf.mxu0
      %v2614 = vadd.f32 0.0, %v2613
      %2615 = vmatmul.bf16.gmra.mxu0 %v2532
      %v2616 = vpop.f32.mrf.mxu0
      %v2617 = vadd.f32 0.0, %v2616
      %v2618 = vpop.f32.mrf.mxu0
      %v2619 = vadd.f32 0.0, %v2618
      %2620 = vmatmul.bf16.gmra.mxu0 %v2535
      %v2621 = vpop.f32.mrf.mxu0
      %v2622 = vadd.f32 0.0, %v2621
      %v2623 = vpop.f32.mrf.mxu0
      %v2624 = vadd.f32 0.0, %v2623
      %2625 = vdwg.mxu0
      %v2626 = vadd.f32 %v2280, %v2547
      %v2627 = vadd.f32 %v2281, %v2549
      %v2628 = vadd.f32 %v2282, %v2552
      %v2629 = vadd.f32 %v2283, %v2554
      %v2630 = vadd.f32 %v2284, %v2557
      %v2631 = vadd.f32 %v2285, %v2559
      %v2632 = vadd.f32 %v2286, %v2562
      %v2633 = vadd.f32 %v2287, %v2564
      %v2634 = vadd.f32 %v2288, %v2567
      %v2635 = vadd.f32 %v2289, %v2569
      %v2636 = vadd.f32 %v2290, %v2572
      %v2637 = vadd.f32 %v2291, %v2574
      %v2638 = vadd.f32 %v2292, %v2577
      %v2639 = vadd.f32 %v2293, %v2579
      %v2640 = vadd.f32 %v2294, %v2582
      %v2641 = vadd.f32 %v2295, %v2584
      %v2642 = vadd.f32 %v2296, %v2587
      %v2643 = vadd.f32 %v2297, %v2589
      %v2644 = vadd.f32 %v2298, %v2592
      %v2645 = vadd.f32 %v2299, %v2594
      %v2646 = vadd.f32 %v2300, %v2597
      %v2647 = vadd.f32 %v2301, %v2599
      %v2648 = vadd.f32 %v2302, %v2602
      %v2649 = vadd.f32 %v2303, %v2604
      %v2650 = vadd.f32 %v2304, %v2607
      %v2651 = vadd.f32 %v2305, %v2609
      %v2652 = vadd.f32 %v2306, %v2612
      %v2653 = vadd.f32 %v2307, %v2614
      %v2654 = vadd.f32 %v2308, %v2617
      %v2655 = vadd.f32 %v2309, %v2619
      %v2656 = vadd.f32 %v2310, %v2622
      %v2657 = vadd.f32 %v2311, %v2624
      %v2658 = vrot.slane %v2072, 2
      %v2659 = vrot.slane %v2073, 2
      %v2660 = vsel %vm983, %v2658, %v2659
      %v2661 = vrot.slane %v2074, 2
      %v2662 = vsel %vm983, %v2659, %v2661
      %v2663 = vrot.slane %v2075, 2
      %v2664 = vrot.slane %v2076, 2
      %v2665 = vsel %vm983, %v2663, %v2664
      %v2666 = vrot.slane %v2077, 2
      %v2667 = vsel %vm983, %v2664, %v2666
      %v2668 = vrot.slane %v2078, 2
      %v2669 = vrot.slane %v2079, 2
      %v2670 = vsel %vm983, %v2668, %v2669
      %v2671 = vrot.slane %v2080, 2
      %v2672 = vsel %vm983, %v2669, %v2671
      %v2673 = vrot.slane %v2081, 2
      %v2674 = vrot.slane %v2082, 2
      %v2675 = vsel %vm983, %v2673, %v2674
      %v2676 = vrot.slane %v2083, 2
      %v2677 = vsel %vm983, %v2674, %v2676
      %v2678 = vrot.slane %v2084, 2
      %v2679 = vrot.slane %v2085, 2
      %v2680 = vsel %vm983, %v2678, %v2679
      %v2681 = vrot.slane %v2086, 2
      %v2682 = vsel %vm983, %v2679, %v2681
      %v2683 = vrot.slane %v2087, 2
      %v2684 = vrot.slane %v2088, 2
      %v2685 = vsel %vm983, %v2683, %v2684
      %v2686 = vrot.slane %v2089, 2
      %v2687 = vsel %vm983, %v2684, %v2686
      %v2688 = vrot.slane %v2090, 2
      %v2689 = vrot.slane %v2091, 2
      %v2690 = vsel %vm983, %v2688, %v2689
      %v2691 = vrot.slane %v2092, 2
      %v2692 = vsel %vm983, %v2689, %v2691
      %v2693 = vrot.slane %v2093, 2
      %v2694 = vrot.slane %v2094, 2
      %v2695 = vsel %vm983, %v2693, %v2694
      %v2696 = vrot.slane %v2095, 2
      %v2697 = vsel %vm983, %v2694, %v2696
      %v2698 = vrot.slane %v2096, 2
      %v2699 = vrot.slane %v2097, 2
      %v2700 = vsel %vm983, %v2698, %v2699
      %v2701 = vrot.slane %v2098, 2
      %v2702 = vsel %vm983, %v2699, %v2701
      %v2703 = vrot.slane %v2099, 2
      %v2704 = vrot.slane %v2100, 2
      %v2705 = vsel %vm983, %v2703, %v2704
      %v2706 = vrot.slane %v2101, 2
      %v2707 = vsel %vm983, %v2704, %v2706
      %v2708 = vrot.slane %v2102, 2
      %v2709 = vrot.slane %v2103, 2
      %v2710 = vsel %vm983, %v2708, %v2709
      %v2711 = vrot.slane %v2104, 2
      %v2712 = vsel %vm983, %v2709, %v2711
      %v2713 = vrot.slane %v2105, 2
      %v2714 = vrot.slane %v2106, 2
      %v2715 = vsel %vm983, %v2713, %v2714
      %v2716 = vrot.slane %v2107, 2
      %v2717 = vsel %vm983, %v2714, %v2716
      %v2718 = vrot.slane %v2108, 2
      %v2719 = vrot.slane %v2109, 2
      %v2720 = vsel %vm983, %v2718, %v2719
      %v2721 = vrot.slane %v2110, 2
      %v2722 = vsel %vm983, %v2719, %v2721
      %v2723 = vrot.slane %v2111, 2
      %v2724 = vrot.slane %v2112, 2
      %v2725 = vsel %vm983, %v2723, %v2724
      %v2726 = vrot.slane %v2113, 2
      %v2727 = vsel %vm983, %v2724, %v2726
      %v2728 = vrot.slane %v2114, 2
      %v2729 = vrot.slane %v2115, 2
      %v2730 = vsel %vm983, %v2728, %v2729
      %v2731 = vrot.slane %v2116, 2
      %v2732 = vsel %vm983, %v2729, %v2731
      %v2733 = vrot.slane %v2117, 2
      %v2734 = vrot.slane %v2118, 2
      %v2735 = vsel %vm983, %v2733, %v2734
      %v2736 = vrot.slane %v2119, 2
      %v2737 = vsel %vm983, %v2734, %v2736
      %v2770 = vpack.c.bf16 %v2662, %v2660
      %v2771 = vpack.c.bf16 %v2667, %v2665
      %v2772 = vpack.c.bf16 %v2672, %v2670
      %v2773 = vpack.c.bf16 %v2677, %v2675
      %v2774 = vpack.c.bf16 %v2682, %v2680
      %v2775 = vpack.c.bf16 %v2687, %v2685
      %v2776 = vpack.c.bf16 %v2692, %v2690
      %v2777 = vpack.c.bf16 %v2697, %v2695
      %v2778 = vpack.c.bf16 %v2702, %v2700
      %v2779 = vpack.c.bf16 %v2707, %v2705
      %v2780 = vpack.c.bf16 %v2712, %v2710
      %v2781 = vpack.c.bf16 %v2717, %v2715
      %v2782 = vpack.c.bf16 %v2722, %v2720
      %v2783 = vpack.c.bf16 %v2727, %v2725
      %v2784 = vpack.c.bf16 %v2732, %v2730
      %v2785 = vpack.c.bf16 %v2737, %v2735
      %v2786 = vpack.c.bf16 %v428, %v427
      %v2788 = vsel %vm708, %v2770, 0
      %v2791 = vsel %vm708, %v2771, 0
      %v2794 = vsel %vm708, %v2772, 0
      %v2797 = vsel %vm708, %v2773, 0
      %v2800 = vsel %vm708, %v2774, 0
      %v2803 = vsel %vm708, %v2775, 0
      %v2806 = vsel %vm708, %v2776, 0
      %v2809 = vsel %vm708, %v2777, 0
      %v2812 = vsel %vm708, %v2778, 0
      %v2815 = vsel %vm708, %v2779, 0
      %v2818 = vsel %vm708, %v2780, 0
      %v2821 = vsel %vm708, %v2781, 0
      %v2824 = vsel %vm708, %v2782, 0
      %v2827 = vsel %vm708, %v2783, 0
      %v2830 = vsel %vm708, %v2784, 0
      %v2833 = vsel %vm708, %v2785, 0
      %2835 = vmatpush.bf16.msra.mxu0 0
      %2836 = vmatpush.bf16.msra.mxu0 0
      %2837 = vmatpush.bf16.msra.mxu0 0
      %2838 = vmatpush.bf16.msra.mxu0 0
      %2839 = vmatpush.bf16.msra.mxu0 0
      %2840 = vmatpush.bf16.msra.mxu0 0
      %2841 = vmatpush.bf16.msra.mxu0 0
      %2842 = vmatpush.bf16.msra.mxu0 %v2786
      %2843 = vmatmul.bf16.gmra.mxu0 %v2788
      %v2844 = vpop.f32.mrf.mxu0
      %v2845 = vadd.f32 0.0, %v2844
      %v2846 = vpop.f32.mrf.mxu0
      %v2847 = vadd.f32 0.0, %v2846
      %2848 = vmatmul.bf16.gmra.mxu0 %v2791
      %v2849 = vpop.f32.mrf.mxu0
      %v2850 = vadd.f32 0.0, %v2849
      %v2851 = vpop.f32.mrf.mxu0
      %v2852 = vadd.f32 0.0, %v2851
      %2853 = vmatmul.bf16.gmra.mxu0 %v2794
      %v2854 = vpop.f32.mrf.mxu0
      %v2855 = vadd.f32 0.0, %v2854
      %v2856 = vpop.f32.mrf.mxu0
      %v2857 = vadd.f32 0.0, %v2856
      %2858 = vmatmul.bf16.gmra.mxu0 %v2797
      %v2859 = vpop.f32.mrf.mxu0
      %v2860 = vadd.f32 0.0, %v2859
      %v2861 = vpop.f32.mrf.mxu0
      %v2862 = vadd.f32 0.0, %v2861
      %2863 = vmatmul.bf16.gmra.mxu0 %v2800
      %v2864 = vpop.f32.mrf.mxu0
      %v2865 = vadd.f32 0.0, %v2864
      %v2866 = vpop.f32.mrf.mxu0
      %v2867 = vadd.f32 0.0, %v2866
      %2868 = vmatmul.bf16.gmra.mxu0 %v2803
      %v2869 = vpop.f32.mrf.mxu0
      %v2870 = vadd.f32 0.0, %v2869
      %v2871 = vpop.f32.mrf.mxu0
      %v2872 = vadd.f32 0.0, %v2871
      %2873 = vmatmul.bf16.gmra.mxu0 %v2806
      %v2874 = vpop.f32.mrf.mxu0
      %v2875 = vadd.f32 0.0, %v2874
      %v2876 = vpop.f32.mrf.mxu0
      %v2877 = vadd.f32 0.0, %v2876
      %2878 = vmatmul.bf16.gmra.mxu0 %v2809
      %v2879 = vpop.f32.mrf.mxu0
      %v2880 = vadd.f32 0.0, %v2879
      %v2881 = vpop.f32.mrf.mxu0
      %v2882 = vadd.f32 0.0, %v2881
      %2883 = vmatmul.bf16.gmra.mxu0 %v2812
      %v2884 = vpop.f32.mrf.mxu0
      %v2885 = vadd.f32 0.0, %v2884
      %v2886 = vpop.f32.mrf.mxu0
      %v2887 = vadd.f32 0.0, %v2886
      %2888 = vmatmul.bf16.gmra.mxu0 %v2815
      %v2889 = vpop.f32.mrf.mxu0
      %v2890 = vadd.f32 0.0, %v2889
      %v2891 = vpop.f32.mrf.mxu0
      %v2892 = vadd.f32 0.0, %v2891
      %2893 = vmatmul.bf16.gmra.mxu0 %v2818
      %v2894 = vpop.f32.mrf.mxu0
      %v2895 = vadd.f32 0.0, %v2894
      %v2896 = vpop.f32.mrf.mxu0
      %v2897 = vadd.f32 0.0, %v2896
      %2898 = vmatmul.bf16.gmra.mxu0 %v2821
      %v2899 = vpop.f32.mrf.mxu0
      %v2900 = vadd.f32 0.0, %v2899
      %v2901 = vpop.f32.mrf.mxu0
      %v2902 = vadd.f32 0.0, %v2901
      %2903 = vmatmul.bf16.gmra.mxu0 %v2824
      %v2904 = vpop.f32.mrf.mxu0
      %v2905 = vadd.f32 0.0, %v2904
      %v2906 = vpop.f32.mrf.mxu0
      %v2907 = vadd.f32 0.0, %v2906
      %2908 = vmatmul.bf16.gmra.mxu0 %v2827
      %v2909 = vpop.f32.mrf.mxu0
      %v2910 = vadd.f32 0.0, %v2909
      %v2911 = vpop.f32.mrf.mxu0
      %v2912 = vadd.f32 0.0, %v2911
      %2913 = vmatmul.bf16.gmra.mxu0 %v2830
      %v2914 = vpop.f32.mrf.mxu0
      %v2915 = vadd.f32 0.0, %v2914
      %v2916 = vpop.f32.mrf.mxu0
      %v2917 = vadd.f32 0.0, %v2916
      %2918 = vmatmul.bf16.gmra.mxu0 %v2833
      %v2919 = vpop.f32.mrf.mxu0
      %v2920 = vadd.f32 0.0, %v2919
      %v2921 = vpop.f32.mrf.mxu0
      %v2922 = vadd.f32 0.0, %v2921
      %2923 = vdwg.mxu0
      %v2924 = vadd.f32 %v2626, %v2845
      %v2925 = vadd.f32 %v2627, %v2847
      %v2926 = vadd.f32 %v2628, %v2850
      %v2927 = vadd.f32 %v2629, %v2852
      %v2928 = vadd.f32 %v2630, %v2855
      %v2929 = vadd.f32 %v2631, %v2857
      %v2930 = vadd.f32 %v2632, %v2860
      %v2931 = vadd.f32 %v2633, %v2862
      %v2932 = vadd.f32 %v2634, %v2865
      %v2933 = vadd.f32 %v2635, %v2867
      %v2934 = vadd.f32 %v2636, %v2870
      %v2935 = vadd.f32 %v2637, %v2872
      %v2936 = vadd.f32 %v2638, %v2875
      %v2937 = vadd.f32 %v2639, %v2877
      %v2938 = vadd.f32 %v2640, %v2880
      %v2939 = vadd.f32 %v2641, %v2882
      %v2940 = vadd.f32 %v2642, %v2885
      %v2941 = vadd.f32 %v2643, %v2887
      %v2942 = vadd.f32 %v2644, %v2890
      %v2943 = vadd.f32 %v2645, %v2892
      %v2944 = vadd.f32 %v2646, %v2895
      %v2945 = vadd.f32 %v2647, %v2897
      %v2946 = vadd.f32 %v2648, %v2900
      %v2947 = vadd.f32 %v2649, %v2902
      %v2948 = vadd.f32 %v2650, %v2905
      %v2949 = vadd.f32 %v2651, %v2907
      %v2950 = vadd.f32 %v2652, %v2910
      %v2951 = vadd.f32 %v2653, %v2912
      %v2952 = vadd.f32 %v2654, %v2915
      %v2953 = vadd.f32 %v2655, %v2917
      %v2954 = vadd.f32 %v2656, %v2920
      %v2955 = vadd.f32 %v2657, %v2922
      %v2956 = vpack.c.bf16 %v2121, %v2120
      %v2957 = vpack.c.bf16 %v430, %v429
      %v2959 = vsel %vm708, %v2956, 0
      %2961 = vmatpush.bf16.msra.mxu0 0
      %2962 = vmatpush.bf16.msra.mxu0 0
      %2963 = vmatpush.bf16.msra.mxu0 0
      %2964 = vmatpush.bf16.msra.mxu0 0
      %2965 = vmatpush.bf16.msra.mxu0 0
      %2966 = vmatpush.bf16.msra.mxu0 0
      %2967 = vmatpush.bf16.msra.mxu0 0
      %2968 = vmatpush.bf16.msra.mxu0 %v2957
      %2969 = vmatmul.bf16.gmra.mxu0 %v2147
      %v2970 = vpop.f32.mrf.mxu0
      %v2971 = vadd.f32 0.0, %v2970
      %v2972 = vpop.f32.mrf.mxu0
      %v2973 = vadd.f32 0.0, %v2972
      %2974 = vmatmul.bf16.gmra.mxu0 %v2150
      %v2975 = vpop.f32.mrf.mxu0
      %v2976 = vadd.f32 0.0, %v2975
      %v2977 = vpop.f32.mrf.mxu0
      %v2978 = vadd.f32 0.0, %v2977
      %2979 = vmatmul.bf16.gmra.mxu0 %v2153
      %v2980 = vpop.f32.mrf.mxu0
      %v2981 = vadd.f32 0.0, %v2980
      %v2982 = vpop.f32.mrf.mxu0
      %v2983 = vadd.f32 0.0, %v2982
      %2984 = vmatmul.bf16.gmra.mxu0 %v2156
      %v2985 = vpop.f32.mrf.mxu0
      %v2986 = vadd.f32 0.0, %v2985
      %v2987 = vpop.f32.mrf.mxu0
      %v2988 = vadd.f32 0.0, %v2987
      %2989 = vmatmul.bf16.gmra.mxu0 %v2159
      %v2990 = vpop.f32.mrf.mxu0
      %v2991 = vadd.f32 0.0, %v2990
      %v2992 = vpop.f32.mrf.mxu0
      %v2993 = vadd.f32 0.0, %v2992
      %2994 = vmatmul.bf16.gmra.mxu0 %v2162
      %v2995 = vpop.f32.mrf.mxu0
      %v2996 = vadd.f32 0.0, %v2995
      %v2997 = vpop.f32.mrf.mxu0
      %v2998 = vadd.f32 0.0, %v2997
      %2999 = vmatmul.bf16.gmra.mxu0 %v2165
      %v3000 = vpop.f32.mrf.mxu0
      %v3001 = vadd.f32 0.0, %v3000
      %v3002 = vpop.f32.mrf.mxu0
      %v3003 = vadd.f32 0.0, %v3002
      %3004 = vmatmul.bf16.gmra.mxu0 %v2168
      %v3005 = vpop.f32.mrf.mxu0
      %v3006 = vadd.f32 0.0, %v3005
      %v3007 = vpop.f32.mrf.mxu0
      %v3008 = vadd.f32 0.0, %v3007
      %3009 = vmatmul.bf16.gmra.mxu0 %v2171
      %v3010 = vpop.f32.mrf.mxu0
      %v3011 = vadd.f32 0.0, %v3010
      %v3012 = vpop.f32.mrf.mxu0
      %v3013 = vadd.f32 0.0, %v3012
      %3014 = vmatmul.bf16.gmra.mxu0 %v2174
      %v3015 = vpop.f32.mrf.mxu0
      %v3016 = vadd.f32 0.0, %v3015
      %v3017 = vpop.f32.mrf.mxu0
      %v3018 = vadd.f32 0.0, %v3017
      %3019 = vmatmul.bf16.gmra.mxu0 %v2177
      %v3020 = vpop.f32.mrf.mxu0
      %v3021 = vadd.f32 0.0, %v3020
      %v3022 = vpop.f32.mrf.mxu0
      %v3023 = vadd.f32 0.0, %v3022
      %3024 = vmatmul.bf16.gmra.mxu0 %v2180
      %v3025 = vpop.f32.mrf.mxu0
      %v3026 = vadd.f32 0.0, %v3025
      %v3027 = vpop.f32.mrf.mxu0
      %v3028 = vadd.f32 0.0, %v3027
      %3029 = vmatmul.bf16.gmra.mxu0 %v2183
      %v3030 = vpop.f32.mrf.mxu0
      %v3031 = vadd.f32 0.0, %v3030
      %v3032 = vpop.f32.mrf.mxu0
      %v3033 = vadd.f32 0.0, %v3032
      %3034 = vmatmul.bf16.gmra.mxu0 %v2186
      %v3035 = vpop.f32.mrf.mxu0
      %v3036 = vadd.f32 0.0, %v3035
      %v3037 = vpop.f32.mrf.mxu0
      %v3038 = vadd.f32 0.0, %v3037
      %3039 = vmatmul.bf16.gmra.mxu0 %v2189
      %v3040 = vpop.f32.mrf.mxu0
      %v3041 = vadd.f32 0.0, %v3040
      %v3042 = vpop.f32.mrf.mxu0
      %v3043 = vadd.f32 0.0, %v3042
      %3044 = vmatmul.bf16.gmra.mxu0 %v2959
      %v3045 = vpop.f32.mrf.mxu0
      %v3046 = vadd.f32 0.0, %v3045
      %v3047 = vpop.f32.mrf.mxu0
      %v3048 = vadd.f32 0.0, %v3047
      %3049 = vdwg.mxu0
      %v3050 = vadd.f32 %v2924, %v2971
      %v3051 = vadd.f32 %v2925, %v2973
      %v3052 = vadd.f32 %v2926, %v2976
      %v3053 = vadd.f32 %v2927, %v2978
      %v3054 = vadd.f32 %v2928, %v2981
      %v3055 = vadd.f32 %v2929, %v2983
      %v3056 = vadd.f32 %v2930, %v2986
      %v3057 = vadd.f32 %v2931, %v2988
      %v3058 = vadd.f32 %v2932, %v2991
      %v3059 = vadd.f32 %v2933, %v2993
      %v3060 = vadd.f32 %v2934, %v2996
      %v3061 = vadd.f32 %v2935, %v2998
      %v3062 = vadd.f32 %v2936, %v3001
      %v3063 = vadd.f32 %v2937, %v3003
      %v3064 = vadd.f32 %v2938, %v3006
      %v3065 = vadd.f32 %v2939, %v3008
      %v3066 = vadd.f32 %v2940, %v3011
      %v3067 = vadd.f32 %v2941, %v3013
      %v3068 = vadd.f32 %v2942, %v3016
      %v3069 = vadd.f32 %v2943, %v3018
      %v3070 = vadd.f32 %v2944, %v3021
      %v3071 = vadd.f32 %v2945, %v3023
      %v3072 = vadd.f32 %v2946, %v3026
      %v3073 = vadd.f32 %v2947, %v3028
      %v3074 = vadd.f32 %v2948, %v3031
      %v3075 = vadd.f32 %v2949, %v3033
      %v3076 = vadd.f32 %v2950, %v3036
      %v3077 = vadd.f32 %v2951, %v3038
      %v3078 = vadd.f32 %v2952, %v3041
      %v3079 = vadd.f32 %v2953, %v3043
      %v3080 = vadd.f32 %v2954, %v3046
      %v3081 = vadd.f32 %v2955, %v3048
      %v3085 = vrot.slane %v2120, 1
      %v3086 = vrot.slane %v2121, 1
      %v3087 = vsel %vm578, %v3085, %v3086
      %v3088 = vrot.slane %v2122, 1
      %v3089 = vsel %vm578, %v3086, %v3088
      %v3092 = vpack.c.bf16 %v3089, %v3087
      %v3093 = vpack.c.bf16 %v432, %v431
      %v3095 = vsel %vm708, %v3092, 0
      %3097 = vmatpush.bf16.msra.mxu0 0
      %3098 = vmatpush.bf16.msra.mxu0 0
      %3099 = vmatpush.bf16.msra.mxu0 0
      %3100 = vmatpush.bf16.msra.mxu0 0
      %3101 = vmatpush.bf16.msra.mxu0 0
      %3102 = vmatpush.bf16.msra.mxu0 0
      %3103 = vmatpush.bf16.msra.mxu0 0
      %3104 = vmatpush.bf16.msra.mxu0 %v3093
      %3105 = vmatmul.bf16.gmra.mxu0 %v2493
      %v3106 = vpop.f32.mrf.mxu0
      %v3107 = vadd.f32 0.0, %v3106
      %v3108 = vpop.f32.mrf.mxu0
      %v3109 = vadd.f32 0.0, %v3108
      %3110 = vmatmul.bf16.gmra.mxu0 %v2496
      %v3111 = vpop.f32.mrf.mxu0
      %v3112 = vadd.f32 0.0, %v3111
      %v3113 = vpop.f32.mrf.mxu0
      %v3114 = vadd.f32 0.0, %v3113
      %3115 = vmatmul.bf16.gmra.mxu0 %v2499
      %v3116 = vpop.f32.mrf.mxu0
      %v3117 = vadd.f32 0.0, %v3116
      %v3118 = vpop.f32.mrf.mxu0
      %v3119 = vadd.f32 0.0, %v3118
      %3120 = vmatmul.bf16.gmra.mxu0 %v2502
      %v3121 = vpop.f32.mrf.mxu0
      %v3122 = vadd.f32 0.0, %v3121
      %v3123 = vpop.f32.mrf.mxu0
      %v3124 = vadd.f32 0.0, %v3123
      %3125 = vmatmul.bf16.gmra.mxu0 %v2505
      %v3126 = vpop.f32.mrf.mxu0
      %v3127 = vadd.f32 0.0, %v3126
      %v3128 = vpop.f32.mrf.mxu0
      %v3129 = vadd.f32 0.0, %v3128
      %3130 = vmatmul.bf16.gmra.mxu0 %v2508
      %v3131 = vpop.f32.mrf.mxu0
      %v3132 = vadd.f32 0.0, %v3131
      %v3133 = vpop.f32.mrf.mxu0
      %v3134 = vadd.f32 0.0, %v3133
      %3135 = vmatmul.bf16.gmra.mxu0 %v2511
      %v3136 = vpop.f32.mrf.mxu0
      %v3137 = vadd.f32 0.0, %v3136
      %v3138 = vpop.f32.mrf.mxu0
      %v3139 = vadd.f32 0.0, %v3138
      %3140 = vmatmul.bf16.gmra.mxu0 %v2514
      %v3141 = vpop.f32.mrf.mxu0
      %v3142 = vadd.f32 0.0, %v3141
      %v3143 = vpop.f32.mrf.mxu0
      %v3144 = vadd.f32 0.0, %v3143
      %3145 = vmatmul.bf16.gmra.mxu0 %v2517
      %v3146 = vpop.f32.mrf.mxu0
      %v3147 = vadd.f32 0.0, %v3146
      %v3148 = vpop.f32.mrf.mxu0
      %v3149 = vadd.f32 0.0, %v3148
      %3150 = vmatmul.bf16.gmra.mxu0 %v2520
      %v3151 = vpop.f32.mrf.mxu0
      %v3152 = vadd.f32 0.0, %v3151
      %v3153 = vpop.f32.mrf.mxu0
      %v3154 = vadd.f32 0.0, %v3153
      %3155 = vmatmul.bf16.gmra.mxu0 %v2523
      %v3156 = vpop.f32.mrf.mxu0
      %v3157 = vadd.f32 0.0, %v3156
      %v3158 = vpop.f32.mrf.mxu0
      %v3159 = vadd.f32 0.0, %v3158
      %3160 = vmatmul.bf16.gmra.mxu0 %v2526
      %v3161 = vpop.f32.mrf.mxu0
      %v3162 = vadd.f32 0.0, %v3161
      %v3163 = vpop.f32.mrf.mxu0
      %v3164 = vadd.f32 0.0, %v3163
      %3165 = vmatmul.bf16.gmra.mxu0 %v2529
      %v3166 = vpop.f32.mrf.mxu0
      %v3167 = vadd.f32 0.0, %v3166
      %v3168 = vpop.f32.mrf.mxu0
      %v3169 = vadd.f32 0.0, %v3168
      %3170 = vmatmul.bf16.gmra.mxu0 %v2532
      %v3171 = vpop.f32.mrf.mxu0
      %v3172 = vadd.f32 0.0, %v3171
      %v3173 = vpop.f32.mrf.mxu0
      %v3174 = vadd.f32 0.0, %v3173
      %3175 = vmatmul.bf16.gmra.mxu0 %v2535
      %v3176 = vpop.f32.mrf.mxu0
      %v3177 = vadd.f32 0.0, %v3176
      %v3178 = vpop.f32.mrf.mxu0
      %v3179 = vadd.f32 0.0, %v3178
      %3180 = vmatmul.bf16.gmra.mxu0 %v3095
      %v3181 = vpop.f32.mrf.mxu0
      %v3182 = vadd.f32 0.0, %v3181
      %v3183 = vpop.f32.mrf.mxu0
      %v3184 = vadd.f32 0.0, %v3183
      %3185 = vdwg.mxu0
      %v3186 = vadd.f32 %v3050, %v3107
      %v3187 = vadd.f32 %v3051, %v3109
      %v3188 = vadd.f32 %v3052, %v3112
      %v3189 = vadd.f32 %v3053, %v3114
      %v3190 = vadd.f32 %v3054, %v3117
      %v3191 = vadd.f32 %v3055, %v3119
      %v3192 = vadd.f32 %v3056, %v3122
      %v3193 = vadd.f32 %v3057, %v3124
      %v3194 = vadd.f32 %v3058, %v3127
      %v3195 = vadd.f32 %v3059, %v3129
      %v3196 = vadd.f32 %v3060, %v3132
      %v3197 = vadd.f32 %v3061, %v3134
      %v3198 = vadd.f32 %v3062, %v3137
      %v3199 = vadd.f32 %v3063, %v3139
      %v3200 = vadd.f32 %v3064, %v3142
      %v3201 = vadd.f32 %v3065, %v3144
      %v3202 = vadd.f32 %v3066, %v3147
      %v3203 = vadd.f32 %v3067, %v3149
      %v3204 = vadd.f32 %v3068, %v3152
      %v3205 = vadd.f32 %v3069, %v3154
      %v3206 = vadd.f32 %v3070, %v3157
      %v3207 = vadd.f32 %v3071, %v3159
      %v3208 = vadd.f32 %v3072, %v3162
      %v3209 = vadd.f32 %v3073, %v3164
      %v3210 = vadd.f32 %v3074, %v3167
      %v3211 = vadd.f32 %v3075, %v3169
      %v3212 = vadd.f32 %v3076, %v3172
      %v3213 = vadd.f32 %v3077, %v3174
      %v3214 = vadd.f32 %v3078, %v3177
      %v3215 = vadd.f32 %v3079, %v3179
      %v3216 = vadd.f32 %v3080, %v3182
      %v3217 = vadd.f32 %v3081, %v3184
      %v3218 = vrot.slane %v2120, 2
      %v3219 = vrot.slane %v2121, 2
      %v3220 = vsel %vm983, %v3218, %v3219
      %v3221 = vrot.slane %v2122, 2
      %v3222 = vsel %vm983, %v3219, %v3221
      %v3225 = vpack.c.bf16 %v3222, %v3220
      %v3226 = vpack.c.bf16 %v434, %v433
      %v3228 = vsel %vm708, %v3225, 0
      %3230 = vmatpush.bf16.msra.mxu0 0
      %3231 = vmatpush.bf16.msra.mxu0 0
      %3232 = vmatpush.bf16.msra.mxu0 0
      %3233 = vmatpush.bf16.msra.mxu0 0
      %3234 = vmatpush.bf16.msra.mxu0 0
      %3235 = vmatpush.bf16.msra.mxu0 0
      %3236 = vmatpush.bf16.msra.mxu0 0
      %3237 = vmatpush.bf16.msra.mxu0 %v3226
      %3238 = vmatmul.bf16.gmra.mxu0 %v2791
      %v3239 = vpop.f32.mrf.mxu0
      %v3240 = vadd.f32 0.0, %v3239
      %v3241 = vpop.f32.mrf.mxu0
      %v3242 = vadd.f32 0.0, %v3241
      %3243 = vmatmul.bf16.gmra.mxu0 %v2794
      %v3244 = vpop.f32.mrf.mxu0
      %v3245 = vadd.f32 0.0, %v3244
      %v3246 = vpop.f32.mrf.mxu0
      %v3247 = vadd.f32 0.0, %v3246
      %3248 = vmatmul.bf16.gmra.mxu0 %v2797
      %v3249 = vpop.f32.mrf.mxu0
      %v3250 = vadd.f32 0.0, %v3249
      %v3251 = vpop.f32.mrf.mxu0
      %v3252 = vadd.f32 0.0, %v3251
      %3253 = vmatmul.bf16.gmra.mxu0 %v2800
      %v3254 = vpop.f32.mrf.mxu0
      %v3255 = vadd.f32 0.0, %v3254
      %v3256 = vpop.f32.mrf.mxu0
      %v3257 = vadd.f32 0.0, %v3256
      %3258 = vmatmul.bf16.gmra.mxu0 %v2803
      %v3259 = vpop.f32.mrf.mxu0
      %v3260 = vadd.f32 0.0, %v3259
      %v3261 = vpop.f32.mrf.mxu0
      %v3262 = vadd.f32 0.0, %v3261
      %3263 = vmatmul.bf16.gmra.mxu0 %v2806
      %v3264 = vpop.f32.mrf.mxu0
      %v3265 = vadd.f32 0.0, %v3264
      %v3266 = vpop.f32.mrf.mxu0
      %v3267 = vadd.f32 0.0, %v3266
      %3268 = vmatmul.bf16.gmra.mxu0 %v2809
      %v3269 = vpop.f32.mrf.mxu0
      %v3270 = vadd.f32 0.0, %v3269
      %v3271 = vpop.f32.mrf.mxu0
      %v3272 = vadd.f32 0.0, %v3271
      %3273 = vmatmul.bf16.gmra.mxu0 %v2812
      %v3274 = vpop.f32.mrf.mxu0
      %v3275 = vadd.f32 0.0, %v3274
      %v3276 = vpop.f32.mrf.mxu0
      %v3277 = vadd.f32 0.0, %v3276
      %3278 = vmatmul.bf16.gmra.mxu0 %v2815
      %v3279 = vpop.f32.mrf.mxu0
      %v3280 = vadd.f32 0.0, %v3279
      %v3281 = vpop.f32.mrf.mxu0
      %v3282 = vadd.f32 0.0, %v3281
      %3283 = vmatmul.bf16.gmra.mxu0 %v2818
      %v3284 = vpop.f32.mrf.mxu0
      %v3285 = vadd.f32 0.0, %v3284
      %v3286 = vpop.f32.mrf.mxu0
      %v3287 = vadd.f32 0.0, %v3286
      %3288 = vmatmul.bf16.gmra.mxu0 %v2821
      %v3289 = vpop.f32.mrf.mxu0
      %v3290 = vadd.f32 0.0, %v3289
      %v3291 = vpop.f32.mrf.mxu0
      %v3292 = vadd.f32 0.0, %v3291
      %3293 = vmatmul.bf16.gmra.mxu0 %v2824
      %v3294 = vpop.f32.mrf.mxu0
      %v3295 = vadd.f32 0.0, %v3294
      %v3296 = vpop.f32.mrf.mxu0
      %v3297 = vadd.f32 0.0, %v3296
      %3298 = vmatmul.bf16.gmra.mxu0 %v2827
      %v3299 = vpop.f32.mrf.mxu0
      %v3300 = vadd.f32 0.0, %v3299
      %v3301 = vpop.f32.mrf.mxu0
      %v3302 = vadd.f32 0.0, %v3301
      %3303 = vmatmul.bf16.gmra.mxu0 %v2830
      %v3304 = vpop.f32.mrf.mxu0
      %v3305 = vadd.f32 0.0, %v3304
      %v3306 = vpop.f32.mrf.mxu0
      %v3307 = vadd.f32 0.0, %v3306
      %3308 = vmatmul.bf16.gmra.mxu0 %v2833
      %v3309 = vpop.f32.mrf.mxu0
      %v3310 = vadd.f32 0.0, %v3309
      %v3311 = vpop.f32.mrf.mxu0
      %v3312 = vadd.f32 0.0, %v3311
      %3313 = vmatmul.bf16.gmra.mxu0 %v3228
      %v3314 = vpop.f32.mrf.mxu0
      %v3315 = vadd.f32 0.0, %v3314
      %v3316 = vpop.f32.mrf.mxu0
      %v3317 = vadd.f32 0.0, %v3316
      %3318 = vdwg.mxu0
      %v3319 = vadd.f32 %v3186, %v3240
      %v3320 = vadd.f32 %v3187, %v3242
      %v3321 = vadd.f32 %v3188, %v3245
      %v3322 = vadd.f32 %v3189, %v3247
      %v3323 = vadd.f32 %v3190, %v3250
      %v3324 = vadd.f32 %v3191, %v3252
      %v3325 = vadd.f32 %v3192, %v3255
      %v3326 = vadd.f32 %v3193, %v3257
      %v3327 = vadd.f32 %v3194, %v3260
      %v3328 = vadd.f32 %v3195, %v3262
      %v3329 = vadd.f32 %v3196, %v3265
      %v3330 = vadd.f32 %v3197, %v3267
      %v3331 = vadd.f32 %v3198, %v3270
      %v3332 = vadd.f32 %v3199, %v3272
      %v3333 = vadd.f32 %v3200, %v3275
      %v3334 = vadd.f32 %v3201, %v3277
      %v3335 = vadd.f32 %v3202, %v3280
      %v3336 = vadd.f32 %v3203, %v3282
      %v3337 = vadd.f32 %v3204, %v3285
      %v3338 = vadd.f32 %v3205, %v3287
      %v3339 = vadd.f32 %v3206, %v3290
      %v3340 = vadd.f32 %v3207, %v3292
      %v3341 = vadd.f32 %v3208, %v3295
      %v3342 = vadd.f32 %v3209, %v3297
      %v3343 = vadd.f32 %v3210, %v3300
      %v3344 = vadd.f32 %v3211, %v3302
      %v3345 = vadd.f32 %v3212, %v3305
      %v3346 = vadd.f32 %v3213, %v3307
      %v3347 = vadd.f32 %v3214, %v3310
      %v3348 = vadd.f32 %v3215, %v3312
      %v3349 = vadd.f32 %v3216, %v3315
      %v3350 = vadd.f32 %v3217, %v3317
      %v3351 = vpack.c.bf16 %v2124, %v2123
      %v3352 = vpack.c.bf16 %v436, %v435
      %v3354 = vsel %vm708, %v3351, 0
      %3356 = vmatpush.bf16.msra.mxu0 0
      %3357 = vmatpush.bf16.msra.mxu0 0
      %3358 = vmatpush.bf16.msra.mxu0 0
      %3359 = vmatpush.bf16.msra.mxu0 0
      %3360 = vmatpush.bf16.msra.mxu0 0
      %3361 = vmatpush.bf16.msra.mxu0 0
      %3362 = vmatpush.bf16.msra.mxu0 0
      %3363 = vmatpush.bf16.msra.mxu0 %v3352
      %3364 = vmatmul.bf16.gmra.mxu0 %v2150
      %v3365 = vpop.f32.mrf.mxu0
      %v3366 = vadd.f32 0.0, %v3365
      %v3367 = vpop.f32.mrf.mxu0
      %v3368 = vadd.f32 0.0, %v3367
      %3369 = vmatmul.bf16.gmra.mxu0 %v2153
      %v3370 = vpop.f32.mrf.mxu0
      %v3371 = vadd.f32 0.0, %v3370
      %v3372 = vpop.f32.mrf.mxu0
      %v3373 = vadd.f32 0.0, %v3372
      %3374 = vmatmul.bf16.gmra.mxu0 %v2156
      %v3375 = vpop.f32.mrf.mxu0
      %v3376 = vadd.f32 0.0, %v3375
      %v3377 = vpop.f32.mrf.mxu0
      %v3378 = vadd.f32 0.0, %v3377
      %3379 = vmatmul.bf16.gmra.mxu0 %v2159
      %v3380 = vpop.f32.mrf.mxu0
      %v3381 = vadd.f32 0.0, %v3380
      %v3382 = vpop.f32.mrf.mxu0
      %v3383 = vadd.f32 0.0, %v3382
      %3384 = vmatmul.bf16.gmra.mxu0 %v2162
      %v3385 = vpop.f32.mrf.mxu0
      %v3386 = vadd.f32 0.0, %v3385
      %v3387 = vpop.f32.mrf.mxu0
      %v3388 = vadd.f32 0.0, %v3387
      %3389 = vmatmul.bf16.gmra.mxu0 %v2165
      %v3390 = vpop.f32.mrf.mxu0
      %v3391 = vadd.f32 0.0, %v3390
      %v3392 = vpop.f32.mrf.mxu0
      %v3393 = vadd.f32 0.0, %v3392
      %3394 = vmatmul.bf16.gmra.mxu0 %v2168
      %v3395 = vpop.f32.mrf.mxu0
      %v3396 = vadd.f32 0.0, %v3395
      %v3397 = vpop.f32.mrf.mxu0
      %v3398 = vadd.f32 0.0, %v3397
      %3399 = vmatmul.bf16.gmra.mxu0 %v2171
      %v3400 = vpop.f32.mrf.mxu0
      %v3401 = vadd.f32 0.0, %v3400
      %v3402 = vpop.f32.mrf.mxu0
      %v3403 = vadd.f32 0.0, %v3402
      %3404 = vmatmul.bf16.gmra.mxu0 %v2174
      %v3405 = vpop.f32.mrf.mxu0
      %v3406 = vadd.f32 0.0, %v3405
      %v3407 = vpop.f32.mrf.mxu0
      %v3408 = vadd.f32 0.0, %v3407
      %3409 = vmatmul.bf16.gmra.mxu0 %v2177
      %v3410 = vpop.f32.mrf.mxu0
      %v3411 = vadd.f32 0.0, %v3410
      %v3412 = vpop.f32.mrf.mxu0
      %v3413 = vadd.f32 0.0, %v3412
      %3414 = vmatmul.bf16.gmra.mxu0 %v2180
      %v3415 = vpop.f32.mrf.mxu0
      %v3416 = vadd.f32 0.0, %v3415
      %v3417 = vpop.f32.mrf.mxu0
      %v3418 = vadd.f32 0.0, %v3417
      %3419 = vmatmul.bf16.gmra.mxu0 %v2183
      %v3420 = vpop.f32.mrf.mxu0
      %v3421 = vadd.f32 0.0, %v3420
      %v3422 = vpop.f32.mrf.mxu0
      %v3423 = vadd.f32 0.0, %v3422
      %3424 = vmatmul.bf16.gmra.mxu0 %v2186
      %v3425 = vpop.f32.mrf.mxu0
      %v3426 = vadd.f32 0.0, %v3425
      %v3427 = vpop.f32.mrf.mxu0
      %v3428 = vadd.f32 0.0, %v3427
      %3429 = vmatmul.bf16.gmra.mxu0 %v2189
      %v3430 = vpop.f32.mrf.mxu0
      %v3431 = vadd.f32 0.0, %v3430
      %v3432 = vpop.f32.mrf.mxu0
      %v3433 = vadd.f32 0.0, %v3432
      %3434 = vmatmul.bf16.gmra.mxu0 %v2959
      %v3435 = vpop.f32.mrf.mxu0
      %v3436 = vadd.f32 0.0, %v3435
      %v3437 = vpop.f32.mrf.mxu0
      %v3438 = vadd.f32 0.0, %v3437
      %3439 = vmatmul.bf16.gmra.mxu0 %v3354
      %v3440 = vpop.f32.mrf.mxu0
      %v3441 = vadd.f32 0.0, %v3440
      %v3442 = vpop.f32.mrf.mxu0
      %v3443 = vadd.f32 0.0, %v3442
      %3444 = vdwg.mxu0
      %v3445 = vadd.f32 %v3319, %v3366
      %v3446 = vadd.f32 %v3320, %v3368
      %v3447 = vadd.f32 %v3321, %v3371
      %v3448 = vadd.f32 %v3322, %v3373
      %v3449 = vadd.f32 %v3323, %v3376
      %v3450 = vadd.f32 %v3324, %v3378
      %v3451 = vadd.f32 %v3325, %v3381
      %v3452 = vadd.f32 %v3326, %v3383
      %v3453 = vadd.f32 %v3327, %v3386
      %v3454 = vadd.f32 %v3328, %v3388
      %v3455 = vadd.f32 %v3329, %v3391
      %v3456 = vadd.f32 %v3330, %v3393
      %v3457 = vadd.f32 %v3331, %v3396
      %v3458 = vadd.f32 %v3332, %v3398
      %v3459 = vadd.f32 %v3333, %v3401
      %v3460 = vadd.f32 %v3334, %v3403
      %v3461 = vadd.f32 %v3335, %v3406
      %v3462 = vadd.f32 %v3336, %v3408
      %v3463 = vadd.f32 %v3337, %v3411
      %v3464 = vadd.f32 %v3338, %v3413
      %v3465 = vadd.f32 %v3339, %v3416
      %v3466 = vadd.f32 %v3340, %v3418
      %v3467 = vadd.f32 %v3341, %v3421
      %v3468 = vadd.f32 %v3342, %v3423
      %v3469 = vadd.f32 %v3343, %v3426
      %v3470 = vadd.f32 %v3344, %v3428
      %v3471 = vadd.f32 %v3345, %v3431
      %v3472 = vadd.f32 %v3346, %v3433
      %v3473 = vadd.f32 %v3347, %v3436
      %v3474 = vadd.f32 %v3348, %v3438
      %v3475 = vadd.f32 %v3349, %v3441
      %v3476 = vadd.f32 %v3350, %v3443
      %v3480 = vrot.slane %v2123, 1
      %v3481 = vrot.slane %v2124, 1
      %v3482 = vsel %vm578, %v3480, %v3481
      %v3483 = vrot.slane %v2125, 1
      %v3484 = vsel %vm578, %v3481, %v3483
      %v3487 = vpack.c.bf16 %v3484, %v3482
      %v3488 = vpack.c.bf16 %v438, %v437
      %v3490 = vsel %vm708, %v3487, 0
      %3492 = vmatpush.bf16.msra.mxu0 0
      %3493 = vmatpush.bf16.msra.mxu0 0
      %3494 = vmatpush.bf16.msra.mxu0 0
      %3495 = vmatpush.bf16.msra.mxu0 0
      %3496 = vmatpush.bf16.msra.mxu0 0
      %3497 = vmatpush.bf16.msra.mxu0 0
      %3498 = vmatpush.bf16.msra.mxu0 0
      %3499 = vmatpush.bf16.msra.mxu0 %v3488
      %3500 = vmatmul.bf16.gmra.mxu0 %v2496
      %v3501 = vpop.f32.mrf.mxu0
      %v3502 = vadd.f32 0.0, %v3501
      %v3503 = vpop.f32.mrf.mxu0
      %v3504 = vadd.f32 0.0, %v3503
      %3505 = vmatmul.bf16.gmra.mxu0 %v2499
      %v3506 = vpop.f32.mrf.mxu0
      %v3507 = vadd.f32 0.0, %v3506
      %v3508 = vpop.f32.mrf.mxu0
      %v3509 = vadd.f32 0.0, %v3508
      %3510 = vmatmul.bf16.gmra.mxu0 %v2502
      %v3511 = vpop.f32.mrf.mxu0
      %v3512 = vadd.f32 0.0, %v3511
      %v3513 = vpop.f32.mrf.mxu0
      %v3514 = vadd.f32 0.0, %v3513
      %3515 = vmatmul.bf16.gmra.mxu0 %v2505
      %v3516 = vpop.f32.mrf.mxu0
      %v3517 = vadd.f32 0.0, %v3516
      %v3518 = vpop.f32.mrf.mxu0
      %v3519 = vadd.f32 0.0, %v3518
      %3520 = vmatmul.bf16.gmra.mxu0 %v2508
      %v3521 = vpop.f32.mrf.mxu0
      %v3522 = vadd.f32 0.0, %v3521
      %v3523 = vpop.f32.mrf.mxu0
      %v3524 = vadd.f32 0.0, %v3523
      %3525 = vmatmul.bf16.gmra.mxu0 %v2511
      %v3526 = vpop.f32.mrf.mxu0
      %v3527 = vadd.f32 0.0, %v3526
      %v3528 = vpop.f32.mrf.mxu0
      %v3529 = vadd.f32 0.0, %v3528
      %3530 = vmatmul.bf16.gmra.mxu0 %v2514
      %v3531 = vpop.f32.mrf.mxu0
      %v3532 = vadd.f32 0.0, %v3531
      %v3533 = vpop.f32.mrf.mxu0
      %v3534 = vadd.f32 0.0, %v3533
      %3535 = vmatmul.bf16.gmra.mxu0 %v2517
      %v3536 = vpop.f32.mrf.mxu0
      %v3537 = vadd.f32 0.0, %v3536
      %v3538 = vpop.f32.mrf.mxu0
      %v3539 = vadd.f32 0.0, %v3538
      %3540 = vmatmul.bf16.gmra.mxu0 %v2520
      %v3541 = vpop.f32.mrf.mxu0
      %v3542 = vadd.f32 0.0, %v3541
      %v3543 = vpop.f32.mrf.mxu0
      %v3544 = vadd.f32 0.0, %v3543
      %3545 = vmatmul.bf16.gmra.mxu0 %v2523
      %v3546 = vpop.f32.mrf.mxu0
      %v3547 = vadd.f32 0.0, %v3546
      %v3548 = vpop.f32.mrf.mxu0
      %v3549 = vadd.f32 0.0, %v3548
      %3550 = vmatmul.bf16.gmra.mxu0 %v2526
      %v3551 = vpop.f32.mrf.mxu0
      %v3552 = vadd.f32 0.0, %v3551
      %v3553 = vpop.f32.mrf.mxu0
      %v3554 = vadd.f32 0.0, %v3553
      %3555 = vmatmul.bf16.gmra.mxu0 %v2529
      %v3556 = vpop.f32.mrf.mxu0
      %v3557 = vadd.f32 0.0, %v3556
      %v3558 = vpop.f32.mrf.mxu0
      %v3559 = vadd.f32 0.0, %v3558
      %3560 = vmatmul.bf16.gmra.mxu0 %v2532
      %v3561 = vpop.f32.mrf.mxu0
      %v3562 = vadd.f32 0.0, %v3561
      %v3563 = vpop.f32.mrf.mxu0
      %v3564 = vadd.f32 0.0, %v3563
      %3565 = vmatmul.bf16.gmra.mxu0 %v2535
      %v3566 = vpop.f32.mrf.mxu0
      %v3567 = vadd.f32 0.0, %v3566
      %v3568 = vpop.f32.mrf.mxu0
      %v3569 = vadd.f32 0.0, %v3568
      %3570 = vmatmul.bf16.gmra.mxu0 %v3095
      %v3571 = vpop.f32.mrf.mxu0
      %v3572 = vadd.f32 0.0, %v3571
      %v3573 = vpop.f32.mrf.mxu0
      %v3574 = vadd.f32 0.0, %v3573
      %3575 = vmatmul.bf16.gmra.mxu0 %v3490
      %v3576 = vpop.f32.mrf.mxu0
      %v3577 = vadd.f32 0.0, %v3576
      %v3578 = vpop.f32.mrf.mxu0
      %v3579 = vadd.f32 0.0, %v3578
      %3580 = vdwg.mxu0
      %v3581 = vadd.f32 %v3445, %v3502
      %v3582 = vadd.f32 %v3446, %v3504
      %v3583 = vadd.f32 %v3447, %v3507
      %v3584 = vadd.f32 %v3448, %v3509
      %v3585 = vadd.f32 %v3449, %v3512
      %v3586 = vadd.f32 %v3450, %v3514
      %v3587 = vadd.f32 %v3451, %v3517
      %v3588 = vadd.f32 %v3452, %v3519
      %v3589 = vadd.f32 %v3453, %v3522
      %v3590 = vadd.f32 %v3454, %v3524
      %v3591 = vadd.f32 %v3455, %v3527
      %v3592 = vadd.f32 %v3456, %v3529
      %v3593 = vadd.f32 %v3457, %v3532
      %v3594 = vadd.f32 %v3458, %v3534
      %v3595 = vadd.f32 %v3459, %v3537
      %v3596 = vadd.f32 %v3460, %v3539
      %v3597 = vadd.f32 %v3461, %v3542
      %v3598 = vadd.f32 %v3462, %v3544
      %v3599 = vadd.f32 %v3463, %v3547
      %v3600 = vadd.f32 %v3464, %v3549
      %v3601 = vadd.f32 %v3465, %v3552
      %v3602 = vadd.f32 %v3466, %v3554
      %v3603 = vadd.f32 %v3467, %v3557
      %v3604 = vadd.f32 %v3468, %v3559
      %v3605 = vadd.f32 %v3469, %v3562
      %v3606 = vadd.f32 %v3470, %v3564
      %v3607 = vadd.f32 %v3471, %v3567
      %v3608 = vadd.f32 %v3472, %v3569
      %v3609 = vadd.f32 %v3473, %v3572
      %v3610 = vadd.f32 %v3474, %v3574
      %v3611 = vadd.f32 %v3475, %v3577
      %v3612 = vadd.f32 %v3476, %v3579
      %v3613 = vrot.slane %v2123, 2
      %v3614 = vrot.slane %v2124, 2
      %v3615 = vsel %vm983, %v3613, %v3614
      %v3616 = vrot.slane %v2125, 2
      %v3617 = vsel %vm983, %v3614, %v3616
      %v3620 = vpack.c.bf16 %v3617, %v3615
      %v3621 = vpack.c.bf16 %v440, %v439
      %v3623 = vsel %vm708, %v3620, 0
      %3625 = vmatpush.bf16.msra.mxu0 0
      %3626 = vmatpush.bf16.msra.mxu0 0
      %3627 = vmatpush.bf16.msra.mxu0 0
      %3628 = vmatpush.bf16.msra.mxu0 0
      %3629 = vmatpush.bf16.msra.mxu0 0
      %3630 = vmatpush.bf16.msra.mxu0 0
      %3631 = vmatpush.bf16.msra.mxu0 0
      %3632 = vmatpush.bf16.msra.mxu0 %v3621
      %3633 = vmatmul.bf16.gmra.mxu0 %v2794
      %v3634 = vpop.f32.mrf.mxu0
      %v3635 = vadd.f32 0.0, %v3634
      %v3636 = vpop.f32.mrf.mxu0
      %v3637 = vadd.f32 0.0, %v3636
      %3638 = vmatmul.bf16.gmra.mxu0 %v2797
      %v3639 = vpop.f32.mrf.mxu0
      %v3640 = vadd.f32 0.0, %v3639
      %v3641 = vpop.f32.mrf.mxu0
      %v3642 = vadd.f32 0.0, %v3641
      %3643 = vmatmul.bf16.gmra.mxu0 %v2800
      %v3644 = vpop.f32.mrf.mxu0
      %v3645 = vadd.f32 0.0, %v3644
      %v3646 = vpop.f32.mrf.mxu0
      %v3647 = vadd.f32 0.0, %v3646
      %3648 = vmatmul.bf16.gmra.mxu0 %v2803
      %v3649 = vpop.f32.mrf.mxu0
      %v3650 = vadd.f32 0.0, %v3649
      %v3651 = vpop.f32.mrf.mxu0
      %v3652 = vadd.f32 0.0, %v3651
      %3653 = vmatmul.bf16.gmra.mxu0 %v2806
      %v3654 = vpop.f32.mrf.mxu0
      %v3655 = vadd.f32 0.0, %v3654
      %v3656 = vpop.f32.mrf.mxu0
      %v3657 = vadd.f32 0.0, %v3656
      %3658 = vmatmul.bf16.gmra.mxu0 %v2809
      %v3659 = vpop.f32.mrf.mxu0
      %v3660 = vadd.f32 0.0, %v3659
      %v3661 = vpop.f32.mrf.mxu0
      %v3662 = vadd.f32 0.0, %v3661
      %3663 = vmatmul.bf16.gmra.mxu0 %v2812
      %v3664 = vpop.f32.mrf.mxu0
      %v3665 = vadd.f32 0.0, %v3664
      %v3666 = vpop.f32.mrf.mxu0
      %v3667 = vadd.f32 0.0, %v3666
      %3668 = vmatmul.bf16.gmra.mxu0 %v2815
      %v3669 = vpop.f32.mrf.mxu0
      %v3670 = vadd.f32 0.0, %v3669
      %v3671 = vpop.f32.mrf.mxu0
      %v3672 = vadd.f32 0.0, %v3671
      %3673 = vmatmul.bf16.gmra.mxu0 %v2818
      %v3674 = vpop.f32.mrf.mxu0
      %v3675 = vadd.f32 0.0, %v3674
      %v3676 = vpop.f32.mrf.mxu0
      %v3677 = vadd.f32 0.0, %v3676
      %3678 = vmatmul.bf16.gmra.mxu0 %v2821
      %v3679 = vpop.f32.mrf.mxu0
      %v3680 = vadd.f32 0.0, %v3679
      %v3681 = vpop.f32.mrf.mxu0
      %v3682 = vadd.f32 0.0, %v3681
      %3683 = vmatmul.bf16.gmra.mxu0 %v2824
      %v3684 = vpop.f32.mrf.mxu0
      %v3685 = vadd.f32 0.0, %v3684
      %v3686 = vpop.f32.mrf.mxu0
      %v3687 = vadd.f32 0.0, %v3686
      %3688 = vmatmul.bf16.gmra.mxu0 %v2827
      %v3689 = vpop.f32.mrf.mxu0
      %v3690 = vadd.f32 0.0, %v3689
      %v3691 = vpop.f32.mrf.mxu0
      %v3692 = vadd.f32 0.0, %v3691
      %3693 = vmatmul.bf16.gmra.mxu0 %v2830
      %v3694 = vpop.f32.mrf.mxu0
      %v3695 = vadd.f32 0.0, %v3694
      %v3696 = vpop.f32.mrf.mxu0
      %v3697 = vadd.f32 0.0, %v3696
      %3698 = vmatmul.bf16.gmra.mxu0 %v2833
      %v3699 = vpop.f32.mrf.mxu0
      %v3700 = vadd.f32 0.0, %v3699
      %v3701 = vpop.f32.mrf.mxu0
      %v3702 = vadd.f32 0.0, %v3701
      %3703 = vmatmul.bf16.gmra.mxu0 %v3228
      %v3704 = vpop.f32.mrf.mxu0
      %v3705 = vadd.f32 0.0, %v3704
      %v3706 = vpop.f32.mrf.mxu0
      %v3707 = vadd.f32 0.0, %v3706
      %3708 = vmatmul.bf16.gmra.mxu0 %v3623
      %v3709 = vpop.f32.mrf.mxu0
      %v3710 = vadd.f32 0.0, %v3709
      %v3711 = vpop.f32.mrf.mxu0
      %v3712 = vadd.f32 0.0, %v3711
      %3713 = vdwg.mxu0
      %v3714 = vadd.f32 %v3581, %v3635
      %v3715 = vadd.f32 %v3582, %v3637
      %v3716 = vadd.f32 %v3583, %v3640
      %v3717 = vadd.f32 %v3584, %v3642
      %v3718 = vadd.f32 %v3585, %v3645
      %v3719 = vadd.f32 %v3586, %v3647
      %v3720 = vadd.f32 %v3587, %v3650
      %v3721 = vadd.f32 %v3588, %v3652
      %v3722 = vadd.f32 %v3589, %v3655
      %v3723 = vadd.f32 %v3590, %v3657
      %v3724 = vadd.f32 %v3591, %v3660
      %v3725 = vadd.f32 %v3592, %v3662
      %v3726 = vadd.f32 %v3593, %v3665
      %v3727 = vadd.f32 %v3594, %v3667
      %v3728 = vadd.f32 %v3595, %v3670
      %v3729 = vadd.f32 %v3596, %v3672
      %v3730 = vadd.f32 %v3597, %v3675
      %v3731 = vadd.f32 %v3598, %v3677
      %v3732 = vadd.f32 %v3599, %v3680
      %v3733 = vadd.f32 %v3600, %v3682
      %v3734 = vadd.f32 %v3601, %v3685
      %v3735 = vadd.f32 %v3602, %v3687
      %v3736 = vadd.f32 %v3603, %v3690
      %v3737 = vadd.f32 %v3604, %v3692
      %v3738 = vadd.f32 %v3605, %v3695
      %v3739 = vadd.f32 %v3606, %v3697
      %v3740 = vadd.f32 %v3607, %v3700
      %v3741 = vadd.f32 %v3608, %v3702
      %v3742 = vadd.f32 %v3609, %v3705
      %v3743 = vadd.f32 %v3610, %v3707
      %v3744 = vadd.f32 %v3611, %v3710
      %v3745 = vadd.f32 %v3612, %v3712
      %v3746 = vld [vmem:[%s384] sm:$0xff]
      %v3747 = vld [vmem:[%s384 + $0x8] sm:$0xff]
      %v3748 = vld [vmem:[%s384 + $0x10] sm:$0x3]
      %v3749 = vld [vmem:[%s384 + $0x18] sm:$0xff]
      %v3750 = vld [vmem:[%s384 + $0x20] sm:$0xff]
      %v3751 = vld [vmem:[%s384 + $0x28] sm:$0x3]
      %v3752 = vld [vmem:[%s384 + $0x30] sm:$0xff]
      %v3753 = vld [vmem:[%s384 + $0x38] sm:$0xff]
      %v3754 = vld [vmem:[%s384 + $0x40] sm:$0x3]
      %v3755 = vld [vmem:[%s384 + $0x48] sm:$0xff]
      %v3756 = vld [vmem:[%s384 + $0x50] sm:$0xff]
      %v3757 = vld [vmem:[%s384 + $0x58] sm:$0x3]
      %v3758 = vld [vmem:[%s384 + $0x60] sm:$0xff]
      %v3759 = vld [vmem:[%s384 + $0x68] sm:$0xff]
      %v3760 = vld [vmem:[%s384 + $0x70] sm:$0x3]
      %v3761 = vld [vmem:[%s384 + $0x78] sm:$0xff]
      %v3762 = vld [vmem:[%s384 + $0x80] sm:$0xff]
      %v3763 = vld [vmem:[%s384 + $0x88] sm:$0x3]
      %v3764 = vld [vmem:[%s384 + $0x90] sm:$0xff]
      %v3765 = vld [vmem:[%s384 + $0x98] sm:$0xff]
      %v3766 = vld [vmem:[%s384 + $0xa0] sm:$0x3]
      %v3767 = vld [vmem:[%s384 + $0xa8] sm:$0xff]
      %v3768 = vld [vmem:[%s384 + $0xb0] sm:$0xff]
      %v3769 = vld [vmem:[%s384 + $0xb8] sm:$0x3]
      %v3770 = vld [vmem:[%s384 + $0xc0] sm:$0xff]
      %v3771 = vld [vmem:[%s384 + $0xc8] sm:$0xff]
      %v3772 = vld [vmem:[%s384 + $0xd0] sm:$0x3]
      %v3773 = vld [vmem:[%s384 + $0xd8] sm:$0xff]
      %v3774 = vld [vmem:[%s384 + $0xe0] sm:$0xff]
      %v3775 = vld [vmem:[%s384 + $0xe8] sm:$0x3]
      %v3776 = vld [vmem:[%s384 + $0xf0] sm:$0xff]
      %v3777 = vld [vmem:[%s384 + $0xf8] sm:$0xff]
      %v3778 = vld [vmem:[%s384 + $0x100] sm:$0x3]
      %v3779 = vld [vmem:[%s384 + $0x108] sm:$0xff]
      %v3780 = vld [vmem:[%s384 + $0x110] sm:$0xff]
      %v3781 = vld [vmem:[%s384 + $0x118] sm:$0x3]
      %v3782 = vld [vmem:[%s384 + $0x120] sm:$0xff]
      %v3783 = vld [vmem:[%s384 + $0x128] sm:$0xff]
      %v3784 = vld [vmem:[%s384 + $0x130] sm:$0x3]
      %v3785 = vld [vmem:[%s384 + $0x138] sm:$0xff]
      %v3786 = vld [vmem:[%s384 + $0x140] sm:$0xff]
      %v3787 = vld [vmem:[%s384 + $0x148] sm:$0x3]
      %v3788 = vld [vmem:[%s384 + $0x150] sm:$0xff]
      %v3789 = vld [vmem:[%s384 + $0x158] sm:$0xff]
      %v3790 = vld [vmem:[%s384 + $0x160] sm:$0x3]
      %v3791 = vld [vmem:[%s384 + $0x168] sm:$0xff]
      %v3792 = vld [vmem:[%s384 + $0x170] sm:$0xff]
      %v3793 = vld [vmem:[%s384 + $0x178] sm:$0x3]
      %v3794 = vld [vmem:[%s384 + $0x180] sm:$0xff]
      %v3795 = vld [vmem:[%s384 + $0x188] sm:$0xff]
      %v3796 = vld [vmem:[%s384 + $0x190] sm:$0x3]
      %v3797 = vld [vmem:[%s384 + $0x198] sm:$0xff]
      %v3798 = vld [vmem:[%s384 + $0x1a0] sm:$0xff]
      %v3799 = vld [vmem:[%s384 + $0x1a8] sm:$0x3]
      %v3800 = vpack.c.bf16 %v3747, %v3746
      %v3801 = vpack.c.bf16 %v3750, %v3749
      %v3802 = vpack.c.bf16 %v3753, %v3752
      %v3803 = vpack.c.bf16 %v3756, %v3755
      %v3804 = vpack.c.bf16 %v3759, %v3758
      %v3805 = vpack.c.bf16 %v3762, %v3761
      %v3806 = vpack.c.bf16 %v3765, %v3764
      %v3807 = vpack.c.bf16 %v3768, %v3767
      %v3808 = vpack.c.bf16 %v3771, %v3770
      %v3809 = vpack.c.bf16 %v3774, %v3773
      %v3810 = vpack.c.bf16 %v3777, %v3776
      %v3811 = vpack.c.bf16 %v3780, %v3779
      %v3812 = vpack.c.bf16 %v3783, %v3782
      %v3813 = vpack.c.bf16 %v3786, %v3785
      %v3814 = vpack.c.bf16 %v3789, %v3788
      %v3815 = vpack.c.bf16 %v3792, %v3791
      %v3816 = vpack.c.bf16 %v442, %v441
      %v3818 = vsel %vm708, %v3800, 0
      %v3821 = vsel %vm708, %v3801, 0
      %v3824 = vsel %vm708, %v3802, 0
      %v3827 = vsel %vm708, %v3803, 0
      %v3830 = vsel %vm708, %v3804, 0
      %v3833 = vsel %vm708, %v3805, 0
      %v3836 = vsel %vm708, %v3806, 0
      %v3839 = vsel %vm708, %v3807, 0
      %v3842 = vsel %vm708, %v3808, 0
      %v3845 = vsel %vm708, %v3809, 0
      %v3848 = vsel %vm708, %v3810, 0
      %v3851 = vsel %vm708, %v3811, 0
      %v3854 = vsel %vm708, %v3812, 0
      %v3857 = vsel %vm708, %v3813, 0
      %v3860 = vsel %vm708, %v3814, 0
      %v3863 = vsel %vm708, %v3815, 0
      %3865 = vmatpush.bf16.msra.mxu0 0
      %3866 = vmatpush.bf16.msra.mxu0 0
      %3867 = vmatpush.bf16.msra.mxu0 0
      %3868 = vmatpush.bf16.msra.mxu0 0
      %3869 = vmatpush.bf16.msra.mxu0 0
      %3870 = vmatpush.bf16.msra.mxu0 0
      %3871 = vmatpush.bf16.msra.mxu0 0
      %3872 = vmatpush.bf16.msra.mxu0 %v3816
      %3873 = vmatmul.bf16.gmra.mxu0 %v3818
      %v3874 = vpop.f32.mrf.mxu0
      %v3875 = vadd.f32 0.0, %v3874
      %v3876 = vpop.f32.mrf.mxu0
      %v3877 = vadd.f32 0.0, %v3876
      %3878 = vmatmul.bf16.gmra.mxu0 %v3821
      %v3879 = vpop.f32.mrf.mxu0
      %v3880 = vadd.f32 0.0, %v3879
      %v3881 = vpop.f32.mrf.mxu0
      %v3882 = vadd.f32 0.0, %v3881
      %3883 = vmatmul.bf16.gmra.mxu0 %v3824
      %v3884 = vpop.f32.mrf.mxu0
      %v3885 = vadd.f32 0.0, %v3884
      %v3886 = vpop.f32.mrf.mxu0
      %v3887 = vadd.f32 0.0, %v3886
      %3888 = vmatmul.bf16.gmra.mxu0 %v3827
      %v3889 = vpop.f32.mrf.mxu0
      %v3890 = vadd.f32 0.0, %v3889
      %v3891 = vpop.f32.mrf.mxu0
      %v3892 = vadd.f32 0.0, %v3891
      %3893 = vmatmul.bf16.gmra.mxu0 %v3830
      %v3894 = vpop.f32.mrf.mxu0
      %v3895 = vadd.f32 0.0, %v3894
      %v3896 = vpop.f32.mrf.mxu0
      %v3897 = vadd.f32 0.0, %v3896
      %3898 = vmatmul.bf16.gmra.mxu0 %v3833
      %v3899 = vpop.f32.mrf.mxu0
      %v3900 = vadd.f32 0.0, %v3899
      %v3901 = vpop.f32.mrf.mxu0
      %v3902 = vadd.f32 0.0, %v3901
      %3903 = vmatmul.bf16.gmra.mxu0 %v3836
      %v3904 = vpop.f32.mrf.mxu0
      %v3905 = vadd.f32 0.0, %v3904
      %v3906 = vpop.f32.mrf.mxu0
      %v3907 = vadd.f32 0.0, %v3906
      %3908 = vmatmul.bf16.gmra.mxu0 %v3839
      %v3909 = vpop.f32.mrf.mxu0
      %v3910 = vadd.f32 0.0, %v3909
      %v3911 = vpop.f32.mrf.mxu0
      %v3912 = vadd.f32 0.0, %v3911
      %3913 = vmatmul.bf16.gmra.mxu0 %v3842
      %v3914 = vpop.f32.mrf.mxu0
      %v3915 = vadd.f32 0.0, %v3914
      %v3916 = vpop.f32.mrf.mxu0
      %v3917 = vadd.f32 0.0, %v3916
      %3918 = vmatmul.bf16.gmra.mxu0 %v3845
      %v3919 = vpop.f32.mrf.mxu0
      %v3920 = vadd.f32 0.0, %v3919
      %v3921 = vpop.f32.mrf.mxu0
      %v3922 = vadd.f32 0.0, %v3921
      %3923 = vmatmul.bf16.gmra.mxu0 %v3848
      %v3924 = vpop.f32.mrf.mxu0
      %v3925 = vadd.f32 0.0, %v3924
      %v3926 = vpop.f32.mrf.mxu0
      %v3927 = vadd.f32 0.0, %v3926
      %3928 = vmatmul.bf16.gmra.mxu0 %v3851
      %v3929 = vpop.f32.mrf.mxu0
      %v3930 = vadd.f32 0.0, %v3929
      %v3931 = vpop.f32.mrf.mxu0
      %v3932 = vadd.f32 0.0, %v3931
      %3933 = vmatmul.bf16.gmra.mxu0 %v3854
      %v3934 = vpop.f32.mrf.mxu0
      %v3935 = vadd.f32 0.0, %v3934
      %v3936 = vpop.f32.mrf.mxu0
      %v3937 = vadd.f32 0.0, %v3936
      %3938 = vmatmul.bf16.gmra.mxu0 %v3857
      %v3939 = vpop.f32.mrf.mxu0
      %v3940 = vadd.f32 0.0, %v3939
      %v3941 = vpop.f32.mrf.mxu0
      %v3942 = vadd.f32 0.0, %v3941
      %3943 = vmatmul.bf16.gmra.mxu0 %v3860
      %v3944 = vpop.f32.mrf.mxu0
      %v3945 = vadd.f32 0.0, %v3944
      %v3946 = vpop.f32.mrf.mxu0
      %v3947 = vadd.f32 0.0, %v3946
      %3948 = vmatmul.bf16.gmra.mxu0 %v3863
      %v3949 = vpop.f32.mrf.mxu0
      %v3950 = vadd.f32 0.0, %v3949
      %v3951 = vpop.f32.mrf.mxu0
      %v3952 = vadd.f32 0.0, %v3951
      %3953 = vdwg.mxu0
      %v3954 = vadd.f32 %v3714, %v3875
      %v3955 = vadd.f32 %v3715, %v3877
      %v3956 = vadd.f32 %v3716, %v3880
      %v3957 = vadd.f32 %v3717, %v3882
      %v3958 = vadd.f32 %v3718, %v3885
      %v3959 = vadd.f32 %v3719, %v3887
      %v3960 = vadd.f32 %v3720, %v3890
      %v3961 = vadd.f32 %v3721, %v3892
      %v3962 = vadd.f32 %v3722, %v3895
      %v3963 = vadd.f32 %v3723, %v3897
      %v3964 = vadd.f32 %v3724, %v3900
      %v3965 = vadd.f32 %v3725, %v3902
      %v3966 = vadd.f32 %v3726, %v3905
      %v3967 = vadd.f32 %v3727, %v3907
      %v3968 = vadd.f32 %v3728, %v3910
      %v3969 = vadd.f32 %v3729, %v3912
      %v3970 = vadd.f32 %v3730, %v3915
      %v3971 = vadd.f32 %v3731, %v3917
      %v3972 = vadd.f32 %v3732, %v3920
      %v3973 = vadd.f32 %v3733, %v3922
      %v3974 = vadd.f32 %v3734, %v3925
      %v3975 = vadd.f32 %v3735, %v3927
      %v3976 = vadd.f32 %v3736, %v3930
      %v3977 = vadd.f32 %v3737, %v3932
      %v3978 = vadd.f32 %v3738, %v3935
      %v3979 = vadd.f32 %v3739, %v3937
      %v3980 = vadd.f32 %v3740, %v3940
      %v3981 = vadd.f32 %v3741, %v3942
      %v3982 = vadd.f32 %v3742, %v3945
      %v3983 = vadd.f32 %v3743, %v3947
      %v3984 = vadd.f32 %v3744, %v3950
      %v3985 = vadd.f32 %v3745, %v3952
      %v4034 = vrot.slane %v3746, 1
      %v4035 = vrot.slane %v3747, 1
      %v4036 = vsel %vm578, %v4034, %v4035
      %v4037 = vrot.slane %v3748, 1
      %v4038 = vsel %vm578, %v4035, %v4037
      %v4039 = vrot.slane %v3749, 1
      %v4040 = vrot.slane %v3750, 1
      %v4041 = vsel %vm578, %v4039, %v4040
      %v4042 = vrot.slane %v3751, 1
      %v4043 = vsel %vm578, %v4040, %v4042
      %v4044 = vrot.slane %v3752, 1
      %v4045 = vrot.slane %v3753, 1
      %v4046 = vsel %vm578, %v4044, %v4045
      %v4047 = vrot.slane %v3754, 1
      %v4048 = vsel %vm578, %v4045, %v4047
      %v4049 = vrot.slane %v3755, 1
      %v4050 = vrot.slane %v3756, 1
      %v4051 = vsel %vm578, %v4049, %v4050
      %v4052 = vrot.slane %v3757, 1
      %v4053 = vsel %vm578, %v4050, %v4052
      %v4054 = vrot.slane %v3758, 1
      %v4055 = vrot.slane %v3759, 1
      %v4056 = vsel %vm578, %v4054, %v4055
      %v4057 = vrot.slane %v3760, 1
      %v4058 = vsel %vm578, %v4055, %v4057
      %v4059 = vrot.slane %v3761, 1
      %v4060 = vrot.slane %v3762, 1
      %v4061 = vsel %vm578, %v4059, %v4060
      %v4062 = vrot.slane %v3763, 1
      %v4063 = vsel %vm578, %v4060, %v4062
      %v4064 = vrot.slane %v3764, 1
      %v4065 = vrot.slane %v3765, 1
      %v4066 = vsel %vm578, %v4064, %v4065
      %v4067 = vrot.slane %v3766, 1
      %v4068 = vsel %vm578, %v4065, %v4067
      %v4069 = vrot.slane %v3767, 1
      %v4070 = vrot.slane %v3768, 1
      %v4071 = vsel %vm578, %v4069, %v4070
      %v4072 = vrot.slane %v3769, 1
      %v4073 = vsel %vm578, %v4070, %v4072
      %v4074 = vrot.slane %v3770, 1
      %v4075 = vrot.slane %v3771, 1
      %v4076 = vsel %vm578, %v4074, %v4075
      %v4077 = vrot.slane %v3772, 1
      %v4078 = vsel %vm578, %v4075, %v4077
      %v4079 = vrot.slane %v3773, 1
      %v4080 = vrot.slane %v3774, 1
      %v4081 = vsel %vm578, %v4079, %v4080
      %v4082 = vrot.slane %v3775, 1
      %v4083 = vsel %vm578, %v4080, %v4082
      %v4084 = vrot.slane %v3776, 1
      %v4085 = vrot.slane %v3777, 1
      %v4086 = vsel %vm578, %v4084, %v4085
      %v4087 = vrot.slane %v3778, 1
      %v4088 = vsel %vm578, %v4085, %v4087
      %v4089 = vrot.slane %v3779, 1
      %v4090 = vrot.slane %v3780, 1
      %v4091 = vsel %vm578, %v4089, %v4090
      %v4092 = vrot.slane %v3781, 1
      %v4093 = vsel %vm578, %v4090, %v4092
      %v4094 = vrot.slane %v3782, 1
      %v4095 = vrot.slane %v3783, 1
      %v4096 = vsel %vm578, %v4094, %v4095
      %v4097 = vrot.slane %v3784, 1
      %v4098 = vsel %vm578, %v4095, %v4097
      %v4099 = vrot.slane %v3785, 1
      %v4100 = vrot.slane %v3786, 1
      %v4101 = vsel %vm578, %v4099, %v4100
      %v4102 = vrot.slane %v3787, 1
      %v4103 = vsel %vm578, %v4100, %v4102
      %v4104 = vrot.slane %v3788, 1
      %v4105 = vrot.slane %v3789, 1
      %v4106 = vsel %vm578, %v4104, %v4105
      %v4107 = vrot.slane %v3790, 1
      %v4108 = vsel %vm578, %v4105, %v4107
      %v4109 = vrot.slane %v3791, 1
      %v4110 = vrot.slane %v3792, 1
      %v4111 = vsel %vm578, %v4109, %v4110
      %v4112 = vrot.slane %v3793, 1
      %v4113 = vsel %vm578, %v4110, %v4112
      %v4146 = vpack.c.bf16 %v4038, %v4036
      %v4147 = vpack.c.bf16 %v4043, %v4041
      %v4148 = vpack.c.bf16 %v4048, %v4046
      %v4149 = vpack.c.bf16 %v4053, %v4051
      %v4150 = vpack.c.bf16 %v4058, %v4056
      %v4151 = vpack.c.bf16 %v4063, %v4061
      %v4152 = vpack.c.bf16 %v4068, %v4066
      %v4153 = vpack.c.bf16 %v4073, %v4071
      %v4154 = vpack.c.bf16 %v4078, %v4076
      %v4155 = vpack.c.bf16 %v4083, %v4081
      %v4156 = vpack.c.bf16 %v4088, %v4086
      %v4157 = vpack.c.bf16 %v4093, %v4091
      %v4158 = vpack.c.bf16 %v4098, %v4096
      %v4159 = vpack.c.bf16 %v4103, %v4101
      %v4160 = vpack.c.bf16 %v4108, %v4106
      %v4161 = vpack.c.bf16 %v4113, %v4111
      %v4162 = vpack.c.bf16 %v444, %v443
      %v4164 = vsel %vm708, %v4146, 0
      %v4167 = vsel %vm708, %v4147, 0
      %v4170 = vsel %vm708, %v4148, 0
      %v4173 = vsel %vm708, %v4149, 0
      %v4176 = vsel %vm708, %v4150, 0
      %v4179 = vsel %vm708, %v4151, 0
      %v4182 = vsel %vm708, %v4152, 0
      %v4185 = vsel %vm708, %v4153, 0
      %v4188 = vsel %vm708, %v4154, 0
      %v4191 = vsel %vm708, %v4155, 0
      %v4194 = vsel %vm708, %v4156, 0
      %v4197 = vsel %vm708, %v4157, 0
      %v4200 = vsel %vm708, %v4158, 0
      %v4203 = vsel %vm708, %v4159, 0
      %v4206 = vsel %vm708, %v4160, 0
      %v4209 = vsel %vm708, %v4161, 0
      %4211 = vmatpush.bf16.msra.mxu0 0
      %4212 = vmatpush.bf16.msra.mxu0 0
      %4213 = vmatpush.bf16.msra.mxu0 0
      %4214 = vmatpush.bf16.msra.mxu0 0
      %4215 = vmatpush.bf16.msra.mxu0 0
      %4216 = vmatpush.bf16.msra.mxu0 0
      %4217 = vmatpush.bf16.msra.mxu0 0
      %4218 = vmatpush.bf16.msra.mxu0 %v4162
      %4219 = vmatmul.bf16.gmra.mxu0 %v4164
      %v4220 = vpop.f32.mrf.mxu0
      %v4221 = vadd.f32 0.0, %v4220
      %v4222 = vpop.f32.mrf.mxu0
      %v4223 = vadd.f32 0.0, %v4222
      %4224 = vmatmul.bf16.gmra.mxu0 %v4167
      %v4225 = vpop.f32.mrf.mxu0
      %v4226 = vadd.f32 0.0, %v4225
      %v4227 = vpop.f32.mrf.mxu0
      %v4228 = vadd.f32 0.0, %v4227
      %4229 = vmatmul.bf16.gmra.mxu0 %v4170
      %v4230 = vpop.f32.mrf.mxu0
      %v4231 = vadd.f32 0.0, %v4230
      %v4232 = vpop.f32.mrf.mxu0
      %v4233 = vadd.f32 0.0, %v4232
      %4234 = vmatmul.bf16.gmra.mxu0 %v4173
      %v4235 = vpop.f32.mrf.mxu0
      %v4236 = vadd.f32 0.0, %v4235
      %v4237 = vpop.f32.mrf.mxu0
      %v4238 = vadd.f32 0.0, %v4237
      %4239 = vmatmul.bf16.gmra.mxu0 %v4176
      %v4240 = vpop.f32.mrf.mxu0
      %v4241 = vadd.f32 0.0, %v4240
      %v4242 = vpop.f32.mrf.mxu0
      %v4243 = vadd.f32 0.0, %v4242
      %4244 = vmatmul.bf16.gmra.mxu0 %v4179
      %v4245 = vpop.f32.mrf.mxu0
      %v4246 = vadd.f32 0.0, %v4245
      %v4247 = vpop.f32.mrf.mxu0
      %v4248 = vadd.f32 0.0, %v4247
      %4249 = vmatmul.bf16.gmra.mxu0 %v4182
      %v4250 = vpop.f32.mrf.mxu0
      %v4251 = vadd.f32 0.0, %v4250
      %v4252 = vpop.f32.mrf.mxu0
      %v4253 = vadd.f32 0.0, %v4252
      %4254 = vmatmul.bf16.gmra.mxu0 %v4185
      %v4255 = vpop.f32.mrf.mxu0
      %v4256 = vadd.f32 0.0, %v4255
      %v4257 = vpop.f32.mrf.mxu0
      %v4258 = vadd.f32 0.0, %v4257
      %4259 = vmatmul.bf16.gmra.mxu0 %v4188
      %v4260 = vpop.f32.mrf.mxu0
      %v4261 = vadd.f32 0.0, %v4260
      %v4262 = vpop.f32.mrf.mxu0
      %v4263 = vadd.f32 0.0, %v4262
      %4264 = vmatmul.bf16.gmra.mxu0 %v4191
      %v4265 = vpop.f32.mrf.mxu0
      %v4266 = vadd.f32 0.0, %v4265
      %v4267 = vpop.f32.mrf.mxu0
      %v4268 = vadd.f32 0.0, %v4267
      %4269 = vmatmul.bf16.gmra.mxu0 %v4194
      %v4270 = vpop.f32.mrf.mxu0
      %v4271 = vadd.f32 0.0, %v4270
      %v4272 = vpop.f32.mrf.mxu0
      %v4273 = vadd.f32 0.0, %v4272
      %4274 = vmatmul.bf16.gmra.mxu0 %v4197
      %v4275 = vpop.f32.mrf.mxu0
      %v4276 = vadd.f32 0.0, %v4275
      %v4277 = vpop.f32.mrf.mxu0
      %v4278 = vadd.f32 0.0, %v4277
      %4279 = vmatmul.bf16.gmra.mxu0 %v4200
      %v4280 = vpop.f32.mrf.mxu0
      %v4281 = vadd.f32 0.0, %v4280
      %v4282 = vpop.f32.mrf.mxu0
      %v4283 = vadd.f32 0.0, %v4282
      %4284 = vmatmul.bf16.gmra.mxu0 %v4203
      %v4285 = vpop.f32.mrf.mxu0
      %v4286 = vadd.f32 0.0, %v4285
      %v4287 = vpop.f32.mrf.mxu0
      %v4288 = vadd.f32 0.0, %v4287
      %4289 = vmatmul.bf16.gmra.mxu0 %v4206
      %v4290 = vpop.f32.mrf.mxu0
      %v4291 = vadd.f32 0.0, %v4290
      %v4292 = vpop.f32.mrf.mxu0
      %v4293 = vadd.f32 0.0, %v4292
      %4294 = vmatmul.bf16.gmra.mxu0 %v4209
      %v4295 = vpop.f32.mrf.mxu0
      %v4296 = vadd.f32 0.0, %v4295
      %v4297 = vpop.f32.mrf.mxu0
      %v4298 = vadd.f32 0.0, %v4297
      %4299 = vdwg.mxu0
      %v4300 = vadd.f32 %v3954, %v4221
      %v4301 = vadd.f32 %v3955, %v4223
      %v4302 = vadd.f32 %v3956, %v4226
      %v4303 = vadd.f32 %v3957, %v4228
      %v4304 = vadd.f32 %v3958, %v4231
      %v4305 = vadd.f32 %v3959, %v4233
      %v4306 = vadd.f32 %v3960, %v4236
      %v4307 = vadd.f32 %v3961, %v4238
      %v4308 = vadd.f32 %v3962, %v4241
      %v4309 = vadd.f32 %v3963, %v4243
      %v4310 = vadd.f32 %v3964, %v4246
      %v4311 = vadd.f32 %v3965, %v4248
      %v4312 = vadd.f32 %v3966, %v4251
      %v4313 = vadd.f32 %v3967, %v4253
      %v4314 = vadd.f32 %v3968, %v4256
      %v4315 = vadd.f32 %v3969, %v4258
      %v4316 = vadd.f32 %v3970, %v4261
      %v4317 = vadd.f32 %v3971, %v4263
      %v4318 = vadd.f32 %v3972, %v4266
      %v4319 = vadd.f32 %v3973, %v4268
      %v4320 = vadd.f32 %v3974, %v4271
      %v4321 = vadd.f32 %v3975, %v4273
      %v4322 = vadd.f32 %v3976, %v4276
      %v4323 = vadd.f32 %v3977, %v4278
      %v4324 = vadd.f32 %v3978, %v4281
      %v4325 = vadd.f32 %v3979, %v4283
      %v4326 = vadd.f32 %v3980, %v4286
      %v4327 = vadd.f32 %v3981, %v4288
      %v4328 = vadd.f32 %v3982, %v4291
      %v4329 = vadd.f32 %v3983, %v4293
      %v4330 = vadd.f32 %v3984, %v4296
      %v4331 = vadd.f32 %v3985, %v4298
      %v4332 = vrot.slane %v3746, 2
      %v4333 = vrot.slane %v3747, 2
      %v4334 = vsel %vm983, %v4332, %v4333
      %v4335 = vrot.slane %v3748, 2
      %v4336 = vsel %vm983, %v4333, %v4335
      %v4337 = vrot.slane %v3749, 2
      %v4338 = vrot.slane %v3750, 2
      %v4339 = vsel %vm983, %v4337, %v4338
      %v4340 = vrot.slane %v3751, 2
      %v4341 = vsel %vm983, %v4338, %v4340
      %v4342 = vrot.slane %v3752, 2
      %v4343 = vrot.slane %v3753, 2
      %v4344 = vsel %vm983, %v4342, %v4343
      %v4345 = vrot.slane %v3754, 2
      %v4346 = vsel %vm983, %v4343, %v4345
      %v4347 = vrot.slane %v3755, 2
      %v4348 = vrot.slane %v3756, 2
      %v4349 = vsel %vm983, %v4347, %v4348
      %v4350 = vrot.slane %v3757, 2
      %v4351 = vsel %vm983, %v4348, %v4350
      %v4352 = vrot.slane %v3758, 2
      %v4353 = vrot.slane %v3759, 2
      %v4354 = vsel %vm983, %v4352, %v4353
      %v4355 = vrot.slane %v3760, 2
      %v4356 = vsel %vm983, %v4353, %v4355
      %v4357 = vrot.slane %v3761, 2
      %v4358 = vrot.slane %v3762, 2
      %v4359 = vsel %vm983, %v4357, %v4358
      %v4360 = vrot.slane %v3763, 2
      %v4361 = vsel %vm983, %v4358, %v4360
      %v4362 = vrot.slane %v3764, 2
      %v4363 = vrot.slane %v3765, 2
      %v4364 = vsel %vm983, %v4362, %v4363
      %v4365 = vrot.slane %v3766, 2
      %v4366 = vsel %vm983, %v4363, %v4365
      %v4367 = vrot.slane %v3767, 2
      %v4368 = vrot.slane %v3768, 2
      %v4369 = vsel %vm983, %v4367, %v4368
      %v4370 = vrot.slane %v3769, 2
      %v4371 = vsel %vm983, %v4368, %v4370
      %v4372 = vrot.slane %v3770, 2
      %v4373 = vrot.slane %v3771, 2
      %v4374 = vsel %vm983, %v4372, %v4373
      %v4375 = vrot.slane %v3772, 2
      %v4376 = vsel %vm983, %v4373, %v4375
      %v4377 = vrot.slane %v3773, 2
      %v4378 = vrot.slane %v3774, 2
      %v4379 = vsel %vm983, %v4377, %v4378
      %v4380 = vrot.slane %v3775, 2
      %v4381 = vsel %vm983, %v4378, %v4380
      %v4382 = vrot.slane %v3776, 2
      %v4383 = vrot.slane %v3777, 2
      %v4384 = vsel %vm983, %v4382, %v4383
      %v4385 = vrot.slane %v3778, 2
      %v4386 = vsel %vm983, %v4383, %v4385
      %v4387 = vrot.slane %v3779, 2
      %v4388 = vrot.slane %v3780, 2
      %v4389 = vsel %vm983, %v4387, %v4388
      %v4390 = vrot.slane %v3781, 2
      %v4391 = vsel %vm983, %v4388, %v4390
      %v4392 = vrot.slane %v3782, 2
      %v4393 = vrot.slane %v3783, 2
      %v4394 = vsel %vm983, %v4392, %v4393
      %v4395 = vrot.slane %v3784, 2
      %v4396 = vsel %vm983, %v4393, %v4395
      %v4397 = vrot.slane %v3785, 2
      %v4398 = vrot.slane %v3786, 2
      %v4399 = vsel %vm983, %v4397, %v4398
      %v4400 = vrot.slane %v3787, 2
      %v4401 = vsel %vm983, %v4398, %v4400
      %v4402 = vrot.slane %v3788, 2
      %v4403 = vrot.slane %v3789, 2
      %v4404 = vsel %vm983, %v4402, %v4403
      %v4405 = vrot.slane %v3790, 2
      %v4406 = vsel %vm983, %v4403, %v4405
      %v4407 = vrot.slane %v3791, 2
      %v4408 = vrot.slane %v3792, 2
      %v4409 = vsel %vm983, %v4407, %v4408
      %v4410 = vrot.slane %v3793, 2
      %v4411 = vsel %vm983, %v4408, %v4410
      %v4444 = vpack.c.bf16 %v4336, %v4334
      %v4445 = vpack.c.bf16 %v4341, %v4339
      %v4446 = vpack.c.bf16 %v4346, %v4344
      %v4447 = vpack.c.bf16 %v4351, %v4349
      %v4448 = vpack.c.bf16 %v4356, %v4354
      %v4449 = vpack.c.bf16 %v4361, %v4359
      %v4450 = vpack.c.bf16 %v4366, %v4364
      %v4451 = vpack.c.bf16 %v4371, %v4369
      %v4452 = vpack.c.bf16 %v4376, %v4374
      %v4453 = vpack.c.bf16 %v4381, %v4379
      %v4454 = vpack.c.bf16 %v4386, %v4384
      %v4455 = vpack.c.bf16 %v4391, %v4389
      %v4456 = vpack.c.bf16 %v4396, %v4394
      %v4457 = vpack.c.bf16 %v4401, %v4399
      %v4458 = vpack.c.bf16 %v4406, %v4404
      %v4459 = vpack.c.bf16 %v4411, %v4409
      %v4460 = vpack.c.bf16 %v446, %v445
      %v4462 = vsel %vm708, %v4444, 0
      %v4465 = vsel %vm708, %v4445, 0
      %v4468 = vsel %vm708, %v4446, 0
      %v4471 = vsel %vm708, %v4447, 0
      %v4474 = vsel %vm708, %v4448, 0
      %v4477 = vsel %vm708, %v4449, 0
      %v4480 = vsel %vm708, %v4450, 0
      %v4483 = vsel %vm708, %v4451, 0
      %v4486 = vsel %vm708, %v4452, 0
      %v4489 = vsel %vm708, %v4453, 0
      %v4492 = vsel %vm708, %v4454, 0
      %v4495 = vsel %vm708, %v4455, 0
      %v4498 = vsel %vm708, %v4456, 0
      %v4501 = vsel %vm708, %v4457, 0
      %v4504 = vsel %vm708, %v4458, 0
      %v4507 = vsel %vm708, %v4459, 0
      %4509 = vmatpush.bf16.msra.mxu0 0
      %4510 = vmatpush.bf16.msra.mxu0 0
      %4511 = vmatpush.bf16.msra.mxu0 0
      %4512 = vmatpush.bf16.msra.mxu0 0
      %4513 = vmatpush.bf16.msra.mxu0 0
      %4514 = vmatpush.bf16.msra.mxu0 0
      %4515 = vmatpush.bf16.msra.mxu0 0
      %4516 = vmatpush.bf16.msra.mxu0 %v4460
      %4517 = vmatmul.bf16.gmra.mxu0 %v4462
      %v4518 = vpop.f32.mrf.mxu0
      %v4519 = vadd.f32 0.0, %v4518
      %v4520 = vpop.f32.mrf.mxu0
      %v4521 = vadd.f32 0.0, %v4520
      %4522 = vmatmul.bf16.gmra.mxu0 %v4465
      %v4523 = vpop.f32.mrf.mxu0
      %v4524 = vadd.f32 0.0, %v4523
      %v4525 = vpop.f32.mrf.mxu0
      %v4526 = vadd.f32 0.0, %v4525
      %4527 = vmatmul.bf16.gmra.mxu0 %v4468
      %v4528 = vpop.f32.mrf.mxu0
      %v4529 = vadd.f32 0.0, %v4528
      %v4530 = vpop.f32.mrf.mxu0
      %v4531 = vadd.f32 0.0, %v4530
      %4532 = vmatmul.bf16.gmra.mxu0 %v4471
      %v4533 = vpop.f32.mrf.mxu0
      %v4534 = vadd.f32 0.0, %v4533
      %v4535 = vpop.f32.mrf.mxu0
      %v4536 = vadd.f32 0.0, %v4535
      %4537 = vmatmul.bf16.gmra.mxu0 %v4474
      %v4538 = vpop.f32.mrf.mxu0
      %v4539 = vadd.f32 0.0, %v4538
      %v4540 = vpop.f32.mrf.mxu0
      %v4541 = vadd.f32 0.0, %v4540
      %4542 = vmatmul.bf16.gmra.mxu0 %v4477
      %v4543 = vpop.f32.mrf.mxu0
      %v4544 = vadd.f32 0.0, %v4543
      %v4545 = vpop.f32.mrf.mxu0
      %v4546 = vadd.f32 0.0, %v4545
      %4547 = vmatmul.bf16.gmra.mxu0 %v4480
      %v4548 = vpop.f32.mrf.mxu0
      %v4549 = vadd.f32 0.0, %v4548
      %v4550 = vpop.f32.mrf.mxu0
      %v4551 = vadd.f32 0.0, %v4550
      %4552 = vmatmul.bf16.gmra.mxu0 %v4483
      %v4553 = vpop.f32.mrf.mxu0
      %v4554 = vadd.f32 0.0, %v4553
      %v4555 = vpop.f32.mrf.mxu0
      %v4556 = vadd.f32 0.0, %v4555
      %4557 = vmatmul.bf16.gmra.mxu0 %v4486
      %v4558 = vpop.f32.mrf.mxu0
      %v4559 = vadd.f32 0.0, %v4558
      %v4560 = vpop.f32.mrf.mxu0
      %v4561 = vadd.f32 0.0, %v4560
      %4562 = vmatmul.bf16.gmra.mxu0 %v4489
      %v4563 = vpop.f32.mrf.mxu0
      %v4564 = vadd.f32 0.0, %v4563
      %v4565 = vpop.f32.mrf.mxu0
      %v4566 = vadd.f32 0.0, %v4565
      %4567 = vmatmul.bf16.gmra.mxu0 %v4492
      %v4568 = vpop.f32.mrf.mxu0
      %v4569 = vadd.f32 0.0, %v4568
      %v4570 = vpop.f32.mrf.mxu0
      %v4571 = vadd.f32 0.0, %v4570
      %4572 = vmatmul.bf16.gmra.mxu0 %v4495
      %v4573 = vpop.f32.mrf.mxu0
      %v4574 = vadd.f32 0.0, %v4573
      %v4575 = vpop.f32.mrf.mxu0
      %v4576 = vadd.f32 0.0, %v4575
      %4577 = vmatmul.bf16.gmra.mxu0 %v4498
      %v4578 = vpop.f32.mrf.mxu0
      %v4579 = vadd.f32 0.0, %v4578
      %v4580 = vpop.f32.mrf.mxu0
      %v4581 = vadd.f32 0.0, %v4580
      %4582 = vmatmul.bf16.gmra.mxu0 %v4501
      %v4583 = vpop.f32.mrf.mxu0
      %v4584 = vadd.f32 0.0, %v4583
      %v4585 = vpop.f32.mrf.mxu0
      %v4586 = vadd.f32 0.0, %v4585
      %4587 = vmatmul.bf16.gmra.mxu0 %v4504
      %v4588 = vpop.f32.mrf.mxu0
      %v4589 = vadd.f32 0.0, %v4588
      %v4590 = vpop.f32.mrf.mxu0
      %v4591 = vadd.f32 0.0, %v4590
      %4592 = vmatmul.bf16.gmra.mxu0 %v4507
      %v4593 = vpop.f32.mrf.mxu0
      %v4594 = vadd.f32 0.0, %v4593
      %v4595 = vpop.f32.mrf.mxu0
      %v4596 = vadd.f32 0.0, %v4595
      %4597 = vdwg.mxu0
      %v4598 = vadd.f32 %v4300, %v4519
      %v4599 = vadd.f32 %v4301, %v4521
      %v4600 = vadd.f32 %v4302, %v4524
      %v4601 = vadd.f32 %v4303, %v4526
      %v4602 = vadd.f32 %v4304, %v4529
      %v4603 = vadd.f32 %v4305, %v4531
      %v4604 = vadd.f32 %v4306, %v4534
      %v4605 = vadd.f32 %v4307, %v4536
      %v4606 = vadd.f32 %v4308, %v4539
      %v4607 = vadd.f32 %v4309, %v4541
      %v4608 = vadd.f32 %v4310, %v4544
      %v4609 = vadd.f32 %v4311, %v4546
      %v4610 = vadd.f32 %v4312, %v4549
      %v4611 = vadd.f32 %v4313, %v4551
      %v4612 = vadd.f32 %v4314, %v4554
      %v4613 = vadd.f32 %v4315, %v4556
      %v4614 = vadd.f32 %v4316, %v4559
      %v4615 = vadd.f32 %v4317, %v4561
      %v4616 = vadd.f32 %v4318, %v4564
      %v4617 = vadd.f32 %v4319, %v4566
      %v4618 = vadd.f32 %v4320, %v4569
      %v4619 = vadd.f32 %v4321, %v4571
      %v4620 = vadd.f32 %v4322, %v4574
      %v4621 = vadd.f32 %v4323, %v4576
      %v4622 = vadd.f32 %v4324, %v4579
      %v4623 = vadd.f32 %v4325, %v4581
      %v4624 = vadd.f32 %v4326, %v4584
      %v4625 = vadd.f32 %v4327, %v4586
      %v4626 = vadd.f32 %v4328, %v4589
      %v4627 = vadd.f32 %v4329, %v4591
      %v4628 = vadd.f32 %v4330, %v4594
      %v4629 = vadd.f32 %v4331, %v4596
      %v4630 = vpack.c.bf16 %v3795, %v3794
      %v4631 = vpack.c.bf16 %v448, %v447
      %v4633 = vsel %vm708, %v4630, 0
      %4635 = vmatpush.bf16.msra.mxu0 0
      %4636 = vmatpush.bf16.msra.mxu0 0
      %4637 = vmatpush.bf16.msra.mxu0 0
      %4638 = vmatpush.bf16.msra.mxu0 0
      %4639 = vmatpush.bf16.msra.mxu0 0
      %4640 = vmatpush.bf16.msra.mxu0 0
      %4641 = vmatpush.bf16.msra.mxu0 0
      %4642 = vmatpush.bf16.msra.mxu0 %v4631
      %4643 = vmatmul.bf16.gmra.mxu0 %v3821
      %v4644 = vpop.f32.mrf.mxu0
      %v4645 = vadd.f32 0.0, %v4644
      %v4646 = vpop.f32.mrf.mxu0
      %v4647 = vadd.f32 0.0, %v4646
      %4648 = vmatmul.bf16.gmra.mxu0 %v3824
      %v4649 = vpop.f32.mrf.mxu0
      %v4650 = vadd.f32 0.0, %v4649
      %v4651 = vpop.f32.mrf.mxu0
      %v4652 = vadd.f32 0.0, %v4651
      %4653 = vmatmul.bf16.gmra.mxu0 %v3827
      %v4654 = vpop.f32.mrf.mxu0
      %v4655 = vadd.f32 0.0, %v4654
      %v4656 = vpop.f32.mrf.mxu0
      %v4657 = vadd.f32 0.0, %v4656
      %4658 = vmatmul.bf16.gmra.mxu0 %v3830
      %v4659 = vpop.f32.mrf.mxu0
      %v4660 = vadd.f32 0.0, %v4659
      %v4661 = vpop.f32.mrf.mxu0
      %v4662 = vadd.f32 0.0, %v4661
      %4663 = vmatmul.bf16.gmra.mxu0 %v3833
      %v4664 = vpop.f32.mrf.mxu0
      %v4665 = vadd.f32 0.0, %v4664
      %v4666 = vpop.f32.mrf.mxu0
      %v4667 = vadd.f32 0.0, %v4666
      %4668 = vmatmul.bf16.gmra.mxu0 %v3836
      %v4669 = vpop.f32.mrf.mxu0
      %v4670 = vadd.f32 0.0, %v4669
      %v4671 = vpop.f32.mrf.mxu0
      %v4672 = vadd.f32 0.0, %v4671
      %4673 = vmatmul.bf16.gmra.mxu0 %v3839
      %v4674 = vpop.f32.mrf.mxu0
      %v4675 = vadd.f32 0.0, %v4674
      %v4676 = vpop.f32.mrf.mxu0
      %v4677 = vadd.f32 0.0, %v4676
      %4678 = vmatmul.bf16.gmra.mxu0 %v3842
      %v4679 = vpop.f32.mrf.mxu0
      %v4680 = vadd.f32 0.0, %v4679
      %v4681 = vpop.f32.mrf.mxu0
      %v4682 = vadd.f32 0.0, %v4681
      %4683 = vmatmul.bf16.gmra.mxu0 %v3845
      %v4684 = vpop.f32.mrf.mxu0
      %v4685 = vadd.f32 0.0, %v4684
      %v4686 = vpop.f32.mrf.mxu0
      %v4687 = vadd.f32 0.0, %v4686
      %4688 = vmatmul.bf16.gmra.mxu0 %v3848
      %v4689 = vpop.f32.mrf.mxu0
      %v4690 = vadd.f32 0.0, %v4689
      %v4691 = vpop.f32.mrf.mxu0
      %v4692 = vadd.f32 0.0, %v4691
      %4693 = vmatmul.bf16.gmra.mxu0 %v3851
      %v4694 = vpop.f32.mrf.mxu0
      %v4695 = vadd.f32 0.0, %v4694
      %v4696 = vpop.f32.mrf.mxu0
      %v4697 = vadd.f32 0.0, %v4696
      %4698 = vmatmul.bf16.gmra.mxu0 %v3854
      %v4699 = vpop.f32.mrf.mxu0
      %v4700 = vadd.f32 0.0, %v4699
      %v4701 = vpop.f32.mrf.mxu0
      %v4702 = vadd.f32 0.0, %v4701
      %4703 = vmatmul.bf16.gmra.mxu0 %v3857
      %v4704 = vpop.f32.mrf.mxu0
      %v4705 = vadd.f32 0.0, %v4704
      %v4706 = vpop.f32.mrf.mxu0
      %v4707 = vadd.f32 0.0, %v4706
      %4708 = vmatmul.bf16.gmra.mxu0 %v3860
      %v4709 = vpop.f32.mrf.mxu0
      %v4710 = vadd.f32 0.0, %v4709
      %v4711 = vpop.f32.mrf.mxu0
      %v4712 = vadd.f32 0.0, %v4711
      %4713 = vmatmul.bf16.gmra.mxu0 %v3863
      %v4714 = vpop.f32.mrf.mxu0
      %v4715 = vadd.f32 0.0, %v4714
      %v4716 = vpop.f32.mrf.mxu0
      %v4717 = vadd.f32 0.0, %v4716
      %4718 = vmatmul.bf16.gmra.mxu0 %v4633
      %v4719 = vpop.f32.mrf.mxu0
      %v4720 = vadd.f32 0.0, %v4719
      %v4721 = vpop.f32.mrf.mxu0
      %v4722 = vadd.f32 0.0, %v4721
      %4723 = vdwg.mxu0
      %v4724 = vadd.f32 %v4598, %v4645
      %v4725 = vadd.f32 %v4599, %v4647
      %v4726 = vadd.f32 %v4600, %v4650
      %v4727 = vadd.f32 %v4601, %v4652
      %v4728 = vadd.f32 %v4602, %v4655
      %v4729 = vadd.f32 %v4603, %v4657
      %v4730 = vadd.f32 %v4604, %v4660
      %v4731 = vadd.f32 %v4605, %v4662
      %v4732 = vadd.f32 %v4606, %v4665
      %v4733 = vadd.f32 %v4607, %v4667
      %v4734 = vadd.f32 %v4608, %v4670
      %v4735 = vadd.f32 %v4609, %v4672
      %v4736 = vadd.f32 %v4610, %v4675
      %v4737 = vadd.f32 %v4611, %v4677
      %v4738 = vadd.f32 %v4612, %v4680
      %v4739 = vadd.f32 %v4613, %v4682
      %v4740 = vadd.f32 %v4614, %v4685
      %v4741 = vadd.f32 %v4615, %v4687
      %v4742 = vadd.f32 %v4616, %v4690
      %v4743 = vadd.f32 %v4617, %v4692
      %v4744 = vadd.f32 %v4618, %v4695
      %v4745 = vadd.f32 %v4619, %v4697
      %v4746 = vadd.f32 %v4620, %v4700
      %v4747 = vadd.f32 %v4621, %v4702
      %v4748 = vadd.f32 %v4622, %v4705
      %v4749 = vadd.f32 %v4623, %v4707
      %v4750 = vadd.f32 %v4624, %v4710
      %v4751 = vadd.f32 %v4625, %v4712
      %v4752 = vadd.f32 %v4626, %v4715
      %v4753 = vadd.f32 %v4627, %v4717
      %v4754 = vadd.f32 %v4628, %v4720
      %v4755 = vadd.f32 %v4629, %v4722
      %v4759 = vrot.slane %v3794, 1
      %v4760 = vrot.slane %v3795, 1
      %v4761 = vsel %vm578, %v4759, %v4760
      %v4762 = vrot.slane %v3796, 1
      %v4763 = vsel %vm578, %v4760, %v4762
      %v4766 = vpack.c.bf16 %v4763, %v4761
      %v4767 = vpack.c.bf16 %v450, %v449
      %v4769 = vsel %vm708, %v4766, 0
      %4771 = vmatpush.bf16.msra.mxu0 0
      %4772 = vmatpush.bf16.msra.mxu0 0
      %4773 = vmatpush.bf16.msra.mxu0 0
      %4774 = vmatpush.bf16.msra.mxu0 0
      %4775 = vmatpush.bf16.msra.mxu0 0
      %4776 = vmatpush.bf16.msra.mxu0 0
      %4777 = vmatpush.bf16.msra.mxu0 0
      %4778 = vmatpush.bf16.msra.mxu0 %v4767
      %4779 = vmatmul.bf16.gmra.mxu0 %v4167
      %v4780 = vpop.f32.mrf.mxu0
      %v4781 = vadd.f32 0.0, %v4780
      %v4782 = vpop.f32.mrf.mxu0
      %v4783 = vadd.f32 0.0, %v4782
      %4784 = vmatmul.bf16.gmra.mxu0 %v4170
      %v4785 = vpop.f32.mrf.mxu0
      %v4786 = vadd.f32 0.0, %v4785
      %v4787 = vpop.f32.mrf.mxu0
      %v4788 = vadd.f32 0.0, %v4787
      %4789 = vmatmul.bf16.gmra.mxu0 %v4173
      %v4790 = vpop.f32.mrf.mxu0
      %v4791 = vadd.f32 0.0, %v4790
      %v4792 = vpop.f32.mrf.mxu0
      %v4793 = vadd.f32 0.0, %v4792
      %4794 = vmatmul.bf16.gmra.mxu0 %v4176
      %v4795 = vpop.f32.mrf.mxu0
      %v4796 = vadd.f32 0.0, %v4795
      %v4797 = vpop.f32.mrf.mxu0
      %v4798 = vadd.f32 0.0, %v4797
      %4799 = vmatmul.bf16.gmra.mxu0 %v4179
      %v4800 = vpop.f32.mrf.mxu0
      %v4801 = vadd.f32 0.0, %v4800
      %v4802 = vpop.f32.mrf.mxu0
      %v4803 = vadd.f32 0.0, %v4802
      %4804 = vmatmul.bf16.gmra.mxu0 %v4182
      %v4805 = vpop.f32.mrf.mxu0
      %v4806 = vadd.f32 0.0, %v4805
      %v4807 = vpop.f32.mrf.mxu0
      %v4808 = vadd.f32 0.0, %v4807
      %4809 = vmatmul.bf16.gmra.mxu0 %v4185
      %v4810 = vpop.f32.mrf.mxu0
      %v4811 = vadd.f32 0.0, %v4810
      %v4812 = vpop.f32.mrf.mxu0
      %v4813 = vadd.f32 0.0, %v4812
      %4814 = vmatmul.bf16.gmra.mxu0 %v4188
      %v4815 = vpop.f32.mrf.mxu0
      %v4816 = vadd.f32 0.0, %v4815
      %v4817 = vpop.f32.mrf.mxu0
      %v4818 = vadd.f32 0.0, %v4817
      %4819 = vmatmul.bf16.gmra.mxu0 %v4191
      %v4820 = vpop.f32.mrf.mxu0
      %v4821 = vadd.f32 0.0, %v4820
      %v4822 = vpop.f32.mrf.mxu0
      %v4823 = vadd.f32 0.0, %v4822
      %4824 = vmatmul.bf16.gmra.mxu0 %v4194
      %v4825 = vpop.f32.mrf.mxu0
      %v4826 = vadd.f32 0.0, %v4825
      %v4827 = vpop.f32.mrf.mxu0
      %v4828 = vadd.f32 0.0, %v4827
      %4829 = vmatmul.bf16.gmra.mxu0 %v4197
      %v4830 = vpop.f32.mrf.mxu0
      %v4831 = vadd.f32 0.0, %v4830
      %v4832 = vpop.f32.mrf.mxu0
      %v4833 = vadd.f32 0.0, %v4832
      %4834 = vmatmul.bf16.gmra.mxu0 %v4200
      %v4835 = vpop.f32.mrf.mxu0
      %v4836 = vadd.f32 0.0, %v4835
      %v4837 = vpop.f32.mrf.mxu0
      %v4838 = vadd.f32 0.0, %v4837
      %4839 = vmatmul.bf16.gmra.mxu0 %v4203
      %v4840 = vpop.f32.mrf.mxu0
      %v4841 = vadd.f32 0.0, %v4840
      %v4842 = vpop.f32.mrf.mxu0
      %v4843 = vadd.f32 0.0, %v4842
      %4844 = vmatmul.bf16.gmra.mxu0 %v4206
      %v4845 = vpop.f32.mrf.mxu0
      %v4846 = vadd.f32 0.0, %v4845
      %v4847 = vpop.f32.mrf.mxu0
      %v4848 = vadd.f32 0.0, %v4847
      %4849 = vmatmul.bf16.gmra.mxu0 %v4209
      %v4850 = vpop.f32.mrf.mxu0
      %v4851 = vadd.f32 0.0, %v4850
      %v4852 = vpop.f32.mrf.mxu0
      %v4853 = vadd.f32 0.0, %v4852
      %4854 = vmatmul.bf16.gmra.mxu0 %v4769
      %v4855 = vpop.f32.mrf.mxu0
      %v4856 = vadd.f32 0.0, %v4855
      %v4857 = vpop.f32.mrf.mxu0
      %v4858 = vadd.f32 0.0, %v4857
      %4859 = vdwg.mxu0
      %v4860 = vadd.f32 %v4724, %v4781
      %v4861 = vadd.f32 %v4725, %v4783
      %v4862 = vadd.f32 %v4726, %v4786
      %v4863 = vadd.f32 %v4727, %v4788
      %v4864 = vadd.f32 %v4728, %v4791
      %v4865 = vadd.f32 %v4729, %v4793
      %v4866 = vadd.f32 %v4730, %v4796
      %v4867 = vadd.f32 %v4731, %v4798
      %v4868 = vadd.f32 %v4732, %v4801
      %v4869 = vadd.f32 %v4733, %v4803
      %v4870 = vadd.f32 %v4734, %v4806
      %v4871 = vadd.f32 %v4735, %v4808
      %v4872 = vadd.f32 %v4736, %v4811
      %v4873 = vadd.f32 %v4737, %v4813
      %v4874 = vadd.f32 %v4738, %v4816
      %v4875 = vadd.f32 %v4739, %v4818
      %v4876 = vadd.f32 %v4740, %v4821
      %v4877 = vadd.f32 %v4741, %v4823
      %v4878 = vadd.f32 %v4742, %v4826
      %v4879 = vadd.f32 %v4743, %v4828
      %v4880 = vadd.f32 %v4744, %v4831
      %v4881 = vadd.f32 %v4745, %v4833
      %v4882 = vadd.f32 %v4746, %v4836
      %v4883 = vadd.f32 %v4747, %v4838
      %v4884 = vadd.f32 %v4748, %v4841
      %v4885 = vadd.f32 %v4749, %v4843
      %v4886 = vadd.f32 %v4750, %v4846
      %v4887 = vadd.f32 %v4751, %v4848
      %v4888 = vadd.f32 %v4752, %v4851
      %v4889 = vadd.f32 %v4753, %v4853
      %v4890 = vadd.f32 %v4754, %v4856
      %v4891 = vadd.f32 %v4755, %v4858
      %v4892 = vrot.slane %v3794, 2
      %v4893 = vrot.slane %v3795, 2
      %v4894 = vsel %vm983, %v4892, %v4893
      %v4895 = vrot.slane %v3796, 2
      %v4896 = vsel %vm983, %v4893, %v4895
      %v4899 = vpack.c.bf16 %v4896, %v4894
      %v4900 = vpack.c.bf16 %v452, %v451
      %v4902 = vsel %vm708, %v4899, 0
      %4904 = vmatpush.bf16.msra.mxu0 0
      %4905 = vmatpush.bf16.msra.mxu0 0
      %4906 = vmatpush.bf16.msra.mxu0 0
      %4907 = vmatpush.bf16.msra.mxu0 0
      %4908 = vmatpush.bf16.msra.mxu0 0
      %4909 = vmatpush.bf16.msra.mxu0 0
      %4910 = vmatpush.bf16.msra.mxu0 0
      %4911 = vmatpush.bf16.msra.mxu0 %v4900
      %4912 = vmatmul.bf16.gmra.mxu0 %v4465
      %v4913 = vpop.f32.mrf.mxu0
      %v4914 = vadd.f32 0.0, %v4913
      %v4915 = vpop.f32.mrf.mxu0
      %v4916 = vadd.f32 0.0, %v4915
      %4917 = vmatmul.bf16.gmra.mxu0 %v4468
      %v4918 = vpop.f32.mrf.mxu0
      %v4919 = vadd.f32 0.0, %v4918
      %v4920 = vpop.f32.mrf.mxu0
      %v4921 = vadd.f32 0.0, %v4920
      %4922 = vmatmul.bf16.gmra.mxu0 %v4471
      %v4923 = vpop.f32.mrf.mxu0
      %v4924 = vadd.f32 0.0, %v4923
      %v4925 = vpop.f32.mrf.mxu0
      %v4926 = vadd.f32 0.0, %v4925
      %4927 = vmatmul.bf16.gmra.mxu0 %v4474
      %v4928 = vpop.f32.mrf.mxu0
      %v4929 = vadd.f32 0.0, %v4928
      %v4930 = vpop.f32.mrf.mxu0
      %v4931 = vadd.f32 0.0, %v4930
      %4932 = vmatmul.bf16.gmra.mxu0 %v4477
      %v4933 = vpop.f32.mrf.mxu0
      %v4934 = vadd.f32 0.0, %v4933
      %v4935 = vpop.f32.mrf.mxu0
      %v4936 = vadd.f32 0.0, %v4935
      %4937 = vmatmul.bf16.gmra.mxu0 %v4480
      %v4938 = vpop.f32.mrf.mxu0
      %v4939 = vadd.f32 0.0, %v4938
      %v4940 = vpop.f32.mrf.mxu0
      %v4941 = vadd.f32 0.0, %v4940
      %4942 = vmatmul.bf16.gmra.mxu0 %v4483
      %v4943 = vpop.f32.mrf.mxu0
      %v4944 = vadd.f32 0.0, %v4943
      %v4945 = vpop.f32.mrf.mxu0
      %v4946 = vadd.f32 0.0, %v4945
      %4947 = vmatmul.bf16.gmra.mxu0 %v4486
      %v4948 = vpop.f32.mrf.mxu0
      %v4949 = vadd.f32 0.0, %v4948
      %v4950 = vpop.f32.mrf.mxu0
      %v4951 = vadd.f32 0.0, %v4950
      %4952 = vmatmul.bf16.gmra.mxu0 %v4489
      %v4953 = vpop.f32.mrf.mxu0
      %v4954 = vadd.f32 0.0, %v4953
      %v4955 = vpop.f32.mrf.mxu0
      %v4956 = vadd.f32 0.0, %v4955
      %4957 = vmatmul.bf16.gmra.mxu0 %v4492
      %v4958 = vpop.f32.mrf.mxu0
      %v4959 = vadd.f32 0.0, %v4958
      %v4960 = vpop.f32.mrf.mxu0
      %v4961 = vadd.f32 0.0, %v4960
      %4962 = vmatmul.bf16.gmra.mxu0 %v4495
      %v4963 = vpop.f32.mrf.mxu0
      %v4964 = vadd.f32 0.0, %v4963
      %v4965 = vpop.f32.mrf.mxu0
      %v4966 = vadd.f32 0.0, %v4965
      %4967 = vmatmul.bf16.gmra.mxu0 %v4498
      %v4968 = vpop.f32.mrf.mxu0
      %v4969 = vadd.f32 0.0, %v4968
      %v4970 = vpop.f32.mrf.mxu0
      %v4971 = vadd.f32 0.0, %v4970
      %4972 = vmatmul.bf16.gmra.mxu0 %v4501
      %v4973 = vpop.f32.mrf.mxu0
      %v4974 = vadd.f32 0.0, %v4973
      %v4975 = vpop.f32.mrf.mxu0
      %v4976 = vadd.f32 0.0, %v4975
      %4977 = vmatmul.bf16.gmra.mxu0 %v4504
      %v4978 = vpop.f32.mrf.mxu0
      %v4979 = vadd.f32 0.0, %v4978
      %v4980 = vpop.f32.mrf.mxu0
      %v4981 = vadd.f32 0.0, %v4980
      %4982 = vmatmul.bf16.gmra.mxu0 %v4507
      %v4983 = vpop.f32.mrf.mxu0
      %v4984 = vadd.f32 0.0, %v4983
      %v4985 = vpop.f32.mrf.mxu0
      %v4986 = vadd.f32 0.0, %v4985
      %4987 = vmatmul.bf16.gmra.mxu0 %v4902
      %v4988 = vpop.f32.mrf.mxu0
      %v4989 = vadd.f32 0.0, %v4988
      %v4990 = vpop.f32.mrf.mxu0
      %v4991 = vadd.f32 0.0, %v4990
      %4992 = vdwg.mxu0
      %v4993 = vadd.f32 %v4860, %v4914
      %v4994 = vadd.f32 %v4861, %v4916
      %v4995 = vadd.f32 %v4862, %v4919
      %v4996 = vadd.f32 %v4863, %v4921
      %v4997 = vadd.f32 %v4864, %v4924
      %v4998 = vadd.f32 %v4865, %v4926
      %v4999 = vadd.f32 %v4866, %v4929
      %v5000 = vadd.f32 %v4867, %v4931
      %v5001 = vadd.f32 %v4868, %v4934
      %v5002 = vadd.f32 %v4869, %v4936
      %v5003 = vadd.f32 %v4870, %v4939
      %v5004 = vadd.f32 %v4871, %v4941
      %v5005 = vadd.f32 %v4872, %v4944
      %v5006 = vadd.f32 %v4873, %v4946
      %v5007 = vadd.f32 %v4874, %v4949
      %v5008 = vadd.f32 %v4875, %v4951
      %v5009 = vadd.f32 %v4876, %v4954
      %v5010 = vadd.f32 %v4877, %v4956
      %v5011 = vadd.f32 %v4878, %v4959
      %v5012 = vadd.f32 %v4879, %v4961
      %v5013 = vadd.f32 %v4880, %v4964
      %v5014 = vadd.f32 %v4881, %v4966
      %v5015 = vadd.f32 %v4882, %v4969
      %v5016 = vadd.f32 %v4883, %v4971
      %v5017 = vadd.f32 %v4884, %v4974
      %v5018 = vadd.f32 %v4885, %v4976
      %v5019 = vadd.f32 %v4886, %v4979
      %v5020 = vadd.f32 %v4887, %v4981
      %v5021 = vadd.f32 %v4888, %v4984
      %v5022 = vadd.f32 %v4889, %v4986
      %v5023 = vadd.f32 %v4890, %v4989
      %v5024 = vadd.f32 %v4891, %v4991
      %v5025 = vpack.c.bf16 %v3798, %v3797
      %v5026 = vpack.c.bf16 %v454, %v453
      %v5028 = vsel %vm708, %v5025, 0
      %5030 = vmatpush.bf16.msra.mxu0 0
      %5031 = vmatpush.bf16.msra.mxu0 0
      %5032 = vmatpush.bf16.msra.mxu0 0
      %5033 = vmatpush.bf16.msra.mxu0 0
      %5034 = vmatpush.bf16.msra.mxu0 0
      %5035 = vmatpush.bf16.msra.mxu0 0
      %5036 = vmatpush.bf16.msra.mxu0 0
      %5037 = vmatpush.bf16.msra.mxu0 %v5026
      %5038 = vmatmul.bf16.gmra.mxu0 %v3824
      %v5039 = vpop.f32.mrf.mxu0
      %v5040 = vadd.f32 0.0, %v5039
      %v5041 = vpop.f32.mrf.mxu0
      %v5042 = vadd.f32 0.0, %v5041
      %5043 = vmatmul.bf16.gmra.mxu0 %v3827
      %v5044 = vpop.f32.mrf.mxu0
      %v5045 = vadd.f32 0.0, %v5044
      %v5046 = vpop.f32.mrf.mxu0
      %v5047 = vadd.f32 0.0, %v5046
      %5048 = vmatmul.bf16.gmra.mxu0 %v3830
      %v5049 = vpop.f32.mrf.mxu0
      %v5050 = vadd.f32 0.0, %v5049
      %v5051 = vpop.f32.mrf.mxu0
      %v5052 = vadd.f32 0.0, %v5051
      %5053 = vmatmul.bf16.gmra.mxu0 %v3833
      %v5054 = vpop.f32.mrf.mxu0
      %v5055 = vadd.f32 0.0, %v5054
      %v5056 = vpop.f32.mrf.mxu0
      %v5057 = vadd.f32 0.0, %v5056
      %5058 = vmatmul.bf16.gmra.mxu0 %v3836
      %v5059 = vpop.f32.mrf.mxu0
      %v5060 = vadd.f32 0.0, %v5059
      %v5061 = vpop.f32.mrf.mxu0
      %v5062 = vadd.f32 0.0, %v5061
      %5063 = vmatmul.bf16.gmra.mxu0 %v3839
      %v5064 = vpop.f32.mrf.mxu0
      %v5065 = vadd.f32 0.0, %v5064
      %v5066 = vpop.f32.mrf.mxu0
      %v5067 = vadd.f32 0.0, %v5066
      %5068 = vmatmul.bf16.gmra.mxu0 %v3842
      %v5069 = vpop.f32.mrf.mxu0
      %v5070 = vadd.f32 0.0, %v5069
      %v5071 = vpop.f32.mrf.mxu0
      %v5072 = vadd.f32 0.0, %v5071
      %5073 = vmatmul.bf16.gmra.mxu0 %v3845
      %v5074 = vpop.f32.mrf.mxu0
      %v5075 = vadd.f32 0.0, %v5074
      %v5076 = vpop.f32.mrf.mxu0
      %v5077 = vadd.f32 0.0, %v5076
      %5078 = vmatmul.bf16.gmra.mxu0 %v3848
      %v5079 = vpop.f32.mrf.mxu0
      %v5080 = vadd.f32 0.0, %v5079
      %v5081 = vpop.f32.mrf.mxu0
      %v5082 = vadd.f32 0.0, %v5081
      %5083 = vmatmul.bf16.gmra.mxu0 %v3851
      %v5084 = vpop.f32.mrf.mxu0
      %v5085 = vadd.f32 0.0, %v5084
      %v5086 = vpop.f32.mrf.mxu0
      %v5087 = vadd.f32 0.0, %v5086
      %5088 = vmatmul.bf16.gmra.mxu0 %v3854
      %v5089 = vpop.f32.mrf.mxu0
      %v5090 = vadd.f32 0.0, %v5089
      %v5091 = vpop.f32.mrf.mxu0
      %v5092 = vadd.f32 0.0, %v5091
      %5093 = vmatmul.bf16.gmra.mxu0 %v3857
      %v5094 = vpop.f32.mrf.mxu0
      %v5095 = vadd.f32 0.0, %v5094
      %v5096 = vpop.f32.mrf.mxu0
      %v5097 = vadd.f32 0.0, %v5096
      %5098 = vmatmul.bf16.gmra.mxu0 %v3860
      %v5099 = vpop.f32.mrf.mxu0
      %v5100 = vadd.f32 0.0, %v5099
      %v5101 = vpop.f32.mrf.mxu0
      %v5102 = vadd.f32 0.0, %v5101
      %5103 = vmatmul.bf16.gmra.mxu0 %v3863
      %v5104 = vpop.f32.mrf.mxu0
      %v5105 = vadd.f32 0.0, %v5104
      %v5106 = vpop.f32.mrf.mxu0
      %v5107 = vadd.f32 0.0, %v5106
      %5108 = vmatmul.bf16.gmra.mxu0 %v4633
      %v5109 = vpop.f32.mrf.mxu0
      %v5110 = vadd.f32 0.0, %v5109
      %v5111 = vpop.f32.mrf.mxu0
      %v5112 = vadd.f32 0.0, %v5111
      %5113 = vmatmul.bf16.gmra.mxu0 %v5028
      %v5114 = vpop.f32.mrf.mxu0
      %v5115 = vadd.f32 0.0, %v5114
      %v5116 = vpop.f32.mrf.mxu0
      %v5117 = vadd.f32 0.0, %v5116
      %5118 = vdwg.mxu0
      %v5119 = vadd.f32 %v4993, %v5040
      %v5120 = vadd.f32 %v4994, %v5042
      %v5121 = vadd.f32 %v4995, %v5045
      %v5122 = vadd.f32 %v4996, %v5047
      %v5123 = vadd.f32 %v4997, %v5050
      %v5124 = vadd.f32 %v4998, %v5052
      %v5125 = vadd.f32 %v4999, %v5055
      %v5126 = vadd.f32 %v5000, %v5057
      %v5127 = vadd.f32 %v5001, %v5060
      %v5128 = vadd.f32 %v5002, %v5062
      %v5129 = vadd.f32 %v5003, %v5065
      %v5130 = vadd.f32 %v5004, %v5067
      %v5131 = vadd.f32 %v5005, %v5070
      %v5132 = vadd.f32 %v5006, %v5072
      %v5133 = vadd.f32 %v5007, %v5075
      %v5134 = vadd.f32 %v5008, %v5077
      %v5135 = vadd.f32 %v5009, %v5080
      %v5136 = vadd.f32 %v5010, %v5082
      %v5137 = vadd.f32 %v5011, %v5085
      %v5138 = vadd.f32 %v5012, %v5087
      %v5139 = vadd.f32 %v5013, %v5090
      %v5140 = vadd.f32 %v5014, %v5092
      %v5141 = vadd.f32 %v5015, %v5095
      %v5142 = vadd.f32 %v5016, %v5097
      %v5143 = vadd.f32 %v5017, %v5100
      %v5144 = vadd.f32 %v5018, %v5102
      %v5145 = vadd.f32 %v5019, %v5105
      %v5146 = vadd.f32 %v5020, %v5107
      %v5147 = vadd.f32 %v5021, %v5110
      %v5148 = vadd.f32 %v5022, %v5112
      %v5149 = vadd.f32 %v5023, %v5115
      %v5150 = vadd.f32 %v5024, %v5117
      %v5154 = vrot.slane %v3797, 1
      %v5155 = vrot.slane %v3798, 1
      %v5156 = vsel %vm578, %v5154, %v5155
      %v5157 = vrot.slane %v3799, 1
      %v5158 = vsel %vm578, %v5155, %v5157
      %v5161 = vpack.c.bf16 %v5158, %v5156
      %v5162 = vpack.c.bf16 %v456, %v455
      %v5164 = vsel %vm708, %v5161, 0
      %5166 = vmatpush.bf16.msra.mxu0 0
      %5167 = vmatpush.bf16.msra.mxu0 0
      %5168 = vmatpush.bf16.msra.mxu0 0
      %5169 = vmatpush.bf16.msra.mxu0 0
      %5170 = vmatpush.bf16.msra.mxu0 0
      %5171 = vmatpush.bf16.msra.mxu0 0
      %5172 = vmatpush.bf16.msra.mxu0 0
      %5173 = vmatpush.bf16.msra.mxu0 %v5162
      %5174 = vmatmul.bf16.gmra.mxu0 %v4170
      %v5175 = vpop.f32.mrf.mxu0
      %v5176 = vadd.f32 0.0, %v5175
      %v5177 = vpop.f32.mrf.mxu0
      %v5178 = vadd.f32 0.0, %v5177
      %5179 = vmatmul.bf16.gmra.mxu0 %v4173
      %v5180 = vpop.f32.mrf.mxu0
      %v5181 = vadd.f32 0.0, %v5180
      %v5182 = vpop.f32.mrf.mxu0
      %v5183 = vadd.f32 0.0, %v5182
      %5184 = vmatmul.bf16.gmra.mxu0 %v4176
      %v5185 = vpop.f32.mrf.mxu0
      %v5186 = vadd.f32 0.0, %v5185
      %v5187 = vpop.f32.mrf.mxu0
      %v5188 = vadd.f32 0.0, %v5187
      %5189 = vmatmul.bf16.gmra.mxu0 %v4179
      %v5190 = vpop.f32.mrf.mxu0
      %v5191 = vadd.f32 0.0, %v5190
      %v5192 = vpop.f32.mrf.mxu0
      %v5193 = vadd.f32 0.0, %v5192
      %5194 = vmatmul.bf16.gmra.mxu0 %v4182
      %v5195 = vpop.f32.mrf.mxu0
      %v5196 = vadd.f32 0.0, %v5195
      %v5197 = vpop.f32.mrf.mxu0
      %v5198 = vadd.f32 0.0, %v5197
      %5199 = vmatmul.bf16.gmra.mxu0 %v4185
      %v5200 = vpop.f32.mrf.mxu0
      %v5201 = vadd.f32 0.0, %v5200
      %v5202 = vpop.f32.mrf.mxu0
      %v5203 = vadd.f32 0.0, %v5202
      %5204 = vmatmul.bf16.gmra.mxu0 %v4188
      %v5205 = vpop.f32.mrf.mxu0
      %v5206 = vadd.f32 0.0, %v5205
      %v5207 = vpop.f32.mrf.mxu0
      %v5208 = vadd.f32 0.0, %v5207
      %5209 = vmatmul.bf16.gmra.mxu0 %v4191
      %v5210 = vpop.f32.mrf.mxu0
      %v5211 = vadd.f32 0.0, %v5210
      %v5212 = vpop.f32.mrf.mxu0
      %v5213 = vadd.f32 0.0, %v5212
      %5214 = vmatmul.bf16.gmra.mxu0 %v4194
      %v5215 = vpop.f32.mrf.mxu0
      %v5216 = vadd.f32 0.0, %v5215
      %v5217 = vpop.f32.mrf.mxu0
      %v5218 = vadd.f32 0.0, %v5217
      %5219 = vmatmul.bf16.gmra.mxu0 %v4197
      %v5220 = vpop.f32.mrf.mxu0
      %v5221 = vadd.f32 0.0, %v5220
      %v5222 = vpop.f32.mrf.mxu0
      %v5223 = vadd.f32 0.0, %v5222
      %5224 = vmatmul.bf16.gmra.mxu0 %v4200
      %v5225 = vpop.f32.mrf.mxu0
      %v5226 = vadd.f32 0.0, %v5225
      %v5227 = vpop.f32.mrf.mxu0
      %v5228 = vadd.f32 0.0, %v5227
      %5229 = vmatmul.bf16.gmra.mxu0 %v4203
      %v5230 = vpop.f32.mrf.mxu0
      %v5231 = vadd.f32 0.0, %v5230
      %v5232 = vpop.f32.mrf.mxu0
      %v5233 = vadd.f32 0.0, %v5232
      %5234 = vmatmul.bf16.gmra.mxu0 %v4206
      %v5235 = vpop.f32.mrf.mxu0
      %v5236 = vadd.f32 0.0, %v5235
      %v5237 = vpop.f32.mrf.mxu0
      %v5238 = vadd.f32 0.0, %v5237
      %5239 = vmatmul.bf16.gmra.mxu0 %v4209
      %v5240 = vpop.f32.mrf.mxu0
      %v5241 = vadd.f32 0.0, %v5240
      %v5242 = vpop.f32.mrf.mxu0
      %v5243 = vadd.f32 0.0, %v5242
      %5244 = vmatmul.bf16.gmra.mxu0 %v4769
      %v5245 = vpop.f32.mrf.mxu0
      %v5246 = vadd.f32 0.0, %v5245
      %v5247 = vpop.f32.mrf.mxu0
      %v5248 = vadd.f32 0.0, %v5247
      %5249 = vmatmul.bf16.gmra.mxu0 %v5164
      %v5250 = vpop.f32.mrf.mxu0
      %v5251 = vadd.f32 0.0, %v5250
      %v5252 = vpop.f32.mrf.mxu0
      %v5253 = vadd.f32 0.0, %v5252
      %5254 = vdwg.mxu0
      %v5255 = vadd.f32 %v5119, %v5176
      %v5256 = vadd.f32 %v5120, %v5178
      %v5257 = vadd.f32 %v5121, %v5181
      %v5258 = vadd.f32 %v5122, %v5183
      %v5259 = vadd.f32 %v5123, %v5186
      %v5260 = vadd.f32 %v5124, %v5188
      %v5261 = vadd.f32 %v5125, %v5191
      %v5262 = vadd.f32 %v5126, %v5193
      %v5263 = vadd.f32 %v5127, %v5196
      %v5264 = vadd.f32 %v5128, %v5198
      %v5265 = vadd.f32 %v5129, %v5201
      %v5266 = vadd.f32 %v5130, %v5203
      %v5267 = vadd.f32 %v5131, %v5206
      %v5268 = vadd.f32 %v5132, %v5208
      %v5269 = vadd.f32 %v5133, %v5211
      %v5270 = vadd.f32 %v5134, %v5213
      %v5271 = vadd.f32 %v5135, %v5216
      %v5272 = vadd.f32 %v5136, %v5218
      %v5273 = vadd.f32 %v5137, %v5221
      %v5274 = vadd.f32 %v5138, %v5223
      %v5275 = vadd.f32 %v5139, %v5226
      %v5276 = vadd.f32 %v5140, %v5228
      %v5277 = vadd.f32 %v5141, %v5231
      %v5278 = vadd.f32 %v5142, %v5233
      %v5279 = vadd.f32 %v5143, %v5236
      %v5280 = vadd.f32 %v5144, %v5238
      %v5281 = vadd.f32 %v5145, %v5241
      %v5282 = vadd.f32 %v5146, %v5243
      %v5283 = vadd.f32 %v5147, %v5246
      %v5284 = vadd.f32 %v5148, %v5248
      %v5285 = vadd.f32 %v5149, %v5251
      %v5286 = vadd.f32 %v5150, %v5253
      %v5287 = vrot.slane %v3797, 2
      %v5288 = vrot.slane %v3798, 2
      %v5289 = vsel %vm983, %v5287, %v5288
      %v5290 = vrot.slane %v3799, 2
      %v5291 = vsel %vm983, %v5288, %v5290
      %v5294 = vpack.c.bf16 %v5291, %v5289
      %v5295 = vpack.c.bf16 %v458, %v457
      %v5297 = vsel %vm708, %v5294, 0
      %5299 = vmatpush.bf16.msra.mxu0 0
      %5300 = vmatpush.bf16.msra.mxu0 0
      %5301 = vmatpush.bf16.msra.mxu0 0
      %5302 = vmatpush.bf16.msra.mxu0 0
      %5303 = vmatpush.bf16.msra.mxu0 0
      %5304 = vmatpush.bf16.msra.mxu0 0
      %5305 = vmatpush.bf16.msra.mxu0 0
      %5306 = vmatpush.bf16.msra.mxu0 %v5295
      %5307 = vmatmul.bf16.gmra.mxu0 %v4468
      %v5308 = vpop.f32.mrf.mxu0
      %v5309 = vadd.f32 0.0, %v5308
      %v5310 = vpop.f32.mrf.mxu0
      %v5311 = vadd.f32 0.0, %v5310
      %5312 = vmatmul.bf16.gmra.mxu0 %v4471
      %v5313 = vpop.f32.mrf.mxu0
      %v5314 = vadd.f32 0.0, %v5313
      %v5315 = vpop.f32.mrf.mxu0
      %v5316 = vadd.f32 0.0, %v5315
      %5317 = vmatmul.bf16.gmra.mxu0 %v4474
      %v5318 = vpop.f32.mrf.mxu0
      %v5319 = vadd.f32 0.0, %v5318
      %v5320 = vpop.f32.mrf.mxu0
      %v5321 = vadd.f32 0.0, %v5320
      %5322 = vmatmul.bf16.gmra.mxu0 %v4477
      %v5323 = vpop.f32.mrf.mxu0
      %v5324 = vadd.f32 0.0, %v5323
      %v5325 = vpop.f32.mrf.mxu0
      %v5326 = vadd.f32 0.0, %v5325
      %5327 = vmatmul.bf16.gmra.mxu0 %v4480
      %v5328 = vpop.f32.mrf.mxu0
      %v5329 = vadd.f32 0.0, %v5328
      %v5330 = vpop.f32.mrf.mxu0
      %v5331 = vadd.f32 0.0, %v5330
      %5332 = vmatmul.bf16.gmra.mxu0 %v4483
      %v5333 = vpop.f32.mrf.mxu0
      %v5334 = vadd.f32 0.0, %v5333
      %v5335 = vpop.f32.mrf.mxu0
      %v5336 = vadd.f32 0.0, %v5335
      %5337 = vmatmul.bf16.gmra.mxu0 %v4486
      %v5338 = vpop.f32.mrf.mxu0
      %v5339 = vadd.f32 0.0, %v5338
      %v5340 = vpop.f32.mrf.mxu0
      %v5341 = vadd.f32 0.0, %v5340
      %5342 = vmatmul.bf16.gmra.mxu0 %v4489
      %v5343 = vpop.f32.mrf.mxu0
      %v5344 = vadd.f32 0.0, %v5343
      %v5345 = vpop.f32.mrf.mxu0
      %v5346 = vadd.f32 0.0, %v5345
      %5347 = vmatmul.bf16.gmra.mxu0 %v4492
      %v5348 = vpop.f32.mrf.mxu0
      %v5349 = vadd.f32 0.0, %v5348
      %v5350 = vpop.f32.mrf.mxu0
      %v5351 = vadd.f32 0.0, %v5350
      %5352 = vmatmul.bf16.gmra.mxu0 %v4495
      %v5353 = vpop.f32.mrf.mxu0
      %v5354 = vadd.f32 0.0, %v5353
      %v5355 = vpop.f32.mrf.mxu0
      %v5356 = vadd.f32 0.0, %v5355
      %5357 = vmatmul.bf16.gmra.mxu0 %v4498
      %v5358 = vpop.f32.mrf.mxu0
      %v5359 = vadd.f32 0.0, %v5358
      %v5360 = vpop.f32.mrf.mxu0
      %v5361 = vadd.f32 0.0, %v5360
      %5362 = vmatmul.bf16.gmra.mxu0 %v4501
      %v5363 = vpop.f32.mrf.mxu0
      %v5364 = vadd.f32 0.0, %v5363
      %v5365 = vpop.f32.mrf.mxu0
      %v5366 = vadd.f32 0.0, %v5365
      %5367 = vmatmul.bf16.gmra.mxu0 %v4504
      %v5368 = vpop.f32.mrf.mxu0
      %v5369 = vadd.f32 0.0, %v5368
      %v5370 = vpop.f32.mrf.mxu0
      %v5371 = vadd.f32 0.0, %v5370
      %5372 = vmatmul.bf16.gmra.mxu0 %v4507
      %v5373 = vpop.f32.mrf.mxu0
      %v5374 = vadd.f32 0.0, %v5373
      %v5375 = vpop.f32.mrf.mxu0
      %v5376 = vadd.f32 0.0, %v5375
      %5377 = vmatmul.bf16.gmra.mxu0 %v4902
      %v5378 = vpop.f32.mrf.mxu0
      %v5379 = vadd.f32 0.0, %v5378
      %v5380 = vpop.f32.mrf.mxu0
      %v5381 = vadd.f32 0.0, %v5380
      %5382 = vmatmul.bf16.gmra.mxu0 %v5297
      %v5383 = vpop.f32.mrf.mxu0
      %v5384 = vadd.f32 0.0, %v5383
      %v5385 = vpop.f32.mrf.mxu0
      %v5386 = vadd.f32 0.0, %v5385
      %5387 = vdwg.mxu0
      %v5388 = vadd.f32 %v5255, %v5309
      %v5389 = vadd.f32 %v5256, %v5311
      %v5390 = vadd.f32 %v5257, %v5314
      %v5391 = vadd.f32 %v5258, %v5316
      %v5392 = vadd.f32 %v5259, %v5319
      %v5393 = vadd.f32 %v5260, %v5321
      %v5394 = vadd.f32 %v5261, %v5324
      %v5395 = vadd.f32 %v5262, %v5326
      %v5396 = vadd.f32 %v5263, %v5329
      %v5397 = vadd.f32 %v5264, %v5331
      %v5398 = vadd.f32 %v5265, %v5334
      %v5399 = vadd.f32 %v5266, %v5336
      %v5400 = vadd.f32 %v5267, %v5339
      %v5401 = vadd.f32 %v5268, %v5341
      %v5402 = vadd.f32 %v5269, %v5344
      %v5403 = vadd.f32 %v5270, %v5346
      %v5404 = vadd.f32 %v5271, %v5349
      %v5405 = vadd.f32 %v5272, %v5351
      %v5406 = vadd.f32 %v5273, %v5354
      %v5407 = vadd.f32 %v5274, %v5356
      %v5408 = vadd.f32 %v5275, %v5359
      %v5409 = vadd.f32 %v5276, %v5361
      %v5410 = vadd.f32 %v5277, %v5364
      %v5411 = vadd.f32 %v5278, %v5366
      %v5412 = vadd.f32 %v5279, %v5369
      %v5413 = vadd.f32 %v5280, %v5371
      %v5414 = vadd.f32 %v5281, %v5374
      %v5415 = vadd.f32 %v5282, %v5376
      %v5416 = vadd.f32 %v5283, %v5379
      %v5417 = vadd.f32 %v5284, %v5381
      %v5418 = vadd.f32 %v5285, %v5384
      %v5419 = vadd.f32 %v5286, %v5386
      %v5420 = vld [vmem:[%s4] sm:$0x1]
      %v5422 = vperm.slane %v5420, 0
      %v5424 = vadd.f32 %v5388, %v5422
      %v5425 = vadd.f32 %v5389, %v5422
      %v5426 = vadd.f32 %v5390, %v5422
      %v5427 = vadd.f32 %v5391, %v5422
      %v5428 = vadd.f32 %v5392, %v5422
      %v5429 = vadd.f32 %v5393, %v5422
      %v5430 = vadd.f32 %v5394, %v5422
      %v5431 = vadd.f32 %v5395, %v5422
      %v5432 = vadd.f32 %v5396, %v5422
      %v5433 = vadd.f32 %v5397, %v5422
      %v5434 = vadd.f32 %v5398, %v5422
      %v5435 = vadd.f32 %v5399, %v5422
      %v5436 = vadd.f32 %v5400, %v5422
      %v5437 = vadd.f32 %v5401, %v5422
      %v5438 = vadd.f32 %v5402, %v5422
      %v5439 = vadd.f32 %v5403, %v5422
      %v5440 = vadd.f32 %v5404, %v5422
      %v5441 = vadd.f32 %v5405, %v5422
      %v5442 = vadd.f32 %v5406, %v5422
      %v5443 = vadd.f32 %v5407, %v5422
      %v5444 = vadd.f32 %v5408, %v5422
      %v5445 = vadd.f32 %v5409, %v5422
      %v5446 = vadd.f32 %v5410, %v5422
      %v5447 = vadd.f32 %v5411, %v5422
      %v5448 = vadd.f32 %v5412, %v5422
      %v5449 = vadd.f32 %v5413, %v5422
      %v5450 = vadd.f32 %v5414, %v5422
      %v5451 = vadd.f32 %v5415, %v5422
      %v5452 = vadd.f32 %v5416, %v5422
      %v5453 = vadd.f32 %v5417, %v5422
      %v5454 = vadd.f32 %v5418, %v5422
      %v5455 = vadd.f32 %v5419, %v5422
      %v5456 = vld [vmem:[%s394] sm:$0xff]
      %v5457 = vld [vmem:[%s394 + $0x8] sm:$0xff]
      %v5458 = vld [vmem:[%s394 + $0x10] sm:$0xff]
      %v5459 = vld [vmem:[%s394 + $0x18] sm:$0xff]
      %v5460 = vld [vmem:[%s394 + $0x20] sm:$0xff]
      %v5461 = vld [vmem:[%s394 + $0x28] sm:$0xff]
      %v5462 = vld [vmem:[%s394 + $0x30] sm:$0xff]
      %v5463 = vld [vmem:[%s394 + $0x38] sm:$0xff]
      %v5464 = vld [vmem:[%s394 + $0x40] sm:$0xff]
      %v5465 = vld [vmem:[%s394 + $0x48] sm:$0xff]
      %v5466 = vld [vmem:[%s394 + $0x50] sm:$0xff]
      %v5467 = vld [vmem:[%s394 + $0x58] sm:$0xff]
      %v5468 = vld [vmem:[%s394 + $0x60] sm:$0xff]
      %v5469 = vld [vmem:[%s394 + $0x68] sm:$0xff]
      %v5470 = vld [vmem:[%s394 + $0x70] sm:$0xff]
      %v5471 = vld [vmem:[%s394 + $0x78] sm:$0xff]
      %v5472 = vld [vmem:[%s394 + $0x80] sm:$0xff]
      %v5473 = vld [vmem:[%s394 + $0x88] sm:$0xff]
      %v5474 = vld [vmem:[%s394 + $0x90] sm:$0xff]
      %v5475 = vld [vmem:[%s394 + $0x98] sm:$0xff]
      %v5476 = vld [vmem:[%s394 + $0xa0] sm:$0xff]
      %v5477 = vld [vmem:[%s394 + $0xa8] sm:$0xff]
      %v5478 = vld [vmem:[%s394 + $0xb0] sm:$0xff]
      %v5479 = vld [vmem:[%s394 + $0xb8] sm:$0xff]
      %v5480 = vld [vmem:[%s394 + $0xc0] sm:$0xff]
      %v5481 = vld [vmem:[%s394 + $0xc8] sm:$0xff]
      %v5482 = vld [vmem:[%s394 + $0xd0] sm:$0xff]
      %v5483 = vld [vmem:[%s394 + $0xd8] sm:$0xff]
      %v5484 = vld [vmem:[%s394 + $0xe0] sm:$0xff]
      %v5485 = vld [vmem:[%s394 + $0xe8] sm:$0xff]
      %v5486 = vld [vmem:[%s394 + $0xf0] sm:$0xff]
      %v5487 = vld [vmem:[%s394 + $0xf8] sm:$0xff]
      %v5488 = vadd.f32 %v5424, %v5456
      %v5489 = vadd.f32 %v5425, %v5457
      %v5490 = vadd.f32 %v5426, %v5458
      %v5491 = vadd.f32 %v5427, %v5459
      %v5492 = vadd.f32 %v5428, %v5460
      %v5493 = vadd.f32 %v5429, %v5461
      %v5494 = vadd.f32 %v5430, %v5462
      %v5495 = vadd.f32 %v5431, %v5463
      %v5496 = vadd.f32 %v5432, %v5464
      %v5497 = vadd.f32 %v5433, %v5465
      %v5498 = vadd.f32 %v5434, %v5466
      %v5499 = vadd.f32 %v5435, %v5467
      %v5500 = vadd.f32 %v5436, %v5468
      %v5501 = vadd.f32 %v5437, %v5469
      %v5502 = vadd.f32 %v5438, %v5470
      %v5503 = vadd.f32 %v5439, %v5471
      %v5504 = vadd.f32 %v5440, %v5472
      %v5505 = vadd.f32 %v5441, %v5473
      %v5506 = vadd.f32 %v5442, %v5474
      %v5507 = vadd.f32 %v5443, %v5475
      %v5508 = vadd.f32 %v5444, %v5476
      %v5509 = vadd.f32 %v5445, %v5477
      %v5510 = vadd.f32 %v5446, %v5478
      %v5511 = vadd.f32 %v5447, %v5479
      %v5512 = vadd.f32 %v5448, %v5480
      %v5513 = vadd.f32 %v5449, %v5481
      %v5514 = vadd.f32 %v5450, %v5482
      %v5515 = vadd.f32 %v5451, %v5483
      %v5516 = vadd.f32 %v5452, %v5484
      %v5517 = vadd.f32 %v5453, %v5485
      %v5518 = vadd.f32 %v5454, %v5486
      %v5519 = vadd.f32 %v5455, %v5487
      %v5520 = vmax.f32 %v5488, 0.0
      %v5521 = vmax.f32 %v5489, 0.0
      %v5522 = vmax.f32 %v5490, 0.0
      %v5523 = vmax.f32 %v5491, 0.0
      %v5524 = vmax.f32 %v5492, 0.0
      %v5525 = vmax.f32 %v5493, 0.0
      %v5526 = vmax.f32 %v5494, 0.0
      %v5527 = vmax.f32 %v5495, 0.0
      %v5528 = vmax.f32 %v5496, 0.0
      %v5529 = vmax.f32 %v5497, 0.0
      %v5530 = vmax.f32 %v5498, 0.0
      %v5531 = vmax.f32 %v5499, 0.0
      %v5532 = vmax.f32 %v5500, 0.0
      %v5533 = vmax.f32 %v5501, 0.0
      %v5534 = vmax.f32 %v5502, 0.0
      %v5535 = vmax.f32 %v5503, 0.0
      %v5536 = vmax.f32 %v5504, 0.0
      %v5537 = vmax.f32 %v5505, 0.0
      %v5538 = vmax.f32 %v5506, 0.0
      %v5539 = vmax.f32 %v5507, 0.0
      %v5540 = vmax.f32 %v5508, 0.0
      %v5541 = vmax.f32 %v5509, 0.0
      %v5542 = vmax.f32 %v5510, 0.0
      %v5543 = vmax.f32 %v5511, 0.0
      %v5544 = vmax.f32 %v5512, 0.0
      %v5545 = vmax.f32 %v5513, 0.0
      %v5546 = vmax.f32 %v5514, 0.0
      %v5547 = vmax.f32 %v5515, 0.0
      %v5548 = vmax.f32 %v5516, 0.0
      %v5549 = vmax.f32 %v5517, 0.0
      %v5550 = vmax.f32 %v5518, 0.0
      %v5551 = vmax.f32 %v5519, 0.0
      %5552 = vst.msk [vmem:[%s403] sm:$0xff] %vm708, %v5520
      %5553 = vst.msk [vmem:[%s403 + $0x8] sm:$0xff] %vm708, %v5521
      %5554 = vst.msk [vmem:[%s403 + $0x10] sm:$0xff] %vm708, %v5522
      %5555 = vst.msk [vmem:[%s403 + $0x18] sm:$0xff] %vm708, %v5523
      %5556 = vst.msk [vmem:[%s403 + $0x20] sm:$0xff] %vm708, %v5524
      %5557 = vst.msk [vmem:[%s403 + $0x28] sm:$0xff] %vm708, %v5525
      %5558 = vst.msk [vmem:[%s403 + $0x30] sm:$0xff] %vm708, %v5526
      %5559 = vst.msk [vmem:[%s403 + $0x38] sm:$0xff] %vm708, %v5527
      %5560 = vst.msk [vmem:[%s403 + $0x40] sm:$0xff] %vm708, %v5528
      %5561 = vst.msk [vmem:[%s403 + $0x48] sm:$0xff] %vm708, %v5529
      %5562 = vst.msk [vmem:[%s403 + $0x50] sm:$0xff] %vm708, %v5530
      %5563 = vst.msk [vmem:[%s403 + $0x58] sm:$0xff] %vm708, %v5531
      %5564 = vst.msk [vmem:[%s403 + $0x60] sm:$0xff] %vm708, %v5532
      %5565 = vst.msk [vmem:[%s403 + $0x68] sm:$0xff] %vm708, %v5533
      %5566 = vst.msk [vmem:[%s403 + $0x70] sm:$0xff] %vm708, %v5534
      %5567 = vst.msk [vmem:[%s403 + $0x78] sm:$0xff] %vm708, %v5535
      %5568 = vst.msk [vmem:[%s403 + $0x80] sm:$0xff] %vm708, %v5536
      %5569 = vst.msk [vmem:[%s403 + $0x88] sm:$0xff] %vm708, %v5537
      %5570 = vst.msk [vmem:[%s403 + $0x90] sm:$0xff] %vm708, %v5538
      %5571 = vst.msk [vmem:[%s403 + $0x98] sm:$0xff] %vm708, %v5539
      %5572 = vst.msk [vmem:[%s403 + $0xa0] sm:$0xff] %vm708, %v5540
      %5573 = vst.msk [vmem:[%s403 + $0xa8] sm:$0xff] %vm708, %v5541
      %5574 = vst.msk [vmem:[%s403 + $0xb0] sm:$0xff] %vm708, %v5542
      %5575 = vst.msk [vmem:[%s403 + $0xb8] sm:$0xff] %vm708, %v5543
      %5576 = vst.msk [vmem:[%s403 + $0xc0] sm:$0xff] %vm708, %v5544
      %5577 = vst.msk [vmem:[%s403 + $0xc8] sm:$0xff] %vm708, %v5545
      %5578 = vst.msk [vmem:[%s403 + $0xd0] sm:$0xff] %vm708, %v5546
      %5579 = vst.msk [vmem:[%s403 + $0xd8] sm:$0xff] %vm708, %v5547
      %5580 = vst.msk [vmem:[%s403 + $0xe0] sm:$0xff] %vm708, %v5548
      %5581 = vst.msk [vmem:[%s403 + $0xe8] sm:$0xff] %vm708, %v5549
      %5582 = vst.msk [vmem:[%s403 + $0xf0] sm:$0xff] %vm708, %v5550
      %5583 = vst.msk [vmem:[%s403 + $0xf8] sm:$0xff] %vm708, %v5551
      %p5584 = scmp.lt.s32.totalorder %s21, 1
      %s5585 = scalar_select %p5584, %s21, 1
      %p5586 = scmp.lt.s32.totalorder %s22, 15
      %s5587 = scalar_select %p5586, %s22, 15
      %s5588 = smul.addr %s5587, 32
      %s5589 = smul.addr %s5585, 512
      %s5590 = sadd.s32 %s5588, %s5589
      %s5591 = smul.addr %s5590, 8
      %s5592 = scalar_lea.vmem %s6, %s5591
      // Predicated region
      $region45: #{resconv_block_forward.5} parent=43 // pred_check
        %p5593 = pneg %p207
      $region46: #{resconv_block_forward.5} parent=43 // pred_check_branch
        %5595 = sbr.rel (%p5593) target = $region48
      $region47: #{resconv_block_forward.5} parent=43 // pred_region
        _
      $region48: #{resconv_block_forward.5} parent=43 // pred_fallthru
        _
    $region44: #{resconv_block_forward.5} parent=5 // pred_fallthru
      _
    %p5596 = scmp.le.s32.totalorder 2, %s12
    // Predicated region
    $region49: #{resconv_block_forward.5} parent=5 // pred_check
      %p5597 = pneg %p5596
    $region50: #{resconv_block_forward.5} parent=5 // pred_check_branch
      %5599 = sbr.rel (%p5597) target = $region52
    $region51: #{resconv_block_forward.5} parent=5 // pred_region
      %s5600 = ssub.s32 %s12, 2
      // Predicated region
      $region53: #{resconv_block_forward.5} parent=51 // pred_check
        %p5601 = pneg %p213
      $region54: #{resconv_block_forward.5} parent=51 // pred_check_branch
        %5603 = sbr.rel (%p5601) target = $region56
      $region55: #{resconv_block_forward.5} parent=51 // pred_region
        %p5604 = scmp.lt.s32.totalorder %s23, 1
        %s5605 = scalar_select %p5604, %s23, 1
        %p5606 = scmp.lt.s32.totalorder %s24, 15
        %s5607 = scalar_select %p5606, %s24, 15
        %s5608 = smul.addr %s5607, 32
        %s5609 = smul.addr %s5605, 512
        %s5610 = sadd.s32 %s5608, %s5609
        %s5611 = smul.addr %s5610, 8
        %s5612 = scalar_lea.vmem %s6, %s5611
      $region56: #{resconv_block_forward.5} parent=51 // pred_fallthru
        _
    $region52: #{resconv_block_forward.5} parent=5 // pred_fallthru
      _
  $region6: #{resconv_block_forward.5} parent=0 // loop_footer
    %s16 = sadd.s32 1, %s12
  $region7: #{resconv_block_forward.5} parent=0 // loop_footer_branch
    %11 = sbr.rel target = $region3
  $region8: #{resconv_block_forward.5} parent=0 // loop_exit
    _

</llo_original>
